<compile_context>
chip_gen: v6e
topology: v6e:2x2x1
jax: 0.10.0
libtpu: 0.0.40
codegen_flags: <defaults>
</compile_context>

<pallas_src>
import functools

import jax
import jax.numpy as jnp
from jax.experimental import pallas as pl
from jax.experimental.pallas import tpu as pltpu

GN_EPS = 1e-5   # nn.GroupNorm default
WS_EPS = 1e-6   # timm StdConv2d default
GN_GROUPS = 32  # partial(GroupNormAct, num_groups=32)


def make_div(v, divisor=8):
    min_value = divisor
    new_v = max(min_value, int(v + divisor / 2) // divisor * divisor)
    if new_v < 0.9 * v:
        new_v += divisor
    return new_v


def _pick_tile(dim, candidates):
    """Largest candidate tile that evenly divides `dim`; else full extent (always legal)."""
    for c in candidates:
        if c <= dim and dim % c == 0:
            return c
    return dim


_MM_TM = (512, 448, 384, 320, 256, 192, 128, 64, 32, 16, 8)
_MM_TK = (512, 256, 128)
_MM_TN = (256, 128)
_C3_TN = (512, 256, 128)   # 3x3 conv: Cin is small (mid chs), afford wider Cout tiles
_ST_TM = (1024, 512, 448, 384, 256, 128, 64, 32, 16, 8)


# ----------------------------- Pallas kernels ------------------------------

def _gn_stats_kernel(x_ref, gath_ref, scat_ref, gamma_ref, beta_ref,
                     scale_ref, shift_ref, s1_ref, s2_ref, *, eps, count):
    """Accumulate per-channel sums over HW tiles; finalize per-channel scale/shift."""
    i = pl.program_id(1)

    @pl.when(i == 0)
    def _():
        s1_ref[...] = jnp.zeros_like(s1_ref)
        s2_ref[...] = jnp.zeros_like(s2_ref)

    x = x_ref[0].astype(jnp.float32)                        # (tm, C)
    s1_ref[...] += jnp.sum(x, axis=0, keepdims=True)        # (1, C)
    s2_ref[...] += jnp.sum(x * x, axis=0, keepdims=True)

    @pl.when(i == pl.num_programs(1) - 1)
    def _():
        s1g = jnp.dot(s1_ref[...], gath_ref[...], preferred_element_type=jnp.float32)
        s2g = jnp.dot(s2_ref[...], gath_ref[...], preferred_element_type=jnp.float32)
        mean_g = s1g / count
        var_g = jnp.maximum(s2g / count - mean_g * mean_g, 0.0)  # clamp: E[x^2]-E[x]^2 >= 0
        inv_g = jax.lax.rsqrt(var_g + eps)
        mean_c = jnp.dot(mean_g, scat_ref[...], preferred_element_type=jnp.float32)
        inv_c = jnp.dot(inv_g, scat_ref[...], preferred_element_type=jnp.float32)
        scale = gamma_ref[...] * inv_c
        shift = beta_ref[...] - mean_c * scale
        scale_ref[0] = scale
        shift_ref[0] = shift


def _gn_mm_kernel(x_ref, scale_ref, shift_ref, w_ref, *rest, with_res):
    """normalize(x)*relu -> tiled matmul accumulate; residual + writeback at K==last."""
    if with_res:
        res_ref, o_ref, acc_ref = rest
    else:
        o_ref, acc_ref = rest
    k = pl.program_id(3)

    @pl.when(k == 0)
    def _():
        acc_ref[...] = jnp.zeros_like(acc_ref)

    a = x_ref[0].astype(jnp.float32) * scale_ref[0] + shift_ref[0]
    a = jnp.maximum(a, 0.0)                                  # GroupNormAct ReLU
    acc_ref[...] += jnp.dot(a.astype(jnp.bfloat16), w_ref[...],
                            preferred_element_type=jnp.float32)

    @pl.when(k == pl.num_programs(3) - 1)
    def _():
        out = acc_ref[...]
        if with_res:
            out = out + res_ref[0].astype(jnp.float32)
        o_ref[0] = out.astype(o_ref.dtype)


def _conv3x3_kernel(x_ref, scale_ref, shift_ref, mask_ref, w_ref, o_ref, y_ref,
                    *, tap_starts, out_rows):
    """Fused GN+ReLU+3x3 conv: normalize once per sample (cached in VMEM scratch across
    Cout tiles), then 9 static-shift matmuls, f32 accumulate."""
    j = pl.program_id(1)

    @pl.when(j == 0)
    def _():
        x = x_ref[0].astype(jnp.float32)                     # (F, C) phase-major flattened
        y = jnp.maximum(x * scale_ref[0] + shift_ref[0], 0.0) * mask_ref[...]
        y_ref[...] = y.astype(jnp.bfloat16)

    acc = jnp.zeros((out_rows, o_ref.shape[-1]), jnp.float32)
    for t, start in enumerate(tap_starts):                   # 9 taps, statically unrolled
        acc = acc + jnp.dot(y_ref[start:start + out_rows, :], w_ref[t],
                            preferred_element_type=jnp.float32)
    o_ref[0] = acc.astype(o_ref.dtype)


# ----------------------------- kernel wrappers ------------------------------

def gn_stats(x, gamma, beta, *, groups=GN_GROUPS, eps=GN_EPS):
    """GroupNorm stats per sample, folded into per-channel (scale, shift). x: NHWC."""
    n, h, w, c = x.shape
    assert c % groups == 0
    m = h * w
    cg = c // groups
    xr = x.reshape(n, m, c)
    tm = _pick_tile(m, _ST_TM)
    ch = jnp.arange(c, dtype=jnp.int32)[:, None] // cg
    gr = jnp.arange(groups, dtype=jnp.int32)[None, :]
    gather = (ch == gr).astype(jnp.float32)                  # (C, G), hoisted out of kernel
    scatter = jnp.transpose(gather)                          # (G, C)
    gamma2 = gamma.reshape(1, c).astype(jnp.float32)
    beta2 = beta.reshape(1, c).astype(jnp.float32)
    kernel = functools.partial(_gn_stats_kernel, eps=eps, count=float(m * cg))
    bytes_acc = x.dtype.itemsize * n * m * c + 8 * n * c
    scale, shift = pl.pallas_call(
        kernel,
        out_shape=(jax.ShapeDtypeStruct((n, 1, c), jnp.float32),
                   jax.ShapeDtypeStruct((n, 1, c), jnp.float32)),
        grid=(n, m // tm),
        in_specs=[
            pl.BlockSpec((1, tm, c), lambda b, i: (b, i, 0)),
            pl.BlockSpec((c, groups), lambda b, i: (0, 0)),
            pl.BlockSpec((groups, c), lambda b, i: (0, 0)),
            pl.BlockSpec((1, c), lambda b, i: (0, 0)),
            pl.BlockSpec((1, c), lambda b, i: (0, 0)),
        ],
        out_specs=(pl.BlockSpec((1, 1, c), lambda b, i: (b, 0, 0)),
                   pl.BlockSpec((1, 1, c), lambda b, i: (b, 0, 0))),
        scratch_shapes=[pltpu.VMEM((1, c), jnp.float32),
                        pltpu.VMEM((1, c), jnp.float32)],
        compiler_params=pltpu.CompilerParams(
            dimension_semantics=("parallel", "arbitrary")),
        cost_estimate=pl.CostEstimate(flops=3 * n * m * c, transcendentals=0,
                                      bytes_accessed=bytes_acc),
    )(xr, gather, scatter, gamma2, beta2)
    return scale, shift


def gn_conv1x1(x, scale, shift, w, residual=None):
    """Fused GN-apply + ReLU + 1x1 StdConv2d (+ residual). x NHWC bf16, w (Cin, Cout) bf16."""
    n, h, wd, c = x.shape
    m = h * wd
    cout = w.shape[1]
    xr = x.reshape(n, m, c)
    tm = _pick_tile(m, _MM_TM)
    tk = _pick_tile(c, _MM_TK)
    tn = _pick_tile(cout, _MM_TN)
    grid = (n, m // tm, cout // tn, c // tk)
    in_specs = [
        pl.BlockSpec((1, tm, tk), lambda b, i, j, k: (b, i, k)),
        pl.BlockSpec((1, 1, tk), lambda b, i, j, k: (b, 0, k)),
        pl.BlockSpec((1, 1, tk), lambda b, i, j, k: (b, 0, k)),
        pl.BlockSpec((tk, tn), lambda b, i, j, k: (k, j)),
    ]
    args = [xr, scale, shift, w]
    if residual is not None:
        in_specs.append(pl.BlockSpec((1, tm, tn), lambda b, i, j, k: (b, i, j)))
        args.append(residual.reshape(n, m, cout))
    flops = 2 * n * m * c * cout
    bytes_acc = 2 * (n * m * c + c * cout + n * m * cout) + 8 * n * c
    if residual is not None:
        bytes_acc += 2 * n * m * cout
    out = pl.pallas_call(
        functools.partial(_gn_mm_kernel, with_res=residual is not None),
        out_shape=jax.ShapeDtypeStruct((n, m, cout), jnp.bfloat16),
        grid=grid,
        in_specs=in_specs,
        out_specs=pl.BlockSpec((1, tm, tn), lambda b, i, j, k: (b, i, j)),
        scratch_shapes=[pltpu.VMEM((tm, tn), jnp.float32)],
        compiler_params=pltpu.CompilerParams(
            dimension_semantics=("parallel", "parallel", "parallel", "arbitrary")),
        cost_estimate=pl.CostEstimate(flops=flops, transcendentals=0,
                                      bytes_accessed=bytes_acc),
    )(*args)
    return out.reshape(n, h, wd, cout)


def gn_conv3x3(x, scale, shift, w9, *, stride=1, dilation=1):
    """Fused GN-apply + ReLU + 3x3 StdConv2d (stride/dilation), no im2col.

    x NHWC bf16, w9 (9, Cin, Cout) bf16 (tap-major, standardized)."""
    n, h, wd, c = x.shape
    kk, s, d = 3, stride, dilation
    p = ((s - 1) + d * (kk - 1)) // 2                        # timm get_padding
    ho = (h + 2 * p - d * (kk - 1) - 1) // s + 1
    wo = (wd + 2 * p - d * (kk - 1) - 1) // s + 1
    qmax = (d * (kk - 1)) // s
    hq, wq = ho + qmax, wo + qmax
    hp, wp = s * hq, s * wq                                  # padded, phase-splittable extent
    xpad = jnp.pad(x, ((0, 0), (p, hp - h - p), (p, wp - wd - p), (0, 0)))
    mask = jnp.pad(jnp.ones((h, wd), jnp.float32),
                   ((p, hp - h - p), (p, wp - wd - p)))
    # phase-major flatten: flat[((py*s+px)*Hq + y)*Wq + x] = xpad[s*y+py, s*x+px]
    xf = xpad.reshape(n, hq, s, wq, s, c).transpose(0, 2, 4, 1, 3, 5)
    xf = xf.reshape(n, s * s * hq * wq, c)
    mf = mask.reshape(hq, s, wq, s).transpose(1, 3, 0, 2).reshape(s * s * hq * wq, 1)
    L = (ho - 1) * wq + wo                                   # valid rows of the wq-grid output
    tap_starts = []
    for ky in range(kk):
        for kx in range(kk):
            oy, ox = ky * d, kx * d
            py, qy = oy % s, oy // s
            px, qx = ox % s, ox // s
            tap_starts.append(((py * s + px) * hq + qy) * wq + qx)
    cout = w9.shape[-1]
    tn = _pick_tile(cout, _C3_TN)
    f = s * s * hq * wq
    flops = 2 * 9 * n * L * c * cout
    bytes_acc = 2 * (n * f * c + 9 * c * cout + n * L * cout) + 8 * n * c
    out = pl.pallas_call(
        functools.partial(_conv3x3_kernel, tap_starts=tuple(tap_starts), out_rows=L),
        out_shape=jax.ShapeDtypeStruct((n, L, cout), jnp.bfloat16),
        grid=(n, cout // tn),
        in_specs=[
            pl.BlockSpec((1, f, c), lambda b, j: (b, 0, 0)),
            pl.BlockSpec((1, 1, c), lambda b, j: (b, 0, 0)),
            pl.BlockSpec((1, 1, c), lambda b, j: (b, 0, 0)),
            pl.BlockSpec((f, 1), lambda b, j: (0, 0)),
            pl.BlockSpec((9, c, tn), lambda b, j: (0, 0, j)),
        ],
        out_specs=pl.BlockSpec((1, L, tn), lambda b, j: (b, 0, j)),
        # normalized activation cached across Cout tiles (computed at j == 0)
        scratch_shapes=[pltpu.VMEM((f, c), jnp.bfloat16)],
        compiler_params=pltpu.CompilerParams(
            dimension_semantics=("parallel", "arbitrary")),
        cost_estimate=pl.CostEstimate(flops=flops, transcendentals=0,
                                      bytes_accessed=bytes_acc),
    )(xf, scale, shift, mf, w9)
    # drop the wq-grid junk columns and restore NHWC
    out = jnp.pad(out, ((0, 0), (0, ho * wq - L), (0, 0)))
    out = out.reshape(n, ho, wq, cout)[:, :, :wo, :]
    return out


# ----------------------------- StdConv2d weight prep ------------------------

def standardize_weight(w, eps=WS_EPS):
    """timm StdConv2d weight standardization, w: (Cout, Cin, kh, kw)."""
    w2 = w.reshape(w.shape[0], -1).astype(jnp.float32)
    mean = jnp.mean(w2, axis=1, keepdims=True)
    var = jnp.var(w2, axis=1, keepdims=True)                 # biased
    w2 = (w2 - mean) * jax.lax.rsqrt(var + eps)
    return w2.reshape(w.shape)


def prep_w1x1(w):
    """(Cout, Cin, 1, 1) -> standardized (Cin, Cout) bf16."""
    w = standardize_weight(w)
    return jnp.transpose(w[:, :, 0, 0]).astype(jnp.bfloat16)


def prep_w3x3(w):
    """(Cout, Cin, 3, 3) -> standardized (9, Cin, Cout) bf16, tap index = ky*3+kx."""
    cout, cin = w.shape[0], w.shape[1]
    w = standardize_weight(w)
    return jnp.transpose(w, (2, 3, 1, 0)).reshape(9, cin, cout).astype(jnp.bfloat16)


# ----------------------------- PreActBottleneck / ResNetStage ----------------

def preact_bottleneck(x, p, *, stride, first_dilation):
    scale1, shift1 = gn_stats(x, p["g1"], p["b1"])
    if "wd" in p:
        # DownsampleConv with preact=True: 1x1 StdConv2d(stride), no norm after.
        # TODO(synk): fold the stride-2 spatial subsample into the matmul A index_map
        # instead of this XLA strided slice.
        xs = x[:, ::stride, ::stride, :] if stride > 1 else x
        shortcut = gn_conv1x1(xs, scale1, shift1, prep_w1x1(p["wd"]))
    else:
        shortcut = x
    h1 = gn_conv1x1(x, scale1, shift1, prep_w1x1(p["w1"]))
    scale2, shift2 = gn_stats(h1, p["g2"], p["b2"])
    h2 = gn_conv3x3(h1, scale2, shift2, prep_w3x3(p["w2"]),
                    stride=stride, dilation=first_dilation)
    scale3, shift3 = gn_stats(h2, p["g3"], p["b3"])
    # conv3 + residual add fused into the matmul epilogue (drop_path rate 0 -> identity)
    return gn_conv1x1(h2, scale3, shift3, prep_w1x1(p["w3"]), residual=shortcut)


def resnet_stage(x_nchw, params, *, stride, dilation):
    # layout boundary: NCHW (PyTorch) -> NHWC bf16 for kernels -> back to NCHW f32
    x = jnp.transpose(x_nchw, (0, 2, 3, 1)).astype(jnp.bfloat16)
    first_dilation = 1 if dilation in (1, 2) else 2
    for bi, p in enumerate(params):
        s = stride if bi == 0 else 1
        x = preact_bottleneck(x, p, stride=s, first_dilation=first_dilation)
        first_dilation = dilation
    return jnp.transpose(x, (0, 3, 1, 2)).astype(jnp.float32)


def init_stage_params(key, in_chs, out_chs, depth, bottle_ratio=0.25):
    mid = make_div(out_chs * bottle_ratio)
    params = []
    prev = in_chs
    for bi in range(depth):
        k = jax.random.split(jax.random.fold_in(key, bi), 10)
        p = {
            "g1": 1.0 + 0.1 * jax.random.normal(k[0], (prev,), jnp.float32),
            "b1": 0.1 * jax.random.normal(k[1], (prev,), jnp.float32),
            "w1": 0.05 * jax.random.normal(k[2], (mid, prev, 1, 1), jnp.float32),
            "g2": 1.0 + 0.1 * jax.random.normal(k[3], (mid,), jnp.float32),
            "b2": 0.1 * jax.random.normal(k[4], (mid,), jnp.float32),
            "w2": 0.05 * jax.random.normal(k[5], (mid, mid, 3, 3), jnp.float32),
            "g3": 1.0 + 0.1 * jax.random.normal(k[6], (mid,), jnp.float32),
            "b3": 0.1 * jax.random.normal(k[7], (mid,), jnp.float32),
            "w3": 0.05 * jax.random.normal(k[8], (out_chs, mid, 1, 1), jnp.float32),
        }
        if bi == 0:  # DownsampleConv projection only on the first block of the stage
            p["wd"] = 0.05 * jax.random.normal(k[9], (out_chs, prev, 1, 1), jnp.float32)
        params.append(p)
        prev = out_chs
    return params


if __name__ == "__main__":
    # Channel counts chosen so GroupNorm(num_groups=32) is valid: in=32, out=128, mid=make_div(32)=32.
    in_chs, out_chs, stride, dilation, depth = 32, 128, 2, 1, 2
    key = jax.random.PRNGKey(0)
    x = jax.random.normal(jax.random.fold_in(key, 123), (2, in_chs, 8, 8), jnp.float32)  # NCHW
    params = init_stage_params(jax.random.fold_in(key, 7), in_chs, out_chs, depth)

    fwd = jax.jit(functools.partial(resnet_stage, stride=stride, dilation=dilation))
    out = fwd(x, params)
    jax.block_until_ready(out)
    assert out.shape == (2, out_chs, 4, 4), out.shape
    assert bool(jnp.all(jnp.isfinite(out)))
    print("KERNEL_OK")
</pallas_src>

<mosaic_0001>
module attributes {stable_mosaic.version = 11 : i64} {
  func.func @_gn_stats_kernel(%arg0: i32, %arg1: i32, %arg2: memref<1x64x32xbf16, #tpu.memory_space<vmem>>, %arg3: memref<32x32xf32, #tpu.memory_space<vmem>>, %arg4: memref<32x32xf32, #tpu.memory_space<vmem>>, %arg5: memref<1x32xf32, #tpu.memory_space<vmem>>, %arg6: memref<1x32xf32, #tpu.memory_space<vmem>>, %arg7: memref<1x1x32xf32, #tpu.memory_space<vmem>>, %arg8: memref<1x1x32xf32, #tpu.memory_space<vmem>>, %arg9: memref<1x32xf32, #tpu.memory_space<vmem>>, %arg10: memref<1x32xf32, #tpu.memory_space<vmem>>) attributes {dimension_semantics = [#tpu.dimension_semantics<parallel>, #tpu.dimension_semantics<arbitrary>], iteration_bounds = array<i64: 2, 1>, scalar_prefetch = 0 : i64, scratch_operands = 2 : i64, tpu.core_type = #tpu.core_type<tc>, window_params = [{transform_indices = @transform_0, window_bounds = array<i64: 1, 64, 32>}, {pipeline_mode = #tpu.pipeline_mode<synchronous>, transform_indices = @transform_1, window_bounds = array<i64: 32, 32>}, {pipeline_mode = #tpu.pipeline_mode<synchronous>, transform_indices = @transform_2, window_bounds = array<i64: 32, 32>}, {pipeline_mode = #tpu.pipeline_mode<synchronous>, transform_indices = @transform_3, window_bounds = array<i64: 1, 32>}, {pipeline_mode = #tpu.pipeline_mode<synchronous>, transform_indices = @transform_4, window_bounds = array<i64: 1, 32>}, {transform_indices = @transform_5, window_bounds = array<i64: 1, 1, 32>}, {transform_indices = @transform_6, window_bounds = array<i64: 1, 1, 32>}]} {
    %c0_i32 = arith.constant 0 : i32
    %0 = arith.cmpi eq, %arg1, %c0_i32 : i32
    %1 = arith.extui %0 : i1 to i32
    %c0_i32_0 = arith.constant 0 : i32
    %2 = arith.cmpi ne, %1, %c0_i32_0 : i32
    scf.if %2 {
      %cst_14 = arith.constant 0.000000e+00 : f32
      %20 = vector.broadcast %cst_14 : f32 to vector<1x32xf32>
      %c0_15 = arith.constant 0 : index
      %c0_16 = arith.constant 0 : index
      %21 = vector.load %arg9[%c0_15, %c0_16] : memref<1x32xf32, #tpu.memory_space<vmem>>, vector<1x32xf32>
      tpu.vector_store %arg9[%c0_15, %c0_16], %20 {strides = array<i32>} : memref<1x32xf32, #tpu.memory_space<vmem>>, vector<1x32xf32>,
      %cst_17 = arith.constant 0.000000e+00 : f32
      %22 = vector.broadcast %cst_17 : f32 to vector<1x32xf32>
      %c0_18 = arith.constant 0 : index
      %c0_19 = arith.constant 0 : index
      %23 = vector.load %arg10[%c0_18, %c0_19] : memref<1x32xf32, #tpu.memory_space<vmem>>, vector<1x32xf32>
      tpu.vector_store %arg10[%c0_18, %c0_19], %22 {strides = array<i32>} : memref<1x32xf32, #tpu.memory_space<vmem>>, vector<1x32xf32>,
    } else {
    }
    %c0 = arith.constant 0 : index
    %c0_1 = arith.constant 0 : index
    %c0_2 = arith.constant 0 : index
    %3 = vector.load %arg2[%c0, %c0_1, %c0_2] : memref<1x64x32xbf16, #tpu.memory_space<vmem>>, vector<1x64x32xbf16>
    %4 = vector.shape_cast %3 : vector<1x64x32xbf16> to vector<64x32xbf16>
    %5 = arith.extf %4 : vector<64x32xbf16> to vector<64x32xf32>
    %c0_3 = arith.constant 0 : index
    %c0_4 = arith.constant 0 : index
    %6 = vector.load %arg9[%c0_3, %c0_4] : memref<1x32xf32, #tpu.memory_space<vmem>>, vector<1x32xf32>
    %cst = arith.constant dense<0.000000e+00> : vector<32xf32>
    %7 = vector.multi_reduction <add>, %5, %cst [0] : vector<64x32xf32> to vector<32xf32>
    %8 = vector.shape_cast %7 : vector<32xf32> to vector<1x32xf32>
    %9 = arith.addf %6, %8 : vector<1x32xf32>
    %c0_5 = arith.constant 0 : index
    %c0_6 = arith.constant 0 : index
    %10 = vector.load %arg9[%c0_5, %c0_6] : memref<1x32xf32, #tpu.memory_space<vmem>>, vector<1x32xf32>
    tpu.vector_store %arg9[%c0_5, %c0_6], %9 {strides = array<i32>} : memref<1x32xf32, #tpu.memory_space<vmem>>, vector<1x32xf32>,
    %c0_7 = arith.constant 0 : index
    %c0_8 = arith.constant 0 : index
    %11 = vector.load %arg10[%c0_7, %c0_8] : memref<1x32xf32, #tpu.memory_space<vmem>>, vector<1x32xf32>
    %12 = arith.mulf %5, %5 : vector<64x32xf32>
    %cst_9 = arith.constant dense<0.000000e+00> : vector<32xf32>
    %13 = vector.multi_reduction <add>, %12, %cst_9 [0] : vector<64x32xf32> to vector<32xf32>
    %14 = vector.shape_cast %13 : vector<32xf32> to vector<1x32xf32>
    %15 = arith.addf %11, %14 : vector<1x32xf32>
    %c0_10 = arith.constant 0 : index
    %c0_11 = arith.constant 0 : index
    %16 = vector.load %arg10[%c0_10, %c0_11] : memref<1x32xf32, #tpu.memory_space<vmem>>, vector<1x32xf32>
    tpu.vector_store %arg10[%c0_10, %c0_11], %15 {strides = array<i32>} : memref<1x32xf32, #tpu.memory_space<vmem>>, vector<1x32xf32>,
    %c0_i32_12 = arith.constant 0 : i32
    %17 = arith.cmpi eq, %arg1, %c0_i32_12 : i32
    %18 = arith.extui %17 : i1 to i32
    %c0_i32_13 = arith.constant 0 : i32
    %19 = arith.cmpi ne, %18, %c0_i32_13 : i32
    scf.if %19 {
      %c0_14 = arith.constant 0 : index
      %c0_15 = arith.constant 0 : index
      %20 = vector.load %arg9[%c0_14, %c0_15] : memref<1x32xf32, #tpu.memory_space<vmem>>, vector<1x32xf32>
      %c0_16 = arith.constant 0 : index
      %c0_17 = arith.constant 0 : index
      %21 = vector.load %arg3[%c0_16, %c0_17] : memref<32x32xf32, #tpu.memory_space<vmem>>, vector<32x32xf32>
      %cst_18 = arith.constant dense<0.000000e+00> : vector<1x32xf32>
      %22 = tpu.matmul %20, %21, %cst_18 {dimension_numbers = #tpu.dot_dimension_numbers<[1], [0], [0], [1], [0, 0, 1, 1], [], []>} : vector<1x32xf32>, vector<32x32xf32>, vector<1x32xf32> -> vector<1x32xf32>
      %c0_19 = arith.constant 0 : index
      %c0_20 = arith.constant 0 : index
      %23 = vector.load %arg10[%c0_19, %c0_20] : memref<1x32xf32, #tpu.memory_space<vmem>>, vector<1x32xf32>
      %c0_21 = arith.constant 0 : index
      %c0_22 = arith.constant 0 : index
      %24 = vector.load %arg3[%c0_21, %c0_22] : memref<32x32xf32, #tpu.memory_space<vmem>>, vector<32x32xf32>
      %cst_23 = arith.constant dense<0.000000e+00> : vector<1x32xf32>
      %25 = tpu.matmul %23, %24, %cst_23 {dimension_numbers = #tpu.dot_dimension_numbers<[1], [0], [0], [1], [0, 0, 1, 1], [], []>} : vector<1x32xf32>, vector<32x32xf32>, vector<1x32xf32> -> vector<1x32xf32>
      %cst_24 = arith.constant 6.400000e+01 : f32
      %26 = vector.broadcast %cst_24 : f32 to vector<1x32xf32>
      %27 = arith.divf %22, %26 : vector<1x32xf32>
      %cst_25 = arith.constant 6.400000e+01 : f32
      %28 = vector.broadcast %cst_25 : f32 to vector<1x32xf32>
      %29 = arith.divf %25, %28 : vector<1x32xf32>
      %30 = arith.mulf %27, %27 : vector<1x32xf32>
      %31 = arith.subf %29, %30 : vector<1x32xf32>
      %cst_26 = arith.constant 0.000000e+00 : f32
      %32 = vector.broadcast %cst_26 : f32 to vector<1x32xf32>
      %33 = arith.maximumf %31, %32 : vector<1x32xf32>
      %cst_27 = arith.constant 9.99999974E-6 : f32
      %34 = vector.broadcast %cst_27 : f32 to vector<1x32xf32>
      %35 = arith.addf %33, %34 : vector<1x32xf32>
      %36 = math.rsqrt %35 : vector<1x32xf32>
      %c0_28 = arith.constant 0 : index
      %c0_29 = arith.constant 0 : index
      %37 = vector.load %arg4[%c0_28, %c0_29] : memref<32x32xf32, #tpu.memory_space<vmem>>, vector<32x32xf32>
      %cst_30 = arith.constant dense<0.000000e+00> : vector<1x32xf32>
      %38 = tpu.matmul %27, %37, %cst_30 {dimension_numbers = #tpu.dot_dimension_numbers<[1], [0], [0], [1], [0, 0, 1, 1], [], []>} : vector<1x32xf32>, vector<32x32xf32>, vector<1x32xf32> -> vector<1x32xf32>
      %c0_31 = arith.constant 0 : index
      %c0_32 = arith.constant 0 : index
      %39 = vector.load %arg4[%c0_31, %c0_32] : memref<32x32xf32, #tpu.memory_space<vmem>>, vector<32x32xf32>
      %cst_33 = arith.constant dense<0.000000e+00> : vector<1x32xf32>
      %40 = tpu.matmul %36, %39, %cst_33 {dimension_numbers = #tpu.dot_dimension_numbers<[1], [0], [0], [1], [0, 0, 1, 1], [], []>} : vector<1x32xf32>, vector<32x32xf32>, vector<1x32xf32> -> vector<1x32xf32>
      %c0_34 = arith.constant 0 : index
      %c0_35 = arith.constant 0 : index
      %41 = vector.load %arg5[%c0_34, %c0_35] : memref<1x32xf32, #tpu.memory_space<vmem>>, vector<1x32xf32>
      %42 = arith.mulf %41, %40 : vector<1x32xf32>
      %c0_36 = arith.constant 0 : index
      %c0_37 = arith.constant 0 : index
      %43 = vector.load %arg6[%c0_36, %c0_37] : memref<1x32xf32, #tpu.memory_space<vmem>>, vector<1x32xf32>
      %44 = arith.mulf %38, %42 : vector<1x32xf32>
      %45 = arith.subf %43, %44 : vector<1x32xf32>
      %c0_38 = arith.constant 0 : index
      %c0_39 = arith.constant 0 : index
      %c0_40 = arith.constant 0 : index
      %46 = vector.load %arg7[%c0_38, %c0_39, %c0_40] : memref<1x1x32xf32, #tpu.memory_space<vmem>>, vector<1x1x32xf32>
      %47 = vector.shape_cast %46 : vector<1x1x32xf32> to vector<1x32xf32>
      %48 = vector.shape_cast %42 : vector<1x32xf32> to vector<1x1x32xf32>
      tpu.vector_store %arg7[%c0_38, %c0_39, %c0_40], %48 {strides = array<i32>} : memref<1x1x32xf32, #tpu.memory_space<vmem>>, vector<1x1x32xf32>,
      %c0_41 = arith.constant 0 : index
      %c0_42 = arith.constant 0 : index
      %c0_43 = arith.constant 0 : index
      %49 = vector.load %arg8[%c0_41, %c0_42, %c0_43] : memref<1x1x32xf32, #tpu.memory_space<vmem>>, vector<1x1x32xf32>
      %50 = vector.shape_cast %49 : vector<1x1x32xf32> to vector<1x32xf32>
      %51 = vector.shape_cast %45 : vector<1x32xf32> to vector<1x1x32xf32>
      tpu.vector_store %arg8[%c0_41, %c0_42, %c0_43], %51 {strides = array<i32>} : memref<1x1x32xf32, #tpu.memory_space<vmem>>, vector<1x1x32xf32>,
    } else {
    }
    return
  }
  func.func @transform_0(%arg0: i32, %arg1: i32) -> (i32, i32, i32) {
    %c0_i32 = arith.constant 0 : i32
    %c0_i32_0 = arith.constant 0 : i32
    return %arg0, %arg1, %c0_i32 : i32, i32, i32
  }
  func.func @transform_1(%arg0: i32, %arg1: i32) -> (i32, i32) {
    %c0_i32 = arith.constant 0 : i32
    %c0_i32_0 = arith.constant 0 : i32
    %c0_i32_1 = arith.constant 0 : i32
    return %c0_i32, %c0_i32_0 : i32, i32
  }
  func.func @transform_2(%arg0: i32, %arg1: i32) -> (i32, i32) {
    %c0_i32 = arith.constant 0 : i32
    %c0_i32_0 = arith.constant 0 : i32
    %c0_i32_1 = arith.constant 0 : i32
    return %c0_i32, %c0_i32_0 : i32, i32
  }
  func.func @transform_3(%arg0: i32, %arg1: i32) -> (i32, i32) {
    %c0_i32 = arith.constant 0 : i32
    %c0_i32_0 = arith.constant 0 : i32
    %c0_i32_1 = arith.constant 0 : i32
    return %c0_i32, %c0_i32_0 : i32, i32
  }
  func.func @transform_4(%arg0: i32, %arg1: i32) -> (i32, i32) {
    %c0_i32 = arith.constant 0 : i32
    %c0_i32_0 = arith.constant 0 : i32
    %c0_i32_1 = arith.constant 0 : i32
    return %c0_i32, %c0_i32_0 : i32, i32
  }
  func.func @transform_5(%arg0: i32, %arg1: i32) -> (i32, i32, i32) {
    %c0_i32 = arith.constant 0 : i32
    %c0_i32_0 = arith.constant 0 : i32
    %c0_i32_1 = arith.constant 0 : i32
    return %arg0, %c0_i32, %c0_i32_0 : i32, i32, i32
  }
  func.func @transform_6(%arg0: i32, %arg1: i32) -> (i32, i32, i32) {
    %c0_i32 = arith.constant 0 : i32
    %c0_i32_0 = arith.constant 0 : i32
    %c0_i32_1 = arith.constant 0 : i32
    return %arg0, %c0_i32, %c0_i32_0 : i32, i32, i32
  }
}

module attributes {stable_mosaic.version = 11 : i64} {
  func.func @_gn_mm_kernel(%arg0: i32, %arg1: i32, %arg2: i32, %arg3: i32, %arg4: memref<1x64x32xbf16, #tpu.memory_space<vmem>>, %arg5: memref<1x1x32xf32, #tpu.memory_space<vmem>>, %arg6: memref<1x1x32xf32, #tpu.memory_space<vmem>>, %arg7: memref<32x32xbf16, #tpu.memory_space<vmem>>, %arg8: memref<1x64x32xbf16, #tpu.memory_space<vmem>>, %arg9: memref<64x32xf32, #tpu.memory_space<vmem>>) attributes {dimension_semantics = [#tpu.dimension_semantics<parallel>, #tpu.dimension_semantics<parallel>, #tpu.dimension_semantics<parallel>, #tpu.dimension_semantics<arbitrary>], iteration_bounds = array<i64: 2, 1, 1, 1>, scalar_prefetch = 0 : i64, scratch_operands = 1 : i64, tpu.core_type = #tpu.core_type<tc>, window_params = [{transform_indices = @transform_0, window_bounds = array<i64: 1, 64, 32>}, {transform_indices = @transform_1, window_bounds = array<i64: 1, 1, 32>}, {transform_indices = @transform_2, window_bounds = array<i64: 1, 1, 32>}, {transform_indices = @transform_3, window_bounds = array<i64: 32, 32>}, {transform_indices = @transform_4, window_bounds = array<i64: 1, 64, 32>}]} {
    %c0_i32 = arith.constant 0 : i32
    %0 = arith.cmpi eq, %arg3, %c0_i32 : i32
    %1 = arith.extui %0 : i1 to i32
    %c0_i32_0 = arith.constant 0 : i32
    %2 = arith.cmpi ne, %1, %c0_i32_0 : i32
    scf.if %2 {
      %cst_18 = arith.constant 0.000000e+00 : f32
      %25 = vector.broadcast %cst_18 : f32 to vector<64x32xf32>
      %c0_19 = arith.constant 0 : index
      %c0_20 = arith.constant 0 : index
      %26 = vector.load %arg9[%c0_19, %c0_20] : memref<64x32xf32, #tpu.memory_space<vmem>>, vector<64x32xf32>
      tpu.vector_store %arg9[%c0_19, %c0_20], %25 {strides = array<i32>} : memref<64x32xf32, #tpu.memory_space<vmem>>, vector<64x32xf32>,
    } else {
    }
    %c0 = arith.constant 0 : index
    %c0_1 = arith.constant 0 : index
    %c0_2 = arith.constant 0 : index
    %3 = vector.load %arg4[%c0, %c0_1, %c0_2] : memref<1x64x32xbf16, #tpu.memory_space<vmem>>, vector<1x64x32xbf16>
    %4 = vector.shape_cast %3 : vector<1x64x32xbf16> to vector<64x32xbf16>
    %5 = arith.extf %4 : vector<64x32xbf16> to vector<64x32xf32>
    %c0_3 = arith.constant 0 : index
    %c0_4 = arith.constant 0 : index
    %c0_5 = arith.constant 0 : index
    %6 = vector.load %arg5[%c0_3, %c0_4, %c0_5] : memref<1x1x32xf32, #tpu.memory_space<vmem>>, vector<1x1x32xf32>
    %7 = vector.shape_cast %6 : vector<1x1x32xf32> to vector<1x32xf32>
    %8 = vector.broadcast %7 : vector<1x32xf32> to vector<64x32xf32>
    %9 = arith.mulf %5, %8 : vector<64x32xf32>
    %c0_6 = arith.constant 0 : index
    %c0_7 = arith.constant 0 : index
    %c0_8 = arith.constant 0 : index
    %10 = vector.load %arg6[%c0_6, %c0_7, %c0_8] : memref<1x1x32xf32, #tpu.memory_space<vmem>>, vector<1x1x32xf32>
    %11 = vector.shape_cast %10 : vector<1x1x32xf32> to vector<1x32xf32>
    %12 = vector.broadcast %11 : vector<1x32xf32> to vector<64x32xf32>
    %13 = arith.addf %9, %12 : vector<64x32xf32>
    %cst = arith.constant 0.000000e+00 : f32
    %14 = vector.broadcast %cst : f32 to vector<64x32xf32>
    %15 = arith.maximumf %13, %14 : vector<64x32xf32>
    %c0_9 = arith.constant 0 : index
    %c0_10 = arith.constant 0 : index
    %16 = vector.load %arg9[%c0_9, %c0_10] : memref<64x32xf32, #tpu.memory_space<vmem>>, vector<64x32xf32>
    %17 = arith.truncf %15 : vector<64x32xf32> to vector<64x32xbf16>
    %c0_11 = arith.constant 0 : index
    %c0_12 = arith.constant 0 : index
    %18 = vector.load %arg7[%c0_11, %c0_12] : memref<32x32xbf16, #tpu.memory_space<vmem>>, vector<32x32xbf16>
    %cst_13 = arith.constant dense<0.000000e+00> : vector<64x32xf32>
    %19 = tpu.matmul %17, %18, %cst_13 {dimension_numbers = #tpu.dot_dimension_numbers<[1], [0], [0], [1], [0, 0, 1, 1], [], []>} : vector<64x32xbf16>, vector<32x32xbf16>, vector<64x32xf32> -> vector<64x32xf32>
    %20 = arith.addf %16, %19 : vector<64x32xf32>
    %c0_14 = arith.constant 0 : index
    %c0_15 = arith.constant 0 : index
    %21 = vector.load %arg9[%c0_14, %c0_15] : memref<64x32xf32, #tpu.memory_space<vmem>>, vector<64x32xf32>
    tpu.vector_store %arg9[%c0_14, %c0_15], %20 {strides = array<i32>} : memref<64x32xf32, #tpu.memory_space<vmem>>, vector<64x32xf32>,
    %c0_i32_16 = arith.constant 0 : i32
    %22 = arith.cmpi eq, %arg3, %c0_i32_16 : i32
    %23 = arith.extui %22 : i1 to i32
    %c0_i32_17 = arith.constant 0 : i32
    %24 = arith.cmpi ne, %23, %c0_i32_17 : i32
    scf.if %24 {
      %c0_18 = arith.constant 0 : index
      %c0_19 = arith.constant 0 : index
      %25 = vector.load %arg9[%c0_18, %c0_19] : memref<64x32xf32, #tpu.memory_space<vmem>>, vector<64x32xf32>
      %26 = arith.truncf %25 : vector<64x32xf32> to vector<64x32xbf16>
      %c0_20 = arith.constant 0 : index
      %c0_21 = arith.constant 0 : index
      %c0_22 = arith.constant 0 : index
      %27 = vector.load %arg8[%c0_20, %c0_21, %c0_22] : memref<1x64x32xbf16, #tpu.memory_space<vmem>>, vector<1x64x32xbf16>
      %28 = vector.shape_cast %27 : vector<1x64x32xbf16> to vector<64x32xbf16>
      %29 = vector.shape_cast %26 : vector<64x32xbf16> to vector<1x64x32xbf16>
      tpu.vector_store %arg8[%c0_20, %c0_21, %c0_22], %29 {strides = array<i32>} : memref<1x64x32xbf16, #tpu.memory_space<vmem>>, vector<1x64x32xbf16>,
    } else {
    }
    return
  }
  func.func @transform_0(%arg0: i32, %arg1: i32, %arg2: i32, %arg3: i32) -> (i32, i32, i32) {
    %c0_i32 = arith.constant 0 : i32
    return %arg0, %arg1, %arg3 : i32, i32, i32
  }
  func.func @transform_1(%arg0: i32, %arg1: i32, %arg2: i32, %arg3: i32) -> (i32, i32, i32) {
    %c0_i32 = arith.constant 0 : i32
    %c0_i32_0 = arith.constant 0 : i32
    return %arg0, %c0_i32, %arg3 : i32, i32, i32
  }
  func.func @transform_2(%arg0: i32, %arg1: i32, %arg2: i32, %arg3: i32) -> (i32, i32, i32) {
    %c0_i32 = arith.constant 0 : i32
    %c0_i32_0 = arith.constant 0 : i32
    return %arg0, %c0_i32, %arg3 : i32, i32, i32
  }
  func.func @transform_3(%arg0: i32, %arg1: i32, %arg2: i32, %arg3: i32) -> (i32, i32) {
    %c0_i32 = arith.constant 0 : i32
    return %arg3, %arg2 : i32, i32
  }
  func.func @transform_4(%arg0: i32, %arg1: i32, %arg2: i32, %arg3: i32) -> (i32, i32, i32) {
    %c0_i32 = arith.constant 0 : i32
    return %arg0, %arg1, %arg2 : i32, i32, i32
  }
}

module attributes {stable_mosaic.version = 11 : i64} {
  func.func @_conv3x3_kernel(%arg0: i32, %arg1: i32, %arg2: memref<1x100x32xbf16, #tpu.memory_space<vmem>>, %arg3: memref<1x1x32xf32, #tpu.memory_space<vmem>>, %arg4: memref<1x1x32xf32, #tpu.memory_space<vmem>>, %arg5: memref<100x1xf32, #tpu.memory_space<vmem>>, %arg6: memref<9x32x32xbf16, #tpu.memory_space<vmem>>, %arg7: memref<1x19x32xbf16, #tpu.memory_space<vmem>>, %arg8: memref<100x32xbf16, #tpu.memory_space<vmem>>) attributes {dimension_semantics = [#tpu.dimension_semantics<parallel>, #tpu.dimension_semantics<arbitrary>], iteration_bounds = array<i64: 2, 1>, scalar_prefetch = 0 : i64, scratch_operands = 1 : i64, tpu.core_type = #tpu.core_type<tc>, window_params = [{transform_indices = @transform_0, window_bounds = array<i64: 1, 100, 32>}, {transform_indices = @transform_1, window_bounds = array<i64: 1, 1, 32>}, {transform_indices = @transform_2, window_bounds = array<i64: 1, 1, 32>}, {pipeline_mode = #tpu.pipeline_mode<synchronous>, transform_indices = @transform_3, window_bounds = array<i64: 100, 1>}, {transform_indices = @transform_4, window_bounds = array<i64: 9, 32, 32>}, {transform_indices = @transform_5, window_bounds = array<i64: 1, 19, 32>}]} {
    %c0_i32 = arith.constant 0 : i32
    %0 = arith.cmpi eq, %arg1, %c0_i32 : i32
    %1 = arith.extui %0 : i1 to i32
    %c0_i32_0 = arith.constant 0 : i32
    %2 = arith.cmpi ne, %1, %c0_i32_0 : i32
    scf.if %2 {
      %c0_44 = arith.constant 0 : index
      %c0_45 = arith.constant 0 : index
      %c0_46 = arith.constant 0 : index
      %53 = vector.load %arg2[%c0_44, %c0_45, %c0_46] : memref<1x100x32xbf16, #tpu.memory_space<vmem>>, vector<1x100x32xbf16>
      %54 = vector.shape_cast %53 : vector<1x100x32xbf16> to vector<100x32xbf16>
      %55 = arith.extf %54 : vector<100x32xbf16> to vector<100x32xf32>
      %c0_47 = arith.constant 0 : index
      %c0_48 = arith.constant 0 : index
      %c0_49 = arith.constant 0 : index
      %56 = vector.load %arg3[%c0_47, %c0_48, %c0_49] : memref<1x1x32xf32, #tpu.memory_space<vmem>>, vector<1x1x32xf32>
      %57 = vector.shape_cast %56 : vector<1x1x32xf32> to vector<1x32xf32>
      %58 = vector.broadcast %57 : vector<1x32xf32> to vector<100x32xf32>
      %59 = arith.mulf %55, %58 : vector<100x32xf32>
      %c0_50 = arith.constant 0 : index
      %c0_51 = arith.constant 0 : index
      %c0_52 = arith.constant 0 : index
      %60 = vector.load %arg4[%c0_50, %c0_51, %c0_52] : memref<1x1x32xf32, #tpu.memory_space<vmem>>, vector<1x1x32xf32>
      %61 = vector.shape_cast %60 : vector<1x1x32xf32> to vector<1x32xf32>
      %62 = vector.broadcast %61 : vector<1x32xf32> to vector<100x32xf32>
      %63 = arith.addf %59, %62 : vector<100x32xf32>
      %cst_53 = arith.constant 0.000000e+00 : f32
      %64 = vector.broadcast %cst_53 : f32 to vector<100x32xf32>
      %65 = arith.maximumf %63, %64 : vector<100x32xf32>
      %c0_54 = arith.constant 0 : index
      %c0_55 = arith.constant 0 : index
      %66 = vector.load %arg5[%c0_54, %c0_55] : memref<100x1xf32, #tpu.memory_space<vmem>>, vector<100x1xf32>
      %67 = vector.broadcast %66 : vector<100x1xf32> to vector<100x32xf32>
      %68 = arith.mulf %65, %67 : vector<100x32xf32>
      %69 = arith.truncf %68 : vector<100x32xf32> to vector<100x32xbf16>
      %c0_56 = arith.constant 0 : index
      %c0_57 = arith.constant 0 : index
      %70 = vector.load %arg8[%c0_56, %c0_57] : memref<100x32xbf16, #tpu.memory_space<vmem>>, vector<100x32xbf16>
      tpu.vector_store %arg8[%c0_56, %c0_57], %69 {strides = array<i32>} : memref<100x32xbf16, #tpu.memory_space<vmem>>, vector<100x32xbf16>,
    } else {
    }
    %cst = arith.constant 0.000000e+00 : f32
    %3 = vector.broadcast %cst : f32 to vector<19x32xf32>
    %c0 = arith.constant 0 : index
    %c0_1 = arith.constant 0 : index
    %4 = vector.load %arg8[%c0, %c0_1] : memref<100x32xbf16, #tpu.memory_space<vmem>>, vector<19x32xbf16>
    %c0_2 = arith.constant 0 : index
    %c0_3 = arith.constant 0 : index
    %c0_4 = arith.constant 0 : index
    %5 = vector.load %arg6[%c0_2, %c0_3, %c0_4] : memref<9x32x32xbf16, #tpu.memory_space<vmem>>, vector<1x32x32xbf16>
    %6 = vector.shape_cast %5 : vector<1x32x32xbf16> to vector<32x32xbf16>
    %cst_5 = arith.constant dense<0.000000e+00> : vector<19x32xf32>
    %7 = tpu.matmul %4, %6, %cst_5 {dimension_numbers = #tpu.dot_dimension_numbers<[1], [0], [0], [1], [0, 0, 1, 1], [], []>} : vector<19x32xbf16>, vector<32x32xbf16>, vector<19x32xf32> -> vector<19x32xf32>
    %8 = arith.addf %3, %7 : vector<19x32xf32>
    %c25 = arith.constant 25 : index
    %c0_6 = arith.constant 0 : index
    %9 = vector.load %arg8[%c25, %c0_6] : memref<100x32xbf16, #tpu.memory_space<vmem>>, vector<19x32xbf16>
    %c1 = arith.constant 1 : index
    %c0_7 = arith.constant 0 : index
    %c0_8 = arith.constant 0 : index
    %10 = vector.load %arg6[%c1, %c0_7, %c0_8] : memref<9x32x32xbf16, #tpu.memory_space<vmem>>, vector<1x32x32xbf16>
    %11 = vector.shape_cast %10 : vector<1x32x32xbf16> to vector<32x32xbf16>
    %cst_9 = arith.constant dense<0.000000e+00> : vector<19x32xf32>
    %12 = tpu.matmul %9, %11, %cst_9 {dimension_numbers = #tpu.dot_dimension_numbers<[1], [0], [0], [1], [0, 0, 1, 1], [], []>} : vector<19x32xbf16>, vector<32x32xbf16>, vector<19x32xf32> -> vector<19x32xf32>
    %13 = arith.addf %8, %12 : vector<19x32xf32>
    %c1_10 = arith.constant 1 : index
    %c0_11 = arith.constant 0 : index
    %14 = vector.load %arg8[%c1_10, %c0_11] : memref<100x32xbf16, #tpu.memory_space<vmem>>, vector<19x32xbf16>
    %c2 = arith.constant 2 : index
    %c0_12 = arith.constant 0 : index
    %c0_13 = arith.constant 0 : index
    %15 = vector.load %arg6[%c2, %c0_12, %c0_13] : memref<9x32x32xbf16, #tpu.memory_space<vmem>>, vector<1x32x32xbf16>
    %16 = vector.shape_cast %15 : vector<1x32x32xbf16> to vector<32x32xbf16>
    %cst_14 = arith.constant dense<0.000000e+00> : vector<19x32xf32>
    %17 = tpu.matmul %14, %16, %cst_14 {dimension_numbers = #tpu.dot_dimension_numbers<[1], [0], [0], [1], [0, 0, 1, 1], [], []>} : vector<19x32xbf16>, vector<32x32xbf16>, vector<19x32xf32> -> vector<19x32xf32>
    %18 = arith.addf %13, %17 : vector<19x32xf32>
    %c50 = arith.constant 50 : index
    %c0_15 = arith.constant 0 : index
    %19 = vector.load %arg8[%c50, %c0_15] : memref<100x32xbf16, #tpu.memory_space<vmem>>, vector<19x32xbf16>
    %c3 = arith.constant 3 : index
    %c0_16 = arith.constant 0 : index
    %c0_17 = arith.constant 0 : index
    %20 = vector.load %arg6[%c3, %c0_16, %c0_17] : memref<9x32x32xbf16, #tpu.memory_space<vmem>>, vector<1x32x32xbf16>
    %21 = vector.shape_cast %20 : vector<1x32x32xbf16> to vector<32x32xbf16>
    %cst_18 = arith.constant dense<0.000000e+00> : vector<19x32xf32>
    %22 = tpu.matmul %19, %21, %cst_18 {dimension_numbers = #tpu.dot_dimension_numbers<[1], [0], [0], [1], [0, 0, 1, 1], [], []>} : vector<19x32xbf16>, vector<32x32xbf16>, vector<19x32xf32> -> vector<19x32xf32>
    %23 = arith.addf %18, %22 : vector<19x32xf32>
    %c75 = arith.constant 75 : index
    %c0_19 = arith.constant 0 : index
    %24 = vector.load %arg8[%c75, %c0_19] : memref<100x32xbf16, #tpu.memory_space<vmem>>, vector<19x32xbf16>
    %c4 = arith.constant 4 : index
    %c0_20 = arith.constant 0 : index
    %c0_21 = arith.constant 0 : index
    %25 = vector.load %arg6[%c4, %c0_20, %c0_21] : memref<9x32x32xbf16, #tpu.memory_space<vmem>>, vector<1x32x32xbf16>
    %26 = vector.shape_cast %25 : vector<1x32x32xbf16> to vector<32x32xbf16>
    %cst_22 = arith.constant dense<0.000000e+00> : vector<19x32xf32>
    %27 = tpu.matmul %24, %26, %cst_22 {dimension_numbers = #tpu.dot_dimension_numbers<[1], [0], [0], [1], [0, 0, 1, 1], [], []>} : vector<19x32xbf16>, vector<32x32xbf16>, vector<19x32xf32> -> vector<19x32xf32>
    %28 = arith.addf %23, %27 : vector<19x32xf32>
    %c51 = arith.constant 51 : index
    %c0_23 = arith.constant 0 : index
    %29 = vector.load %arg8[%c51, %c0_23] : memref<100x32xbf16, #tpu.memory_space<vmem>>, vector<19x32xbf16>
    %c5 = arith.constant 5 : index
    %c0_24 = arith.constant 0 : index
    %c0_25 = arith.constant 0 : index
    %30 = vector.load %arg6[%c5, %c0_24, %c0_25] : memref<9x32x32xbf16, #tpu.memory_space<vmem>>, vector<1x32x32xbf16>
    %31 = vector.shape_cast %30 : vector<1x32x32xbf16> to vector<32x32xbf16>
    %cst_26 = arith.constant dense<0.000000e+00> : vector<19x32xf32>
    %32 = tpu.matmul %29, %31, %cst_26 {dimension_numbers = #tpu.dot_dimension_numbers<[1], [0], [0], [1], [0, 0, 1, 1], [], []>} : vector<19x32xbf16>, vector<32x32xbf16>, vector<19x32xf32> -> vector<19x32xf32>
    %33 = arith.addf %28, %32 : vector<19x32xf32>
    %c5_27 = arith.constant 5 : index
    %c0_28 = arith.constant 0 : index
    %34 = vector.load %arg8[%c5_27, %c0_28] : memref<100x32xbf16, #tpu.memory_space<vmem>>, vector<19x32xbf16>
    %c6 = arith.constant 6 : index
    %c0_29 = arith.constant 0 : index
    %c0_30 = arith.constant 0 : index
    %35 = vector.load %arg6[%c6, %c0_29, %c0_30] : memref<9x32x32xbf16, #tpu.memory_space<vmem>>, vector<1x32x32xbf16>
    %36 = vector.shape_cast %35 : vector<1x32x32xbf16> to vector<32x32xbf16>
    %cst_31 = arith.constant dense<0.000000e+00> : vector<19x32xf32>
    %37 = tpu.matmul %34, %36, %cst_31 {dimension_numbers = #tpu.dot_dimension_numbers<[1], [0], [0], [1], [0, 0, 1, 1], [], []>} : vector<19x32xbf16>, vector<32x32xbf16>, vector<19x32xf32> -> vector<19x32xf32>
    %38 = arith.addf %33, %37 : vector<19x32xf32>
    %c30 = arith.constant 30 : index
    %c0_32 = arith.constant 0 : index
    %39 = vector.load %arg8[%c30, %c0_32] : memref<100x32xbf16, #tpu.memory_space<vmem>>, vector<19x32xbf16>
    %c7 = arith.constant 7 : index
    %c0_33 = arith.constant 0 : index
    %c0_34 = arith.constant 0 : index
    %40 = vector.load %arg6[%c7, %c0_33, %c0_34] : memref<9x32x32xbf16, #tpu.memory_space<vmem>>, vector<1x32x32xbf16>
    %41 = vector.shape_cast %40 : vector<1x32x32xbf16> to vector<32x32xbf16>
    %cst_35 = arith.constant dense<0.000000e+00> : vector<19x32xf32>
    %42 = tpu.matmul %39, %41, %cst_35 {dimension_numbers = #tpu.dot_dimension_numbers<[1], [0], [0], [1], [0, 0, 1, 1], [], []>} : vector<19x32xbf16>, vector<32x32xbf16>, vector<19x32xf32> -> vector<19x32xf32>
    %43 = arith.addf %38, %42 : vector<19x32xf32>
    %c6_36 = arith.constant 6 : index
    %c0_37 = arith.constant 0 : index
    %44 = vector.load %arg8[%c6_36, %c0_37] : memref<100x32xbf16, #tpu.memory_space<vmem>>, vector<19x32xbf16>
    %c8 = arith.constant 8 : index
    %c0_38 = arith.constant 0 : index
    %c0_39 = arith.constant 0 : index
    %45 = vector.load %arg6[%c8, %c0_38, %c0_39] : memref<9x32x32xbf16, #tpu.memory_space<vmem>>, vector<1x32x32xbf16>
    %46 = vector.shape_cast %45 : vector<1x32x32xbf16> to vector<32x32xbf16>
    %cst_40 = arith.constant dense<0.000000e+00> : vector<19x32xf32>
    %47 = tpu.matmul %44, %46, %cst_40 {dimension_numbers = #tpu.dot_dimension_numbers<[1], [0], [0], [1], [0, 0, 1, 1], [], []>} : vector<19x32xbf16>, vector<32x32xbf16>, vector<19x32xf32> -> vector<19x32xf32>
    %48 = arith.addf %43, %47 : vector<19x32xf32>
    %49 = arith.truncf %48 : vector<19x32xf32> to vector<19x32xbf16>
    %c0_41 = arith.constant 0 : index
    %c0_42 = arith.constant 0 : index
    %c0_43 = arith.constant 0 : index
    %50 = vector.load %arg7[%c0_41, %c0_42, %c0_43] : memref<1x19x32xbf16, #tpu.memory_space<vmem>>, vector<1x19x32xbf16>
    %51 = vector.shape_cast %50 : vector<1x19x32xbf16> to vector<19x32xbf16>
    %52 = vector.shape_cast %49 : vector<19x32xbf16> to vector<1x19x32xbf16>
    tpu.vector_store %arg7[%c0_41, %c0_42, %c0_43], %52 {strides = array<i32>} : memref<1x19x32xbf16, #tpu.memory_space<vmem>>, vector<1x19x32xbf16>,
    return
  }
  func.func @transform_0(%arg0: i32, %arg1: i32) -> (i32, i32, i32) {
    %c0_i32 = arith.constant 0 : i32
    %c0_i32_0 = arith.constant 0 : i32
    %c0_i32_1 = arith.constant 0 : i32
    return %arg0, %c0_i32, %c0_i32_0 : i32, i32, i32
  }
  func.func @transform_1(%arg0: i32, %arg1: i32) -> (i32, i32, i32) {
    %c0_i32 = arith.constant 0 : i32
    %c0_i32_0 = arith.constant 0 : i32
    %c0_i32_1 = arith.constant 0 : i32
    return %arg0, %c0_i32, %c0_i32_0 : i32, i32, i32
  }
  func.func @transform_2(%arg0: i32, %arg1: i32) -> (i32, i32, i32) {
    %c0_i32 = arith.constant 0 : i32
    %c0_i32_0 = arith.constant 0 : i32
    %c0_i32_1 = arith.constant 0 : i32
    return %arg0, %c0_i32, %c0_i32_0 : i32, i32, i32
  }
  func.func @transform_3(%arg0: i32, %arg1: i32) -> (i32, i32) {
    %c0_i32 = arith.constant 0 : i32
    %c0_i32_0 = arith.constant 0 : i32
    %c0_i32_1 = arith.constant 0 : i32
    return %c0_i32, %c0_i32_0 : i32, i32
  }
  func.func @transform_4(%arg0: i32, %arg1: i32) -> (i32, i32, i32) {
    %c0_i32 = arith.constant 0 : i32
    %c0_i32_0 = arith.constant 0 : i32
    %c0_i32_1 = arith.constant 0 : i32
    return %c0_i32, %c0_i32_0, %arg1 : i32, i32, i32
  }
  func.func @transform_5(%arg0: i32, %arg1: i32) -> (i32, i32, i32) {
    %c0_i32 = arith.constant 0 : i32
    %c0_i32_0 = arith.constant 0 : i32
    return %arg0, %c0_i32, %arg1 : i32, i32, i32
  }
}

module attributes {stable_mosaic.version = 11 : i64} {
  func.func @_gn_stats_kernel(%arg0: i32, %arg1: i32, %arg2: memref<1x16x32xbf16, #tpu.memory_space<vmem>>, %arg3: memref<32x32xf32, #tpu.memory_space<vmem>>, %arg4: memref<32x32xf32, #tpu.memory_space<vmem>>, %arg5: memref<1x32xf32, #tpu.memory_space<vmem>>, %arg6: memref<1x32xf32, #tpu.memory_space<vmem>>, %arg7: memref<1x1x32xf32, #tpu.memory_space<vmem>>, %arg8: memref<1x1x32xf32, #tpu.memory_space<vmem>>, %arg9: memref<1x32xf32, #tpu.memory_space<vmem>>, %arg10: memref<1x32xf32, #tpu.memory_space<vmem>>) attributes {dimension_semantics = [#tpu.dimension_semantics<parallel>, #tpu.dimension_semantics<arbitrary>], iteration_bounds = array<i64: 2, 1>, scalar_prefetch = 0 : i64, scratch_operands = 2 : i64, tpu.core_type = #tpu.core_type<tc>, window_params = [{transform_indices = @transform_0, window_bounds = array<i64: 1, 16, 32>}, {pipeline_mode = #tpu.pipeline_mode<synchronous>, transform_indices = @transform_1, window_bounds = array<i64: 32, 32>}, {pipeline_mode = #tpu.pipeline_mode<synchronous>, transform_indices = @transform_2, window_bounds = array<i64: 32, 32>}, {pipeline_mode = #tpu.pipeline_mode<synchronous>, transform_indices = @transform_3, window_bounds = array<i64: 1, 32>}, {pipeline_mode = #tpu.pipeline_mode<synchronous>, transform_indices = @transform_4, window_bounds = array<i64: 1, 32>}, {transform_indices = @transform_5, window_bounds = array<i64: 1, 1, 32>}, {transform_indices = @transform_6, window_bounds = array<i64: 1, 1, 32>}]} {
    %c0_i32 = arith.constant 0 : i32
    %0 = arith.cmpi eq, %arg1, %c0_i32 : i32
    %1 = arith.extui %0 : i1 to i32
    %c0_i32_0 = arith.constant 0 : i32
    %2 = arith.cmpi ne, %1, %c0_i32_0 : i32
    scf.if %2 {
      %cst_14 = arith.constant 0.000000e+00 : f32
      %20 = vector.broadcast %cst_14 : f32 to vector<1x32xf32>
      %c0_15 = arith.constant 0 : index
      %c0_16 = arith.constant 0 : index
      %21 = vector.load %arg9[%c0_15, %c0_16] : memref<1x32xf32, #tpu.memory_space<vmem>>, vector<1x32xf32>
      tpu.vector_store %arg9[%c0_15, %c0_16], %20 {strides = array<i32>} : memref<1x32xf32, #tpu.memory_space<vmem>>, vector<1x32xf32>,
      %cst_17 = arith.constant 0.000000e+00 : f32
      %22 = vector.broadcast %cst_17 : f32 to vector<1x32xf32>
      %c0_18 = arith.constant 0 : index
      %c0_19 = arith.constant 0 : index
      %23 = vector.load %arg10[%c0_18, %c0_19] : memref<1x32xf32, #tpu.memory_space<vmem>>, vector<1x32xf32>
      tpu.vector_store %arg10[%c0_18, %c0_19], %22 {strides = array<i32>} : memref<1x32xf32, #tpu.memory_space<vmem>>, vector<1x32xf32>,
    } else {
    }
    %c0 = arith.constant 0 : index
    %c0_1 = arith.constant 0 : index
    %c0_2 = arith.constant 0 : index
    %3 = vector.load %arg2[%c0, %c0_1, %c0_2] : memref<1x16x32xbf16, #tpu.memory_space<vmem>>, vector<1x16x32xbf16>
    %4 = vector.shape_cast %3 : vector<1x16x32xbf16> to vector<16x32xbf16>
    %5 = arith.extf %4 : vector<16x32xbf16> to vector<16x32xf32>
    %c0_3 = arith.constant 0 : index
    %c0_4 = arith.constant 0 : index
    %6 = vector.load %arg9[%c0_3, %c0_4] : memref<1x32xf32, #tpu.memory_space<vmem>>, vector<1x32xf32>
    %cst = arith.constant dense<0.000000e+00> : vector<32xf32>
    %7 = vector.multi_reduction <add>, %5, %cst [0] : vector<16x32xf32> to vector<32xf32>
    %8 = vector.shape_cast %7 : vector<32xf32> to vector<1x32xf32>
    %9 = arith.addf %6, %8 : vector<1x32xf32>
    %c0_5 = arith.constant 0 : index
    %c0_6 = arith.constant 0 : index
    %10 = vector.load %arg9[%c0_5, %c0_6] : memref<1x32xf32, #tpu.memory_space<vmem>>, vector<1x32xf32>
    tpu.vector_store %arg9[%c0_5, %c0_6], %9 {strides = array<i32>} : memref<1x32xf32, #tpu.memory_space<vmem>>, vector<1x32xf32>,
    %c0_7 = arith.constant 0 : index
    %c0_8 = arith.constant 0 : index
    %11 = vector.load %arg10[%c0_7, %c0_8] : memref<1x32xf32, #tpu.memory_space<vmem>>, vector<1x32xf32>
    %12 = arith.mulf %5, %5 : vector<16x32xf32>
    %cst_9 = arith.constant dense<0.000000e+00> : vector<32xf32>
    %13 = vector.multi_reduction <add>, %12, %cst_9 [0] : vector<16x32xf32> to vector<32xf32>
    %14 = vector.shape_cast %13 : vector<32xf32> to vector<1x32xf32>
    %15 = arith.addf %11, %14 : vector<1x32xf32>
    %c0_10 = arith.constant 0 : index
    %c0_11 = arith.constant 0 : index
    %16 = vector.load %arg10[%c0_10, %c0_11] : memref<1x32xf32, #tpu.memory_space<vmem>>, vector<1x32xf32>
    tpu.vector_store %arg10[%c0_10, %c0_11], %15 {strides = array<i32>} : memref<1x32xf32, #tpu.memory_space<vmem>>, vector<1x32xf32>,
    %c0_i32_12 = arith.constant 0 : i32
    %17 = arith.cmpi eq, %arg1, %c0_i32_12 : i32
    %18 = arith.extui %17 : i1 to i32
    %c0_i32_13 = arith.constant 0 : i32
    %19 = arith.cmpi ne, %18, %c0_i32_13 : i32
    scf.if %19 {
      %c0_14 = arith.constant 0 : index
      %c0_15 = arith.constant 0 : index
      %20 = vector.load %arg9[%c0_14, %c0_15] : memref<1x32xf32, #tpu.memory_space<vmem>>, vector<1x32xf32>
      %c0_16 = arith.constant 0 : index
      %c0_17 = arith.constant 0 : index
      %21 = vector.load %arg3[%c0_16, %c0_17] : memref<32x32xf32, #tpu.memory_space<vmem>>, vector<32x32xf32>
      %cst_18 = arith.constant dense<0.000000e+00> : vector<1x32xf32>
      %22 = tpu.matmul %20, %21, %cst_18 {dimension_numbers = #tpu.dot_dimension_numbers<[1], [0], [0], [1], [0, 0, 1, 1], [], []>} : vector<1x32xf32>, vector<32x32xf32>, vector<1x32xf32> -> vector<1x32xf32>
      %c0_19 = arith.constant 0 : index
      %c0_20 = arith.constant 0 : index
      %23 = vector.load %arg10[%c0_19, %c0_20] : memref<1x32xf32, #tpu.memory_space<vmem>>, vector<1x32xf32>
      %c0_21 = arith.constant 0 : index
      %c0_22 = arith.constant 0 : index
      %24 = vector.load %arg3[%c0_21, %c0_22] : memref<32x32xf32, #tpu.memory_space<vmem>>, vector<32x32xf32>
      %cst_23 = arith.constant dense<0.000000e+00> : vector<1x32xf32>
      %25 = tpu.matmul %23, %24, %cst_23 {dimension_numbers = #tpu.dot_dimension_numbers<[1], [0], [0], [1], [0, 0, 1, 1], [], []>} : vector<1x32xf32>, vector<32x32xf32>, vector<1x32xf32> -> vector<1x32xf32>
      %cst_24 = arith.constant 1.600000e+01 : f32
      %26 = vector.broadcast %cst_24 : f32 to vector<1x32xf32>
      %27 = arith.divf %22, %26 : vector<1x32xf32>
      %cst_25 = arith.constant 1.600000e+01 : f32
      %28 = vector.broadcast %cst_25 : f32 to vector<1x32xf32>
      %29 = arith.divf %25, %28 : vector<1x32xf32>
      %30 = arith.mulf %27, %27 : vector<1x32xf32>
      %31 = arith.subf %29, %30 : vector<1x32xf32>
      %cst_26 = arith.constant 0.000000e+00 : f32
      %32 = vector.broadcast %cst_26 : f32 to vector<1x32xf32>
      %33 = arith.maximumf %31, %32 : vector<1x32xf32>
      %cst_27 = arith.constant 9.99999974E-6 : f32
      %34 = vector.broadcast %cst_27 : f32 to vector<1x32xf32>
      %35 = arith.addf %33, %34 : vector<1x32xf32>
      %36 = math.rsqrt %35 : vector<1x32xf32>
      %c0_28 = arith.constant 0 : index
      %c0_29 = arith.constant 0 : index
      %37 = vector.load %arg4[%c0_28, %c0_29] : memref<32x32xf32, #tpu.memory_space<vmem>>, vector<32x32xf32>
      %cst_30 = arith.constant dense<0.000000e+00> : vector<1x32xf32>
      %38 = tpu.matmul %27, %37, %cst_30 {dimension_numbers = #tpu.dot_dimension_numbers<[1], [0], [0], [1], [0, 0, 1, 1], [], []>} : vector<1x32xf32>, vector<32x32xf32>, vector<1x32xf32> -> vector<1x32xf32>
      %c0_31 = arith.constant 0 : index
      %c0_32 = arith.constant 0 : index
      %39 = vector.load %arg4[%c0_31, %c0_32] : memref<32x32xf32, #tpu.memory_space<vmem>>, vector<32x32xf32>
      %cst_33 = arith.constant dense<0.000000e+00> : vector<1x32xf32>
      %40 = tpu.matmul %36, %39, %cst_33 {dimension_numbers = #tpu.dot_dimension_numbers<[1], [0], [0], [1], [0, 0, 1, 1], [], []>} : vector<1x32xf32>, vector<32x32xf32>, vector<1x32xf32> -> vector<1x32xf32>
      %c0_34 = arith.constant 0 : index
      %c0_35 = arith.constant 0 : index
      %41 = vector.load %arg5[%c0_34, %c0_35] : memref<1x32xf32, #tpu.memory_space<vmem>>, vector<1x32xf32>
      %42 = arith.mulf %41, %40 : vector<1x32xf32>
      %c0_36 = arith.constant 0 : index
      %c0_37 = arith.constant 0 : index
      %43 = vector.load %arg6[%c0_36, %c0_37] : memref<1x32xf32, #tpu.memory_space<vmem>>, vector<1x32xf32>
      %44 = arith.mulf %38, %42 : vector<1x32xf32>
      %45 = arith.subf %43, %44 : vector<1x32xf32>
      %c0_38 = arith.constant 0 : index
      %c0_39 = arith.constant 0 : index
      %c0_40 = arith.constant 0 : index
      %46 = vector.load %arg7[%c0_38, %c0_39, %c0_40] : memref<1x1x32xf32, #tpu.memory_space<vmem>>, vector<1x1x32xf32>
      %47 = vector.shape_cast %46 : vector<1x1x32xf32> to vector<1x32xf32>
      %48 = vector.shape_cast %42 : vector<1x32xf32> to vector<1x1x32xf32>
      tpu.vector_store %arg7[%c0_38, %c0_39, %c0_40], %48 {strides = array<i32>} : memref<1x1x32xf32, #tpu.memory_space<vmem>>, vector<1x1x32xf32>,
      %c0_41 = arith.constant 0 : index
      %c0_42 = arith.constant 0 : index
      %c0_43 = arith.constant 0 : index
      %49 = vector.load %arg8[%c0_41, %c0_42, %c0_43] : memref<1x1x32xf32, #tpu.memory_space<vmem>>, vector<1x1x32xf32>
      %50 = vector.shape_cast %49 : vector<1x1x32xf32> to vector<1x32xf32>
      %51 = vector.shape_cast %45 : vector<1x32xf32> to vector<1x1x32xf32>
      tpu.vector_store %arg8[%c0_41, %c0_42, %c0_43], %51 {strides = array<i32>} : memref<1x1x32xf32, #tpu.memory_space<vmem>>, vector<1x1x32xf32>,
    } else {
    }
    return
  }
  func.func @transform_0(%arg0: i32, %arg1: i32) -> (i32, i32, i32) {
    %c0_i32 = arith.constant 0 : i32
    %c0_i32_0 = arith.constant 0 : i32
    return %arg0, %arg1, %c0_i32 : i32, i32, i32
  }
  func.func @transform_1(%arg0: i32, %arg1: i32) -> (i32, i32) {
    %c0_i32 = arith.constant 0 : i32
    %c0_i32_0 = arith.constant 0 : i32
    %c0_i32_1 = arith.constant 0 : i32
    return %c0_i32, %c0_i32_0 : i32, i32
  }
  func.func @transform_2(%arg0: i32, %arg1: i32) -> (i32, i32) {
    %c0_i32 = arith.constant 0 : i32
    %c0_i32_0 = arith.constant 0 : i32
    %c0_i32_1 = arith.constant 0 : i32
    return %c0_i32, %c0_i32_0 : i32, i32
  }
  func.func @transform_3(%arg0: i32, %arg1: i32) -> (i32, i32) {
    %c0_i32 = arith.constant 0 : i32
    %c0_i32_0 = arith.constant 0 : i32
    %c0_i32_1 = arith.constant 0 : i32
    return %c0_i32, %c0_i32_0 : i32, i32
  }
  func.func @transform_4(%arg0: i32, %arg1: i32) -> (i32, i32) {
    %c0_i32 = arith.constant 0 : i32
    %c0_i32_0 = arith.constant 0 : i32
    %c0_i32_1 = arith.constant 0 : i32
    return %c0_i32, %c0_i32_0 : i32, i32
  }
  func.func @transform_5(%arg0: i32, %arg1: i32) -> (i32, i32, i32) {
    %c0_i32 = arith.constant 0 : i32
    %c0_i32_0 = arith.constant 0 : i32
    %c0_i32_1 = arith.constant 0 : i32
    return %arg0, %c0_i32, %c0_i32_0 : i32, i32, i32
  }
  func.func @transform_6(%arg0: i32, %arg1: i32) -> (i32, i32, i32) {
    %c0_i32 = arith.constant 0 : i32
    %c0_i32_0 = arith.constant 0 : i32
    %c0_i32_1 = arith.constant 0 : i32
    return %arg0, %c0_i32, %c0_i32_0 : i32, i32, i32
  }
}

module attributes {stable_mosaic.version = 11 : i64} {
  func.func @_gn_mm_kernel(%arg0: i32, %arg1: i32, %arg2: i32, %arg3: i32, %arg4: memref<1x16x32xbf16, #tpu.memory_space<vmem>>, %arg5: memref<1x1x32xf32, #tpu.memory_space<vmem>>, %arg6: memref<1x1x32xf32, #tpu.memory_space<vmem>>, %arg7: memref<32x128xbf16, #tpu.memory_space<vmem>>, %arg8: memref<1x16x128xbf16, #tpu.memory_space<vmem>>, %arg9: memref<16x128xf32, #tpu.memory_space<vmem>>) attributes {dimension_semantics = [#tpu.dimension_semantics<parallel>, #tpu.dimension_semantics<parallel>, #tpu.dimension_semantics<parallel>, #tpu.dimension_semantics<arbitrary>], iteration_bounds = array<i64: 2, 1, 1, 1>, scalar_prefetch = 0 : i64, scratch_operands = 1 : i64, tpu.core_type = #tpu.core_type<tc>, window_params = [{transform_indices = @transform_0, window_bounds = array<i64: 1, 16, 32>}, {transform_indices = @transform_1, window_bounds = array<i64: 1, 1, 32>}, {transform_indices = @transform_2, window_bounds = array<i64: 1, 1, 32>}, {transform_indices = @transform_3, window_bounds = array<i64: 32, 128>}, {transform_indices = @transform_4, window_bounds = array<i64: 1, 16, 128>}]} {
    %c0_i32 = arith.constant 0 : i32
    %0 = arith.cmpi eq, %arg3, %c0_i32 : i32
    %1 = arith.extui %0 : i1 to i32
    %c0_i32_0 = arith.constant 0 : i32
    %2 = arith.cmpi ne, %1, %c0_i32_0 : i32
    scf.if %2 {
      %cst_18 = arith.constant 0.000000e+00 : f32
      %25 = vector.broadcast %cst_18 : f32 to vector<16x128xf32>
      %c0_19 = arith.constant 0 : index
      %c0_20 = arith.constant 0 : index
      %26 = vector.load %arg9[%c0_19, %c0_20] : memref<16x128xf32, #tpu.memory_space<vmem>>, vector<16x128xf32>
      tpu.vector_store %arg9[%c0_19, %c0_20], %25 {strides = array<i32>} : memref<16x128xf32, #tpu.memory_space<vmem>>, vector<16x128xf32>,
    } else {
    }
    %c0 = arith.constant 0 : index
    %c0_1 = arith.constant 0 : index
    %c0_2 = arith.constant 0 : index
    %3 = vector.load %arg4[%c0, %c0_1, %c0_2] : memref<1x16x32xbf16, #tpu.memory_space<vmem>>, vector<1x16x32xbf16>
    %4 = vector.shape_cast %3 : vector<1x16x32xbf16> to vector<16x32xbf16>
    %5 = arith.extf %4 : vector<16x32xbf16> to vector<16x32xf32>
    %c0_3 = arith.constant 0 : index
    %c0_4 = arith.constant 0 : index
    %c0_5 = arith.constant 0 : index
    %6 = vector.load %arg5[%c0_3, %c0_4, %c0_5] : memref<1x1x32xf32, #tpu.memory_space<vmem>>, vector<1x1x32xf32>
    %7 = vector.shape_cast %6 : vector<1x1x32xf32> to vector<1x32xf32>
    %8 = vector.broadcast %7 : vector<1x32xf32> to vector<16x32xf32>
    %9 = arith.mulf %5, %8 : vector<16x32xf32>
    %c0_6 = arith.constant 0 : index
    %c0_7 = arith.constant 0 : index
    %c0_8 = arith.constant 0 : index
    %10 = vector.load %arg6[%c0_6, %c0_7, %c0_8] : memref<1x1x32xf32, #tpu.memory_space<vmem>>, vector<1x1x32xf32>
    %11 = vector.shape_cast %10 : vector<1x1x32xf32> to vector<1x32xf32>
    %12 = vector.broadcast %11 : vector<1x32xf32> to vector<16x32xf32>
    %13 = arith.addf %9, %12 : vector<16x32xf32>
    %cst = arith.constant 0.000000e+00 : f32
    %14 = vector.broadcast %cst : f32 to vector<16x32xf32>
    %15 = arith.maximumf %13, %14 : vector<16x32xf32>
    %c0_9 = arith.constant 0 : index
    %c0_10 = arith.constant 0 : index
    %16 = vector.load %arg9[%c0_9, %c0_10] : memref<16x128xf32, #tpu.memory_space<vmem>>, vector<16x128xf32>
    %17 = arith.truncf %15 : vector<16x32xf32> to vector<16x32xbf16>
    %c0_11 = arith.constant 0 : index
    %c0_12 = arith.constant 0 : index
    %18 = vector.load %arg7[%c0_11, %c0_12] : memref<32x128xbf16, #tpu.memory_space<vmem>>, vector<32x128xbf16>
    %cst_13 = arith.constant dense<0.000000e+00> : vector<16x128xf32>
    %19 = tpu.matmul %17, %18, %cst_13 {dimension_numbers = #tpu.dot_dimension_numbers<[1], [0], [0], [1], [0, 0, 1, 1], [], []>} : vector<16x32xbf16>, vector<32x128xbf16>, vector<16x128xf32> -> vector<16x128xf32>
    %20 = arith.addf %16, %19 : vector<16x128xf32>
    %c0_14 = arith.constant 0 : index
    %c0_15 = arith.constant 0 : index
    %21 = vector.load %arg9[%c0_14, %c0_15] : memref<16x128xf32, #tpu.memory_space<vmem>>, vector<16x128xf32>
    tpu.vector_store %arg9[%c0_14, %c0_15], %20 {strides = array<i32>} : memref<16x128xf32, #tpu.memory_space<vmem>>, vector<16x128xf32>,
    %c0_i32_16 = arith.constant 0 : i32
    %22 = arith.cmpi eq, %arg3, %c0_i32_16 : i32
    %23 = arith.extui %22 : i1 to i32
    %c0_i32_17 = arith.constant 0 : i32
    %24 = arith.cmpi ne, %23, %c0_i32_17 : i32
    scf.if %24 {
      %c0_18 = arith.constant 0 : index
      %c0_19 = arith.constant 0 : index
      %25 = vector.load %arg9[%c0_18, %c0_19] : memref<16x128xf32, #tpu.memory_space<vmem>>, vector<16x128xf32>
      %26 = arith.truncf %25 : vector<16x128xf32> to vector<16x128xbf16>
      %c0_20 = arith.constant 0 : index
      %c0_21 = arith.constant 0 : index
      %c0_22 = arith.constant 0 : index
      %27 = vector.load %arg8[%c0_20, %c0_21, %c0_22] : memref<1x16x128xbf16, #tpu.memory_space<vmem>>, vector<1x16x128xbf16>
      %28 = vector.shape_cast %27 : vector<1x16x128xbf16> to vector<16x128xbf16>
      %29 = vector.shape_cast %26 : vector<16x128xbf16> to vector<1x16x128xbf16>
      tpu.vector_store %arg8[%c0_20, %c0_21, %c0_22], %29 {strides = array<i32>} : memref<1x16x128xbf16, #tpu.memory_space<vmem>>, vector<1x16x128xbf16>,
    } else {
    }
    return
  }
  func.func @transform_0(%arg0: i32, %arg1: i32, %arg2: i32, %arg3: i32) -> (i32, i32, i32) {
    %c0_i32 = arith.constant 0 : i32
    return %arg0, %arg1, %arg3 : i32, i32, i32
  }
  func.func @transform_1(%arg0: i32, %arg1: i32, %arg2: i32, %arg3: i32) -> (i32, i32, i32) {
    %c0_i32 = arith.constant 0 : i32
    %c0_i32_0 = arith.constant 0 : i32
    return %arg0, %c0_i32, %arg3 : i32, i32, i32
  }
  func.func @transform_2(%arg0: i32, %arg1: i32, %arg2: i32, %arg3: i32) -> (i32, i32, i32) {
    %c0_i32 = arith.constant 0 : i32
    %c0_i32_0 = arith.constant 0 : i32
    return %arg0, %c0_i32, %arg3 : i32, i32, i32
  }
  func.func @transform_3(%arg0: i32, %arg1: i32, %arg2: i32, %arg3: i32) -> (i32, i32) {
    %c0_i32 = arith.constant 0 : i32
    return %arg3, %arg2 : i32, i32
  }
  func.func @transform_4(%arg0: i32, %arg1: i32, %arg2: i32, %arg3: i32) -> (i32, i32, i32) {
    %c0_i32 = arith.constant 0 : i32
    return %arg0, %arg1, %arg2 : i32, i32, i32
  }
}

module attributes {stable_mosaic.version = 11 : i64} {
  func.func @_gn_mm_kernel(%arg0: i32, %arg1: i32, %arg2: i32, %arg3: i32, %arg4: memref<1x16x32xbf16, #tpu.memory_space<vmem>>, %arg5: memref<1x1x32xf32, #tpu.memory_space<vmem>>, %arg6: memref<1x1x32xf32, #tpu.memory_space<vmem>>, %arg7: memref<32x128xbf16, #tpu.memory_space<vmem>>, %arg8: memref<1x16x128xbf16, #tpu.memory_space<vmem>>, %arg9: memref<1x16x128xbf16, #tpu.memory_space<vmem>>, %arg10: memref<16x128xf32, #tpu.memory_space<vmem>>) attributes {dimension_semantics = [#tpu.dimension_semantics<parallel>, #tpu.dimension_semantics<parallel>, #tpu.dimension_semantics<parallel>, #tpu.dimension_semantics<arbitrary>], iteration_bounds = array<i64: 2, 1, 1, 1>, scalar_prefetch = 0 : i64, scratch_operands = 1 : i64, tpu.core_type = #tpu.core_type<tc>, window_params = [{transform_indices = @transform_0, window_bounds = array<i64: 1, 16, 32>}, {transform_indices = @transform_1, window_bounds = array<i64: 1, 1, 32>}, {transform_indices = @transform_2, window_bounds = array<i64: 1, 1, 32>}, {transform_indices = @transform_3, window_bounds = array<i64: 32, 128>}, {transform_indices = @transform_4, window_bounds = array<i64: 1, 16, 128>}, {transform_indices = @transform_5, window_bounds = array<i64: 1, 16, 128>}]} {
    %c0_i32 = arith.constant 0 : i32
    %0 = arith.cmpi eq, %arg3, %c0_i32 : i32
    %1 = arith.extui %0 : i1 to i32
    %c0_i32_0 = arith.constant 0 : i32
    %2 = arith.cmpi ne, %1, %c0_i32_0 : i32
    scf.if %2 {
      %cst_18 = arith.constant 0.000000e+00 : f32
      %25 = vector.broadcast %cst_18 : f32 to vector<16x128xf32>
      %c0_19 = arith.constant 0 : index
      %c0_20 = arith.constant 0 : index
      %26 = vector.load %arg10[%c0_19, %c0_20] : memref<16x128xf32, #tpu.memory_space<vmem>>, vector<16x128xf32>
      tpu.vector_store %arg10[%c0_19, %c0_20], %25 {strides = array<i32>} : memref<16x128xf32, #tpu.memory_space<vmem>>, vector<16x128xf32>,
    } else {
    }
    %c0 = arith.constant 0 : index
    %c0_1 = arith.constant 0 : index
    %c0_2 = arith.constant 0 : index
    %3 = vector.load %arg4[%c0, %c0_1, %c0_2] : memref<1x16x32xbf16, #tpu.memory_space<vmem>>, vector<1x16x32xbf16>
    %4 = vector.shape_cast %3 : vector<1x16x32xbf16> to vector<16x32xbf16>
    %5 = arith.extf %4 : vector<16x32xbf16> to vector<16x32xf32>
    %c0_3 = arith.constant 0 : index
    %c0_4 = arith.constant 0 : index
    %c0_5 = arith.constant 0 : index
    %6 = vector.load %arg5[%c0_3, %c0_4, %c0_5] : memref<1x1x32xf32, #tpu.memory_space<vmem>>, vector<1x1x32xf32>
    %7 = vector.shape_cast %6 : vector<1x1x32xf32> to vector<1x32xf32>
    %8 = vector.broadcast %7 : vector<1x32xf32> to vector<16x32xf32>
    %9 = arith.mulf %5, %8 : vector<16x32xf32>
    %c0_6 = arith.constant 0 : index
    %c0_7 = arith.constant 0 : index
    %c0_8 = arith.constant 0 : index
    %10 = vector.load %arg6[%c0_6, %c0_7, %c0_8] : memref<1x1x32xf32, #tpu.memory_space<vmem>>, vector<1x1x32xf32>
    %11 = vector.shape_cast %10 : vector<1x1x32xf32> to vector<1x32xf32>
    %12 = vector.broadcast %11 : vector<1x32xf32> to vector<16x32xf32>
    %13 = arith.addf %9, %12 : vector<16x32xf32>
    %cst = arith.constant 0.000000e+00 : f32
    %14 = vector.broadcast %cst : f32 to vector<16x32xf32>
    %15 = arith.maximumf %13, %14 : vector<16x32xf32>
    %c0_9 = arith.constant 0 : index
    %c0_10 = arith.constant 0 : index
    %16 = vector.load %arg10[%c0_9, %c0_10] : memref<16x128xf32, #tpu.memory_space<vmem>>, vector<16x128xf32>
    %17 = arith.truncf %15 : vector<16x32xf32> to vector<16x32xbf16>
    %c0_11 = arith.constant 0 : index
    %c0_12 = arith.constant 0 : index
    %18 = vector.load %arg7[%c0_11, %c0_12] : memref<32x128xbf16, #tpu.memory_space<vmem>>, vector<32x128xbf16>
    %cst_13 = arith.constant dense<0.000000e+00> : vector<16x128xf32>
    %19 = tpu.matmul %17, %18, %cst_13 {dimension_numbers = #tpu.dot_dimension_numbers<[1], [0], [0], [1], [0, 0, 1, 1], [], []>} : vector<16x32xbf16>, vector<32x128xbf16>, vector<16x128xf32> -> vector<16x128xf32>
    %20 = arith.addf %16, %19 : vector<16x128xf32>
    %c0_14 = arith.constant 0 : index
    %c0_15 = arith.constant 0 : index
    %21 = vector.load %arg10[%c0_14, %c0_15] : memref<16x128xf32, #tpu.memory_space<vmem>>, vector<16x128xf32>
    tpu.vector_store %arg10[%c0_14, %c0_15], %20 {strides = array<i32>} : memref<16x128xf32, #tpu.memory_space<vmem>>, vector<16x128xf32>,
    %c0_i32_16 = arith.constant 0 : i32
    %22 = arith.cmpi eq, %arg3, %c0_i32_16 : i32
    %23 = arith.extui %22 : i1 to i32
    %c0_i32_17 = arith.constant 0 : i32
    %24 = arith.cmpi ne, %23, %c0_i32_17 : i32
    scf.if %24 {
      %c0_18 = arith.constant 0 : index
      %c0_19 = arith.constant 0 : index
      %25 = vector.load %arg10[%c0_18, %c0_19] : memref<16x128xf32, #tpu.memory_space<vmem>>, vector<16x128xf32>
      %c0_20 = arith.constant 0 : index
      %c0_21 = arith.constant 0 : index
      %c0_22 = arith.constant 0 : index
      %26 = vector.load %arg8[%c0_20, %c0_21, %c0_22] : memref<1x16x128xbf16, #tpu.memory_space<vmem>>, vector<1x16x128xbf16>
      %27 = vector.shape_cast %26 : vector<1x16x128xbf16> to vector<16x128xbf16>
      %28 = arith.extf %27 : vector<16x128xbf16> to vector<16x128xf32>
      %29 = arith.addf %25, %28 : vector<16x128xf32>
      %30 = arith.truncf %29 : vector<16x128xf32> to vector<16x128xbf16>
      %c0_23 = arith.constant 0 : index
      %c0_24 = arith.constant 0 : index
      %c0_25 = arith.constant 0 : index
      %31 = vector.load %arg9[%c0_23, %c0_24, %c0_25] : memref<1x16x128xbf16, #tpu.memory_space<vmem>>, vector<1x16x128xbf16>
      %32 = vector.shape_cast %31 : vector<1x16x128xbf16> to vector<16x128xbf16>
      %33 = vector.shape_cast %30 : vector<16x128xbf16> to vector<1x16x128xbf16>
      tpu.vector_store %arg9[%c0_23, %c0_24, %c0_25], %33 {strides = array<i32>} : memref<1x16x128xbf16, #tpu.memory_space<vmem>>, vector<1x16x128xbf16>,
    } else {
    }
    return
  }
  func.func @transform_0(%arg0: i32, %arg1: i32, %arg2: i32, %arg3: i32) -> (i32, i32, i32) {
    %c0_i32 = arith.constant 0 : i32
    return %arg0, %arg1, %arg3 : i32, i32, i32
  }
  func.func @transform_1(%arg0: i32, %arg1: i32, %arg2: i32, %arg3: i32) -> (i32, i32, i32) {
    %c0_i32 = arith.constant 0 : i32
    %c0_i32_0 = arith.constant 0 : i32
    return %arg0, %c0_i32, %arg3 : i32, i32, i32
  }
  func.func @transform_2(%arg0: i32, %arg1: i32, %arg2: i32, %arg3: i32) -> (i32, i32, i32) {
    %c0_i32 = arith.constant 0 : i32
    %c0_i32_0 = arith.constant 0 : i32
    return %arg0, %c0_i32, %arg3 : i32, i32, i32
  }
  func.func @transform_3(%arg0: i32, %arg1: i32, %arg2: i32, %arg3: i32) -> (i32, i32) {
    %c0_i32 = arith.constant 0 : i32
    return %arg3, %arg2 : i32, i32
  }
  func.func @transform_4(%arg0: i32, %arg1: i32, %arg2: i32, %arg3: i32) -> (i32, i32, i32) {
    %c0_i32 = arith.constant 0 : i32
    return %arg0, %arg1, %arg2 : i32, i32, i32
  }
  func.func @transform_5(%arg0: i32, %arg1: i32, %arg2: i32, %arg3: i32) -> (i32, i32, i32) {
    %c0_i32 = arith.constant 0 : i32
    return %arg0, %arg1, %arg2 : i32, i32, i32
  }
}

module attributes {stable_mosaic.version = 11 : i64} {
  func.func @_gn_stats_kernel(%arg0: i32, %arg1: i32, %arg2: memref<1x16x128xbf16, #tpu.memory_space<vmem>>, %arg3: memref<128x32xf32, #tpu.memory_space<vmem>>, %arg4: memref<32x128xf32, #tpu.memory_space<vmem>>, %arg5: memref<1x128xf32, #tpu.memory_space<vmem>>, %arg6: memref<1x128xf32, #tpu.memory_space<vmem>>, %arg7: memref<1x1x128xf32, #tpu.memory_space<vmem>>, %arg8: memref<1x1x128xf32, #tpu.memory_space<vmem>>, %arg9: memref<1x128xf32, #tpu.memory_space<vmem>>, %arg10: memref<1x128xf32, #tpu.memory_space<vmem>>) attributes {dimension_semantics = [#tpu.dimension_semantics<parallel>, #tpu.dimension_semantics<arbitrary>], iteration_bounds = array<i64: 2, 1>, scalar_prefetch = 0 : i64, scratch_operands = 2 : i64, tpu.core_type = #tpu.core_type<tc>, window_params = [{transform_indices = @transform_0, window_bounds = array<i64: 1, 16, 128>}, {pipeline_mode = #tpu.pipeline_mode<synchronous>, transform_indices = @transform_1, window_bounds = array<i64: 128, 32>}, {pipeline_mode = #tpu.pipeline_mode<synchronous>, transform_indices = @transform_2, window_bounds = array<i64: 32, 128>}, {pipeline_mode = #tpu.pipeline_mode<synchronous>, transform_indices = @transform_3, window_bounds = array<i64: 1, 128>}, {pipeline_mode = #tpu.pipeline_mode<synchronous>, transform_indices = @transform_4, window_bounds = array<i64: 1, 128>}, {transform_indices = @transform_5, window_bounds = array<i64: 1, 1, 128>}, {transform_indices = @transform_6, window_bounds = array<i64: 1, 1, 128>}]} {
    %c0_i32 = arith.constant 0 : i32
    %0 = arith.cmpi eq, %arg1, %c0_i32 : i32
    %1 = arith.extui %0 : i1 to i32
    %c0_i32_0 = arith.constant 0 : i32
    %2 = arith.cmpi ne, %1, %c0_i32_0 : i32
    scf.if %2 {
      %cst_14 = arith.constant 0.000000e+00 : f32
      %20 = vector.broadcast %cst_14 : f32 to vector<1x128xf32>
      %c0_15 = arith.constant 0 : index
      %c0_16 = arith.constant 0 : index
      %21 = vector.load %arg9[%c0_15, %c0_16] : memref<1x128xf32, #tpu.memory_space<vmem>>, vector<1x128xf32>
      tpu.vector_store %arg9[%c0_15, %c0_16], %20 {strides = array<i32>} : memref<1x128xf32, #tpu.memory_space<vmem>>, vector<1x128xf32>,
      %cst_17 = arith.constant 0.000000e+00 : f32
      %22 = vector.broadcast %cst_17 : f32 to vector<1x128xf32>
      %c0_18 = arith.constant 0 : index
      %c0_19 = arith.constant 0 : index
      %23 = vector.load %arg10[%c0_18, %c0_19] : memref<1x128xf32, #tpu.memory_space<vmem>>, vector<1x128xf32>
      tpu.vector_store %arg10[%c0_18, %c0_19], %22 {strides = array<i32>} : memref<1x128xf32, #tpu.memory_space<vmem>>, vector<1x128xf32>,
    } else {
    }
    %c0 = arith.constant 0 : index
    %c0_1 = arith.constant 0 : index
    %c0_2 = arith.constant 0 : index
    %3 = vector.load %arg2[%c0, %c0_1, %c0_2] : memref<1x16x128xbf16, #tpu.memory_space<vmem>>, vector<1x16x128xbf16>
    %4 = vector.shape_cast %3 : vector<1x16x128xbf16> to vector<16x128xbf16>
    %5 = arith.extf %4 : vector<16x128xbf16> to vector<16x128xf32>
    %c0_3 = arith.constant 0 : index
    %c0_4 = arith.constant 0 : index
    %6 = vector.load %arg9[%c0_3, %c0_4] : memref<1x128xf32, #tpu.memory_space<vmem>>, vector<1x128xf32>
    %cst = arith.constant dense<0.000000e+00> : vector<128xf32>
    %7 = vector.multi_reduction <add>, %5, %cst [0] : vector<16x128xf32> to vector<128xf32>
    %8 = vector.shape_cast %7 : vector<128xf32> to vector<1x128xf32>
    %9 = arith.addf %6, %8 : vector<1x128xf32>
    %c0_5 = arith.constant 0 : index
    %c0_6 = arith.constant 0 : index
    %10 = vector.load %arg9[%c0_5, %c0_6] : memref<1x128xf32, #tpu.memory_space<vmem>>, vector<1x128xf32>
    tpu.vector_store %arg9[%c0_5, %c0_6], %9 {strides = array<i32>} : memref<1x128xf32, #tpu.memory_space<vmem>>, vector<1x128xf32>,
    %c0_7 = arith.constant 0 : index
    %c0_8 = arith.constant 0 : index
    %11 = vector.load %arg10[%c0_7, %c0_8] : memref<1x128xf32, #tpu.memory_space<vmem>>, vector<1x128xf32>
    %12 = arith.mulf %5, %5 : vector<16x128xf32>
    %cst_9 = arith.constant dense<0.000000e+00> : vector<128xf32>
    %13 = vector.multi_reduction <add>, %12, %cst_9 [0] : vector<16x128xf32> to vector<128xf32>
    %14 = vector.shape_cast %13 : vector<128xf32> to vector<1x128xf32>
    %15 = arith.addf %11, %14 : vector<1x128xf32>
    %c0_10 = arith.constant 0 : index
    %c0_11 = arith.constant 0 : index
    %16 = vector.load %arg10[%c0_10, %c0_11] : memref<1x128xf32, #tpu.memory_space<vmem>>, vector<1x128xf32>
    tpu.vector_store %arg10[%c0_10, %c0_11], %15 {strides = array<i32>} : memref<1x128xf32, #tpu.memory_space<vmem>>, vector<1x128xf32>,
    %c0_i32_12 = arith.constant 0 : i32
    %17 = arith.cmpi eq, %arg1, %c0_i32_12 : i32
    %18 = arith.extui %17 : i1 to i32
    %c0_i32_13 = arith.constant 0 : i32
    %19 = arith.cmpi ne, %18, %c0_i32_13 : i32
    scf.if %19 {
      %c0_14 = arith.constant 0 : index
      %c0_15 = arith.constant 0 : index
      %20 = vector.load %arg9[%c0_14, %c0_15] : memref<1x128xf32, #tpu.memory_space<vmem>>, vector<1x128xf32>
      %c0_16 = arith.constant 0 : index
      %c0_17 = arith.constant 0 : index
      %21 = vector.load %arg3[%c0_16, %c0_17] : memref<128x32xf32, #tpu.memory_space<vmem>>, vector<128x32xf32>
      %cst_18 = arith.constant dense<0.000000e+00> : vector<1x32xf32>
      %22 = tpu.matmul %20, %21, %cst_18 {dimension_numbers = #tpu.dot_dimension_numbers<[1], [0], [0], [1], [0, 0, 1, 1], [], []>} : vector<1x128xf32>, vector<128x32xf32>, vector<1x32xf32> -> vector<1x32xf32>
      %c0_19 = arith.constant 0 : index
      %c0_20 = arith.constant 0 : index
      %23 = vector.load %arg10[%c0_19, %c0_20] : memref<1x128xf32, #tpu.memory_space<vmem>>, vector<1x128xf32>
      %c0_21 = arith.constant 0 : index
      %c0_22 = arith.constant 0 : index
      %24 = vector.load %arg3[%c0_21, %c0_22] : memref<128x32xf32, #tpu.memory_space<vmem>>, vector<128x32xf32>
      %cst_23 = arith.constant dense<0.000000e+00> : vector<1x32xf32>
      %25 = tpu.matmul %23, %24, %cst_23 {dimension_numbers = #tpu.dot_dimension_numbers<[1], [0], [0], [1], [0, 0, 1, 1], [], []>} : vector<1x128xf32>, vector<128x32xf32>, vector<1x32xf32> -> vector<1x32xf32>
      %cst_24 = arith.constant 6.400000e+01 : f32
      %26 = vector.broadcast %cst_24 : f32 to vector<1x32xf32>
      %27 = arith.divf %22, %26 : vector<1x32xf32>
      %cst_25 = arith.constant 6.400000e+01 : f32
      %28 = vector.broadcast %cst_25 : f32 to vector<1x32xf32>
      %29 = arith.divf %25, %28 : vector<1x32xf32>
      %30 = arith.mulf %27, %27 : vector<1x32xf32>
      %31 = arith.subf %29, %30 : vector<1x32xf32>
      %cst_26 = arith.constant 0.000000e+00 : f32
      %32 = vector.broadcast %cst_26 : f32 to vector<1x32xf32>
      %33 = arith.maximumf %31, %32 : vector<1x32xf32>
      %cst_27 = arith.constant 9.99999974E-6 : f32
      %34 = vector.broadcast %cst_27 : f32 to vector<1x32xf32>
      %35 = arith.addf %33, %34 : vector<1x32xf32>
      %36 = math.rsqrt %35 : vector<1x32xf32>
      %c0_28 = arith.constant 0 : index
      %c0_29 = arith.constant 0 : index
      %37 = vector.load %arg4[%c0_28, %c0_29] : memref<32x128xf32, #tpu.memory_space<vmem>>, vector<32x128xf32>
      %cst_30 = arith.constant dense<0.000000e+00> : vector<1x128xf32>
      %38 = tpu.matmul %27, %37, %cst_30 {dimension_numbers = #tpu.dot_dimension_numbers<[1], [0], [0], [1], [0, 0, 1, 1], [], []>} : vector<1x32xf32>, vector<32x128xf32>, vector<1x128xf32> -> vector<1x128xf32>
      %c0_31 = arith.constant 0 : index
      %c0_32 = arith.constant 0 : index
      %39 = vector.load %arg4[%c0_31, %c0_32] : memref<32x128xf32, #tpu.memory_space<vmem>>, vector<32x128xf32>
      %cst_33 = arith.constant dense<0.000000e+00> : vector<1x128xf32>
      %40 = tpu.matmul %36, %39, %cst_33 {dimension_numbers = #tpu.dot_dimension_numbers<[1], [0], [0], [1], [0, 0, 1, 1], [], []>} : vector<1x32xf32>, vector<32x128xf32>, vector<1x128xf32> -> vector<1x128xf32>
      %c0_34 = arith.constant 0 : index
      %c0_35 = arith.constant 0 : index
      %41 = vector.load %arg5[%c0_34, %c0_35] : memref<1x128xf32, #tpu.memory_space<vmem>>, vector<1x128xf32>
      %42 = arith.mulf %41, %40 : vector<1x128xf32>
      %c0_36 = arith.constant 0 : index
      %c0_37 = arith.constant 0 : index
      %43 = vector.load %arg6[%c0_36, %c0_37] : memref<1x128xf32, #tpu.memory_space<vmem>>, vector<1x128xf32>
      %44 = arith.mulf %38, %42 : vector<1x128xf32>
      %45 = arith.subf %43, %44 : vector<1x128xf32>
      %c0_38 = arith.constant 0 : index
      %c0_39 = arith.constant 0 : index
      %c0_40 = arith.constant 0 : index
      %46 = vector.load %arg7[%c0_38, %c0_39, %c0_40] : memref<1x1x128xf32, #tpu.memory_space<vmem>>, vector<1x1x128xf32>
      %47 = vector.shape_cast %46 : vector<1x1x128xf32> to vector<1x128xf32>
      %48 = vector.shape_cast %42 : vector<1x128xf32> to vector<1x1x128xf32>
      tpu.vector_store %arg7[%c0_38, %c0_39, %c0_40], %48 {strides = array<i32>} : memref<1x1x128xf32, #tpu.memory_space<vmem>>, vector<1x1x128xf32>,
      %c0_41 = arith.constant 0 : index
      %c0_42 = arith.constant 0 : index
      %c0_43 = arith.constant 0 : index
      %49 = vector.load %arg8[%c0_41, %c0_42, %c0_43] : memref<1x1x128xf32, #tpu.memory_space<vmem>>, vector<1x1x128xf32>
      %50 = vector.shape_cast %49 : vector<1x1x128xf32> to vector<1x128xf32>
      %51 = vector.shape_cast %45 : vector<1x128xf32> to vector<1x1x128xf32>
      tpu.vector_store %arg8[%c0_41, %c0_42, %c0_43], %51 {strides = array<i32>} : memref<1x1x128xf32, #tpu.memory_space<vmem>>, vector<1x1x128xf32>,
    } else {
    }
    return
  }
  func.func @transform_0(%arg0: i32, %arg1: i32) -> (i32, i32, i32) {
    %c0_i32 = arith.constant 0 : i32
    %c0_i32_0 = arith.constant 0 : i32
    return %arg0, %arg1, %c0_i32 : i32, i32, i32
  }
  func.func @transform_1(%arg0: i32, %arg1: i32) -> (i32, i32) {
    %c0_i32 = arith.constant 0 : i32
    %c0_i32_0 = arith.constant 0 : i32
    %c0_i32_1 = arith.constant 0 : i32
    return %c0_i32, %c0_i32_0 : i32, i32
  }
  func.func @transform_2(%arg0: i32, %arg1: i32) -> (i32, i32) {
    %c0_i32 = arith.constant 0 : i32
    %c0_i32_0 = arith.constant 0 : i32
    %c0_i32_1 = arith.constant 0 : i32
    return %c0_i32, %c0_i32_0 : i32, i32
  }
  func.func @transform_3(%arg0: i32, %arg1: i32) -> (i32, i32) {
    %c0_i32 = arith.constant 0 : i32
    %c0_i32_0 = arith.constant 0 : i32
    %c0_i32_1 = arith.constant 0 : i32
    return %c0_i32, %c0_i32_0 : i32, i32
  }
  func.func @transform_4(%arg0: i32, %arg1: i32) -> (i32, i32) {
    %c0_i32 = arith.constant 0 : i32
    %c0_i32_0 = arith.constant 0 : i32
    %c0_i32_1 = arith.constant 0 : i32
    return %c0_i32, %c0_i32_0 : i32, i32
  }
  func.func @transform_5(%arg0: i32, %arg1: i32) -> (i32, i32, i32) {
    %c0_i32 = arith.constant 0 : i32
    %c0_i32_0 = arith.constant 0 : i32
    %c0_i32_1 = arith.constant 0 : i32
    return %arg0, %c0_i32, %c0_i32_0 : i32, i32, i32
  }
  func.func @transform_6(%arg0: i32, %arg1: i32) -> (i32, i32, i32) {
    %c0_i32 = arith.constant 0 : i32
    %c0_i32_0 = arith.constant 0 : i32
    %c0_i32_1 = arith.constant 0 : i32
    return %arg0, %c0_i32, %c0_i32_0 : i32, i32, i32
  }
}

module attributes {stable_mosaic.version = 11 : i64} {
  func.func @_gn_mm_kernel(%arg0: i32, %arg1: i32, %arg2: i32, %arg3: i32, %arg4: memref<1x16x128xbf16, #tpu.memory_space<vmem>>, %arg5: memref<1x1x128xf32, #tpu.memory_space<vmem>>, %arg6: memref<1x1x128xf32, #tpu.memory_space<vmem>>, %arg7: memref<128x32xbf16, #tpu.memory_space<vmem>>, %arg8: memref<1x16x32xbf16, #tpu.memory_space<vmem>>, %arg9: memref<16x32xf32, #tpu.memory_space<vmem>>) attributes {dimension_semantics = [#tpu.dimension_semantics<parallel>, #tpu.dimension_semantics<parallel>, #tpu.dimension_semantics<parallel>, #tpu.dimension_semantics<arbitrary>], iteration_bounds = array<i64: 2, 1, 1, 1>, scalar_prefetch = 0 : i64, scratch_operands = 1 : i64, tpu.core_type = #tpu.core_type<tc>, window_params = [{transform_indices = @transform_0, window_bounds = array<i64: 1, 16, 128>}, {transform_indices = @transform_1, window_bounds = array<i64: 1, 1, 128>}, {transform_indices = @transform_2, window_bounds = array<i64: 1, 1, 128>}, {transform_indices = @transform_3, window_bounds = array<i64: 128, 32>}, {transform_indices = @transform_4, window_bounds = array<i64: 1, 16, 32>}]} {
    %c0_i32 = arith.constant 0 : i32
    %0 = arith.cmpi eq, %arg3, %c0_i32 : i32
    %1 = arith.extui %0 : i1 to i32
    %c0_i32_0 = arith.constant 0 : i32
    %2 = arith.cmpi ne, %1, %c0_i32_0 : i32
    scf.if %2 {
      %cst_18 = arith.constant 0.000000e+00 : f32
      %25 = vector.broadcast %cst_18 : f32 to vector<16x32xf32>
      %c0_19 = arith.constant 0 : index
      %c0_20 = arith.constant 0 : index
      %26 = vector.load %arg9[%c0_19, %c0_20] : memref<16x32xf32, #tpu.memory_space<vmem>>, vector<16x32xf32>
      tpu.vector_store %arg9[%c0_19, %c0_20], %25 {strides = array<i32>} : memref<16x32xf32, #tpu.memory_space<vmem>>, vector<16x32xf32>,
    } else {
    }
    %c0 = arith.constant 0 : index
    %c0_1 = arith.constant 0 : index
    %c0_2 = arith.constant 0 : index
    %3 = vector.load %arg4[%c0, %c0_1, %c0_2] : memref<1x16x128xbf16, #tpu.memory_space<vmem>>, vector<1x16x128xbf16>
    %4 = vector.shape_cast %3 : vector<1x16x128xbf16> to vector<16x128xbf16>
    %5 = arith.extf %4 : vector<16x128xbf16> to vector<16x128xf32>
    %c0_3 = arith.constant 0 : index
    %c0_4 = arith.constant 0 : index
    %c0_5 = arith.constant 0 : index
    %6 = vector.load %arg5[%c0_3, %c0_4, %c0_5] : memref<1x1x128xf32, #tpu.memory_space<vmem>>, vector<1x1x128xf32>
    %7 = vector.shape_cast %6 : vector<1x1x128xf32> to vector<1x128xf32>
    %8 = vector.broadcast %7 : vector<1x128xf32> to vector<16x128xf32>
    %9 = arith.mulf %5, %8 : vector<16x128xf32>
    %c0_6 = arith.constant 0 : index
    %c0_7 = arith.constant 0 : index
    %c0_8 = arith.constant 0 : index
    %10 = vector.load %arg6[%c0_6, %c0_7, %c0_8] : memref<1x1x128xf32, #tpu.memory_space<vmem>>, vector<1x1x128xf32>
    %11 = vector.shape_cast %10 : vector<1x1x128xf32> to vector<1x128xf32>
    %12 = vector.broadcast %11 : vector<1x128xf32> to vector<16x128xf32>
    %13 = arith.addf %9, %12 : vector<16x128xf32>
    %cst = arith.constant 0.000000e+00 : f32
    %14 = vector.broadcast %cst : f32 to vector<16x128xf32>
    %15 = arith.maximumf %13, %14 : vector<16x128xf32>
    %c0_9 = arith.constant 0 : index
    %c0_10 = arith.constant 0 : index
    %16 = vector.load %arg9[%c0_9, %c0_10] : memref<16x32xf32, #tpu.memory_space<vmem>>, vector<16x32xf32>
    %17 = arith.truncf %15 : vector<16x128xf32> to vector<16x128xbf16>
    %c0_11 = arith.constant 0 : index
    %c0_12 = arith.constant 0 : index
    %18 = vector.load %arg7[%c0_11, %c0_12] : memref<128x32xbf16, #tpu.memory_space<vmem>>, vector<128x32xbf16>
    %cst_13 = arith.constant dense<0.000000e+00> : vector<16x32xf32>
    %19 = tpu.matmul %17, %18, %cst_13 {dimension_numbers = #tpu.dot_dimension_numbers<[1], [0], [0], [1], [0, 0, 1, 1], [], []>} : vector<16x128xbf16>, vector<128x32xbf16>, vector<16x32xf32> -> vector<16x32xf32>
    %20 = arith.addf %16, %19 : vector<16x32xf32>
    %c0_14 = arith.constant 0 : index
    %c0_15 = arith.constant 0 : index
    %21 = vector.load %arg9[%c0_14, %c0_15] : memref<16x32xf32, #tpu.memory_space<vmem>>, vector<16x32xf32>
    tpu.vector_store %arg9[%c0_14, %c0_15], %20 {strides = array<i32>} : memref<16x32xf32, #tpu.memory_space<vmem>>, vector<16x32xf32>,
    %c0_i32_16 = arith.constant 0 : i32
    %22 = arith.cmpi eq, %arg3, %c0_i32_16 : i32
    %23 = arith.extui %22 : i1 to i32
    %c0_i32_17 = arith.constant 0 : i32
    %24 = arith.cmpi ne, %23, %c0_i32_17 : i32
    scf.if %24 {
      %c0_18 = arith.constant 0 : index
      %c0_19 = arith.constant 0 : index
      %25 = vector.load %arg9[%c0_18, %c0_19] : memref<16x32xf32, #tpu.memory_space<vmem>>, vector<16x32xf32>
      %26 = arith.truncf %25 : vector<16x32xf32> to vector<16x32xbf16>
      %c0_20 = arith.constant 0 : index
      %c0_21 = arith.constant 0 : index
      %c0_22 = arith.constant 0 : index
      %27 = vector.load %arg8[%c0_20, %c0_21, %c0_22] : memref<1x16x32xbf16, #tpu.memory_space<vmem>>, vector<1x16x32xbf16>
      %28 = vector.shape_cast %27 : vector<1x16x32xbf16> to vector<16x32xbf16>
      %29 = vector.shape_cast %26 : vector<16x32xbf16> to vector<1x16x32xbf16>
      tpu.vector_store %arg8[%c0_20, %c0_21, %c0_22], %29 {strides = array<i32>} : memref<1x16x32xbf16, #tpu.memory_space<vmem>>, vector<1x16x32xbf16>,
    } else {
    }
    return
  }
  func.func @transform_0(%arg0: i32, %arg1: i32, %arg2: i32, %arg3: i32) -> (i32, i32, i32) {
    %c0_i32 = arith.constant 0 : i32
    return %arg0, %arg1, %arg3 : i32, i32, i32
  }
  func.func @transform_1(%arg0: i32, %arg1: i32, %arg2: i32, %arg3: i32) -> (i32, i32, i32) {
    %c0_i32 = arith.constant 0 : i32
    %c0_i32_0 = arith.constant 0 : i32
    return %arg0, %c0_i32, %arg3 : i32, i32, i32
  }
  func.func @transform_2(%arg0: i32, %arg1: i32, %arg2: i32, %arg3: i32) -> (i32, i32, i32) {
    %c0_i32 = arith.constant 0 : i32
    %c0_i32_0 = arith.constant 0 : i32
    return %arg0, %c0_i32, %arg3 : i32, i32, i32
  }
  func.func @transform_3(%arg0: i32, %arg1: i32, %arg2: i32, %arg3: i32) -> (i32, i32) {
    %c0_i32 = arith.constant 0 : i32
    return %arg3, %arg2 : i32, i32
  }
  func.func @transform_4(%arg0: i32, %arg1: i32, %arg2: i32, %arg3: i32) -> (i32, i32, i32) {
    %c0_i32 = arith.constant 0 : i32
    return %arg0, %arg1, %arg2 : i32, i32, i32
  }
}

module attributes {stable_mosaic.version = 11 : i64} {
  func.func @_conv3x3_kernel(%arg0: i32, %arg1: i32, %arg2: memref<1x36x32xbf16, #tpu.memory_space<vmem>>, %arg3: memref<1x1x32xf32, #tpu.memory_space<vmem>>, %arg4: memref<1x1x32xf32, #tpu.memory_space<vmem>>, %arg5: memref<36x1xf32, #tpu.memory_space<vmem>>, %arg6: memref<9x32x32xbf16, #tpu.memory_space<vmem>>, %arg7: memref<1x22x32xbf16, #tpu.memory_space<vmem>>, %arg8: memref<36x32xbf16, #tpu.memory_space<vmem>>) attributes {dimension_semantics = [#tpu.dimension_semantics<parallel>, #tpu.dimension_semantics<arbitrary>], iteration_bounds = array<i64: 2, 1>, scalar_prefetch = 0 : i64, scratch_operands = 1 : i64, tpu.core_type = #tpu.core_type<tc>, window_params = [{transform_indices = @transform_0, window_bounds = array<i64: 1, 36, 32>}, {transform_indices = @transform_1, window_bounds = array<i64: 1, 1, 32>}, {transform_indices = @transform_2, window_bounds = array<i64: 1, 1, 32>}, {pipeline_mode = #tpu.pipeline_mode<synchronous>, transform_indices = @transform_3, window_bounds = array<i64: 36, 1>}, {transform_indices = @transform_4, window_bounds = array<i64: 9, 32, 32>}, {transform_indices = @transform_5, window_bounds = array<i64: 1, 22, 32>}]} {
    %c0_i32 = arith.constant 0 : i32
    %0 = arith.cmpi eq, %arg1, %c0_i32 : i32
    %1 = arith.extui %0 : i1 to i32
    %c0_i32_0 = arith.constant 0 : i32
    %2 = arith.cmpi ne, %1, %c0_i32_0 : i32
    scf.if %2 {
      %c0_46 = arith.constant 0 : index
      %c0_47 = arith.constant 0 : index
      %c0_48 = arith.constant 0 : index
      %53 = vector.load %arg2[%c0_46, %c0_47, %c0_48] : memref<1x36x32xbf16, #tpu.memory_space<vmem>>, vector<1x36x32xbf16>
      %54 = vector.shape_cast %53 : vector<1x36x32xbf16> to vector<36x32xbf16>
      %55 = arith.extf %54 : vector<36x32xbf16> to vector<36x32xf32>
      %c0_49 = arith.constant 0 : index
      %c0_50 = arith.constant 0 : index
      %c0_51 = arith.constant 0 : index
      %56 = vector.load %arg3[%c0_49, %c0_50, %c0_51] : memref<1x1x32xf32, #tpu.memory_space<vmem>>, vector<1x1x32xf32>
      %57 = vector.shape_cast %56 : vector<1x1x32xf32> to vector<1x32xf32>
      %58 = vector.broadcast %57 : vector<1x32xf32> to vector<36x32xf32>
      %59 = arith.mulf %55, %58 : vector<36x32xf32>
      %c0_52 = arith.constant 0 : index
      %c0_53 = arith.constant 0 : index
      %c0_54 = arith.constant 0 : index
      %60 = vector.load %arg4[%c0_52, %c0_53, %c0_54] : memref<1x1x32xf32, #tpu.memory_space<vmem>>, vector<1x1x32xf32>
      %61 = vector.shape_cast %60 : vector<1x1x32xf32> to vector<1x32xf32>
      %62 = vector.broadcast %61 : vector<1x32xf32> to vector<36x32xf32>
      %63 = arith.addf %59, %62 : vector<36x32xf32>
      %cst_55 = arith.constant 0.000000e+00 : f32
      %64 = vector.broadcast %cst_55 : f32 to vector<36x32xf32>
      %65 = arith.maximumf %63, %64 : vector<36x32xf32>
      %c0_56 = arith.constant 0 : index
      %c0_57 = arith.constant 0 : index
      %66 = vector.load %arg5[%c0_56, %c0_57] : memref<36x1xf32, #tpu.memory_space<vmem>>, vector<36x1xf32>
      %67 = vector.broadcast %66 : vector<36x1xf32> to vector<36x32xf32>
      %68 = arith.mulf %65, %67 : vector<36x32xf32>
      %69 = arith.truncf %68 : vector<36x32xf32> to vector<36x32xbf16>
      %c0_58 = arith.constant 0 : index
      %c0_59 = arith.constant 0 : index
      %70 = vector.load %arg8[%c0_58, %c0_59] : memref<36x32xbf16, #tpu.memory_space<vmem>>, vector<36x32xbf16>
      tpu.vector_store %arg8[%c0_58, %c0_59], %69 {strides = array<i32>} : memref<36x32xbf16, #tpu.memory_space<vmem>>, vector<36x32xbf16>,
    } else {
    }
    %cst = arith.constant 0.000000e+00 : f32
    %3 = vector.broadcast %cst : f32 to vector<22x32xf32>
    %c0 = arith.constant 0 : index
    %c0_1 = arith.constant 0 : index
    %4 = vector.load %arg8[%c0, %c0_1] : memref<36x32xbf16, #tpu.memory_space<vmem>>, vector<22x32xbf16>
    %c0_2 = arith.constant 0 : index
    %c0_3 = arith.constant 0 : index
    %c0_4 = arith.constant 0 : index
    %5 = vector.load %arg6[%c0_2, %c0_3, %c0_4] : memref<9x32x32xbf16, #tpu.memory_space<vmem>>, vector<1x32x32xbf16>
    %6 = vector.shape_cast %5 : vector<1x32x32xbf16> to vector<32x32xbf16>
    %cst_5 = arith.constant dense<0.000000e+00> : vector<22x32xf32>
    %7 = tpu.matmul %4, %6, %cst_5 {dimension_numbers = #tpu.dot_dimension_numbers<[1], [0], [0], [1], [0, 0, 1, 1], [], []>} : vector<22x32xbf16>, vector<32x32xbf16>, vector<22x32xf32> -> vector<22x32xf32>
    %8 = arith.addf %3, %7 : vector<22x32xf32>
    %c1 = arith.constant 1 : index
    %c0_6 = arith.constant 0 : index
    %9 = vector.load %arg8[%c1, %c0_6] : memref<36x32xbf16, #tpu.memory_space<vmem>>, vector<22x32xbf16>
    %c1_7 = arith.constant 1 : index
    %c0_8 = arith.constant 0 : index
    %c0_9 = arith.constant 0 : index
    %10 = vector.load %arg6[%c1_7, %c0_8, %c0_9] : memref<9x32x32xbf16, #tpu.memory_space<vmem>>, vector<1x32x32xbf16>
    %11 = vector.shape_cast %10 : vector<1x32x32xbf16> to vector<32x32xbf16>
    %cst_10 = arith.constant dense<0.000000e+00> : vector<22x32xf32>
    %12 = tpu.matmul %9, %11, %cst_10 {dimension_numbers = #tpu.dot_dimension_numbers<[1], [0], [0], [1], [0, 0, 1, 1], [], []>} : vector<22x32xbf16>, vector<32x32xbf16>, vector<22x32xf32> -> vector<22x32xf32>
    %13 = arith.addf %8, %12 : vector<22x32xf32>
    %c2 = arith.constant 2 : index
    %c0_11 = arith.constant 0 : index
    %14 = vector.load %arg8[%c2, %c0_11] : memref<36x32xbf16, #tpu.memory_space<vmem>>, vector<22x32xbf16>
    %c2_12 = arith.constant 2 : index
    %c0_13 = arith.constant 0 : index
    %c0_14 = arith.constant 0 : index
    %15 = vector.load %arg6[%c2_12, %c0_13, %c0_14] : memref<9x32x32xbf16, #tpu.memory_space<vmem>>, vector<1x32x32xbf16>
    %16 = vector.shape_cast %15 : vector<1x32x32xbf16> to vector<32x32xbf16>
    %cst_15 = arith.constant dense<0.000000e+00> : vector<22x32xf32>
    %17 = tpu.matmul %14, %16, %cst_15 {dimension_numbers = #tpu.dot_dimension_numbers<[1], [0], [0], [1], [0, 0, 1, 1], [], []>} : vector<22x32xbf16>, vector<32x32xbf16>, vector<22x32xf32> -> vector<22x32xf32>
    %18 = arith.addf %13, %17 : vector<22x32xf32>
    %c6 = arith.constant 6 : index
    %c0_16 = arith.constant 0 : index
    %19 = vector.load %arg8[%c6, %c0_16] : memref<36x32xbf16, #tpu.memory_space<vmem>>, vector<22x32xbf16>
    %c3 = arith.constant 3 : index
    %c0_17 = arith.constant 0 : index
    %c0_18 = arith.constant 0 : index
    %20 = vector.load %arg6[%c3, %c0_17, %c0_18] : memref<9x32x32xbf16, #tpu.memory_space<vmem>>, vector<1x32x32xbf16>
    %21 = vector.shape_cast %20 : vector<1x32x32xbf16> to vector<32x32xbf16>
    %cst_19 = arith.constant dense<0.000000e+00> : vector<22x32xf32>
    %22 = tpu.matmul %19, %21, %cst_19 {dimension_numbers = #tpu.dot_dimension_numbers<[1], [0], [0], [1], [0, 0, 1, 1], [], []>} : vector<22x32xbf16>, vector<32x32xbf16>, vector<22x32xf32> -> vector<22x32xf32>
    %23 = arith.addf %18, %22 : vector<22x32xf32>
    %c7 = arith.constant 7 : index
    %c0_20 = arith.constant 0 : index
    %24 = vector.load %arg8[%c7, %c0_20] : memref<36x32xbf16, #tpu.memory_space<vmem>>, vector<22x32xbf16>
    %c4 = arith.constant 4 : index
    %c0_21 = arith.constant 0 : index
    %c0_22 = arith.constant 0 : index
    %25 = vector.load %arg6[%c4, %c0_21, %c0_22] : memref<9x32x32xbf16, #tpu.memory_space<vmem>>, vector<1x32x32xbf16>
    %26 = vector.shape_cast %25 : vector<1x32x32xbf16> to vector<32x32xbf16>
    %cst_23 = arith.constant dense<0.000000e+00> : vector<22x32xf32>
    %27 = tpu.matmul %24, %26, %cst_23 {dimension_numbers = #tpu.dot_dimension_numbers<[1], [0], [0], [1], [0, 0, 1, 1], [], []>} : vector<22x32xbf16>, vector<32x32xbf16>, vector<22x32xf32> -> vector<22x32xf32>
    %28 = arith.addf %23, %27 : vector<22x32xf32>
    %c8 = arith.constant 8 : index
    %c0_24 = arith.constant 0 : index
    %29 = vector.load %arg8[%c8, %c0_24] : memref<36x32xbf16, #tpu.memory_space<vmem>>, vector<22x32xbf16>
    %c5 = arith.constant 5 : index
    %c0_25 = arith.constant 0 : index
    %c0_26 = arith.constant 0 : index
    %30 = vector.load %arg6[%c5, %c0_25, %c0_26] : memref<9x32x32xbf16, #tpu.memory_space<vmem>>, vector<1x32x32xbf16>
    %31 = vector.shape_cast %30 : vector<1x32x32xbf16> to vector<32x32xbf16>
    %cst_27 = arith.constant dense<0.000000e+00> : vector<22x32xf32>
    %32 = tpu.matmul %29, %31, %cst_27 {dimension_numbers = #tpu.dot_dimension_numbers<[1], [0], [0], [1], [0, 0, 1, 1], [], []>} : vector<22x32xbf16>, vector<32x32xbf16>, vector<22x32xf32> -> vector<22x32xf32>
    %33 = arith.addf %28, %32 : vector<22x32xf32>
    %c12 = arith.constant 12 : index
    %c0_28 = arith.constant 0 : index
    %34 = vector.load %arg8[%c12, %c0_28] : memref<36x32xbf16, #tpu.memory_space<vmem>>, vector<22x32xbf16>
    %c6_29 = arith.constant 6 : index
    %c0_30 = arith.constant 0 : index
    %c0_31 = arith.constant 0 : index
    %35 = vector.load %arg6[%c6_29, %c0_30, %c0_31] : memref<9x32x32xbf16, #tpu.memory_space<vmem>>, vector<1x32x32xbf16>
    %36 = vector.shape_cast %35 : vector<1x32x32xbf16> to vector<32x32xbf16>
    %cst_32 = arith.constant dense<0.000000e+00> : vector<22x32xf32>
    %37 = tpu.matmul %34, %36, %cst_32 {dimension_numbers = #tpu.dot_dimension_numbers<[1], [0], [0], [1], [0, 0, 1, 1], [], []>} : vector<22x32xbf16>, vector<32x32xbf16>, vector<22x32xf32> -> vector<22x32xf32>
    %38 = arith.addf %33, %37 : vector<22x32xf32>
    %c13 = arith.constant 13 : index
    %c0_33 = arith.constant 0 : index
    %39 = vector.load %arg8[%c13, %c0_33] : memref<36x32xbf16, #tpu.memory_space<vmem>>, vector<22x32xbf16>
    %c7_34 = arith.constant 7 : index
    %c0_35 = arith.constant 0 : index
    %c0_36 = arith.constant 0 : index
    %40 = vector.load %arg6[%c7_34, %c0_35, %c0_36] : memref<9x32x32xbf16, #tpu.memory_space<vmem>>, vector<1x32x32xbf16>
    %41 = vector.shape_cast %40 : vector<1x32x32xbf16> to vector<32x32xbf16>
    %cst_37 = arith.constant dense<0.000000e+00> : vector<22x32xf32>
    %42 = tpu.matmul %39, %41, %cst_37 {dimension_numbers = #tpu.dot_dimension_numbers<[1], [0], [0], [1], [0, 0, 1, 1], [], []>} : vector<22x32xbf16>, vector<32x32xbf16>, vector<22x32xf32> -> vector<22x32xf32>
    %43 = arith.addf %38, %42 : vector<22x32xf32>
    %c14 = arith.constant 14 : index
    %c0_38 = arith.constant 0 : index
    %44 = vector.load %arg8[%c14, %c0_38] : memref<36x32xbf16, #tpu.memory_space<vmem>>, vector<22x32xbf16>
    %c8_39 = arith.constant 8 : index
    %c0_40 = arith.constant 0 : index
    %c0_41 = arith.constant 0 : index
    %45 = vector.load %arg6[%c8_39, %c0_40, %c0_41] : memref<9x32x32xbf16, #tpu.memory_space<vmem>>, vector<1x32x32xbf16>
    %46 = vector.shape_cast %45 : vector<1x32x32xbf16> to vector<32x32xbf16>
    %cst_42 = arith.constant dense<0.000000e+00> : vector<22x32xf32>
    %47 = tpu.matmul %44, %46, %cst_42 {dimension_numbers = #tpu.dot_dimension_numbers<[1], [0], [0], [1], [0, 0, 1, 1], [], []>} : vector<22x32xbf16>, vector<32x32xbf16>, vector<22x32xf32> -> vector<22x32xf32>
    %48 = arith.addf %43, %47 : vector<22x32xf32>
    %49 = arith.truncf %48 : vector<22x32xf32> to vector<22x32xbf16>
    %c0_43 = arith.constant 0 : index
    %c0_44 = arith.constant 0 : index
    %c0_45 = arith.constant 0 : index
    %50 = vector.load %arg7[%c0_43, %c0_44, %c0_45] : memref<1x22x32xbf16, #tpu.memory_space<vmem>>, vector<1x22x32xbf16>
    %51 = vector.shape_cast %50 : vector<1x22x32xbf16> to vector<22x32xbf16>
    %52 = vector.shape_cast %49 : vector<22x32xbf16> to vector<1x22x32xbf16>
    tpu.vector_store %arg7[%c0_43, %c0_44, %c0_45], %52 {strides = array<i32>} : memref<1x22x32xbf16, #tpu.memory_space<vmem>>, vector<1x22x32xbf16>,
    return
  }
  func.func @transform_0(%arg0: i32, %arg1: i32) -> (i32, i32, i32) {
    %c0_i32 = arith.constant 0 : i32
    %c0_i32_0 = arith.constant 0 : i32
    %c0_i32_1 = arith.constant 0 : i32
    return %arg0, %c0_i32, %c0_i32_0 : i32, i32, i32
  }
  func.func @transform_1(%arg0: i32, %arg1: i32) -> (i32, i32, i32) {
    %c0_i32 = arith.constant 0 : i32
    %c0_i32_0 = arith.constant 0 : i32
    %c0_i32_1 = arith.constant 0 : i32
    return %arg0, %c0_i32, %c0_i32_0 : i32, i32, i32
  }
  func.func @transform_2(%arg0: i32, %arg1: i32) -> (i32, i32, i32) {
    %c0_i32 = arith.constant 0 : i32
    %c0_i32_0 = arith.constant 0 : i32
    %c0_i32_1 = arith.constant 0 : i32
    return %arg0, %c0_i32, %c0_i32_0 : i32, i32, i32
  }
  func.func @transform_3(%arg0: i32, %arg1: i32) -> (i32, i32) {
    %c0_i32 = arith.constant 0 : i32
    %c0_i32_0 = arith.constant 0 : i32
    %c0_i32_1 = arith.constant 0 : i32
    return %c0_i32, %c0_i32_0 : i32, i32
  }
  func.func @transform_4(%arg0: i32, %arg1: i32) -> (i32, i32, i32) {
    %c0_i32 = arith.constant 0 : i32
    %c0_i32_0 = arith.constant 0 : i32
    %c0_i32_1 = arith.constant 0 : i32
    return %c0_i32, %c0_i32_0, %arg1 : i32, i32, i32
  }
  func.func @transform_5(%arg0: i32, %arg1: i32) -> (i32, i32, i32) {
    %c0_i32 = arith.constant 0 : i32
    %c0_i32_0 = arith.constant 0 : i32
    return %arg0, %c0_i32, %arg1 : i32, i32, i32
  }
}

</mosaic_0001>

<llo_original>
// kernel: resnet_stage.13
$region0: #{resnet_stage.13}
  #allocation0 [shape = 'u32[]', space=smem, size = 0x4, offset = 0x4, fixed_abs, tag = 'smem constant byte address 0x4 - core index']
  #allocation1 [shape = 'u32[144,128]{1,0:T(1,128)}', space=vmem, size = 0x12000, scoped, tag = 'internal scratch']
  #allocation2 [shape = 'f32[1,32]{1,0:T(1,128)}', space=vmem, size = 0x200, scoped, tag = 'scratch operand']
  #allocation3 [shape = 'f32[1,32]{1,0:T(1,128)}', space=vmem, size = 0x200, scoped, tag = 'scratch operand']
  %s0 = inlined_call_operand.vmem [shape: bf16[2,64,32], index: 0, kind: input, shape index: {}]
  %s1 = inlined_call_operand.vmem [shape: f32[32,32], index: 1, kind: input, shape index: {}]
  %s2 = inlined_call_operand.vmem [shape: f32[32,32], index: 2, kind: input, shape index: {}]
  %s3 = inlined_call_operand.vmem [shape: f32[1,32], index: 3, kind: input, shape index: {}]
  %s4 = inlined_call_operand.vmem [shape: f32[1,32], index: 4, kind: input, shape index: {}]
  %s5 = inlined_call_operand.vmem [shape: f32[2,1,32], index: 5, kind: output, shape index: {0}]
  %s6 = inlined_call_operand.vmem [shape: f32[2,1,32], index: 6, kind: output, shape index: {1}]
  %7 = xla_tuple %s5, %s6
  %s8 = sld [smem:[#allocation0]]
  $region69: #{resnet_stage.13} parent=0
    _
  %s10 = ssub.s32 1, %s8
  %s11 = scalar_select 0, %s10, %s8
  loop: start=0, step=1, limit=4
  $region2: #{resnet_stage.13} parent=0 // loop_pre_header
    _
  $region3: #{resnet_stage.13} parent=0 // loop_header
    %s13 = sphi 0, %s17
    %p14 = scmp.ge.s32.totalorder %s13, 4
    %s20 = sphi 0, %s32
    %s21 = sphi 0, %s28
    %s22 = sphi 0, %s20
    %s23 = sphi 0, %s21
    %s24 = sphi 0, %s22
    %s25 = sphi 0, %s23
    %s37 = sphi 0, %s39
    %s40 = sphi 0, %s37
    %s41 = sphi 0, %s40
    %s57 = sphi 0, %s41
    %s61 = sphi 0, %s61
    %s63 = sphi 0, %s61
    %s64 = sphi 0, %s63
    %s78 = sphi 0, %s64
    %s82 = sphi 0, %s82
    %s84 = sphi 0, %s82
    %s85 = sphi 0, %s84
    %s99 = sphi 0, %s85
    %s103 = sphi 0, %s103
    %s105 = sphi 0, %s103
    %s106 = sphi 0, %s105
    %s120 = sphi 0, %s106
    %s124 = sphi 0, %s124
    %s126 = sphi 0, %s124
    %s127 = sphi 0, %s126
    %s141 = sphi 0, %s127
    %s147 = sphi 0, %s149
    %s150 = sphi 0, %s147
    %s151 = sphi 0, %s150
    %s167 = sphi 0, %s151
    %s173 = sphi 0, %s175
    %s176 = sphi 0, %s173
    %s177 = sphi 0, %s176
    %s193 = sphi 0, %s177
  $region4: #{resnet_stage.13} parent=0 // loop_header_branch
    %16 = sbr.rel (%p14) target = $region8
  $region5: #{resnet_stage.13} parent=0 // loop_body
    %s18 = ssub.s32 %s13, 1
    %s19 = ssub.s32 %s13, 2
    %s26 = sadd.s32 1, %s21
    %p27 = scmp.ge.s32.totalorder %s26, 1
    %s28 = scalar_select %p27, 0, %s26
    %s29 = sadd.s32 1, %s20
    %s30 = scalar_select %p27, %s29, %s20
    %p31 = scmp.ge.s32.totalorder %s30, 2
    %s32 = scalar_select %p31, 0, %s30
    %s33 = ssub.s32 %s20, %s32
    %s34 = ssub.s32 %s21, %s28
    %s35 = sor.u32 %s33, %s34
    %p36 = scmp.eq.s32.totalorder %s35, 0
    %s38 = sadd.s32 %s37, 1
    %s39 = scalar_select %p36, %s37, %s38
    %p42 = pneg %p36
    %p43 = scmp.eq.s32.totalorder %s13, 1
    %p44 = por %p42, %p43
    %p45 = scmp.ne.s32.totalorder %s37, %s40
    %p46 = scmp.eq.s32.totalorder %s13, 0
    %p47 = por %p45, %p46
    %p48 = scmp.ne.s32.totalorder %s37, %s40
    %p49 = scmp.eq.s32.totalorder %s18, 1
    %p50 = por %p48, %p49
    %p51 = scmp.ne.s32.totalorder %s40, %s41
    %p52 = scmp.eq.s32.totalorder %s18, 0
    %p53 = por %p51, %p52
    %p54 = scmp.ne.s32.totalorder %s40, %s41
    %p55 = scmp.eq.s32.totalorder %s19, 1
    %p56 = por %p54, %p55
    %p58 = scmp.ne.s32.totalorder %s41, %s57
    %p59 = scmp.eq.s32.totalorder %s19, 0
    %p60 = por %p58, %p59
    %s62 = sadd.s32 %s61, 1
    %p65 = scmp.eq.s32.totalorder %s13, 1
    %p66 = scmp.ne.s32.totalorder %s61, %s63
    %p67 = scmp.eq.s32.totalorder %s13, 0
    %p68 = por %p66, %p67
    %p69 = scmp.ne.s32.totalorder %s61, %s63
    %p70 = scmp.eq.s32.totalorder %s18, 1
    %p71 = por %p69, %p70
    %p72 = scmp.ne.s32.totalorder %s63, %s64
    %p73 = scmp.eq.s32.totalorder %s18, 0
    %p74 = por %p72, %p73
    %p75 = scmp.ne.s32.totalorder %s63, %s64
    %p76 = scmp.eq.s32.totalorder %s19, 1
    %p77 = por %p75, %p76
    %p79 = scmp.ne.s32.totalorder %s64, %s78
    %p80 = scmp.eq.s32.totalorder %s19, 0
    %p81 = por %p79, %p80
    %s83 = sadd.s32 %s82, 1
    %p86 = scmp.eq.s32.totalorder %s13, 1
    %p87 = scmp.ne.s32.totalorder %s82, %s84
    %p88 = scmp.eq.s32.totalorder %s13, 0
    %p89 = por %p87, %p88
    %p90 = scmp.ne.s32.totalorder %s82, %s84
    %p91 = scmp.eq.s32.totalorder %s18, 1
    %p92 = por %p90, %p91
    %p93 = scmp.ne.s32.totalorder %s84, %s85
    %p94 = scmp.eq.s32.totalorder %s18, 0
    %p95 = por %p93, %p94
    %p96 = scmp.ne.s32.totalorder %s84, %s85
    %p97 = scmp.eq.s32.totalorder %s19, 1
    %p98 = por %p96, %p97
    %p100 = scmp.ne.s32.totalorder %s85, %s99
    %p101 = scmp.eq.s32.totalorder %s19, 0
    %p102 = por %p100, %p101
    %s104 = sadd.s32 %s103, 1
    %p107 = scmp.eq.s32.totalorder %s13, 1
    %p108 = scmp.ne.s32.totalorder %s103, %s105
    %p109 = scmp.eq.s32.totalorder %s13, 0
    %p110 = por %p108, %p109
    %p111 = scmp.ne.s32.totalorder %s103, %s105
    %p112 = scmp.eq.s32.totalorder %s18, 1
    %p113 = por %p111, %p112
    %p114 = scmp.ne.s32.totalorder %s105, %s106
    %p115 = scmp.eq.s32.totalorder %s18, 0
    %p116 = por %p114, %p115
    %p117 = scmp.ne.s32.totalorder %s105, %s106
    %p118 = scmp.eq.s32.totalorder %s19, 1
    %p119 = por %p117, %p118
    %p121 = scmp.ne.s32.totalorder %s106, %s120
    %p122 = scmp.eq.s32.totalorder %s19, 0
    %p123 = por %p121, %p122
    %s125 = sadd.s32 %s124, 1
    %p128 = scmp.eq.s32.totalorder %s13, 1
    %p129 = scmp.ne.s32.totalorder %s124, %s126
    %p130 = scmp.eq.s32.totalorder %s13, 0
    %p131 = por %p129, %p130
    %p132 = scmp.ne.s32.totalorder %s124, %s126
    %p133 = scmp.eq.s32.totalorder %s18, 1
    %p134 = por %p132, %p133
    %p135 = scmp.ne.s32.totalorder %s126, %s127
    %p136 = scmp.eq.s32.totalorder %s18, 0
    %p137 = por %p135, %p136
    %p138 = scmp.ne.s32.totalorder %s126, %s127
    %p139 = scmp.eq.s32.totalorder %s19, 1
    %p140 = por %p138, %p139
    %p142 = scmp.ne.s32.totalorder %s127, %s141
    %p143 = scmp.eq.s32.totalorder %s19, 0
    %p144 = por %p142, %p143
    %s145 = ssub.s32 %s20, %s32
    %p146 = scmp.eq.s32.totalorder %s145, 0
    %s148 = sadd.s32 %s147, 1
    %s149 = scalar_select %p146, %s147, %s148
    %p152 = pneg %p146
    %p153 = scmp.eq.s32.totalorder %s13, 1
    %p154 = por %p152, %p153
    %p155 = scmp.ne.s32.totalorder %s147, %s150
    %p156 = scmp.eq.s32.totalorder %s13, 0
    %p157 = por %p155, %p156
    %p158 = scmp.ne.s32.totalorder %s147, %s150
    %p159 = scmp.eq.s32.totalorder %s18, 1
    %p160 = por %p158, %p159
    %p161 = scmp.ne.s32.totalorder %s150, %s151
    %p162 = scmp.eq.s32.totalorder %s18, 0
    %p163 = por %p161, %p162
    %p164 = scmp.ne.s32.totalorder %s150, %s151
    %p165 = scmp.eq.s32.totalorder %s19, 1
    %p166 = por %p164, %p165
    %p168 = scmp.ne.s32.totalorder %s151, %s167
    %p169 = scmp.eq.s32.totalorder %s19, 0
    %p170 = por %p168, %p169
    %s171 = ssub.s32 %s20, %s32
    %p172 = scmp.eq.s32.totalorder %s171, 0
    %s174 = sadd.s32 %s173, 1
    %s175 = scalar_select %p172, %s173, %s174
    %p178 = pneg %p172
    %p179 = scmp.eq.s32.totalorder %s13, 1
    %p180 = por %p178, %p179
    %p181 = scmp.ne.s32.totalorder %s173, %s176
    %p182 = scmp.eq.s32.totalorder %s13, 0
    %p183 = por %p181, %p182
    %p184 = scmp.ne.s32.totalorder %s173, %s176
    %p185 = scmp.eq.s32.totalorder %s18, 1
    %p186 = por %p184, %p185
    %p187 = scmp.ne.s32.totalorder %s176, %s177
    %p188 = scmp.eq.s32.totalorder %s18, 0
    %p189 = por %p187, %p188
    %p190 = scmp.ne.s32.totalorder %s176, %s177
    %p191 = scmp.eq.s32.totalorder %s19, 1
    %p192 = por %p190, %p191
    %p194 = scmp.ne.s32.totalorder %s177, %s193
    %p195 = scmp.eq.s32.totalorder %s19, 0
    %p196 = por %p194, %p195
    %p197 = scmp.le.s32.totalorder 1, %s13
    %p198 = scmp.lt.s32.totalorder %s13, 3
    %p199 = pnand %p197, %p198
    %p200 = pneg %p199
    // Predicated region
    $region9: #{resnet_stage.13} parent=5 // pred_check
      _
    $region10: #{resnet_stage.13} parent=5 // pred_check_branch
      %202 = sbr.rel (%p199) target = $region12
    $region11: #{resnet_stage.13} parent=5 // pred_region
      %s203 = ssub.s32 %s13, 1
      // Predicated region
      $region13: #{resnet_stage.13} parent=11 // pred_check
        %p204 = pneg %p74
      $region14: #{resnet_stage.13} parent=11 // pred_check_branch
        %206 = sbr.rel (%p204) target = $region16
      $region15: #{resnet_stage.13} parent=11 // pred_region
        _
      $region16: #{resnet_stage.13} parent=11 // pred_fallthru
        _
      // Predicated region
      $region17: #{resnet_stage.13} parent=11 // pred_check
        %p207 = pneg %p95
      $region18: #{resnet_stage.13} parent=11 // pred_check_branch
        %209 = sbr.rel (%p207) target = $region20
      $region19: #{resnet_stage.13} parent=11 // pred_region
        _
      $region20: #{resnet_stage.13} parent=11 // pred_fallthru
        _
      // Predicated region
      $region21: #{resnet_stage.13} parent=11 // pred_check
        %p210 = pneg %p116
      $region22: #{resnet_stage.13} parent=11 // pred_check_branch
        %212 = sbr.rel (%p210) target = $region24
      $region23: #{resnet_stage.13} parent=11 // pred_region
        _
      $region24: #{resnet_stage.13} parent=11 // pred_fallthru
        _
      // Predicated region
      $region25: #{resnet_stage.13} parent=11 // pred_check
        %p213 = pneg %p137
      $region26: #{resnet_stage.13} parent=11 // pred_check_branch
        %215 = sbr.rel (%p213) target = $region28
      $region27: #{resnet_stage.13} parent=11 // pred_region
        _
      $region28: #{resnet_stage.13} parent=11 // pred_fallthru
        _
    $region12: #{resnet_stage.13} parent=5 // pred_fallthru
      _
    %p216 = scmp.lt.s32.totalorder %s13, 2
    // Predicated region
    $region29: #{resnet_stage.13} parent=5 // pred_check
      %p217 = pneg %p216
    $region30: #{resnet_stage.13} parent=5 // pred_check_branch
      %219 = sbr.rel (%p217) target = $region32
    $region31: #{resnet_stage.13} parent=5 // pred_region
      // Predicated region
      $region33: #{resnet_stage.13} parent=31 // pred_check
        %p220 = pneg %p47
      $region34: #{resnet_stage.13} parent=31 // pred_check_branch
        %222 = sbr.rel (%p220) target = $region36
      $region35: #{resnet_stage.13} parent=31 // pred_region
        %s223 = smul.u32 8, %s21
        %p224 = scmp.lt.s32.totalorder %s20, 1
        %s225 = scalar_select %p224, %s20, 1
        %p226 = scmp.lt.s32.totalorder %s223, 7
        %s227 = scalar_select %p226, %s223, 7
        %s228 = smul.addr %s225, 8
        %s229 = sadd.s32 %s227, %s228
        %s230 = smul.addr %s229, 4
        %s231 = scalar_lea.vmem %s0, %s230
        %s232 = smul.u32 8, %s21
      $region36: #{resnet_stage.13} parent=31 // pred_fallthru
        _
    $region32: #{resnet_stage.13} parent=5 // pred_fallthru
      _
    %p233 = scmp.le.s32.totalorder 1, %s13
    %p234 = scmp.lt.s32.totalorder %s13, 3
    %p235 = pnand %p233, %p234
    %p236 = pneg %p235
    // Predicated region
    $region37: #{resnet_stage.13} parent=5 // pred_check
      _
    $region38: #{resnet_stage.13} parent=5 // pred_check_branch
      %238 = sbr.rel (%p235) target = $region40
    $region39: #{resnet_stage.13} parent=5 // pred_region
      %s239 = ssub.s32 %s13, 1
      %s240 = smul.u32 8, %s23
      %p241 = scmp.lt.s32.totalorder %s22, 1
      %s242 = scalar_select %p241, %s22, 1
      %p243 = scmp.lt.s32.totalorder %s240, 7
      %s244 = scalar_select %p243, %s240, 7
      %s245 = smul.addr %s242, 8
      %s246 = sadd.s32 %s244, %s245
      %s247 = smul.addr %s246, 4
      %s248 = scalar_lea.vmem %s0, %s247
      %p249 = pneg %p53
      %p250 = pneg %p50
      %p251 = pneg %p74
      %p252 = pneg %p71
      %p253 = pneg %p95
      %p254 = pneg %p92
      %p255 = pneg %p116
      %p256 = pneg %p113
      %p257 = pneg %p137
      %p258 = pneg %p134
      %p259 = pneg %p163
      %p260 = pneg %p160
      %p261 = scmp.lt.s32.totalorder %s22, 1
      %s262 = scalar_select %p261, %s22, 1
      %s263 = scalar_lea.vmem %s5, %s262
      %p264 = pneg %p189
      %p265 = pneg %p186
      %p266 = scmp.lt.s32.totalorder %s22, 1
      %s267 = scalar_select %p266, %s22, 1
      %s268 = scalar_lea.vmem %s6, %s267
      %s269 = smul.u32 8, %s23
      %p270 = scmp.lt.s32.totalorder %s22, 1
      %s271 = scalar_select %p270, %s22, 1
      %p272 = scmp.lt.s32.totalorder %s269, 7
      %s273 = scalar_select %p272, %s269, 7
      %s274 = smul.addr %s271, 8
      %s275 = sadd.s32 %s273, %s274
      %s276 = smul.addr %s275, 4
      %s277 = scalar_lea.vmem %s0, %s276
      %s278 = smul.u32 8, %s23
      %p279 = scmp.lt.s32.totalorder %s22, 1
      %s280 = scalar_select %p279, %s22, 1
      %s281 = scalar_lea.vmem %s5, %s280
      %p282 = scmp.lt.s32.totalorder %s22, 1
      %s283 = scalar_select %p282, %s22, 1
      %s284 = scalar_lea.vmem %s6, %s283
      %p285 = scmp.eq.s32.totalorder %s23, 0
      // Predicated region
      $region41: #{resnet_stage.13} parent=39 // pred_check
        %p286 = pneg %p285
      $region42: #{resnet_stage.13} parent=39 // pred_check_branch
        %288 = sbr.rel (%p286) target = $region44
      $region43: #{resnet_stage.13} parent=39 // pred_region
        %vm289 = vcmask 253952
        %290 = vst.msk [vmem:[#allocation2] sm:$0x1] %vm289, 0.0
        %291 = vst.msk [vmem:[#allocation3] sm:$0x1] %vm289, 0.0
      $region44: #{resnet_stage.13} parent=39 // pred_fallthru
        _
      %v292 = vld [vmem:[%s277] sm:$0xf]
      %v293 = vld [vmem:[%s277 + $0x4] sm:$0xf]
      %v294 = vld [vmem:[%s277 + $0x8] sm:$0xf]
      %v295 = vld [vmem:[%s277 + $0xc] sm:$0xf]
      %v296 = vld [vmem:[%s277 + $0x10] sm:$0xf]
      %v297 = vld [vmem:[%s277 + $0x14] sm:$0xf]
      %v298 = vld [vmem:[%s277 + $0x18] sm:$0xf]
      %v299 = vld [vmem:[%s277 + $0x1c] sm:$0xf]
      %v300 = vunpack.c.l.bf16 %v292
      %v301 = vunpack.c.l.bf16 %v293
      %v302 = vunpack.c.l.bf16 %v294
      %v303 = vunpack.c.l.bf16 %v295
      %v304 = vunpack.c.l.bf16 %v296
      %v305 = vunpack.c.l.bf16 %v297
      %v306 = vunpack.c.l.bf16 %v298
      %v307 = vunpack.c.l.bf16 %v299
      %v308 = vld [vmem:[#allocation2] sm:$0x1]
      %vm309 = vcmask 261120
      %v310 = vsel %vm309, %v300, 0.0
      %v311 = vsel %vm309, %v301, 0.0
      %v312 = vadd.f32 %v310, %v311
      %v313 = vsel %vm309, %v302, 0.0
      %v314 = vadd.f32 %v312, %v313
      %v315 = vsel %vm309, %v303, 0.0
      %v316 = vadd.f32 %v314, %v315
      %v317 = vsel %vm309, %v304, 0.0
      %v318 = vadd.f32 %v316, %v317
      %v319 = vsel %vm309, %v305, 0.0
      %v320 = vadd.f32 %v318, %v319
      %v321 = vsel %vm309, %v306, 0.0
      %v322 = vadd.f32 %v320, %v321
      %v323 = vsel %vm309, %v307, 0.0
      %v324 = vadd.f32 %v322, %v323
      %v325 = vrot.slane %v324, 4
      %v326 = vadd.f32 %v324, %v325
      %v327 = vrot.slane %v326, 2
      %v328 = vadd.f32 %v326, %v327
      %v329 = vrot.slane %v328, 1
      %v330 = vadd.f32 %v328, %v329
      %v331 = vadd.f32 %v308, %v330
      %vm332 = vcmask 253952
      %333 = vst.msk [vmem:[#allocation2] sm:$0x1] %vm332, %v331
      %v334 = vld [vmem:[#allocation3] sm:$0x1]
      %v335 = vmul.f32 %v300, %v300
      %v336 = vmul.f32 %v301, %v301
      %v337 = vmul.f32 %v302, %v302
      %v338 = vmul.f32 %v303, %v303
      %v339 = vmul.f32 %v304, %v304
      %v340 = vmul.f32 %v305, %v305
      %v341 = vmul.f32 %v306, %v306
      %v342 = vmul.f32 %v307, %v307
      %v343 = vsel %vm309, %v335, 0.0
      %v344 = vsel %vm309, %v336, 0.0
      %v345 = vadd.f32 %v343, %v344
      %v346 = vsel %vm309, %v337, 0.0
      %v347 = vadd.f32 %v345, %v346
      %v348 = vsel %vm309, %v338, 0.0
      %v349 = vadd.f32 %v347, %v348
      %v350 = vsel %vm309, %v339, 0.0
      %v351 = vadd.f32 %v349, %v350
      %v352 = vsel %vm309, %v340, 0.0
      %v353 = vadd.f32 %v351, %v352
      %v354 = vsel %vm309, %v341, 0.0
      %v355 = vadd.f32 %v353, %v354
      %v356 = vsel %vm309, %v342, 0.0
      %v357 = vadd.f32 %v355, %v356
      %v358 = vrot.slane %v357, 4
      %v359 = vadd.f32 %v357, %v358
      %v360 = vrot.slane %v359, 2
      %v361 = vadd.f32 %v359, %v360
      %v362 = vrot.slane %v361, 1
      %v363 = vadd.f32 %v361, %v362
      %v364 = vadd.f32 %v334, %v363
      %365 = vst.msk [vmem:[#allocation3] sm:$0x1] %vm332, %v364
      // Predicated region
      $region45: #{resnet_stage.13} parent=39 // pred_check
        %p366 = pneg %p285
      $region46: #{resnet_stage.13} parent=39 // pred_check_branch
        %368 = sbr.rel (%p366) target = $region48
      $region47: #{resnet_stage.13} parent=39 // pred_region
        %v369 = vld [vmem:[#allocation2] sm:$0x1]
        %v370 = vld [vmem:[%s1] sm:$0xff]
        %v371 = vld [vmem:[%s1 + $0x8] sm:$0xff]
        %v372 = vld [vmem:[%s1 + $0x10] sm:$0xff]
        %v373 = vld [vmem:[%s1 + $0x18] sm:$0xff]
        %v375 = vsel %vm309, %v369, 0
        %377 = vmatprep.subr.mxu0 0.0
        %378 = vmatpush1.msra.mxu0 0.0
        %379 = vmatprep.subr.mxu0 0.0
        %380 = vmatpush1.msra.mxu0 0.0
        %381 = vmatprep.subr.mxu0 0.0
        %382 = vmatpush1.msra.mxu0 0.0
        %383 = vmatprep.subr.mxu0 0.0
        %384 = vmatpush1.msra.mxu0 0.0
        %385 = vmatprep.subr.mxu0 0.0
        %386 = vmatpush1.msra.mxu0 0.0
        %387 = vmatprep.subr.mxu0 0.0
        %388 = vmatpush1.msra.mxu0 0.0
        %389 = vmatprep.subr.mxu0 0.0
        %390 = vmatpush1.msra.mxu0 0.0
        %391 = vmatprep.subr.mxu0 0.0
        %392 = vmatpush1.msra.mxu0 0.0
        %393 = vmatprep.subr.mxu0 0.0
        %394 = vmatpush1.msra.mxu0 0.0
        %395 = vmatprep.subr.mxu0 0.0
        %396 = vmatpush1.msra.mxu0 0.0
        %397 = vmatprep.subr.mxu0 0.0
        %398 = vmatpush1.msra.mxu0 0.0
        %399 = vmatprep.subr.mxu0 0.0
        %400 = vmatpush1.msra.mxu0 0.0
        %401 = vmatprep.subr.mxu0 0.0
        %402 = vmatpush1.msra.mxu0 %v373
        %403 = vmatprep.subr.mxu0 0.0
        %404 = vmatpush1.msra.mxu0 %v372
        %405 = vmatprep.subr.mxu0 0.0
        %406 = vmatpush1.msra.mxu0 %v371
        %407 = vmatprep.subr.mxu0 0.0
        %408 = vmatpush1.msra.mxu0 %v370
        %409 = vmatprep.subr.mxu0 0.0
        %410 = vmatpush2.msra.mxu0 0.0
        %411 = vmatprep.subr.mxu0 0.0
        %412 = vmatpush2.msra.mxu0 0.0
        %413 = vmatprep.subr.mxu0 0.0
        %414 = vmatpush2.msra.mxu0 0.0
        %415 = vmatprep.subr.mxu0 0.0
        %416 = vmatpush2.msra.mxu0 0.0
        %417 = vmatprep.subr.mxu0 0.0
        %418 = vmatpush2.msra.mxu0 0.0
        %419 = vmatprep.subr.mxu0 0.0
        %420 = vmatpush2.msra.mxu0 0.0
        %421 = vmatprep.subr.mxu0 0.0
        %422 = vmatpush2.msra.mxu0 0.0
        %423 = vmatprep.subr.mxu0 0.0
        %424 = vmatpush2.msra.mxu0 0.0
        %425 = vmatprep.subr.mxu0 0.0
        %426 = vmatpush2.msra.mxu0 0.0
        %427 = vmatprep.subr.mxu0 0.0
        %428 = vmatpush2.msra.mxu0 0.0
        %429 = vmatprep.subr.mxu0 0.0
        %430 = vmatpush2.msra.mxu0 0.0
        %431 = vmatprep.subr.mxu0 0.0
        %432 = vmatpush2.msra.mxu0 0.0
        %433 = vmatprep.subr.mxu0 0.0
        %434 = vmatpush2.msra.mxu0 0.0
        %435 = vmatprep.subr.mxu0 0.0
        %436 = vmatpush2.msra.mxu0 0.0
        %437 = vmatprep.subr.mxu0 0.0
        %438 = vmatpush2.msra.mxu0 0.0
        %439 = vmatprep.subr.mxu0 0.0
        %440 = vmatpush2.msra.mxu0 0.0
        %441 = vmatprep.mubr.f32.mxu0 0.0
        %442 = vmatmul.mubr.f32.gmra.mxu0 %v375
        %v443 = vpop.f32.mrf.mxu0
        %v444 = vadd.f32 0.0, %v443
        %v445 = vpop.f32.mrf.mxu0
        %446 = vdwg.mxu0
        %v447 = vld [vmem:[#allocation3] sm:$0x1]
        %v449 = vsel %vm309, %v447, 0
        %451 = vmatprep.subr.mxu0 0.0
        %452 = vmatpush1.msra.mxu0 0.0
        %453 = vmatprep.subr.mxu0 0.0
        %454 = vmatpush1.msra.mxu0 0.0
        %455 = vmatprep.subr.mxu0 0.0
        %456 = vmatpush1.msra.mxu0 0.0
        %457 = vmatprep.subr.mxu0 0.0
        %458 = vmatpush1.msra.mxu0 0.0
        %459 = vmatprep.subr.mxu0 0.0
        %460 = vmatpush1.msra.mxu0 0.0
        %461 = vmatprep.subr.mxu0 0.0
        %462 = vmatpush1.msra.mxu0 0.0
        %463 = vmatprep.subr.mxu0 0.0
        %464 = vmatpush1.msra.mxu0 0.0
        %465 = vmatprep.subr.mxu0 0.0
        %466 = vmatpush1.msra.mxu0 0.0
        %467 = vmatprep.subr.mxu0 0.0
        %468 = vmatpush1.msra.mxu0 0.0
        %469 = vmatprep.subr.mxu0 0.0
        %470 = vmatpush1.msra.mxu0 0.0
        %471 = vmatprep.subr.mxu0 0.0
        %472 = vmatpush1.msra.mxu0 0.0
        %473 = vmatprep.subr.mxu0 0.0
        %474 = vmatpush1.msra.mxu0 0.0
        %475 = vmatprep.subr.mxu0 0.0
        %476 = vmatpush1.msra.mxu0 %v373
        %477 = vmatprep.subr.mxu0 0.0
        %478 = vmatpush1.msra.mxu0 %v372
        %479 = vmatprep.subr.mxu0 0.0
        %480 = vmatpush1.msra.mxu0 %v371
        %481 = vmatprep.subr.mxu0 0.0
        %482 = vmatpush1.msra.mxu0 %v370
        %483 = vmatprep.subr.mxu0 0.0
        %484 = vmatpush2.msra.mxu0 0.0
        %485 = vmatprep.subr.mxu0 0.0
        %486 = vmatpush2.msra.mxu0 0.0
        %487 = vmatprep.subr.mxu0 0.0
        %488 = vmatpush2.msra.mxu0 0.0
        %489 = vmatprep.subr.mxu0 0.0
        %490 = vmatpush2.msra.mxu0 0.0
        %491 = vmatprep.subr.mxu0 0.0
        %492 = vmatpush2.msra.mxu0 0.0
        %493 = vmatprep.subr.mxu0 0.0
        %494 = vmatpush2.msra.mxu0 0.0
        %495 = vmatprep.subr.mxu0 0.0
        %496 = vmatpush2.msra.mxu0 0.0
        %497 = vmatprep.subr.mxu0 0.0
        %498 = vmatpush2.msra.mxu0 0.0
        %499 = vmatprep.subr.mxu0 0.0
        %500 = vmatpush2.msra.mxu0 0.0
        %501 = vmatprep.subr.mxu0 0.0
        %502 = vmatpush2.msra.mxu0 0.0
        %503 = vmatprep.subr.mxu0 0.0
        %504 = vmatpush2.msra.mxu0 0.0
        %505 = vmatprep.subr.mxu0 0.0
        %506 = vmatpush2.msra.mxu0 0.0
        %507 = vmatprep.subr.mxu0 0.0
        %508 = vmatpush2.msra.mxu0 0.0
        %509 = vmatprep.subr.mxu0 0.0
        %510 = vmatpush2.msra.mxu0 0.0
        %511 = vmatprep.subr.mxu0 0.0
        %512 = vmatpush2.msra.mxu0 0.0
        %513 = vmatprep.subr.mxu0 0.0
        %514 = vmatpush2.msra.mxu0 0.0
        %515 = vmatprep.mubr.f32.mxu0 0.0
        %516 = vmatmul.mubr.f32.gmra.mxu0 %v449
        %v517 = vpop.f32.mrf.mxu0
        %v518 = vadd.f32 0.0, %v517
        %v519 = vpop.f32.mrf.mxu0
        %520 = vdwg.mxu0
        %v521 = vrcp.pop 64.0
        %v522 = vmul.f32 %v444, %v521
        %v523 = vmul.f32 %v518, %v521
        %v524 = vmul.f32 %v522, %v522
        %v525 = vsub.f32 %v523, %v524
        %v526 = vmax.f32 %v525, 0.0
        %v527 = vadd.f32 %v526, 1e-05
        %v528 = vrsqrt.pop %v527
        %v529 = vld [vmem:[%s2] sm:$0xff]
        %v530 = vld [vmem:[%s2 + $0x8] sm:$0xff]
        %v531 = vld [vmem:[%s2 + $0x10] sm:$0xff]
        %v532 = vld [vmem:[%s2 + $0x18] sm:$0xff]
        %v534 = vsel %vm309, %v522, 0
        %536 = vmatprep.subr.mxu0 0.0
        %537 = vmatpush1.msra.mxu0 0.0
        %538 = vmatprep.subr.mxu0 0.0
        %539 = vmatpush1.msra.mxu0 0.0
        %540 = vmatprep.subr.mxu0 0.0
        %541 = vmatpush1.msra.mxu0 0.0
        %542 = vmatprep.subr.mxu0 0.0
        %543 = vmatpush1.msra.mxu0 0.0
        %544 = vmatprep.subr.mxu0 0.0
        %545 = vmatpush1.msra.mxu0 0.0
        %546 = vmatprep.subr.mxu0 0.0
        %547 = vmatpush1.msra.mxu0 0.0
        %548 = vmatprep.subr.mxu0 0.0
        %549 = vmatpush1.msra.mxu0 0.0
        %550 = vmatprep.subr.mxu0 0.0
        %551 = vmatpush1.msra.mxu0 0.0
        %552 = vmatprep.subr.mxu0 0.0
        %553 = vmatpush1.msra.mxu0 0.0
        %554 = vmatprep.subr.mxu0 0.0
        %555 = vmatpush1.msra.mxu0 0.0
        %556 = vmatprep.subr.mxu0 0.0
        %557 = vmatpush1.msra.mxu0 0.0
        %558 = vmatprep.subr.mxu0 0.0
        %559 = vmatpush1.msra.mxu0 0.0
        %560 = vmatprep.subr.mxu0 0.0
        %561 = vmatpush1.msra.mxu0 %v532
        %562 = vmatprep.subr.mxu0 0.0
        %563 = vmatpush1.msra.mxu0 %v531
        %564 = vmatprep.subr.mxu0 0.0
        %565 = vmatpush1.msra.mxu0 %v530
        %566 = vmatprep.subr.mxu0 0.0
        %567 = vmatpush1.msra.mxu0 %v529
        %568 = vmatprep.subr.mxu0 0.0
        %569 = vmatpush2.msra.mxu0 0.0
        %570 = vmatprep.subr.mxu0 0.0
        %571 = vmatpush2.msra.mxu0 0.0
        %572 = vmatprep.subr.mxu0 0.0
        %573 = vmatpush2.msra.mxu0 0.0
        %574 = vmatprep.subr.mxu0 0.0
        %575 = vmatpush2.msra.mxu0 0.0
        %576 = vmatprep.subr.mxu0 0.0
        %577 = vmatpush2.msra.mxu0 0.0
        %578 = vmatprep.subr.mxu0 0.0
        %579 = vmatpush2.msra.mxu0 0.0
        %580 = vmatprep.subr.mxu0 0.0
        %581 = vmatpush2.msra.mxu0 0.0
        %582 = vmatprep.subr.mxu0 0.0
        %583 = vmatpush2.msra.mxu0 0.0
        %584 = vmatprep.subr.mxu0 0.0
        %585 = vmatpush2.msra.mxu0 0.0
        %586 = vmatprep.subr.mxu0 0.0
        %587 = vmatpush2.msra.mxu0 0.0
        %588 = vmatprep.subr.mxu0 0.0
        %589 = vmatpush2.msra.mxu0 0.0
        %590 = vmatprep.subr.mxu0 0.0
        %591 = vmatpush2.msra.mxu0 0.0
        %592 = vmatprep.subr.mxu0 0.0
        %593 = vmatpush2.msra.mxu0 0.0
        %594 = vmatprep.subr.mxu0 0.0
        %595 = vmatpush2.msra.mxu0 0.0
        %596 = vmatprep.subr.mxu0 0.0
        %597 = vmatpush2.msra.mxu0 0.0
        %598 = vmatprep.subr.mxu0 0.0
        %599 = vmatpush2.msra.mxu0 0.0
        %600 = vmatprep.mubr.f32.mxu0 0.0
        %601 = vmatmul.mubr.f32.gmra.mxu0 %v534
        %v602 = vpop.f32.mrf.mxu0
        %v603 = vadd.f32 0.0, %v602
        %v604 = vpop.f32.mrf.mxu0
        %605 = vdwg.mxu0
        %v607 = vsel %vm309, %v528, 0
        %609 = vmatprep.subr.mxu0 0.0
        %610 = vmatpush1.msra.mxu0 0.0
        %611 = vmatprep.subr.mxu0 0.0
        %612 = vmatpush1.msra.mxu0 0.0
        %613 = vmatprep.subr.mxu0 0.0
        %614 = vmatpush1.msra.mxu0 0.0
        %615 = vmatprep.subr.mxu0 0.0
        %616 = vmatpush1.msra.mxu0 0.0
        %617 = vmatprep.subr.mxu0 0.0
        %618 = vmatpush1.msra.mxu0 0.0
        %619 = vmatprep.subr.mxu0 0.0
        %620 = vmatpush1.msra.mxu0 0.0
        %621 = vmatprep.subr.mxu0 0.0
        %622 = vmatpush1.msra.mxu0 0.0
        %623 = vmatprep.subr.mxu0 0.0
        %624 = vmatpush1.msra.mxu0 0.0
        %625 = vmatprep.subr.mxu0 0.0
        %626 = vmatpush1.msra.mxu0 0.0
        %627 = vmatprep.subr.mxu0 0.0
        %628 = vmatpush1.msra.mxu0 0.0
        %629 = vmatprep.subr.mxu0 0.0
        %630 = vmatpush1.msra.mxu0 0.0
        %631 = vmatprep.subr.mxu0 0.0
        %632 = vmatpush1.msra.mxu0 0.0
        %633 = vmatprep.subr.mxu0 0.0
        %634 = vmatpush1.msra.mxu0 %v532
        %635 = vmatprep.subr.mxu0 0.0
        %636 = vmatpush1.msra.mxu0 %v531
        %637 = vmatprep.subr.mxu0 0.0
        %638 = vmatpush1.msra.mxu0 %v530
        %639 = vmatprep.subr.mxu0 0.0
        %640 = vmatpush1.msra.mxu0 %v529
        %641 = vmatprep.subr.mxu0 0.0
        %642 = vmatpush2.msra.mxu0 0.0
        %643 = vmatprep.subr.mxu0 0.0
        %644 = vmatpush2.msra.mxu0 0.0
        %645 = vmatprep.subr.mxu0 0.0
        %646 = vmatpush2.msra.mxu0 0.0
        %647 = vmatprep.subr.mxu0 0.0
        %648 = vmatpush2.msra.mxu0 0.0
        %649 = vmatprep.subr.mxu0 0.0
        %650 = vmatpush2.msra.mxu0 0.0
        %651 = vmatprep.subr.mxu0 0.0
        %652 = vmatpush2.msra.mxu0 0.0
        %653 = vmatprep.subr.mxu0 0.0
        %654 = vmatpush2.msra.mxu0 0.0
        %655 = vmatprep.subr.mxu0 0.0
        %656 = vmatpush2.msra.mxu0 0.0
        %657 = vmatprep.subr.mxu0 0.0
        %658 = vmatpush2.msra.mxu0 0.0
        %659 = vmatprep.subr.mxu0 0.0
        %660 = vmatpush2.msra.mxu0 0.0
        %661 = vmatprep.subr.mxu0 0.0
        %662 = vmatpush2.msra.mxu0 0.0
        %663 = vmatprep.subr.mxu0 0.0
        %664 = vmatpush2.msra.mxu0 0.0
        %665 = vmatprep.subr.mxu0 0.0
        %666 = vmatpush2.msra.mxu0 0.0
        %667 = vmatprep.subr.mxu0 0.0
        %668 = vmatpush2.msra.mxu0 0.0
        %669 = vmatprep.subr.mxu0 0.0
        %670 = vmatpush2.msra.mxu0 0.0
        %671 = vmatprep.subr.mxu0 0.0
        %672 = vmatpush2.msra.mxu0 0.0
        %673 = vmatprep.mubr.f32.mxu0 0.0
        %674 = vmatmul.mubr.f32.gmra.mxu0 %v607
        %v675 = vpop.f32.mrf.mxu0
        %v676 = vadd.f32 0.0, %v675
        %v677 = vpop.f32.mrf.mxu0
        %678 = vdwg.mxu0
        %v679 = vld [vmem:[%s3] sm:$0x1]
        %v680 = vmul.f32 %v679, %v676
        %v681 = vld [vmem:[%s4] sm:$0x1]
        %v682 = vmul.f32 %v603, %v680
        %v683 = vsub.f32 %v681, %v682
        %684 = vst.msk [vmem:[%s281] sm:$0x1] %vm332, %v680
        %685 = vst.msk [vmem:[%s284] sm:$0x1] %vm332, %v683
      $region48: #{resnet_stage.13} parent=39 // pred_fallthru
        _
      %p686 = scmp.lt.s32.totalorder %s22, 1
      %s687 = scalar_select %p686, %s22, 1
      %s688 = scalar_lea.vmem %s5, %s687
      %p689 = scmp.lt.s32.totalorder %s22, 1
      %s690 = scalar_select %p689, %s22, 1
      %s691 = scalar_lea.vmem %s6, %s690
      // Predicated region
      $region49: #{resnet_stage.13} parent=39 // pred_check
        %p692 = pneg %p160
      $region50: #{resnet_stage.13} parent=39 // pred_check_branch
        %694 = sbr.rel (%p692) target = $region52
      $region51: #{resnet_stage.13} parent=39 // pred_region
        _
      $region52: #{resnet_stage.13} parent=39 // pred_fallthru
        _
      // Predicated region
      $region53: #{resnet_stage.13} parent=39 // pred_check
        %p695 = pneg %p186
      $region54: #{resnet_stage.13} parent=39 // pred_check_branch
        %697 = sbr.rel (%p695) target = $region56
      $region55: #{resnet_stage.13} parent=39 // pred_region
        _
      $region56: #{resnet_stage.13} parent=39 // pred_fallthru
        _
    $region40: #{resnet_stage.13} parent=5 // pred_fallthru
      _
    %p698 = scmp.le.s32.totalorder 2, %s13
    // Predicated region
    $region57: #{resnet_stage.13} parent=5 // pred_check
      %p699 = pneg %p698
    $region58: #{resnet_stage.13} parent=5 // pred_check_branch
      %701 = sbr.rel (%p699) target = $region60
    $region59: #{resnet_stage.13} parent=5 // pred_region
      %s702 = ssub.s32 %s13, 2
      // Predicated region
      $region61: #{resnet_stage.13} parent=59 // pred_check
        %p703 = pneg %p166
      $region62: #{resnet_stage.13} parent=59 // pred_check_branch
        %705 = sbr.rel (%p703) target = $region64
      $region63: #{resnet_stage.13} parent=59 // pred_region
        %p706 = scmp.lt.s32.totalorder %s24, 1
        %s707 = scalar_select %p706, %s24, 1
        %s708 = scalar_lea.vmem %s5, %s707
      $region64: #{resnet_stage.13} parent=59 // pred_fallthru
        _
      // Predicated region
      $region65: #{resnet_stage.13} parent=59 // pred_check
        %p709 = pneg %p192
      $region66: #{resnet_stage.13} parent=59 // pred_check_branch
        %711 = sbr.rel (%p709) target = $region68
      $region67: #{resnet_stage.13} parent=59 // pred_region
        %p712 = scmp.lt.s32.totalorder %s24, 1
        %s713 = scalar_select %p712, %s24, 1
        %s714 = scalar_lea.vmem %s6, %s713
      $region68: #{resnet_stage.13} parent=59 // pred_fallthru
        _
    $region60: #{resnet_stage.13} parent=5 // pred_fallthru
      _
  $region6: #{resnet_stage.13} parent=0 // loop_footer
    %s17 = sadd.s32 1, %s13
  $region7: #{resnet_stage.13} parent=0 // loop_footer_branch
    %12 = sbr.rel target = $region3
  $region8: #{resnet_stage.13} parent=0 // loop_exit
    _

// kernel: resnet_stage.15
$region0: #{resnet_stage.15}
  #allocation0 [shape = 'u32[]', space=smem, size = 0x4, offset = 0x4, fixed_abs, tag = 'smem constant byte address 0x4 - core index']
  #allocation1 [shape = 'u32[144,128]{1,0:T(1,128)}', space=vmem, size = 0x12000, scoped, tag = 'internal scratch']
  #allocation2 [shape = 'f32[64,32]{1,0:T(8,128)}', space=vmem, size = 0x8000, scoped, tag = 'scratch operand']
  %s0 = inlined_call_operand.vmem [shape: bf16[2,64,32], index: 0, kind: input, shape index: {}]
  %s1 = inlined_call_operand.vmem [shape: f32[2,1,32], index: 1, kind: input, shape index: {}]
  %s2 = inlined_call_operand.vmem [shape: f32[2,1,32], index: 2, kind: input, shape index: {}]
  %s3 = inlined_call_operand.vmem [shape: bf16[32,32], index: 3, kind: input, shape index: {}]
  %s4 = inlined_call_operand.vmem [shape: bf16[2,64,32], index: 4, kind: output, shape index: {}]
  %s5 = sld [smem:[#allocation0]]
  $region57: #{resnet_stage.15} parent=0
    _
  %s7 = ssub.s32 1, %s5
  %s8 = scalar_select 0, %s7, %s5
  loop: start=0, step=1, limit=4
  $region2: #{resnet_stage.15} parent=0 // loop_pre_header
    _
  $region3: #{resnet_stage.15} parent=0 // loop_header
    %s10 = sphi 0, %s14
    %p11 = scmp.ge.s32.totalorder %s10, 4
    %s17 = sphi 0, %s43
    %s18 = sphi 0, %s39
    %s19 = sphi 0, %s35
    %s20 = sphi 0, %s31
    %s21 = sphi 0, %s17
    %s22 = sphi 0, %s18
    %s23 = sphi 0, %s19
    %s24 = sphi 0, %s20
    %s25 = sphi 0, %s21
    %s26 = sphi 0, %s22
    %s27 = sphi 0, %s23
    %s28 = sphi 0, %s24
    %s50 = sphi 0, %s52
    %s53 = sphi 0, %s50
    %s54 = sphi 0, %s53
    %s70 = sphi 0, %s54
    %s78 = sphi 0, %s80
    %s81 = sphi 0, %s78
    %s82 = sphi 0, %s81
    %s98 = sphi 0, %s82
    %s106 = sphi 0, %s108
    %s109 = sphi 0, %s106
    %s110 = sphi 0, %s109
    %s126 = sphi 0, %s110
    %s134 = sphi 0, %s136
    %s137 = sphi 0, %s134
    %s138 = sphi 0, %s137
    %s154 = sphi 0, %s138
    %s164 = sphi 0, %s166
    %s167 = sphi 0, %s164
    %s168 = sphi 0, %s167
    %s184 = sphi 0, %s168
  $region4: #{resnet_stage.15} parent=0 // loop_header_branch
    %13 = sbr.rel (%p11) target = $region8
  $region5: #{resnet_stage.15} parent=0 // loop_body
    %s15 = ssub.s32 %s10, 1
    %s16 = ssub.s32 %s10, 2
    %s29 = sadd.s32 1, %s20
    %p30 = scmp.ge.s32.totalorder %s29, 1
    %s31 = scalar_select %p30, 0, %s29
    %s32 = sadd.s32 1, %s19
    %s33 = scalar_select %p30, %s32, %s19
    %p34 = scmp.ge.s32.totalorder %s33, 1
    %s35 = scalar_select %p34, 0, %s33
    %s36 = sadd.s32 1, %s18
    %s37 = scalar_select %p34, %s36, %s18
    %p38 = scmp.ge.s32.totalorder %s37, 1
    %s39 = scalar_select %p38, 0, %s37
    %s40 = sadd.s32 1, %s17
    %s41 = scalar_select %p38, %s40, %s17
    %p42 = scmp.ge.s32.totalorder %s41, 2
    %s43 = scalar_select %p42, 0, %s41
    %s44 = ssub.s32 %s17, %s43
    %s45 = ssub.s32 %s18, %s39
    %s46 = sor.u32 %s44, %s45
    %s47 = ssub.s32 %s20, %s31
    %s48 = sor.u32 %s46, %s47
    %p49 = scmp.eq.s32.totalorder %s48, 0
    %s51 = sadd.s32 %s50, 1
    %s52 = scalar_select %p49, %s50, %s51
    %p55 = pneg %p49
    %p56 = scmp.eq.s32.totalorder %s10, 1
    %p57 = por %p55, %p56
    %p58 = scmp.ne.s32.totalorder %s50, %s53
    %p59 = scmp.eq.s32.totalorder %s10, 0
    %p60 = por %p58, %p59
    %p61 = scmp.ne.s32.totalorder %s50, %s53
    %p62 = scmp.eq.s32.totalorder %s15, 1
    %p63 = por %p61, %p62
    %p64 = scmp.ne.s32.totalorder %s53, %s54
    %p65 = scmp.eq.s32.totalorder %s15, 0
    %p66 = por %p64, %p65
    %p67 = scmp.ne.s32.totalorder %s53, %s54
    %p68 = scmp.eq.s32.totalorder %s16, 1
    %p69 = por %p67, %p68
    %p71 = scmp.ne.s32.totalorder %s54, %s70
    %p72 = scmp.eq.s32.totalorder %s16, 0
    %p73 = por %p71, %p72
    %s74 = ssub.s32 %s17, %s43
    %s75 = ssub.s32 %s20, %s31
    %s76 = sor.u32 %s74, %s75
    %p77 = scmp.eq.s32.totalorder %s76, 0
    %s79 = sadd.s32 %s78, 1
    %s80 = scalar_select %p77, %s78, %s79
    %p83 = pneg %p77
    %p84 = scmp.eq.s32.totalorder %s10, 1
    %p85 = por %p83, %p84
    %p86 = scmp.ne.s32.totalorder %s78, %s81
    %p87 = scmp.eq.s32.totalorder %s10, 0
    %p88 = por %p86, %p87
    %p89 = scmp.ne.s32.totalorder %s78, %s81
    %p90 = scmp.eq.s32.totalorder %s15, 1
    %p91 = por %p89, %p90
    %p92 = scmp.ne.s32.totalorder %s81, %s82
    %p93 = scmp.eq.s32.totalorder %s15, 0
    %p94 = por %p92, %p93
    %p95 = scmp.ne.s32.totalorder %s81, %s82
    %p96 = scmp.eq.s32.totalorder %s16, 1
    %p97 = por %p95, %p96
    %p99 = scmp.ne.s32.totalorder %s82, %s98
    %p100 = scmp.eq.s32.totalorder %s16, 0
    %p101 = por %p99, %p100
    %s102 = ssub.s32 %s17, %s43
    %s103 = ssub.s32 %s20, %s31
    %s104 = sor.u32 %s102, %s103
    %p105 = scmp.eq.s32.totalorder %s104, 0
    %s107 = sadd.s32 %s106, 1
    %s108 = scalar_select %p105, %s106, %s107
    %p111 = pneg %p105
    %p112 = scmp.eq.s32.totalorder %s10, 1
    %p113 = por %p111, %p112
    %p114 = scmp.ne.s32.totalorder %s106, %s109
    %p115 = scmp.eq.s32.totalorder %s10, 0
    %p116 = por %p114, %p115
    %p117 = scmp.ne.s32.totalorder %s106, %s109
    %p118 = scmp.eq.s32.totalorder %s15, 1
    %p119 = por %p117, %p118
    %p120 = scmp.ne.s32.totalorder %s109, %s110
    %p121 = scmp.eq.s32.totalorder %s15, 0
    %p122 = por %p120, %p121
    %p123 = scmp.ne.s32.totalorder %s109, %s110
    %p124 = scmp.eq.s32.totalorder %s16, 1
    %p125 = por %p123, %p124
    %p127 = scmp.ne.s32.totalorder %s110, %s126
    %p128 = scmp.eq.s32.totalorder %s16, 0
    %p129 = por %p127, %p128
    %s130 = ssub.s32 %s20, %s31
    %s131 = ssub.s32 %s19, %s35
    %s132 = sor.u32 %s130, %s131
    %p133 = scmp.eq.s32.totalorder %s132, 0
    %s135 = sadd.s32 %s134, 1
    %s136 = scalar_select %p133, %s134, %s135
    %p139 = pneg %p133
    %p140 = scmp.eq.s32.totalorder %s10, 1
    %p141 = por %p139, %p140
    %p142 = scmp.ne.s32.totalorder %s134, %s137
    %p143 = scmp.eq.s32.totalorder %s10, 0
    %p144 = por %p142, %p143
    %p145 = scmp.ne.s32.totalorder %s134, %s137
    %p146 = scmp.eq.s32.totalorder %s15, 1
    %p147 = por %p145, %p146
    %p148 = scmp.ne.s32.totalorder %s137, %s138
    %p149 = scmp.eq.s32.totalorder %s15, 0
    %p150 = por %p148, %p149
    %p151 = scmp.ne.s32.totalorder %s137, %s138
    %p152 = scmp.eq.s32.totalorder %s16, 1
    %p153 = por %p151, %p152
    %p155 = scmp.ne.s32.totalorder %s138, %s154
    %p156 = scmp.eq.s32.totalorder %s16, 0
    %p157 = por %p155, %p156
    %s158 = ssub.s32 %s17, %s43
    %s159 = ssub.s32 %s18, %s39
    %s160 = sor.u32 %s158, %s159
    %s161 = ssub.s32 %s19, %s35
    %s162 = sor.u32 %s160, %s161
    %p163 = scmp.eq.s32.totalorder %s162, 0
    %s165 = sadd.s32 %s164, 1
    %s166 = scalar_select %p163, %s164, %s165
    %p169 = pneg %p163
    %p170 = scmp.eq.s32.totalorder %s10, 1
    %p171 = por %p169, %p170
    %p172 = scmp.ne.s32.totalorder %s164, %s167
    %p173 = scmp.eq.s32.totalorder %s10, 0
    %p174 = por %p172, %p173
    %p175 = scmp.ne.s32.totalorder %s164, %s167
    %p176 = scmp.eq.s32.totalorder %s15, 1
    %p177 = por %p175, %p176
    %p178 = scmp.ne.s32.totalorder %s167, %s168
    %p179 = scmp.eq.s32.totalorder %s15, 0
    %p180 = por %p178, %p179
    %p181 = scmp.ne.s32.totalorder %s167, %s168
    %p182 = scmp.eq.s32.totalorder %s16, 1
    %p183 = por %p181, %p182
    %p185 = scmp.ne.s32.totalorder %s168, %s184
    %p186 = scmp.eq.s32.totalorder %s16, 0
    %p187 = por %p185, %p186
    %p188 = scmp.le.s32.totalorder 1, %s10
    %p189 = scmp.lt.s32.totalorder %s10, 3
    %p190 = pnand %p188, %p189
    %p191 = pneg %p190
    // Predicated region
    $region9: #{resnet_stage.15} parent=5 // pred_check
      _
    $region10: #{resnet_stage.15} parent=5 // pred_check_branch
      %193 = sbr.rel (%p190) target = $region12
    $region11: #{resnet_stage.15} parent=5 // pred_region
      %s194 = ssub.s32 %s10, 1
      // Predicated region
      $region13: #{resnet_stage.15} parent=11 // pred_check
        %p195 = pneg %p150
      $region14: #{resnet_stage.15} parent=11 // pred_check_branch
        %197 = sbr.rel (%p195) target = $region16
      $region15: #{resnet_stage.15} parent=11 // pred_region
        %s198 = smul.u32 4, %s24
        %p199 = scmp.lt.s32.totalorder %s198, 3
        %s200 = scalar_select %p199, %s198, 3
        %p201 = scmp.lt.s32.totalorder %s23, 0
        %s202 = scalar_select %p201, %s23, 0
        %s203 = sadd.s32 %s202, %s200
        %s204 = smul.addr %s203, 4
        %s205 = scalar_lea.vmem %s3, %s204
        %s206 = smul.u32 4, %s24
      $region16: #{resnet_stage.15} parent=11 // pred_fallthru
        _
    $region12: #{resnet_stage.15} parent=5 // pred_fallthru
      _
    %p207 = scmp.lt.s32.totalorder %s10, 2
    // Predicated region
    $region17: #{resnet_stage.15} parent=5 // pred_check
      %p208 = pneg %p207
    $region18: #{resnet_stage.15} parent=5 // pred_check_branch
      %210 = sbr.rel (%p208) target = $region20
    $region19: #{resnet_stage.15} parent=5 // pred_region
      // Predicated region
      $region21: #{resnet_stage.15} parent=19 // pred_check
        %p211 = pneg %p60
      $region22: #{resnet_stage.15} parent=19 // pred_check_branch
        %213 = sbr.rel (%p211) target = $region24
      $region23: #{resnet_stage.15} parent=19 // pred_region
        %s214 = smul.u32 8, %s18
        %p215 = scmp.lt.s32.totalorder %s17, 1
        %s216 = scalar_select %p215, %s17, 1
        %p217 = scmp.lt.s32.totalorder %s214, 7
        %s218 = scalar_select %p217, %s214, 7
        %p219 = scmp.lt.s32.totalorder %s20, 0
        %s220 = scalar_select %p219, %s20, 0
        %s221 = sadd.s32 %s220, %s218
        %s222 = smul.addr %s216, 8
        %s223 = sadd.s32 %s221, %s222
        %s224 = smul.addr %s223, 4
        %s225 = scalar_lea.vmem %s0, %s224
        %s226 = smul.u32 8, %s18
      $region24: #{resnet_stage.15} parent=19 // pred_fallthru
        _
      // Predicated region
      $region25: #{resnet_stage.15} parent=19 // pred_check
        %p227 = pneg %p88
      $region26: #{resnet_stage.15} parent=19 // pred_check_branch
        %229 = sbr.rel (%p227) target = $region28
      $region27: #{resnet_stage.15} parent=19 // pred_region
        %p230 = scmp.lt.s32.totalorder %s17, 1
        %s231 = scalar_select %p230, %s17, 1
        %p232 = scmp.lt.s32.totalorder %s20, 0
        %s233 = scalar_select %p232, %s20, 0
        %s234 = sadd.s32 %s233, %s231
        %s235 = scalar_lea.vmem %s1, %s234
      $region28: #{resnet_stage.15} parent=19 // pred_fallthru
        _
      // Predicated region
      $region29: #{resnet_stage.15} parent=19 // pred_check
        %p236 = pneg %p116
      $region30: #{resnet_stage.15} parent=19 // pred_check_branch
        %238 = sbr.rel (%p236) target = $region32
      $region31: #{resnet_stage.15} parent=19 // pred_region
        %p239 = scmp.lt.s32.totalorder %s17, 1
        %s240 = scalar_select %p239, %s17, 1
        %p241 = scmp.lt.s32.totalorder %s20, 0
        %s242 = scalar_select %p241, %s20, 0
        %s243 = sadd.s32 %s242, %s240
        %s244 = scalar_lea.vmem %s2, %s243
      $region32: #{resnet_stage.15} parent=19 // pred_fallthru
        _
    $region20: #{resnet_stage.15} parent=5 // pred_fallthru
      _
    %p245 = scmp.le.s32.totalorder 1, %s10
    %p246 = scmp.lt.s32.totalorder %s10, 3
    %p247 = pnand %p245, %p246
    %p248 = pneg %p247
    // Predicated region
    $region33: #{resnet_stage.15} parent=5 // pred_check
      _
    $region34: #{resnet_stage.15} parent=5 // pred_check_branch
      %250 = sbr.rel (%p247) target = $region36
    $region35: #{resnet_stage.15} parent=5 // pred_region
      %s251 = ssub.s32 %s10, 1
      %s252 = smul.u32 8, %s22
      %p253 = scmp.lt.s32.totalorder %s21, 1
      %s254 = scalar_select %p253, %s21, 1
      %p255 = scmp.lt.s32.totalorder %s252, 7
      %s256 = scalar_select %p255, %s252, 7
      %p257 = scmp.lt.s32.totalorder %s24, 0
      %s258 = scalar_select %p257, %s24, 0
      %s259 = sadd.s32 %s258, %s256
      %s260 = smul.addr %s254, 8
      %s261 = sadd.s32 %s259, %s260
      %s262 = smul.addr %s261, 4
      %s263 = scalar_lea.vmem %s0, %s262
      %p264 = pneg %p66
      %p265 = pneg %p63
      %p266 = scmp.lt.s32.totalorder %s21, 1
      %s267 = scalar_select %p266, %s21, 1
      %p268 = scmp.lt.s32.totalorder %s24, 0
      %s269 = scalar_select %p268, %s24, 0
      %s270 = sadd.s32 %s269, %s267
      %s271 = scalar_lea.vmem %s1, %s270
      %p272 = pneg %p94
      %p273 = pneg %p91
      %p274 = scmp.lt.s32.totalorder %s21, 1
      %s275 = scalar_select %p274, %s21, 1
      %p276 = scmp.lt.s32.totalorder %s24, 0
      %s277 = scalar_select %p276, %s24, 0
      %s278 = sadd.s32 %s277, %s275
      %s279 = scalar_lea.vmem %s2, %s278
      %p280 = pneg %p122
      %p281 = pneg %p119
      %s282 = smul.u32 4, %s24
      %p283 = scmp.lt.s32.totalorder %s282, 3
      %s284 = scalar_select %p283, %s282, 3
      %p285 = scmp.lt.s32.totalorder %s23, 0
      %s286 = scalar_select %p285, %s23, 0
      %s287 = sadd.s32 %s286, %s284
      %s288 = smul.addr %s287, 4
      %s289 = scalar_lea.vmem %s3, %s288
      %p290 = pneg %p150
      %p291 = pneg %p147
      %p292 = pneg %p180
      %p293 = pneg %p177
      %s294 = smul.u32 8, %s22
      %p295 = scmp.lt.s32.totalorder %s21, 1
      %s296 = scalar_select %p295, %s21, 1
      %p297 = scmp.lt.s32.totalorder %s294, 7
      %s298 = scalar_select %p297, %s294, 7
      %p299 = scmp.lt.s32.totalorder %s23, 0
      %s300 = scalar_select %p299, %s23, 0
      %s301 = sadd.s32 %s300, %s298
      %s302 = smul.addr %s296, 8
      %s303 = sadd.s32 %s301, %s302
      %s304 = smul.addr %s303, 4
      %s305 = scalar_lea.vmem %s4, %s304
      %s306 = smul.u32 8, %s22
      %p307 = scmp.lt.s32.totalorder %s21, 1
      %s308 = scalar_select %p307, %s21, 1
      %p309 = scmp.lt.s32.totalorder %s306, 7
      %s310 = scalar_select %p309, %s306, 7
      %p311 = scmp.lt.s32.totalorder %s24, 0
      %s312 = scalar_select %p311, %s24, 0
      %s313 = sadd.s32 %s312, %s310
      %s314 = smul.addr %s308, 8
      %s315 = sadd.s32 %s313, %s314
      %s316 = smul.addr %s315, 4
      %s317 = scalar_lea.vmem %s0, %s316
      %s318 = smul.u32 8, %s22
      %p319 = scmp.lt.s32.totalorder %s21, 1
      %s320 = scalar_select %p319, %s21, 1
      %p321 = scmp.lt.s32.totalorder %s24, 0
      %s322 = scalar_select %p321, %s24, 0
      %s323 = sadd.s32 %s322, %s320
      %s324 = scalar_lea.vmem %s1, %s323
      %p325 = scmp.lt.s32.totalorder %s21, 1
      %s326 = scalar_select %p325, %s21, 1
      %p327 = scmp.lt.s32.totalorder %s24, 0
      %s328 = scalar_select %p327, %s24, 0
      %s329 = sadd.s32 %s328, %s326
      %s330 = scalar_lea.vmem %s2, %s329
      %s331 = smul.u32 4, %s24
      %p332 = scmp.lt.s32.totalorder %s331, 3
      %s333 = scalar_select %p332, %s331, 3
      %p334 = scmp.lt.s32.totalorder %s23, 0
      %s335 = scalar_select %p334, %s23, 0
      %s336 = sadd.s32 %s335, %s333
      %s337 = smul.addr %s336, 4
      %s338 = scalar_lea.vmem %s3, %s337
      %s339 = smul.u32 4, %s24
      %s340 = smul.u32 8, %s22
      %p341 = scmp.lt.s32.totalorder %s21, 1
      %s342 = scalar_select %p341, %s21, 1
      %p343 = scmp.lt.s32.totalorder %s340, 7
      %s344 = scalar_select %p343, %s340, 7
      %p345 = scmp.lt.s32.totalorder %s23, 0
      %s346 = scalar_select %p345, %s23, 0
      %s347 = sadd.s32 %s346, %s344
      %s348 = smul.addr %s342, 8
      %s349 = sadd.s32 %s347, %s348
      %s350 = smul.addr %s349, 4
      %s351 = scalar_lea.vmem %s4, %s350
      %s352 = smul.u32 8, %s22
      %p354 = scmp.eq.s32.totalorder %s24, 0
      // Predicated region
      $region37: #{resnet_stage.15} parent=35 // pred_check
        %p355 = pneg %p354
      $region38: #{resnet_stage.15} parent=35 // pred_check_branch
        %357 = sbr.rel (%p355) target = $region40
      $region39: #{resnet_stage.15} parent=35 // pred_region
        %vm358 = vcmask 261120
        %359 = vst.msk [vmem:[#allocation2] sm:$0xff] %vm358, 0.0
        %360 = vst.msk [vmem:[#allocation2 + $0x8] sm:$0xff] %vm358, 0.0
        %361 = vst.msk [vmem:[#allocation2 + $0x10] sm:$0xff] %vm358, 0.0
        %362 = vst.msk [vmem:[#allocation2 + $0x18] sm:$0xff] %vm358, 0.0
        %363 = vst.msk [vmem:[#allocation2 + $0x20] sm:$0xff] %vm358, 0.0
        %364 = vst.msk [vmem:[#allocation2 + $0x28] sm:$0xff] %vm358, 0.0
        %365 = vst.msk [vmem:[#allocation2 + $0x30] sm:$0xff] %vm358, 0.0
        %366 = vst.msk [vmem:[#allocation2 + $0x38] sm:$0xff] %vm358, 0.0
      $region40: #{resnet_stage.15} parent=35 // pred_fallthru
        _
      %v367 = vld [vmem:[%s317] sm:$0xf]
      %v368 = vld [vmem:[%s317 + $0x4] sm:$0xf]
      %v369 = vld [vmem:[%s317 + $0x8] sm:$0xf]
      %v370 = vld [vmem:[%s317 + $0xc] sm:$0xf]
      %v371 = vld [vmem:[%s317 + $0x10] sm:$0xf]
      %v372 = vld [vmem:[%s317 + $0x14] sm:$0xf]
      %v373 = vld [vmem:[%s317 + $0x18] sm:$0xf]
      %v374 = vld [vmem:[%s317 + $0x1c] sm:$0xf]
      %v375 = vunpack.c.l.bf16 %v367
      %v376 = vunpack.c.l.bf16 %v368
      %v377 = vunpack.c.l.bf16 %v369
      %v378 = vunpack.c.l.bf16 %v370
      %v379 = vunpack.c.l.bf16 %v371
      %v380 = vunpack.c.l.bf16 %v372
      %v381 = vunpack.c.l.bf16 %v373
      %v382 = vunpack.c.l.bf16 %v374
      %v383 = vld [vmem:[%s324] sm:$0x1]
      %v385 = vlaneseq
      %v386 = vshrl.u32 %v385, 7
      %v387 = vsub.s32 0, %v386
      %v388 = vrot.slane %v383, %v387
      %v390 = vmul.f32 %v375, %v388
      %v391 = vmul.f32 %v376, %v388
      %v392 = vmul.f32 %v377, %v388
      %v393 = vmul.f32 %v378, %v388
      %v394 = vmul.f32 %v379, %v388
      %v395 = vmul.f32 %v380, %v388
      %v396 = vmul.f32 %v381, %v388
      %v397 = vmul.f32 %v382, %v388
      %v398 = vld [vmem:[%s330] sm:$0x1]
      %v400 = vlaneseq
      %v401 = vshrl.u32 %v400, 7
      %v402 = vsub.s32 0, %v401
      %v403 = vrot.slane %v398, %v402
      %v405 = vadd.f32 %v390, %v403
      %v406 = vadd.f32 %v391, %v403
      %v407 = vadd.f32 %v392, %v403
      %v408 = vadd.f32 %v393, %v403
      %v409 = vadd.f32 %v394, %v403
      %v410 = vadd.f32 %v395, %v403
      %v411 = vadd.f32 %v396, %v403
      %v412 = vadd.f32 %v397, %v403
      %v413 = vmax.f32 %v405, 0.0
      %v414 = vmax.f32 %v406, 0.0
      %v415 = vmax.f32 %v407, 0.0
      %v416 = vmax.f32 %v408, 0.0
      %v417 = vmax.f32 %v409, 0.0
      %v418 = vmax.f32 %v410, 0.0
      %v419 = vmax.f32 %v411, 0.0
      %v420 = vmax.f32 %v412, 0.0
      %v421 = vld [vmem:[#allocation2] sm:$0xff]
      %v422 = vld [vmem:[#allocation2 + $0x8] sm:$0xff]
      %v423 = vld [vmem:[#allocation2 + $0x10] sm:$0xff]
      %v424 = vld [vmem:[#allocation2 + $0x18] sm:$0xff]
      %v425 = vld [vmem:[#allocation2 + $0x20] sm:$0xff]
      %v426 = vld [vmem:[#allocation2 + $0x28] sm:$0xff]
      %v427 = vld [vmem:[#allocation2 + $0x30] sm:$0xff]
      %v428 = vld [vmem:[#allocation2 + $0x38] sm:$0xff]
      %v429 = vpack.c.bf16 %v414, %v413
      %v430 = vpack.c.bf16 %v416, %v415
      %v431 = vpack.c.bf16 %v418, %v417
      %v432 = vpack.c.bf16 %v420, %v419
      %v433 = vld [vmem:[%s338] sm:$0xf]
      %v434 = vld [vmem:[%s338 + $0x4] sm:$0xf]
      %v435 = vld [vmem:[%s338 + $0x8] sm:$0xf]
      %v436 = vld [vmem:[%s338 + $0xc] sm:$0xf]
      %v441 = vunpack.c.l.b16 %v433
      %v442 = vunpack.c.l.b16 %v434
      %v443 = vunpack.c.l.b16 %v435
      %v444 = vunpack.c.l.b16 %v436
      %v445 = vpack.c.b16 %v442, %v441
      %v446 = vpack.c.b16 %v444, %v443
      %vm449 = vcmask 261120
      %v451 = vsel %vm449, %v429, 0
      %v454 = vsel %vm449, %v430, 0
      %v457 = vsel %vm449, %v431, 0
      %v460 = vsel %vm449, %v432, 0
      %462 = vmatprep.subr.bf16.mxu0 0
      %463 = vmatpush1.bf16.msra.mxu0 0
      %464 = vmatprep.subr.bf16.mxu0 0
      %465 = vmatpush1.bf16.msra.mxu0 0
      %466 = vmatprep.subr.bf16.mxu0 0
      %467 = vmatpush1.bf16.msra.mxu0 0
      %468 = vmatprep.subr.bf16.mxu0 0
      %469 = vmatpush1.bf16.msra.mxu0 0
      %470 = vmatprep.subr.bf16.mxu0 0
      %471 = vmatpush1.bf16.msra.mxu0 0
      %472 = vmatprep.subr.bf16.mxu0 0
      %473 = vmatpush1.bf16.msra.mxu0 0
      %474 = vmatprep.subr.bf16.mxu0 0
      %475 = vmatpush1.bf16.msra.mxu0 %v446
      %476 = vmatprep.subr.bf16.mxu0 0
      %477 = vmatpush1.bf16.msra.mxu0 %v445
      %478 = vmatprep.subr.bf16.mxu0 0
      %479 = vmatpush2.bf16.msra.mxu0 0
      %480 = vmatprep.subr.bf16.mxu0 0
      %481 = vmatpush2.bf16.msra.mxu0 0
      %482 = vmatprep.subr.bf16.mxu0 0
      %483 = vmatpush2.bf16.msra.mxu0 0
      %484 = vmatprep.subr.bf16.mxu0 0
      %485 = vmatpush2.bf16.msra.mxu0 0
      %486 = vmatprep.subr.bf16.mxu0 0
      %487 = vmatpush2.bf16.msra.mxu0 0
      %488 = vmatprep.subr.bf16.mxu0 0
      %489 = vmatpush2.bf16.msra.mxu0 0
      %490 = vmatprep.subr.bf16.mxu0 0
      %491 = vmatpush2.bf16.msra.mxu0 0
      %492 = vmatprep.subr.bf16.mxu0 0
      %493 = vmatpush2.bf16.msra.mxu0 0
      %494 = vmatprep.mubr.bf16.mxu0 0
      %495 = vmatmul.mubr.bf16.gmra.mxu0 %v451
      %v496 = vpop.f32.mrf.mxu0
      %v497 = vadd.f32 0.0, %v496
      %v498 = vpop.f32.mrf.mxu0
      %v499 = vpop.f32.mrf.mxu0
      %v500 = vadd.f32 0.0, %v499
      %v501 = vpop.f32.mrf.mxu0
      %502 = vmatprep.mubr.bf16.mxu0 0
      %503 = vmatmul.mubr.bf16.gmra.mxu0 %v454
      %v504 = vpop.f32.mrf.mxu0
      %v505 = vadd.f32 0.0, %v504
      %v506 = vpop.f32.mrf.mxu0
      %v507 = vpop.f32.mrf.mxu0
      %v508 = vadd.f32 0.0, %v507
      %v509 = vpop.f32.mrf.mxu0
      %510 = vmatprep.mubr.bf16.mxu0 0
      %511 = vmatmul.mubr.bf16.gmra.mxu0 %v457
      %v512 = vpop.f32.mrf.mxu0
      %v513 = vadd.f32 0.0, %v512
      %v514 = vpop.f32.mrf.mxu0
      %v515 = vpop.f32.mrf.mxu0
      %v516 = vadd.f32 0.0, %v515
      %v517 = vpop.f32.mrf.mxu0
      %518 = vmatprep.mubr.bf16.mxu0 0
      %519 = vmatmul.mubr.bf16.gmra.mxu0 %v460
      %v520 = vpop.f32.mrf.mxu0
      %v521 = vadd.f32 0.0, %v520
      %v522 = vpop.f32.mrf.mxu0
      %v523 = vpop.f32.mrf.mxu0
      %v524 = vadd.f32 0.0, %v523
      %v525 = vpop.f32.mrf.mxu0
      %526 = vdwg.mxu0
      %v527 = vadd.f32 %v421, %v497
      %v528 = vadd.f32 %v422, %v500
      %v529 = vadd.f32 %v423, %v505
      %v530 = vadd.f32 %v424, %v508
      %v531 = vadd.f32 %v425, %v513
      %v532 = vadd.f32 %v426, %v516
      %v533 = vadd.f32 %v427, %v521
      %v534 = vadd.f32 %v428, %v524
      %535 = vst.msk [vmem:[#allocation2] sm:$0xff] %vm449, %v527
      %536 = vst.msk [vmem:[#allocation2 + $0x8] sm:$0xff] %vm449, %v528
      %537 = vst.msk [vmem:[#allocation2 + $0x10] sm:$0xff] %vm449, %v529
      %538 = vst.msk [vmem:[#allocation2 + $0x18] sm:$0xff] %vm449, %v530
      %539 = vst.msk [vmem:[#allocation2 + $0x20] sm:$0xff] %vm449, %v531
      %540 = vst.msk [vmem:[#allocation2 + $0x28] sm:$0xff] %vm449, %v532
      %541 = vst.msk [vmem:[#allocation2 + $0x30] sm:$0xff] %vm449, %v533
      %542 = vst.msk [vmem:[#allocation2 + $0x38] sm:$0xff] %vm449, %v534
      // Predicated region
      $region41: #{resnet_stage.15} parent=35 // pred_check
        %p543 = pneg %p354
      $region42: #{resnet_stage.15} parent=35 // pred_check_branch
        %545 = sbr.rel (%p543) target = $region44
      $region43: #{resnet_stage.15} parent=35 // pred_region
        %v546 = vld [vmem:[#allocation2] sm:$0xff]
        %v547 = vld [vmem:[#allocation2 + $0x8] sm:$0xff]
        %v548 = vld [vmem:[#allocation2 + $0x10] sm:$0xff]
        %v549 = vld [vmem:[#allocation2 + $0x18] sm:$0xff]
        %v550 = vld [vmem:[#allocation2 + $0x20] sm:$0xff]
        %v551 = vld [vmem:[#allocation2 + $0x28] sm:$0xff]
        %v552 = vld [vmem:[#allocation2 + $0x30] sm:$0xff]
        %v553 = vld [vmem:[#allocation2 + $0x38] sm:$0xff]
        %v554 = vpack.c.bf16 %v547, %v546
        %v555 = vpack.c.bf16 %v549, %v548
        %v556 = vpack.c.bf16 %v551, %v550
        %v557 = vpack.c.bf16 %v553, %v552
        %v562 = vunpack.c.l.b16 %v554
        %v563 = vunpack.c.h.b16 %v554
        %v564 = vunpack.c.l.b16 %v555
        %v565 = vunpack.c.h.b16 %v555
        %v566 = vunpack.c.l.b16 %v556
        %v567 = vunpack.c.h.b16 %v556
        %v568 = vunpack.c.l.b16 %v557
        %v569 = vunpack.c.h.b16 %v557
        %v570 = vpack.c.b16 %v562, %v562
        %v571 = vpack.c.b16 %v563, %v563
        %v572 = vpack.c.b16 %v564, %v564
        %v573 = vpack.c.b16 %v565, %v565
        %v574 = vpack.c.b16 %v566, %v566
        %v575 = vpack.c.b16 %v567, %v567
        %v576 = vpack.c.b16 %v568, %v568
        %v577 = vpack.c.b16 %v569, %v569
        %vm586 = vcmask 257024
        %587 = vst.msk [vmem:[%s351] sm:$0xf] %vm586, %v570
        %588 = vst.msk [vmem:[%s351 + $0x4] sm:$0xf] %vm586, %v571
        %589 = vst.msk [vmem:[%s351 + $0x8] sm:$0xf] %vm586, %v572
        %590 = vst.msk [vmem:[%s351 + $0xc] sm:$0xf] %vm586, %v573
        %591 = vst.msk [vmem:[%s351 + $0x10] sm:$0xf] %vm586, %v574
        %592 = vst.msk [vmem:[%s351 + $0x14] sm:$0xf] %vm586, %v575
        %593 = vst.msk [vmem:[%s351 + $0x18] sm:$0xf] %vm586, %v576
        %594 = vst.msk [vmem:[%s351 + $0x1c] sm:$0xf] %vm586, %v577
      $region44: #{resnet_stage.15} parent=35 // pred_fallthru
        _
      %s595 = smul.u32 8, %s22
      %p596 = scmp.lt.s32.totalorder %s21, 1
      %s597 = scalar_select %p596, %s21, 1
      %p598 = scmp.lt.s32.totalorder %s595, 7
      %s599 = scalar_select %p598, %s595, 7
      %p600 = scmp.lt.s32.totalorder %s23, 0
      %s601 = scalar_select %p600, %s23, 0
      %s602 = sadd.s32 %s601, %s599
      %s603 = smul.addr %s597, 8
      %s604 = sadd.s32 %s602, %s603
      %s605 = smul.addr %s604, 4
      %s606 = scalar_lea.vmem %s4, %s605
      // Predicated region
      $region45: #{resnet_stage.15} parent=35 // pred_check
        %p607 = pneg %p177
      $region46: #{resnet_stage.15} parent=35 // pred_check_branch
        %609 = sbr.rel (%p607) target = $region48
      $region47: #{resnet_stage.15} parent=35 // pred_region
        %s610 = smul.u32 8, %s22
      $region48: #{resnet_stage.15} parent=35 // pred_fallthru
        _
    $region36: #{resnet_stage.15} parent=5 // pred_fallthru
      _
    %p611 = scmp.le.s32.totalorder 2, %s10
    // Predicated region
    $region49: #{resnet_stage.15} parent=5 // pred_check
      %p612 = pneg %p611
    $region50: #{resnet_stage.15} parent=5 // pred_check_branch
      %614 = sbr.rel (%p612) target = $region52
    $region51: #{resnet_stage.15} parent=5 // pred_region
      %s615 = ssub.s32 %s10, 2
      // Predicated region
      $region53: #{resnet_stage.15} parent=51 // pred_check
        %p616 = pneg %p183
      $region54: #{resnet_stage.15} parent=51 // pred_check_branch
        %618 = sbr.rel (%p616) target = $region56
      $region55: #{resnet_stage.15} parent=51 // pred_region
        %s619 = smul.u32 8, %s26
        %p620 = scmp.lt.s32.totalorder %s25, 1
        %s621 = scalar_select %p620, %s25, 1
        %p622 = scmp.lt.s32.totalorder %s619, 7
        %s623 = scalar_select %p622, %s619, 7
        %p624 = scmp.lt.s32.totalorder %s27, 0
        %s625 = scalar_select %p624, %s27, 0
        %s626 = sadd.s32 %s625, %s623
        %s627 = smul.addr %s621, 8
        %s628 = sadd.s32 %s626, %s627
        %s629 = smul.addr %s628, 4
        %s630 = scalar_lea.vmem %s4, %s629
      $region56: #{resnet_stage.15} parent=51 // pred_fallthru
        _
    $region52: #{resnet_stage.15} parent=5 // pred_fallthru
      _
  $region6: #{resnet_stage.15} parent=0 // loop_footer
    %s14 = sadd.s32 1, %s10
  $region7: #{resnet_stage.15} parent=0 // loop_footer_branch
    %9 = sbr.rel target = $region3
  $region8: #{resnet_stage.15} parent=0 // loop_exit
    _

// kernel: resnet_stage.18
$region0: #{resnet_stage.18}
  #allocation0 [shape = 'u32[]', space=smem, size = 0x4, offset = 0x4, fixed_abs, tag = 'smem constant byte address 0x4 - core index']
  #allocation1 [shape = 'u32[144,128]{1,0:T(1,128)}', space=vmem, size = 0x12000, scoped, tag = 'internal scratch']
  #allocation2 [shape = 'f32[1,32]{1,0:T(1,128)}', space=vmem, size = 0x200, scoped, tag = 'scratch operand']
  #allocation3 [shape = 'f32[1,32]{1,0:T(1,128)}', space=vmem, size = 0x200, scoped, tag = 'scratch operand']
  %s0 = inlined_call_operand.vmem [shape: bf16[2,16,32], index: 0, kind: input, shape index: {}]
  %s1 = inlined_call_operand.vmem [shape: f32[32,32], index: 1, kind: input, shape index: {}]
  %s2 = inlined_call_operand.vmem [shape: f32[32,32], index: 2, kind: input, shape index: {}]
  %s3 = inlined_call_operand.vmem [shape: f32[1,32], index: 3, kind: input, shape index: {}]
  %s4 = inlined_call_operand.vmem [shape: f32[1,32], index: 4, kind: input, shape index: {}]
  %s5 = inlined_call_operand.vmem [shape: f32[2,1,32], index: 5, kind: output, shape index: {0}]
  %s6 = inlined_call_operand.vmem [shape: f32[2,1,32], index: 6, kind: output, shape index: {1}]
  %7 = xla_tuple %s5, %s6
  %s8 = sld [smem:[#allocation0]]
  $region69: #{resnet_stage.18} parent=0
    _
  %s10 = ssub.s32 1, %s8
  %s11 = scalar_select 0, %s10, %s8
  loop: start=0, step=1, limit=4
  $region2: #{resnet_stage.18} parent=0 // loop_pre_header
    _
  $region3: #{resnet_stage.18} parent=0 // loop_header
    %s13 = sphi 0, %s17
    %p14 = scmp.ge.s32.totalorder %s13, 4
    %s20 = sphi 0, %s32
    %s21 = sphi 0, %s28
    %s22 = sphi 0, %s20
    %s23 = sphi 0, %s21
    %s24 = sphi 0, %s22
    %s25 = sphi 0, %s23
    %s37 = sphi 0, %s39
    %s40 = sphi 0, %s37
    %s41 = sphi 0, %s40
    %s57 = sphi 0, %s41
    %s61 = sphi 0, %s61
    %s63 = sphi 0, %s61
    %s64 = sphi 0, %s63
    %s78 = sphi 0, %s64
    %s82 = sphi 0, %s82
    %s84 = sphi 0, %s82
    %s85 = sphi 0, %s84
    %s99 = sphi 0, %s85
    %s103 = sphi 0, %s103
    %s105 = sphi 0, %s103
    %s106 = sphi 0, %s105
    %s120 = sphi 0, %s106
    %s124 = sphi 0, %s124
    %s126 = sphi 0, %s124
    %s127 = sphi 0, %s126
    %s141 = sphi 0, %s127
    %s147 = sphi 0, %s149
    %s150 = sphi 0, %s147
    %s151 = sphi 0, %s150
    %s167 = sphi 0, %s151
    %s173 = sphi 0, %s175
    %s176 = sphi 0, %s173
    %s177 = sphi 0, %s176
    %s193 = sphi 0, %s177
  $region4: #{resnet_stage.18} parent=0 // loop_header_branch
    %16 = sbr.rel (%p14) target = $region8
  $region5: #{resnet_stage.18} parent=0 // loop_body
    %s18 = ssub.s32 %s13, 1
    %s19 = ssub.s32 %s13, 2
    %s26 = sadd.s32 1, %s21
    %p27 = scmp.ge.s32.totalorder %s26, 1
    %s28 = scalar_select %p27, 0, %s26
    %s29 = sadd.s32 1, %s20
    %s30 = scalar_select %p27, %s29, %s20
    %p31 = scmp.ge.s32.totalorder %s30, 2
    %s32 = scalar_select %p31, 0, %s30
    %s33 = ssub.s32 %s20, %s32
    %s34 = ssub.s32 %s21, %s28
    %s35 = sor.u32 %s33, %s34
    %p36 = scmp.eq.s32.totalorder %s35, 0
    %s38 = sadd.s32 %s37, 1
    %s39 = scalar_select %p36, %s37, %s38
    %p42 = pneg %p36
    %p43 = scmp.eq.s32.totalorder %s13, 1
    %p44 = por %p42, %p43
    %p45 = scmp.ne.s32.totalorder %s37, %s40
    %p46 = scmp.eq.s32.totalorder %s13, 0
    %p47 = por %p45, %p46
    %p48 = scmp.ne.s32.totalorder %s37, %s40
    %p49 = scmp.eq.s32.totalorder %s18, 1
    %p50 = por %p48, %p49
    %p51 = scmp.ne.s32.totalorder %s40, %s41
    %p52 = scmp.eq.s32.totalorder %s18, 0
    %p53 = por %p51, %p52
    %p54 = scmp.ne.s32.totalorder %s40, %s41
    %p55 = scmp.eq.s32.totalorder %s19, 1
    %p56 = por %p54, %p55
    %p58 = scmp.ne.s32.totalorder %s41, %s57
    %p59 = scmp.eq.s32.totalorder %s19, 0
    %p60 = por %p58, %p59
    %s62 = sadd.s32 %s61, 1
    %p65 = scmp.eq.s32.totalorder %s13, 1
    %p66 = scmp.ne.s32.totalorder %s61, %s63
    %p67 = scmp.eq.s32.totalorder %s13, 0
    %p68 = por %p66, %p67
    %p69 = scmp.ne.s32.totalorder %s61, %s63
    %p70 = scmp.eq.s32.totalorder %s18, 1
    %p71 = por %p69, %p70
    %p72 = scmp.ne.s32.totalorder %s63, %s64
    %p73 = scmp.eq.s32.totalorder %s18, 0
    %p74 = por %p72, %p73
    %p75 = scmp.ne.s32.totalorder %s63, %s64
    %p76 = scmp.eq.s32.totalorder %s19, 1
    %p77 = por %p75, %p76
    %p79 = scmp.ne.s32.totalorder %s64, %s78
    %p80 = scmp.eq.s32.totalorder %s19, 0
    %p81 = por %p79, %p80
    %s83 = sadd.s32 %s82, 1
    %p86 = scmp.eq.s32.totalorder %s13, 1
    %p87 = scmp.ne.s32.totalorder %s82, %s84
    %p88 = scmp.eq.s32.totalorder %s13, 0
    %p89 = por %p87, %p88
    %p90 = scmp.ne.s32.totalorder %s82, %s84
    %p91 = scmp.eq.s32.totalorder %s18, 1
    %p92 = por %p90, %p91
    %p93 = scmp.ne.s32.totalorder %s84, %s85
    %p94 = scmp.eq.s32.totalorder %s18, 0
    %p95 = por %p93, %p94
    %p96 = scmp.ne.s32.totalorder %s84, %s85
    %p97 = scmp.eq.s32.totalorder %s19, 1
    %p98 = por %p96, %p97
    %p100 = scmp.ne.s32.totalorder %s85, %s99
    %p101 = scmp.eq.s32.totalorder %s19, 0
    %p102 = por %p100, %p101
    %s104 = sadd.s32 %s103, 1
    %p107 = scmp.eq.s32.totalorder %s13, 1
    %p108 = scmp.ne.s32.totalorder %s103, %s105
    %p109 = scmp.eq.s32.totalorder %s13, 0
    %p110 = por %p108, %p109
    %p111 = scmp.ne.s32.totalorder %s103, %s105
    %p112 = scmp.eq.s32.totalorder %s18, 1
    %p113 = por %p111, %p112
    %p114 = scmp.ne.s32.totalorder %s105, %s106
    %p115 = scmp.eq.s32.totalorder %s18, 0
    %p116 = por %p114, %p115
    %p117 = scmp.ne.s32.totalorder %s105, %s106
    %p118 = scmp.eq.s32.totalorder %s19, 1
    %p119 = por %p117, %p118
    %p121 = scmp.ne.s32.totalorder %s106, %s120
    %p122 = scmp.eq.s32.totalorder %s19, 0
    %p123 = por %p121, %p122
    %s125 = sadd.s32 %s124, 1
    %p128 = scmp.eq.s32.totalorder %s13, 1
    %p129 = scmp.ne.s32.totalorder %s124, %s126
    %p130 = scmp.eq.s32.totalorder %s13, 0
    %p131 = por %p129, %p130
    %p132 = scmp.ne.s32.totalorder %s124, %s126
    %p133 = scmp.eq.s32.totalorder %s18, 1
    %p134 = por %p132, %p133
    %p135 = scmp.ne.s32.totalorder %s126, %s127
    %p136 = scmp.eq.s32.totalorder %s18, 0
    %p137 = por %p135, %p136
    %p138 = scmp.ne.s32.totalorder %s126, %s127
    %p139 = scmp.eq.s32.totalorder %s19, 1
    %p140 = por %p138, %p139
    %p142 = scmp.ne.s32.totalorder %s127, %s141
    %p143 = scmp.eq.s32.totalorder %s19, 0
    %p144 = por %p142, %p143
    %s145 = ssub.s32 %s20, %s32
    %p146 = scmp.eq.s32.totalorder %s145, 0
    %s148 = sadd.s32 %s147, 1
    %s149 = scalar_select %p146, %s147, %s148
    %p152 = pneg %p146
    %p153 = scmp.eq.s32.totalorder %s13, 1
    %p154 = por %p152, %p153
    %p155 = scmp.ne.s32.totalorder %s147, %s150
    %p156 = scmp.eq.s32.totalorder %s13, 0
    %p157 = por %p155, %p156
    %p158 = scmp.ne.s32.totalorder %s147, %s150
    %p159 = scmp.eq.s32.totalorder %s18, 1
    %p160 = por %p158, %p159
    %p161 = scmp.ne.s32.totalorder %s150, %s151
    %p162 = scmp.eq.s32.totalorder %s18, 0
    %p163 = por %p161, %p162
    %p164 = scmp.ne.s32.totalorder %s150, %s151
    %p165 = scmp.eq.s32.totalorder %s19, 1
    %p166 = por %p164, %p165
    %p168 = scmp.ne.s32.totalorder %s151, %s167
    %p169 = scmp.eq.s32.totalorder %s19, 0
    %p170 = por %p168, %p169
    %s171 = ssub.s32 %s20, %s32
    %p172 = scmp.eq.s32.totalorder %s171, 0
    %s174 = sadd.s32 %s173, 1
    %s175 = scalar_select %p172, %s173, %s174
    %p178 = pneg %p172
    %p179 = scmp.eq.s32.totalorder %s13, 1
    %p180 = por %p178, %p179
    %p181 = scmp.ne.s32.totalorder %s173, %s176
    %p182 = scmp.eq.s32.totalorder %s13, 0
    %p183 = por %p181, %p182
    %p184 = scmp.ne.s32.totalorder %s173, %s176
    %p185 = scmp.eq.s32.totalorder %s18, 1
    %p186 = por %p184, %p185
    %p187 = scmp.ne.s32.totalorder %s176, %s177
    %p188 = scmp.eq.s32.totalorder %s18, 0
    %p189 = por %p187, %p188
    %p190 = scmp.ne.s32.totalorder %s176, %s177
    %p191 = scmp.eq.s32.totalorder %s19, 1
    %p192 = por %p190, %p191
    %p194 = scmp.ne.s32.totalorder %s177, %s193
    %p195 = scmp.eq.s32.totalorder %s19, 0
    %p196 = por %p194, %p195
    %p197 = scmp.le.s32.totalorder 1, %s13
    %p198 = scmp.lt.s32.totalorder %s13, 3
    %p199 = pnand %p197, %p198
    %p200 = pneg %p199
    // Predicated region
    $region9: #{resnet_stage.18} parent=5 // pred_check
      _
    $region10: #{resnet_stage.18} parent=5 // pred_check_branch
      %202 = sbr.rel (%p199) target = $region12
    $region11: #{resnet_stage.18} parent=5 // pred_region
      %s203 = ssub.s32 %s13, 1
      // Predicated region
      $region13: #{resnet_stage.18} parent=11 // pred_check
        %p204 = pneg %p74
      $region14: #{resnet_stage.18} parent=11 // pred_check_branch
        %206 = sbr.rel (%p204) target = $region16
      $region15: #{resnet_stage.18} parent=11 // pred_region
        _
      $region16: #{resnet_stage.18} parent=11 // pred_fallthru
        _
      // Predicated region
      $region17: #{resnet_stage.18} parent=11 // pred_check
        %p207 = pneg %p95
      $region18: #{resnet_stage.18} parent=11 // pred_check_branch
        %209 = sbr.rel (%p207) target = $region20
      $region19: #{resnet_stage.18} parent=11 // pred_region
        _
      $region20: #{resnet_stage.18} parent=11 // pred_fallthru
        _
      // Predicated region
      $region21: #{resnet_stage.18} parent=11 // pred_check
        %p210 = pneg %p116
      $region22: #{resnet_stage.18} parent=11 // pred_check_branch
        %212 = sbr.rel (%p210) target = $region24
      $region23: #{resnet_stage.18} parent=11 // pred_region
        _
      $region24: #{resnet_stage.18} parent=11 // pred_fallthru
        _
      // Predicated region
      $region25: #{resnet_stage.18} parent=11 // pred_check
        %p213 = pneg %p137
      $region26: #{resnet_stage.18} parent=11 // pred_check_branch
        %215 = sbr.rel (%p213) target = $region28
      $region27: #{resnet_stage.18} parent=11 // pred_region
        _
      $region28: #{resnet_stage.18} parent=11 // pred_fallthru
        _
    $region12: #{resnet_stage.18} parent=5 // pred_fallthru
      _
    %p216 = scmp.lt.s32.totalorder %s13, 2
    // Predicated region
    $region29: #{resnet_stage.18} parent=5 // pred_check
      %p217 = pneg %p216
    $region30: #{resnet_stage.18} parent=5 // pred_check_branch
      %219 = sbr.rel (%p217) target = $region32
    $region31: #{resnet_stage.18} parent=5 // pred_region
      // Predicated region
      $region33: #{resnet_stage.18} parent=31 // pred_check
        %p220 = pneg %p47
      $region34: #{resnet_stage.18} parent=31 // pred_check_branch
        %222 = sbr.rel (%p220) target = $region36
      $region35: #{resnet_stage.18} parent=31 // pred_region
        %s223 = smul.u32 2, %s21
        %p224 = scmp.lt.s32.totalorder %s20, 1
        %s225 = scalar_select %p224, %s20, 1
        %p226 = scmp.lt.s32.totalorder %s223, 1
        %s227 = scalar_select %p226, %s223, 1
        %s228 = smul.addr %s225, 2
        %s229 = sadd.s32 %s227, %s228
        %s230 = smul.addr %s229, 4
        %s231 = scalar_lea.vmem %s0, %s230
        %s232 = smul.u32 2, %s21
      $region36: #{resnet_stage.18} parent=31 // pred_fallthru
        _
    $region32: #{resnet_stage.18} parent=5 // pred_fallthru
      _
    %p233 = scmp.le.s32.totalorder 1, %s13
    %p234 = scmp.lt.s32.totalorder %s13, 3
    %p235 = pnand %p233, %p234
    %p236 = pneg %p235
    // Predicated region
    $region37: #{resnet_stage.18} parent=5 // pred_check
      _
    $region38: #{resnet_stage.18} parent=5 // pred_check_branch
      %238 = sbr.rel (%p235) target = $region40
    $region39: #{resnet_stage.18} parent=5 // pred_region
      %s239 = ssub.s32 %s13, 1
      %s240 = smul.u32 2, %s23
      %p241 = scmp.lt.s32.totalorder %s22, 1
      %s242 = scalar_select %p241, %s22, 1
      %p243 = scmp.lt.s32.totalorder %s240, 1
      %s244 = scalar_select %p243, %s240, 1
      %s245 = smul.addr %s242, 2
      %s246 = sadd.s32 %s244, %s245
      %s247 = smul.addr %s246, 4
      %s248 = scalar_lea.vmem %s0, %s247
      %p249 = pneg %p53
      %p250 = pneg %p50
      %p251 = pneg %p74
      %p252 = pneg %p71
      %p253 = pneg %p95
      %p254 = pneg %p92
      %p255 = pneg %p116
      %p256 = pneg %p113
      %p257 = pneg %p137
      %p258 = pneg %p134
      %p259 = pneg %p163
      %p260 = pneg %p160
      %p261 = scmp.lt.s32.totalorder %s22, 1
      %s262 = scalar_select %p261, %s22, 1
      %s263 = scalar_lea.vmem %s5, %s262
      %p264 = pneg %p189
      %p265 = pneg %p186
      %p266 = scmp.lt.s32.totalorder %s22, 1
      %s267 = scalar_select %p266, %s22, 1
      %s268 = scalar_lea.vmem %s6, %s267
      %s269 = smul.u32 2, %s23
      %p270 = scmp.lt.s32.totalorder %s22, 1
      %s271 = scalar_select %p270, %s22, 1
      %p272 = scmp.lt.s32.totalorder %s269, 1
      %s273 = scalar_select %p272, %s269, 1
      %s274 = smul.addr %s271, 2
      %s275 = sadd.s32 %s273, %s274
      %s276 = smul.addr %s275, 4
      %s277 = scalar_lea.vmem %s0, %s276
      %s278 = smul.u32 2, %s23
      %p279 = scmp.lt.s32.totalorder %s22, 1
      %s280 = scalar_select %p279, %s22, 1
      %s281 = scalar_lea.vmem %s5, %s280
      %p282 = scmp.lt.s32.totalorder %s22, 1
      %s283 = scalar_select %p282, %s22, 1
      %s284 = scalar_lea.vmem %s6, %s283
      %p285 = scmp.eq.s32.totalorder %s23, 0
      // Predicated region
      $region41: #{resnet_stage.18} parent=39 // pred_check
        %p286 = pneg %p285
      $region42: #{resnet_stage.18} parent=39 // pred_check_branch
        %288 = sbr.rel (%p286) target = $region44
      $region43: #{resnet_stage.18} parent=39 // pred_region
        %vm289 = vcmask 253952
        %290 = vst.msk [vmem:[#allocation2] sm:$0x1] %vm289, 0.0
        %291 = vst.msk [vmem:[#allocation3] sm:$0x1] %vm289, 0.0
      $region44: #{resnet_stage.18} parent=39 // pred_fallthru
        _
      %v292 = vld [vmem:[%s277] sm:$0xf]
      %v293 = vld [vmem:[%s277 + $0x4] sm:$0xf]
      %v294 = vunpack.c.l.bf16 %v292
      %v295 = vunpack.c.l.bf16 %v293
      %v296 = vld [vmem:[#allocation2] sm:$0x1]
      %vm297 = vcmask 261120
      %v298 = vsel %vm297, %v294, 0.0
      %v299 = vsel %vm297, %v295, 0.0
      %v300 = vadd.f32 %v298, %v299
      %v301 = vrot.slane %v300, 4
      %v302 = vadd.f32 %v300, %v301
      %v303 = vrot.slane %v302, 2
      %v304 = vadd.f32 %v302, %v303
      %v305 = vrot.slane %v304, 1
      %v306 = vadd.f32 %v304, %v305
      %v307 = vadd.f32 %v296, %v306
      %vm308 = vcmask 253952
      %309 = vst.msk [vmem:[#allocation2] sm:$0x1] %vm308, %v307
      %v310 = vld [vmem:[#allocation3] sm:$0x1]
      %v311 = vmul.f32 %v294, %v294
      %v312 = vmul.f32 %v295, %v295
      %v313 = vsel %vm297, %v311, 0.0
      %v314 = vsel %vm297, %v312, 0.0
      %v315 = vadd.f32 %v313, %v314
      %v316 = vrot.slane %v315, 4
      %v317 = vadd.f32 %v315, %v316
      %v318 = vrot.slane %v317, 2
      %v319 = vadd.f32 %v317, %v318
      %v320 = vrot.slane %v319, 1
      %v321 = vadd.f32 %v319, %v320
      %v322 = vadd.f32 %v310, %v321
      %323 = vst.msk [vmem:[#allocation3] sm:$0x1] %vm308, %v322
      // Predicated region
      $region45: #{resnet_stage.18} parent=39 // pred_check
        %p324 = pneg %p285
      $region46: #{resnet_stage.18} parent=39 // pred_check_branch
        %326 = sbr.rel (%p324) target = $region48
      $region47: #{resnet_stage.18} parent=39 // pred_region
        %v327 = vld [vmem:[#allocation2] sm:$0x1]
        %v328 = vld [vmem:[%s1] sm:$0xff]
        %v329 = vld [vmem:[%s1 + $0x8] sm:$0xff]
        %v330 = vld [vmem:[%s1 + $0x10] sm:$0xff]
        %v331 = vld [vmem:[%s1 + $0x18] sm:$0xff]
        %v333 = vsel %vm297, %v327, 0
        %335 = vmatprep.subr.mxu0 0.0
        %336 = vmatpush1.msra.mxu0 0.0
        %337 = vmatprep.subr.mxu0 0.0
        %338 = vmatpush1.msra.mxu0 0.0
        %339 = vmatprep.subr.mxu0 0.0
        %340 = vmatpush1.msra.mxu0 0.0
        %341 = vmatprep.subr.mxu0 0.0
        %342 = vmatpush1.msra.mxu0 0.0
        %343 = vmatprep.subr.mxu0 0.0
        %344 = vmatpush1.msra.mxu0 0.0
        %345 = vmatprep.subr.mxu0 0.0
        %346 = vmatpush1.msra.mxu0 0.0
        %347 = vmatprep.subr.mxu0 0.0
        %348 = vmatpush1.msra.mxu0 0.0
        %349 = vmatprep.subr.mxu0 0.0
        %350 = vmatpush1.msra.mxu0 0.0
        %351 = vmatprep.subr.mxu0 0.0
        %352 = vmatpush1.msra.mxu0 0.0
        %353 = vmatprep.subr.mxu0 0.0
        %354 = vmatpush1.msra.mxu0 0.0
        %355 = vmatprep.subr.mxu0 0.0
        %356 = vmatpush1.msra.mxu0 0.0
        %357 = vmatprep.subr.mxu0 0.0
        %358 = vmatpush1.msra.mxu0 0.0
        %359 = vmatprep.subr.mxu0 0.0
        %360 = vmatpush1.msra.mxu0 %v331
        %361 = vmatprep.subr.mxu0 0.0
        %362 = vmatpush1.msra.mxu0 %v330
        %363 = vmatprep.subr.mxu0 0.0
        %364 = vmatpush1.msra.mxu0 %v329
        %365 = vmatprep.subr.mxu0 0.0
        %366 = vmatpush1.msra.mxu0 %v328
        %367 = vmatprep.subr.mxu0 0.0
        %368 = vmatpush2.msra.mxu0 0.0
        %369 = vmatprep.subr.mxu0 0.0
        %370 = vmatpush2.msra.mxu0 0.0
        %371 = vmatprep.subr.mxu0 0.0
        %372 = vmatpush2.msra.mxu0 0.0
        %373 = vmatprep.subr.mxu0 0.0
        %374 = vmatpush2.msra.mxu0 0.0
        %375 = vmatprep.subr.mxu0 0.0
        %376 = vmatpush2.msra.mxu0 0.0
        %377 = vmatprep.subr.mxu0 0.0
        %378 = vmatpush2.msra.mxu0 0.0
        %379 = vmatprep.subr.mxu0 0.0
        %380 = vmatpush2.msra.mxu0 0.0
        %381 = vmatprep.subr.mxu0 0.0
        %382 = vmatpush2.msra.mxu0 0.0
        %383 = vmatprep.subr.mxu0 0.0
        %384 = vmatpush2.msra.mxu0 0.0
        %385 = vmatprep.subr.mxu0 0.0
        %386 = vmatpush2.msra.mxu0 0.0
        %387 = vmatprep.subr.mxu0 0.0
        %388 = vmatpush2.msra.mxu0 0.0
        %389 = vmatprep.subr.mxu0 0.0
        %390 = vmatpush2.msra.mxu0 0.0
        %391 = vmatprep.subr.mxu0 0.0
        %392 = vmatpush2.msra.mxu0 0.0
        %393 = vmatprep.subr.mxu0 0.0
        %394 = vmatpush2.msra.mxu0 0.0
        %395 = vmatprep.subr.mxu0 0.0
        %396 = vmatpush2.msra.mxu0 0.0
        %397 = vmatprep.subr.mxu0 0.0
        %398 = vmatpush2.msra.mxu0 0.0
        %399 = vmatprep.mubr.f32.mxu0 0.0
        %400 = vmatmul.mubr.f32.gmra.mxu0 %v333
        %v401 = vpop.f32.mrf.mxu0
        %v402 = vadd.f32 0.0, %v401
        %v403 = vpop.f32.mrf.mxu0
        %404 = vdwg.mxu0
        %v405 = vld [vmem:[#allocation3] sm:$0x1]
        %v407 = vsel %vm297, %v405, 0
        %409 = vmatprep.subr.mxu0 0.0
        %410 = vmatpush1.msra.mxu0 0.0
        %411 = vmatprep.subr.mxu0 0.0
        %412 = vmatpush1.msra.mxu0 0.0
        %413 = vmatprep.subr.mxu0 0.0
        %414 = vmatpush1.msra.mxu0 0.0
        %415 = vmatprep.subr.mxu0 0.0
        %416 = vmatpush1.msra.mxu0 0.0
        %417 = vmatprep.subr.mxu0 0.0
        %418 = vmatpush1.msra.mxu0 0.0
        %419 = vmatprep.subr.mxu0 0.0
        %420 = vmatpush1.msra.mxu0 0.0
        %421 = vmatprep.subr.mxu0 0.0
        %422 = vmatpush1.msra.mxu0 0.0
        %423 = vmatprep.subr.mxu0 0.0
        %424 = vmatpush1.msra.mxu0 0.0
        %425 = vmatprep.subr.mxu0 0.0
        %426 = vmatpush1.msra.mxu0 0.0
        %427 = vmatprep.subr.mxu0 0.0
        %428 = vmatpush1.msra.mxu0 0.0
        %429 = vmatprep.subr.mxu0 0.0
        %430 = vmatpush1.msra.mxu0 0.0
        %431 = vmatprep.subr.mxu0 0.0
        %432 = vmatpush1.msra.mxu0 0.0
        %433 = vmatprep.subr.mxu0 0.0
        %434 = vmatpush1.msra.mxu0 %v331
        %435 = vmatprep.subr.mxu0 0.0
        %436 = vmatpush1.msra.mxu0 %v330
        %437 = vmatprep.subr.mxu0 0.0
        %438 = vmatpush1.msra.mxu0 %v329
        %439 = vmatprep.subr.mxu0 0.0
        %440 = vmatpush1.msra.mxu0 %v328
        %441 = vmatprep.subr.mxu0 0.0
        %442 = vmatpush2.msra.mxu0 0.0
        %443 = vmatprep.subr.mxu0 0.0
        %444 = vmatpush2.msra.mxu0 0.0
        %445 = vmatprep.subr.mxu0 0.0
        %446 = vmatpush2.msra.mxu0 0.0
        %447 = vmatprep.subr.mxu0 0.0
        %448 = vmatpush2.msra.mxu0 0.0
        %449 = vmatprep.subr.mxu0 0.0
        %450 = vmatpush2.msra.mxu0 0.0
        %451 = vmatprep.subr.mxu0 0.0
        %452 = vmatpush2.msra.mxu0 0.0
        %453 = vmatprep.subr.mxu0 0.0
        %454 = vmatpush2.msra.mxu0 0.0
        %455 = vmatprep.subr.mxu0 0.0
        %456 = vmatpush2.msra.mxu0 0.0
        %457 = vmatprep.subr.mxu0 0.0
        %458 = vmatpush2.msra.mxu0 0.0
        %459 = vmatprep.subr.mxu0 0.0
        %460 = vmatpush2.msra.mxu0 0.0
        %461 = vmatprep.subr.mxu0 0.0
        %462 = vmatpush2.msra.mxu0 0.0
        %463 = vmatprep.subr.mxu0 0.0
        %464 = vmatpush2.msra.mxu0 0.0
        %465 = vmatprep.subr.mxu0 0.0
        %466 = vmatpush2.msra.mxu0 0.0
        %467 = vmatprep.subr.mxu0 0.0
        %468 = vmatpush2.msra.mxu0 0.0
        %469 = vmatprep.subr.mxu0 0.0
        %470 = vmatpush2.msra.mxu0 0.0
        %471 = vmatprep.subr.mxu0 0.0
        %472 = vmatpush2.msra.mxu0 0.0
        %473 = vmatprep.mubr.f32.mxu0 0.0
        %474 = vmatmul.mubr.f32.gmra.mxu0 %v407
        %v475 = vpop.f32.mrf.mxu0
        %v476 = vadd.f32 0.0, %v475
        %v477 = vpop.f32.mrf.mxu0
        %478 = vdwg.mxu0
        %v479 = vrcp.pop 16.0
        %v480 = vmul.f32 %v402, %v479
        %v481 = vmul.f32 %v476, %v479
        %v482 = vmul.f32 %v480, %v480
        %v483 = vsub.f32 %v481, %v482
        %v484 = vmax.f32 %v483, 0.0
        %v485 = vadd.f32 %v484, 1e-05
        %v486 = vrsqrt.pop %v485
        %v487 = vld [vmem:[%s2] sm:$0xff]
        %v488 = vld [vmem:[%s2 + $0x8] sm:$0xff]
        %v489 = vld [vmem:[%s2 + $0x10] sm:$0xff]
        %v490 = vld [vmem:[%s2 + $0x18] sm:$0xff]
        %v492 = vsel %vm297, %v480, 0
        %494 = vmatprep.subr.mxu0 0.0
        %495 = vmatpush1.msra.mxu0 0.0
        %496 = vmatprep.subr.mxu0 0.0
        %497 = vmatpush1.msra.mxu0 0.0
        %498 = vmatprep.subr.mxu0 0.0
        %499 = vmatpush1.msra.mxu0 0.0
        %500 = vmatprep.subr.mxu0 0.0
        %501 = vmatpush1.msra.mxu0 0.0
        %502 = vmatprep.subr.mxu0 0.0
        %503 = vmatpush1.msra.mxu0 0.0
        %504 = vmatprep.subr.mxu0 0.0
        %505 = vmatpush1.msra.mxu0 0.0
        %506 = vmatprep.subr.mxu0 0.0
        %507 = vmatpush1.msra.mxu0 0.0
        %508 = vmatprep.subr.mxu0 0.0
        %509 = vmatpush1.msra.mxu0 0.0
        %510 = vmatprep.subr.mxu0 0.0
        %511 = vmatpush1.msra.mxu0 0.0
        %512 = vmatprep.subr.mxu0 0.0
        %513 = vmatpush1.msra.mxu0 0.0
        %514 = vmatprep.subr.mxu0 0.0
        %515 = vmatpush1.msra.mxu0 0.0
        %516 = vmatprep.subr.mxu0 0.0
        %517 = vmatpush1.msra.mxu0 0.0
        %518 = vmatprep.subr.mxu0 0.0
        %519 = vmatpush1.msra.mxu0 %v490
        %520 = vmatprep.subr.mxu0 0.0
        %521 = vmatpush1.msra.mxu0 %v489
        %522 = vmatprep.subr.mxu0 0.0
        %523 = vmatpush1.msra.mxu0 %v488
        %524 = vmatprep.subr.mxu0 0.0
        %525 = vmatpush1.msra.mxu0 %v487
        %526 = vmatprep.subr.mxu0 0.0
        %527 = vmatpush2.msra.mxu0 0.0
        %528 = vmatprep.subr.mxu0 0.0
        %529 = vmatpush2.msra.mxu0 0.0
        %530 = vmatprep.subr.mxu0 0.0
        %531 = vmatpush2.msra.mxu0 0.0
        %532 = vmatprep.subr.mxu0 0.0
        %533 = vmatpush2.msra.mxu0 0.0
        %534 = vmatprep.subr.mxu0 0.0
        %535 = vmatpush2.msra.mxu0 0.0
        %536 = vmatprep.subr.mxu0 0.0
        %537 = vmatpush2.msra.mxu0 0.0
        %538 = vmatprep.subr.mxu0 0.0
        %539 = vmatpush2.msra.mxu0 0.0
        %540 = vmatprep.subr.mxu0 0.0
        %541 = vmatpush2.msra.mxu0 0.0
        %542 = vmatprep.subr.mxu0 0.0
        %543 = vmatpush2.msra.mxu0 0.0
        %544 = vmatprep.subr.mxu0 0.0
        %545 = vmatpush2.msra.mxu0 0.0
        %546 = vmatprep.subr.mxu0 0.0
        %547 = vmatpush2.msra.mxu0 0.0
        %548 = vmatprep.subr.mxu0 0.0
        %549 = vmatpush2.msra.mxu0 0.0
        %550 = vmatprep.subr.mxu0 0.0
        %551 = vmatpush2.msra.mxu0 0.0
        %552 = vmatprep.subr.mxu0 0.0
        %553 = vmatpush2.msra.mxu0 0.0
        %554 = vmatprep.subr.mxu0 0.0
        %555 = vmatpush2.msra.mxu0 0.0
        %556 = vmatprep.subr.mxu0 0.0
        %557 = vmatpush2.msra.mxu0 0.0
        %558 = vmatprep.mubr.f32.mxu0 0.0
        %559 = vmatmul.mubr.f32.gmra.mxu0 %v492
        %v560 = vpop.f32.mrf.mxu0
        %v561 = vadd.f32 0.0, %v560
        %v562 = vpop.f32.mrf.mxu0
        %563 = vdwg.mxu0
        %v565 = vsel %vm297, %v486, 0
        %567 = vmatprep.subr.mxu0 0.0
        %568 = vmatpush1.msra.mxu0 0.0
        %569 = vmatprep.subr.mxu0 0.0
        %570 = vmatpush1.msra.mxu0 0.0
        %571 = vmatprep.subr.mxu0 0.0
        %572 = vmatpush1.msra.mxu0 0.0
        %573 = vmatprep.subr.mxu0 0.0
        %574 = vmatpush1.msra.mxu0 0.0
        %575 = vmatprep.subr.mxu0 0.0
        %576 = vmatpush1.msra.mxu0 0.0
        %577 = vmatprep.subr.mxu0 0.0
        %578 = vmatpush1.msra.mxu0 0.0
        %579 = vmatprep.subr.mxu0 0.0
        %580 = vmatpush1.msra.mxu0 0.0
        %581 = vmatprep.subr.mxu0 0.0
        %582 = vmatpush1.msra.mxu0 0.0
        %583 = vmatprep.subr.mxu0 0.0
        %584 = vmatpush1.msra.mxu0 0.0
        %585 = vmatprep.subr.mxu0 0.0
        %586 = vmatpush1.msra.mxu0 0.0
        %587 = vmatprep.subr.mxu0 0.0
        %588 = vmatpush1.msra.mxu0 0.0
        %589 = vmatprep.subr.mxu0 0.0
        %590 = vmatpush1.msra.mxu0 0.0
        %591 = vmatprep.subr.mxu0 0.0
        %592 = vmatpush1.msra.mxu0 %v490
        %593 = vmatprep.subr.mxu0 0.0
        %594 = vmatpush1.msra.mxu0 %v489
        %595 = vmatprep.subr.mxu0 0.0
        %596 = vmatpush1.msra.mxu0 %v488
        %597 = vmatprep.subr.mxu0 0.0
        %598 = vmatpush1.msra.mxu0 %v487
        %599 = vmatprep.subr.mxu0 0.0
        %600 = vmatpush2.msra.mxu0 0.0
        %601 = vmatprep.subr.mxu0 0.0
        %602 = vmatpush2.msra.mxu0 0.0
        %603 = vmatprep.subr.mxu0 0.0
        %604 = vmatpush2.msra.mxu0 0.0
        %605 = vmatprep.subr.mxu0 0.0
        %606 = vmatpush2.msra.mxu0 0.0
        %607 = vmatprep.subr.mxu0 0.0
        %608 = vmatpush2.msra.mxu0 0.0
        %609 = vmatprep.subr.mxu0 0.0
        %610 = vmatpush2.msra.mxu0 0.0
        %611 = vmatprep.subr.mxu0 0.0
        %612 = vmatpush2.msra.mxu0 0.0
        %613 = vmatprep.subr.mxu0 0.0
        %614 = vmatpush2.msra.mxu0 0.0
        %615 = vmatprep.subr.mxu0 0.0
        %616 = vmatpush2.msra.mxu0 0.0
        %617 = vmatprep.subr.mxu0 0.0
        %618 = vmatpush2.msra.mxu0 0.0
        %619 = vmatprep.subr.mxu0 0.0
        %620 = vmatpush2.msra.mxu0 0.0
        %621 = vmatprep.subr.mxu0 0.0
        %622 = vmatpush2.msra.mxu0 0.0
        %623 = vmatprep.subr.mxu0 0.0
        %624 = vmatpush2.msra.mxu0 0.0
        %625 = vmatprep.subr.mxu0 0.0
        %626 = vmatpush2.msra.mxu0 0.0
        %627 = vmatprep.subr.mxu0 0.0
        %628 = vmatpush2.msra.mxu0 0.0
        %629 = vmatprep.subr.mxu0 0.0
        %630 = vmatpush2.msra.mxu0 0.0
        %631 = vmatprep.mubr.f32.mxu0 0.0
        %632 = vmatmul.mubr.f32.gmra.mxu0 %v565
        %v633 = vpop.f32.mrf.mxu0
        %v634 = vadd.f32 0.0, %v633
        %v635 = vpop.f32.mrf.mxu0
        %636 = vdwg.mxu0
        %v637 = vld [vmem:[%s3] sm:$0x1]
        %v638 = vmul.f32 %v637, %v634
        %v639 = vld [vmem:[%s4] sm:$0x1]
        %v640 = vmul.f32 %v561, %v638
        %v641 = vsub.f32 %v639, %v640
        %642 = vst.msk [vmem:[%s281] sm:$0x1] %vm308, %v638
        %643 = vst.msk [vmem:[%s284] sm:$0x1] %vm308, %v641
      $region48: #{resnet_stage.18} parent=39 // pred_fallthru
        _
      %p644 = scmp.lt.s32.totalorder %s22, 1
      %s645 = scalar_select %p644, %s22, 1
      %s646 = scalar_lea.vmem %s5, %s645
      %p647 = scmp.lt.s32.totalorder %s22, 1
      %s648 = scalar_select %p647, %s22, 1
      %s649 = scalar_lea.vmem %s6, %s648
      // Predicated region
      $region49: #{resnet_stage.18} parent=39 // pred_check
        %p650 = pneg %p160
      $region50: #{resnet_stage.18} parent=39 // pred_check_branch
        %652 = sbr.rel (%p650) target = $region52
      $region51: #{resnet_stage.18} parent=39 // pred_region
        _
      $region52: #{resnet_stage.18} parent=39 // pred_fallthru
        _
      // Predicated region
      $region53: #{resnet_stage.18} parent=39 // pred_check
        %p653 = pneg %p186
      $region54: #{resnet_stage.18} parent=39 // pred_check_branch
        %655 = sbr.rel (%p653) target = $region56
      $region55: #{resnet_stage.18} parent=39 // pred_region
        _
      $region56: #{resnet_stage.18} parent=39 // pred_fallthru
        _
    $region40: #{resnet_stage.18} parent=5 // pred_fallthru
      _
    %p656 = scmp.le.s32.totalorder 2, %s13
    // Predicated region
    $region57: #{resnet_stage.18} parent=5 // pred_check
      %p657 = pneg %p656
    $region58: #{resnet_stage.18} parent=5 // pred_check_branch
      %659 = sbr.rel (%p657) target = $region60
    $region59: #{resnet_stage.18} parent=5 // pred_region
      %s660 = ssub.s32 %s13, 2
      // Predicated region
      $region61: #{resnet_stage.18} parent=59 // pred_check
        %p661 = pneg %p166
      $region62: #{resnet_stage.18} parent=59 // pred_check_branch
        %663 = sbr.rel (%p661) target = $region64
      $region63: #{resnet_stage.18} parent=59 // pred_region
        %p664 = scmp.lt.s32.totalorder %s24, 1
        %s665 = scalar_select %p664, %s24, 1
        %s666 = scalar_lea.vmem %s5, %s665
      $region64: #{resnet_stage.18} parent=59 // pred_fallthru
        _
      // Predicated region
      $region65: #{resnet_stage.18} parent=59 // pred_check
        %p667 = pneg %p192
      $region66: #{resnet_stage.18} parent=59 // pred_check_branch
        %669 = sbr.rel (%p667) target = $region68
      $region67: #{resnet_stage.18} parent=59 // pred_region
        %p670 = scmp.lt.s32.totalorder %s24, 1
        %s671 = scalar_select %p670, %s24, 1
        %s672 = scalar_lea.vmem %s6, %s671
      $region68: #{resnet_stage.18} parent=59 // pred_fallthru
        _
    $region60: #{resnet_stage.18} parent=5 // pred_fallthru
      _
  $region6: #{resnet_stage.18} parent=0 // loop_footer
    %s17 = sadd.s32 1, %s13
  $region7: #{resnet_stage.18} parent=0 // loop_footer_branch
    %12 = sbr.rel target = $region3
  $region8: #{resnet_stage.18} parent=0 // loop_exit
    _

// kernel: resnet_stage.14
$region0: #{resnet_stage.14}
  #allocation0 [shape = 'u32[]', space=smem, size = 0x4, offset = 0x4, fixed_abs, tag = 'smem constant byte address 0x4 - core index']
  #allocation1 [shape = 'u32[144,128]{1,0:T(1,128)}', space=vmem, size = 0x12000, scoped, tag = 'internal scratch']
  #allocation2 [shape = 'f32[16,128]{1,0:T(8,128)}', space=vmem, size = 0x2000, scoped, tag = 'scratch operand']
  %s0 = inlined_call_operand.vmem [shape: bf16[2,16,32], index: 0, kind: input, shape index: {}]
  %s1 = inlined_call_operand.vmem [shape: f32[2,1,32], index: 1, kind: input, shape index: {}]
  %s2 = inlined_call_operand.vmem [shape: f32[2,1,32], index: 2, kind: input, shape index: {}]
  %s3 = inlined_call_operand.vmem [shape: bf16[32,128], index: 3, kind: input, shape index: {}]
  %s4 = inlined_call_operand.vmem [shape: bf16[2,16,128], index: 4, kind: output, shape index: {}]
  %s5 = sld [smem:[#allocation0]]
  $region57: #{resnet_stage.14} parent=0
    _
  %s7 = ssub.s32 1, %s5
  %s8 = scalar_select 0, %s7, %s5
  loop: start=0, step=1, limit=4
  $region2: #{resnet_stage.14} parent=0 // loop_pre_header
    _
  $region3: #{resnet_stage.14} parent=0 // loop_header
    %s10 = sphi 0, %s14
    %p11 = scmp.ge.s32.totalorder %s10, 4
    %s17 = sphi 0, %s43
    %s18 = sphi 0, %s39
    %s19 = sphi 0, %s35
    %s20 = sphi 0, %s31
    %s21 = sphi 0, %s17
    %s22 = sphi 0, %s18
    %s23 = sphi 0, %s19
    %s24 = sphi 0, %s20
    %s25 = sphi 0, %s21
    %s26 = sphi 0, %s22
    %s27 = sphi 0, %s23
    %s28 = sphi 0, %s24
    %s50 = sphi 0, %s52
    %s53 = sphi 0, %s50
    %s54 = sphi 0, %s53
    %s70 = sphi 0, %s54
    %s78 = sphi 0, %s80
    %s81 = sphi 0, %s78
    %s82 = sphi 0, %s81
    %s98 = sphi 0, %s82
    %s106 = sphi 0, %s108
    %s109 = sphi 0, %s106
    %s110 = sphi 0, %s109
    %s126 = sphi 0, %s110
    %s134 = sphi 0, %s136
    %s137 = sphi 0, %s134
    %s138 = sphi 0, %s137
    %s154 = sphi 0, %s138
    %s164 = sphi 0, %s166
    %s167 = sphi 0, %s164
    %s168 = sphi 0, %s167
    %s184 = sphi 0, %s168
  $region4: #{resnet_stage.14} parent=0 // loop_header_branch
    %13 = sbr.rel (%p11) target = $region8
  $region5: #{resnet_stage.14} parent=0 // loop_body
    %s15 = ssub.s32 %s10, 1
    %s16 = ssub.s32 %s10, 2
    %s29 = sadd.s32 1, %s20
    %p30 = scmp.ge.s32.totalorder %s29, 1
    %s31 = scalar_select %p30, 0, %s29
    %s32 = sadd.s32 1, %s19
    %s33 = scalar_select %p30, %s32, %s19
    %p34 = scmp.ge.s32.totalorder %s33, 1
    %s35 = scalar_select %p34, 0, %s33
    %s36 = sadd.s32 1, %s18
    %s37 = scalar_select %p34, %s36, %s18
    %p38 = scmp.ge.s32.totalorder %s37, 1
    %s39 = scalar_select %p38, 0, %s37
    %s40 = sadd.s32 1, %s17
    %s41 = scalar_select %p38, %s40, %s17
    %p42 = scmp.ge.s32.totalorder %s41, 2
    %s43 = scalar_select %p42, 0, %s41
    %s44 = ssub.s32 %s17, %s43
    %s45 = ssub.s32 %s18, %s39
    %s46 = sor.u32 %s44, %s45
    %s47 = ssub.s32 %s20, %s31
    %s48 = sor.u32 %s46, %s47
    %p49 = scmp.eq.s32.totalorder %s48, 0
    %s51 = sadd.s32 %s50, 1
    %s52 = scalar_select %p49, %s50, %s51
    %p55 = pneg %p49
    %p56 = scmp.eq.s32.totalorder %s10, 1
    %p57 = por %p55, %p56
    %p58 = scmp.ne.s32.totalorder %s50, %s53
    %p59 = scmp.eq.s32.totalorder %s10, 0
    %p60 = por %p58, %p59
    %p61 = scmp.ne.s32.totalorder %s50, %s53
    %p62 = scmp.eq.s32.totalorder %s15, 1
    %p63 = por %p61, %p62
    %p64 = scmp.ne.s32.totalorder %s53, %s54
    %p65 = scmp.eq.s32.totalorder %s15, 0
    %p66 = por %p64, %p65
    %p67 = scmp.ne.s32.totalorder %s53, %s54
    %p68 = scmp.eq.s32.totalorder %s16, 1
    %p69 = por %p67, %p68
    %p71 = scmp.ne.s32.totalorder %s54, %s70
    %p72 = scmp.eq.s32.totalorder %s16, 0
    %p73 = por %p71, %p72
    %s74 = ssub.s32 %s17, %s43
    %s75 = ssub.s32 %s20, %s31
    %s76 = sor.u32 %s74, %s75
    %p77 = scmp.eq.s32.totalorder %s76, 0
    %s79 = sadd.s32 %s78, 1
    %s80 = scalar_select %p77, %s78, %s79
    %p83 = pneg %p77
    %p84 = scmp.eq.s32.totalorder %s10, 1
    %p85 = por %p83, %p84
    %p86 = scmp.ne.s32.totalorder %s78, %s81
    %p87 = scmp.eq.s32.totalorder %s10, 0
    %p88 = por %p86, %p87
    %p89 = scmp.ne.s32.totalorder %s78, %s81
    %p90 = scmp.eq.s32.totalorder %s15, 1
    %p91 = por %p89, %p90
    %p92 = scmp.ne.s32.totalorder %s81, %s82
    %p93 = scmp.eq.s32.totalorder %s15, 0
    %p94 = por %p92, %p93
    %p95 = scmp.ne.s32.totalorder %s81, %s82
    %p96 = scmp.eq.s32.totalorder %s16, 1
    %p97 = por %p95, %p96
    %p99 = scmp.ne.s32.totalorder %s82, %s98
    %p100 = scmp.eq.s32.totalorder %s16, 0
    %p101 = por %p99, %p100
    %s102 = ssub.s32 %s17, %s43
    %s103 = ssub.s32 %s20, %s31
    %s104 = sor.u32 %s102, %s103
    %p105 = scmp.eq.s32.totalorder %s104, 0
    %s107 = sadd.s32 %s106, 1
    %s108 = scalar_select %p105, %s106, %s107
    %p111 = pneg %p105
    %p112 = scmp.eq.s32.totalorder %s10, 1
    %p113 = por %p111, %p112
    %p114 = scmp.ne.s32.totalorder %s106, %s109
    %p115 = scmp.eq.s32.totalorder %s10, 0
    %p116 = por %p114, %p115
    %p117 = scmp.ne.s32.totalorder %s106, %s109
    %p118 = scmp.eq.s32.totalorder %s15, 1
    %p119 = por %p117, %p118
    %p120 = scmp.ne.s32.totalorder %s109, %s110
    %p121 = scmp.eq.s32.totalorder %s15, 0
    %p122 = por %p120, %p121
    %p123 = scmp.ne.s32.totalorder %s109, %s110
    %p124 = scmp.eq.s32.totalorder %s16, 1
    %p125 = por %p123, %p124
    %p127 = scmp.ne.s32.totalorder %s110, %s126
    %p128 = scmp.eq.s32.totalorder %s16, 0
    %p129 = por %p127, %p128
    %s130 = ssub.s32 %s20, %s31
    %s131 = ssub.s32 %s19, %s35
    %s132 = sor.u32 %s130, %s131
    %p133 = scmp.eq.s32.totalorder %s132, 0
    %s135 = sadd.s32 %s134, 1
    %s136 = scalar_select %p133, %s134, %s135
    %p139 = pneg %p133
    %p140 = scmp.eq.s32.totalorder %s10, 1
    %p141 = por %p139, %p140
    %p142 = scmp.ne.s32.totalorder %s134, %s137
    %p143 = scmp.eq.s32.totalorder %s10, 0
    %p144 = por %p142, %p143
    %p145 = scmp.ne.s32.totalorder %s134, %s137
    %p146 = scmp.eq.s32.totalorder %s15, 1
    %p147 = por %p145, %p146
    %p148 = scmp.ne.s32.totalorder %s137, %s138
    %p149 = scmp.eq.s32.totalorder %s15, 0
    %p150 = por %p148, %p149
    %p151 = scmp.ne.s32.totalorder %s137, %s138
    %p152 = scmp.eq.s32.totalorder %s16, 1
    %p153 = por %p151, %p152
    %p155 = scmp.ne.s32.totalorder %s138, %s154
    %p156 = scmp.eq.s32.totalorder %s16, 0
    %p157 = por %p155, %p156
    %s158 = ssub.s32 %s17, %s43
    %s159 = ssub.s32 %s18, %s39
    %s160 = sor.u32 %s158, %s159
    %s161 = ssub.s32 %s19, %s35
    %s162 = sor.u32 %s160, %s161
    %p163 = scmp.eq.s32.totalorder %s162, 0
    %s165 = sadd.s32 %s164, 1
    %s166 = scalar_select %p163, %s164, %s165
    %p169 = pneg %p163
    %p170 = scmp.eq.s32.totalorder %s10, 1
    %p171 = por %p169, %p170
    %p172 = scmp.ne.s32.totalorder %s164, %s167
    %p173 = scmp.eq.s32.totalorder %s10, 0
    %p174 = por %p172, %p173
    %p175 = scmp.ne.s32.totalorder %s164, %s167
    %p176 = scmp.eq.s32.totalorder %s15, 1
    %p177 = por %p175, %p176
    %p178 = scmp.ne.s32.totalorder %s167, %s168
    %p179 = scmp.eq.s32.totalorder %s15, 0
    %p180 = por %p178, %p179
    %p181 = scmp.ne.s32.totalorder %s167, %s168
    %p182 = scmp.eq.s32.totalorder %s16, 1
    %p183 = por %p181, %p182
    %p185 = scmp.ne.s32.totalorder %s168, %s184
    %p186 = scmp.eq.s32.totalorder %s16, 0
    %p187 = por %p185, %p186
    %p188 = scmp.le.s32.totalorder 1, %s10
    %p189 = scmp.lt.s32.totalorder %s10, 3
    %p190 = pnand %p188, %p189
    %p191 = pneg %p190
    // Predicated region
    $region9: #{resnet_stage.14} parent=5 // pred_check
      _
    $region10: #{resnet_stage.14} parent=5 // pred_check_branch
      %193 = sbr.rel (%p190) target = $region12
    $region11: #{resnet_stage.14} parent=5 // pred_region
      %s194 = ssub.s32 %s10, 1
      // Predicated region
      $region13: #{resnet_stage.14} parent=11 // pred_check
        %p195 = pneg %p150
      $region14: #{resnet_stage.14} parent=11 // pred_check_branch
        %197 = sbr.rel (%p195) target = $region16
      $region15: #{resnet_stage.14} parent=11 // pred_region
        %s198 = smul.u32 4, %s24
        %p199 = scmp.lt.s32.totalorder %s198, 3
        %s200 = scalar_select %p199, %s198, 3
        %p201 = scmp.lt.s32.totalorder %s23, 0
        %s202 = scalar_select %p201, %s23, 0
        %s203 = sadd.s32 %s202, %s200
        %s204 = smul.addr %s203, 4
        %s205 = scalar_lea.vmem %s3, %s204
        %s206 = smul.u32 4, %s24
      $region16: #{resnet_stage.14} parent=11 // pred_fallthru
        _
    $region12: #{resnet_stage.14} parent=5 // pred_fallthru
      _
    %p207 = scmp.lt.s32.totalorder %s10, 2
    // Predicated region
    $region17: #{resnet_stage.14} parent=5 // pred_check
      %p208 = pneg %p207
    $region18: #{resnet_stage.14} parent=5 // pred_check_branch
      %210 = sbr.rel (%p208) target = $region20
    $region19: #{resnet_stage.14} parent=5 // pred_region
      // Predicated region
      $region21: #{resnet_stage.14} parent=19 // pred_check
        %p211 = pneg %p60
      $region22: #{resnet_stage.14} parent=19 // pred_check_branch
        %213 = sbr.rel (%p211) target = $region24
      $region23: #{resnet_stage.14} parent=19 // pred_region
        %s214 = smul.u32 2, %s18
        %p215 = scmp.lt.s32.totalorder %s17, 1
        %s216 = scalar_select %p215, %s17, 1
        %p217 = scmp.lt.s32.totalorder %s214, 1
        %s218 = scalar_select %p217, %s214, 1
        %p219 = scmp.lt.s32.totalorder %s20, 0
        %s220 = scalar_select %p219, %s20, 0
        %s221 = sadd.s32 %s220, %s218
        %s222 = smul.addr %s216, 2
        %s223 = sadd.s32 %s221, %s222
        %s224 = smul.addr %s223, 4
        %s225 = scalar_lea.vmem %s0, %s224
        %s226 = smul.u32 2, %s18
      $region24: #{resnet_stage.14} parent=19 // pred_fallthru
        _
      // Predicated region
      $region25: #{resnet_stage.14} parent=19 // pred_check
        %p227 = pneg %p88
      $region26: #{resnet_stage.14} parent=19 // pred_check_branch
        %229 = sbr.rel (%p227) target = $region28
      $region27: #{resnet_stage.14} parent=19 // pred_region
        %p230 = scmp.lt.s32.totalorder %s17, 1
        %s231 = scalar_select %p230, %s17, 1
        %p232 = scmp.lt.s32.totalorder %s20, 0
        %s233 = scalar_select %p232, %s20, 0
        %s234 = sadd.s32 %s233, %s231
        %s235 = scalar_lea.vmem %s1, %s234
      $region28: #{resnet_stage.14} parent=19 // pred_fallthru
        _
      // Predicated region
      $region29: #{resnet_stage.14} parent=19 // pred_check
        %p236 = pneg %p116
      $region30: #{resnet_stage.14} parent=19 // pred_check_branch
        %238 = sbr.rel (%p236) target = $region32
      $region31: #{resnet_stage.14} parent=19 // pred_region
        %p239 = scmp.lt.s32.totalorder %s17, 1
        %s240 = scalar_select %p239, %s17, 1
        %p241 = scmp.lt.s32.totalorder %s20, 0
        %s242 = scalar_select %p241, %s20, 0
        %s243 = sadd.s32 %s242, %s240
        %s244 = scalar_lea.vmem %s2, %s243
      $region32: #{resnet_stage.14} parent=19 // pred_fallthru
        _
    $region20: #{resnet_stage.14} parent=5 // pred_fallthru
      _
    %p245 = scmp.le.s32.totalorder 1, %s10
    %p246 = scmp.lt.s32.totalorder %s10, 3
    %p247 = pnand %p245, %p246
    %p248 = pneg %p247
    // Predicated region
    $region33: #{resnet_stage.14} parent=5 // pred_check
      _
    $region34: #{resnet_stage.14} parent=5 // pred_check_branch
      %250 = sbr.rel (%p247) target = $region36
    $region35: #{resnet_stage.14} parent=5 // pred_region
      %s251 = ssub.s32 %s10, 1
      %s252 = smul.u32 2, %s22
      %p253 = scmp.lt.s32.totalorder %s21, 1
      %s254 = scalar_select %p253, %s21, 1
      %p255 = scmp.lt.s32.totalorder %s252, 1
      %s256 = scalar_select %p255, %s252, 1
      %p257 = scmp.lt.s32.totalorder %s24, 0
      %s258 = scalar_select %p257, %s24, 0
      %s259 = sadd.s32 %s258, %s256
      %s260 = smul.addr %s254, 2
      %s261 = sadd.s32 %s259, %s260
      %s262 = smul.addr %s261, 4
      %s263 = scalar_lea.vmem %s0, %s262
      %p264 = pneg %p66
      %p265 = pneg %p63
      %p266 = scmp.lt.s32.totalorder %s21, 1
      %s267 = scalar_select %p266, %s21, 1
      %p268 = scmp.lt.s32.totalorder %s24, 0
      %s269 = scalar_select %p268, %s24, 0
      %s270 = sadd.s32 %s269, %s267
      %s271 = scalar_lea.vmem %s1, %s270
      %p272 = pneg %p94
      %p273 = pneg %p91
      %p274 = scmp.lt.s32.totalorder %s21, 1
      %s275 = scalar_select %p274, %s21, 1
      %p276 = scmp.lt.s32.totalorder %s24, 0
      %s277 = scalar_select %p276, %s24, 0
      %s278 = sadd.s32 %s277, %s275
      %s279 = scalar_lea.vmem %s2, %s278
      %p280 = pneg %p122
      %p281 = pneg %p119
      %s282 = smul.u32 4, %s24
      %p283 = scmp.lt.s32.totalorder %s282, 3
      %s284 = scalar_select %p283, %s282, 3
      %p285 = scmp.lt.s32.totalorder %s23, 0
      %s286 = scalar_select %p285, %s23, 0
      %s287 = sadd.s32 %s286, %s284
      %s288 = smul.addr %s287, 4
      %s289 = scalar_lea.vmem %s3, %s288
      %p290 = pneg %p150
      %p291 = pneg %p147
      %p292 = pneg %p180
      %p293 = pneg %p177
      %s294 = smul.u32 2, %s22
      %p295 = scmp.lt.s32.totalorder %s21, 1
      %s296 = scalar_select %p295, %s21, 1
      %p297 = scmp.lt.s32.totalorder %s294, 1
      %s298 = scalar_select %p297, %s294, 1
      %p299 = scmp.lt.s32.totalorder %s23, 0
      %s300 = scalar_select %p299, %s23, 0
      %s301 = sadd.s32 %s300, %s298
      %s302 = smul.addr %s296, 2
      %s303 = sadd.s32 %s301, %s302
      %s304 = smul.addr %s303, 4
      %s305 = scalar_lea.vmem %s4, %s304
      %s306 = smul.u32 2, %s22
      %p307 = scmp.lt.s32.totalorder %s21, 1
      %s308 = scalar_select %p307, %s21, 1
      %p309 = scmp.lt.s32.totalorder %s306, 1
      %s310 = scalar_select %p309, %s306, 1
      %p311 = scmp.lt.s32.totalorder %s24, 0
      %s312 = scalar_select %p311, %s24, 0
      %s313 = sadd.s32 %s312, %s310
      %s314 = smul.addr %s308, 2
      %s315 = sadd.s32 %s313, %s314
      %s316 = smul.addr %s315, 4
      %s317 = scalar_lea.vmem %s0, %s316
      %s318 = smul.u32 2, %s22
      %p319 = scmp.lt.s32.totalorder %s21, 1
      %s320 = scalar_select %p319, %s21, 1
      %p321 = scmp.lt.s32.totalorder %s24, 0
      %s322 = scalar_select %p321, %s24, 0
      %s323 = sadd.s32 %s322, %s320
      %s324 = scalar_lea.vmem %s1, %s323
      %p325 = scmp.lt.s32.totalorder %s21, 1
      %s326 = scalar_select %p325, %s21, 1
      %p327 = scmp.lt.s32.totalorder %s24, 0
      %s328 = scalar_select %p327, %s24, 0
      %s329 = sadd.s32 %s328, %s326
      %s330 = scalar_lea.vmem %s2, %s329
      %s331 = smul.u32 4, %s24
      %p332 = scmp.lt.s32.totalorder %s331, 3
      %s333 = scalar_select %p332, %s331, 3
      %p334 = scmp.lt.s32.totalorder %s23, 0
      %s335 = scalar_select %p334, %s23, 0
      %s336 = sadd.s32 %s335, %s333
      %s337 = smul.addr %s336, 4
      %s338 = scalar_lea.vmem %s3, %s337
      %s339 = smul.u32 4, %s24
      %s340 = smul.u32 2, %s22
      %p341 = scmp.lt.s32.totalorder %s21, 1
      %s342 = scalar_select %p341, %s21, 1
      %p343 = scmp.lt.s32.totalorder %s340, 1
      %s344 = scalar_select %p343, %s340, 1
      %p345 = scmp.lt.s32.totalorder %s23, 0
      %s346 = scalar_select %p345, %s23, 0
      %s347 = sadd.s32 %s346, %s344
      %s348 = smul.addr %s342, 2
      %s349 = sadd.s32 %s347, %s348
      %s350 = smul.addr %s349, 4
      %s351 = scalar_lea.vmem %s4, %s350
      %s352 = smul.u32 2, %s22
      %p354 = scmp.eq.s32.totalorder %s24, 0
      // Predicated region
      $region37: #{resnet_stage.14} parent=35 // pred_check
        %p355 = pneg %p354
      $region38: #{resnet_stage.14} parent=35 // pred_check_branch
        %357 = sbr.rel (%p355) target = $region40
      $region39: #{resnet_stage.14} parent=35 // pred_region
        %358 = vst [vmem:[#allocation2] sm:$0xff] 0.0
        %359 = vst [vmem:[#allocation2 + $0x8] sm:$0xff] 0.0
      $region40: #{resnet_stage.14} parent=35 // pred_fallthru
        _
      %v360 = vld [vmem:[%s317] sm:$0xf]
      %v361 = vld [vmem:[%s317 + $0x4] sm:$0xf]
      %v362 = vunpack.c.l.bf16 %v360
      %v363 = vunpack.c.l.bf16 %v361
      %v364 = vld [vmem:[%s324] sm:$0x1]
      %v366 = vlaneseq
      %v367 = vshrl.u32 %v366, 7
      %v368 = vsub.s32 0, %v367
      %v369 = vrot.slane %v364, %v368
      %v371 = vmul.f32 %v362, %v369
      %v372 = vmul.f32 %v363, %v369
      %v373 = vld [vmem:[%s330] sm:$0x1]
      %v375 = vlaneseq
      %v376 = vshrl.u32 %v375, 7
      %v377 = vsub.s32 0, %v376
      %v378 = vrot.slane %v373, %v377
      %v380 = vadd.f32 %v371, %v378
      %v381 = vadd.f32 %v372, %v378
      %v382 = vmax.f32 %v380, 0.0
      %v383 = vmax.f32 %v381, 0.0
      %v384 = vld [vmem:[#allocation2] sm:$0xff]
      %v385 = vld [vmem:[#allocation2 + $0x8] sm:$0xff]
      %v386 = vpack.c.bf16 %v383, %v382
      %v387 = vld [vmem:[%s338] sm:$0xf]
      %v388 = vld [vmem:[%s338 + $0x4] sm:$0xf]
      %v389 = vld [vmem:[%s338 + $0x8] sm:$0xf]
      %v390 = vld [vmem:[%s338 + $0xc] sm:$0xf]
      %v395 = vunpack.c.l.b16 %v387
      %v396 = vunpack.c.l.b16 %v388
      %v397 = vunpack.c.l.b16 %v389
      %v398 = vunpack.c.l.b16 %v390
      %v399 = vpack.c.b16 %v396, %v395
      %v400 = vpack.c.b16 %v398, %v397
      %vm403 = vcmask 261120
      %v405 = vsel %vm403, %v386, 0
      %407 = vmatprep.subr.bf16.mxu0 0
      %408 = vmatpush1.bf16.msra.mxu0 0
      %409 = vmatprep.subr.bf16.mxu0 0
      %410 = vmatpush1.bf16.msra.mxu0 0
      %411 = vmatprep.subr.bf16.mxu0 0
      %412 = vmatpush1.bf16.msra.mxu0 0
      %413 = vmatprep.subr.bf16.mxu0 0
      %414 = vmatpush1.bf16.msra.mxu0 0
      %415 = vmatprep.subr.bf16.mxu0 0
      %416 = vmatpush1.bf16.msra.mxu0 0
      %417 = vmatprep.subr.bf16.mxu0 0
      %418 = vmatpush1.bf16.msra.mxu0 0
      %419 = vmatprep.subr.bf16.mxu0 0
      %420 = vmatpush1.bf16.msra.mxu0 %v400
      %421 = vmatprep.subr.bf16.mxu0 0
      %422 = vmatpush1.bf16.msra.mxu0 %v399
      %423 = vmatprep.subr.bf16.mxu0 0
      %424 = vmatpush2.bf16.msra.mxu0 0
      %425 = vmatprep.subr.bf16.mxu0 0
      %426 = vmatpush2.bf16.msra.mxu0 0
      %427 = vmatprep.subr.bf16.mxu0 0
      %428 = vmatpush2.bf16.msra.mxu0 0
      %429 = vmatprep.subr.bf16.mxu0 0
      %430 = vmatpush2.bf16.msra.mxu0 0
      %431 = vmatprep.subr.bf16.mxu0 0
      %432 = vmatpush2.bf16.msra.mxu0 0
      %433 = vmatprep.subr.bf16.mxu0 0
      %434 = vmatpush2.bf16.msra.mxu0 0
      %435 = vmatprep.subr.bf16.mxu0 0
      %436 = vmatpush2.bf16.msra.mxu0 0
      %437 = vmatprep.subr.bf16.mxu0 0
      %438 = vmatpush2.bf16.msra.mxu0 0
      %439 = vmatprep.mubr.bf16.mxu0 0
      %440 = vmatmul.mubr.bf16.gmra.mxu0 %v405
      %v441 = vpop.f32.mrf.mxu0
      %v442 = vadd.f32 0.0, %v441
      %v443 = vpop.f32.mrf.mxu0
      %v444 = vpop.f32.mrf.mxu0
      %v445 = vadd.f32 0.0, %v444
      %v446 = vpop.f32.mrf.mxu0
      %447 = vdwg.mxu0
      %v448 = vadd.f32 %v384, %v442
      %v449 = vadd.f32 %v385, %v445
      %450 = vst [vmem:[#allocation2] sm:$0xff] %v448
      %451 = vst [vmem:[#allocation2 + $0x8] sm:$0xff] %v449
      // Predicated region
      $region41: #{resnet_stage.14} parent=35 // pred_check
        %p452 = pneg %p354
      $region42: #{resnet_stage.14} parent=35 // pred_check_branch
        %454 = sbr.rel (%p452) target = $region44
      $region43: #{resnet_stage.14} parent=35 // pred_region
        %v455 = vld [vmem:[#allocation2] sm:$0xff]
        %v456 = vld [vmem:[#allocation2 + $0x8] sm:$0xff]
        %v457 = vpack.c.bf16 %v456, %v455
        %v459 = vunpack.c.l.b16 %v457
        %v460 = vunpack.c.h.b16 %v457
        %v461 = vpack.c.b16 %v459, %v459
        %v462 = vpack.c.b16 %v460, %v460
        %465 = vst [vmem:[%s351] sm:$0xf] %v461
        %466 = vst [vmem:[%s351 + $0x4] sm:$0xf] %v462
      $region44: #{resnet_stage.14} parent=35 // pred_fallthru
        _
      %s467 = smul.u32 2, %s22
      %p468 = scmp.lt.s32.totalorder %s21, 1
      %s469 = scalar_select %p468, %s21, 1
      %p470 = scmp.lt.s32.totalorder %s467, 1
      %s471 = scalar_select %p470, %s467, 1
      %p472 = scmp.lt.s32.totalorder %s23, 0
      %s473 = scalar_select %p472, %s23, 0
      %s474 = sadd.s32 %s473, %s471
      %s475 = smul.addr %s469, 2
      %s476 = sadd.s32 %s474, %s475
      %s477 = smul.addr %s476, 4
      %s478 = scalar_lea.vmem %s4, %s477
      // Predicated region
      $region45: #{resnet_stage.14} parent=35 // pred_check
        %p479 = pneg %p177
      $region46: #{resnet_stage.14} parent=35 // pred_check_branch
        %481 = sbr.rel (%p479) target = $region48
      $region47: #{resnet_stage.14} parent=35 // pred_region
        %s482 = smul.u32 2, %s22
      $region48: #{resnet_stage.14} parent=35 // pred_fallthru
        _
    $region36: #{resnet_stage.14} parent=5 // pred_fallthru
      _
    %p483 = scmp.le.s32.totalorder 2, %s10
    // Predicated region
    $region49: #{resnet_stage.14} parent=5 // pred_check
      %p484 = pneg %p483
    $region50: #{resnet_stage.14} parent=5 // pred_check_branch
      %486 = sbr.rel (%p484) target = $region52
    $region51: #{resnet_stage.14} parent=5 // pred_region
      %s487 = ssub.s32 %s10, 2
      // Predicated region
      $region53: #{resnet_stage.14} parent=51 // pred_check
        %p488 = pneg %p183
      $region54: #{resnet_stage.14} parent=51 // pred_check_branch
        %490 = sbr.rel (%p488) target = $region56
      $region55: #{resnet_stage.14} parent=51 // pred_region
        %s491 = smul.u32 2, %s26
        %p492 = scmp.lt.s32.totalorder %s25, 1
        %s493 = scalar_select %p492, %s25, 1
        %p494 = scmp.lt.s32.totalorder %s491, 1
        %s495 = scalar_select %p494, %s491, 1
        %p496 = scmp.lt.s32.totalorder %s27, 0
        %s497 = scalar_select %p496, %s27, 0
        %s498 = sadd.s32 %s497, %s495
        %s499 = smul.addr %s493, 2
        %s500 = sadd.s32 %s498, %s499
        %s501 = smul.addr %s500, 4
        %s502 = scalar_lea.vmem %s4, %s501
      $region56: #{resnet_stage.14} parent=51 // pred_fallthru
        _
    $region52: #{resnet_stage.14} parent=5 // pred_fallthru
      _
  $region6: #{resnet_stage.14} parent=0 // loop_footer
    %s14 = sadd.s32 1, %s10
  $region7: #{resnet_stage.14} parent=0 // loop_footer_branch
    %9 = sbr.rel target = $region3
  $region8: #{resnet_stage.14} parent=0 // loop_exit
    _

// kernel: resnet_stage.17
$region0: #{resnet_stage.17}
  #allocation0 [shape = 'u32[]', space=smem, size = 0x4, offset = 0x4, fixed_abs, tag = 'smem constant byte address 0x4 - core index']
  #allocation1 [shape = 'u32[144,128]{1,0:T(1,128)}', space=vmem, size = 0x12000, scoped, tag = 'internal scratch']
  #allocation2 [shape = 'bf16[100,32]{1,0:T(8,128)(2,1)}', space=vmem, size = 0x6800, scoped, tag = 'scratch operand']
  %s0 = inlined_call_operand.vmem [shape: bf16[2,100,32], index: 0, kind: input, shape index: {}]
  %s1 = inlined_call_operand.vmem [shape: f32[2,1,32], index: 1, kind: input, shape index: {}]
  %s2 = inlined_call_operand.vmem [shape: f32[2,1,32], index: 2, kind: input, shape index: {}]
  %s3 = inlined_call_operand.vmem [shape: f32[100,1], index: 3, kind: input, shape index: {}]
  %s4 = inlined_call_operand.vmem [shape: bf16[9,32,32], index: 4, kind: input, shape index: {}]
  %s5 = inlined_call_operand.vmem [shape: bf16[2,19,32], index: 5, kind: output, shape index: {}]
  %s6 = sld [smem:[#allocation0]]
  $region57: #{resnet_stage.17} parent=0
    _
  %s8 = ssub.s32 1, %s6
  %s9 = scalar_select 0, %s8, %s6
  loop: start=0, step=1, limit=4
  $region2: #{resnet_stage.17} parent=0 // loop_pre_header
    _
  $region3: #{resnet_stage.17} parent=0 // loop_header
    %s11 = sphi 0, %s15
    %p12 = scmp.ge.s32.totalorder %s11, 4
    %s18 = sphi 0, %s30
    %s19 = sphi 0, %s26
    %s20 = sphi 0, %s18
    %s21 = sphi 0, %s19
    %s22 = sphi 0, %s20
    %s23 = sphi 0, %s21
    %s33 = sphi 0, %s35
    %s36 = sphi 0, %s33
    %s37 = sphi 0, %s36
    %s53 = sphi 0, %s37
    %s59 = sphi 0, %s61
    %s62 = sphi 0, %s59
    %s63 = sphi 0, %s62
    %s79 = sphi 0, %s63
    %s85 = sphi 0, %s87
    %s88 = sphi 0, %s85
    %s89 = sphi 0, %s88
    %s105 = sphi 0, %s89
    %s109 = sphi 0, %s109
    %s111 = sphi 0, %s109
    %s112 = sphi 0, %s111
    %s126 = sphi 0, %s112
    %s132 = sphi 0, %s134
    %s135 = sphi 0, %s132
    %s136 = sphi 0, %s135
    %s152 = sphi 0, %s136
    %s160 = sphi 0, %s162
    %s163 = sphi 0, %s160
    %s164 = sphi 0, %s163
    %s180 = sphi 0, %s164
  $region4: #{resnet_stage.17} parent=0 // loop_header_branch
    %14 = sbr.rel (%p12) target = $region8
  $region5: #{resnet_stage.17} parent=0 // loop_body
    %s16 = ssub.s32 %s11, 1
    %s17 = ssub.s32 %s11, 2
    %s24 = sadd.s32 1, %s19
    %p25 = scmp.ge.s32.totalorder %s24, 1
    %s26 = scalar_select %p25, 0, %s24
    %s27 = sadd.s32 1, %s18
    %s28 = scalar_select %p25, %s27, %s18
    %p29 = scmp.ge.s32.totalorder %s28, 2
    %s30 = scalar_select %p29, 0, %s28
    %s31 = ssub.s32 %s18, %s30
    %p32 = scmp.eq.s32.totalorder %s31, 0
    %s34 = sadd.s32 %s33, 1
    %s35 = scalar_select %p32, %s33, %s34
    %p38 = pneg %p32
    %p39 = scmp.eq.s32.totalorder %s11, 1
    %p40 = por %p38, %p39
    %p41 = scmp.ne.s32.totalorder %s33, %s36
    %p42 = scmp.eq.s32.totalorder %s11, 0
    %p43 = por %p41, %p42
    %p44 = scmp.ne.s32.totalorder %s33, %s36
    %p45 = scmp.eq.s32.totalorder %s16, 1
    %p46 = por %p44, %p45
    %p47 = scmp.ne.s32.totalorder %s36, %s37
    %p48 = scmp.eq.s32.totalorder %s16, 0
    %p49 = por %p47, %p48
    %p50 = scmp.ne.s32.totalorder %s36, %s37
    %p51 = scmp.eq.s32.totalorder %s17, 1
    %p52 = por %p50, %p51
    %p54 = scmp.ne.s32.totalorder %s37, %s53
    %p55 = scmp.eq.s32.totalorder %s17, 0
    %p56 = por %p54, %p55
    %s57 = ssub.s32 %s18, %s30
    %p58 = scmp.eq.s32.totalorder %s57, 0
    %s60 = sadd.s32 %s59, 1
    %s61 = scalar_select %p58, %s59, %s60
    %p64 = pneg %p58
    %p65 = scmp.eq.s32.totalorder %s11, 1
    %p66 = por %p64, %p65
    %p67 = scmp.ne.s32.totalorder %s59, %s62
    %p68 = scmp.eq.s32.totalorder %s11, 0
    %p69 = por %p67, %p68
    %p70 = scmp.ne.s32.totalorder %s59, %s62
    %p71 = scmp.eq.s32.totalorder %s16, 1
    %p72 = por %p70, %p71
    %p73 = scmp.ne.s32.totalorder %s62, %s63
    %p74 = scmp.eq.s32.totalorder %s16, 0
    %p75 = por %p73, %p74
    %p76 = scmp.ne.s32.totalorder %s62, %s63
    %p77 = scmp.eq.s32.totalorder %s17, 1
    %p78 = por %p76, %p77
    %p80 = scmp.ne.s32.totalorder %s63, %s79
    %p81 = scmp.eq.s32.totalorder %s17, 0
    %p82 = por %p80, %p81
    %s83 = ssub.s32 %s18, %s30
    %p84 = scmp.eq.s32.totalorder %s83, 0
    %s86 = sadd.s32 %s85, 1
    %s87 = scalar_select %p84, %s85, %s86
    %p90 = pneg %p84
    %p91 = scmp.eq.s32.totalorder %s11, 1
    %p92 = por %p90, %p91
    %p93 = scmp.ne.s32.totalorder %s85, %s88
    %p94 = scmp.eq.s32.totalorder %s11, 0
    %p95 = por %p93, %p94
    %p96 = scmp.ne.s32.totalorder %s85, %s88
    %p97 = scmp.eq.s32.totalorder %s16, 1
    %p98 = por %p96, %p97
    %p99 = scmp.ne.s32.totalorder %s88, %s89
    %p100 = scmp.eq.s32.totalorder %s16, 0
    %p101 = por %p99, %p100
    %p102 = scmp.ne.s32.totalorder %s88, %s89
    %p103 = scmp.eq.s32.totalorder %s17, 1
    %p104 = por %p102, %p103
    %p106 = scmp.ne.s32.totalorder %s89, %s105
    %p107 = scmp.eq.s32.totalorder %s17, 0
    %p108 = por %p106, %p107
    %s110 = sadd.s32 %s109, 1
    %p113 = scmp.eq.s32.totalorder %s11, 1
    %p114 = scmp.ne.s32.totalorder %s109, %s111
    %p115 = scmp.eq.s32.totalorder %s11, 0
    %p116 = por %p114, %p115
    %p117 = scmp.ne.s32.totalorder %s109, %s111
    %p118 = scmp.eq.s32.totalorder %s16, 1
    %p119 = por %p117, %p118
    %p120 = scmp.ne.s32.totalorder %s111, %s112
    %p121 = scmp.eq.s32.totalorder %s16, 0
    %p122 = por %p120, %p121
    %p123 = scmp.ne.s32.totalorder %s111, %s112
    %p124 = scmp.eq.s32.totalorder %s17, 1
    %p125 = por %p123, %p124
    %p127 = scmp.ne.s32.totalorder %s112, %s126
    %p128 = scmp.eq.s32.totalorder %s17, 0
    %p129 = por %p127, %p128
    %s130 = ssub.s32 %s19, %s26
    %p131 = scmp.eq.s32.totalorder %s130, 0
    %s133 = sadd.s32 %s132, 1
    %s134 = scalar_select %p131, %s132, %s133
    %p137 = pneg %p131
    %p138 = scmp.eq.s32.totalorder %s11, 1
    %p139 = por %p137, %p138
    %p140 = scmp.ne.s32.totalorder %s132, %s135
    %p141 = scmp.eq.s32.totalorder %s11, 0
    %p142 = por %p140, %p141
    %p143 = scmp.ne.s32.totalorder %s132, %s135
    %p144 = scmp.eq.s32.totalorder %s16, 1
    %p145 = por %p143, %p144
    %p146 = scmp.ne.s32.totalorder %s135, %s136
    %p147 = scmp.eq.s32.totalorder %s16, 0
    %p148 = por %p146, %p147
    %p149 = scmp.ne.s32.totalorder %s135, %s136
    %p150 = scmp.eq.s32.totalorder %s17, 1
    %p151 = por %p149, %p150
    %p153 = scmp.ne.s32.totalorder %s136, %s152
    %p154 = scmp.eq.s32.totalorder %s17, 0
    %p155 = por %p153, %p154
    %s156 = ssub.s32 %s18, %s30
    %s157 = ssub.s32 %s19, %s26
    %s158 = sor.u32 %s156, %s157
    %p159 = scmp.eq.s32.totalorder %s158, 0
    %s161 = sadd.s32 %s160, 1
    %s162 = scalar_select %p159, %s160, %s161
    %p165 = pneg %p159
    %p166 = scmp.eq.s32.totalorder %s11, 1
    %p167 = por %p165, %p166
    %p168 = scmp.ne.s32.totalorder %s160, %s163
    %p169 = scmp.eq.s32.totalorder %s11, 0
    %p170 = por %p168, %p169
    %p171 = scmp.ne.s32.totalorder %s160, %s163
    %p172 = scmp.eq.s32.totalorder %s16, 1
    %p173 = por %p171, %p172
    %p174 = scmp.ne.s32.totalorder %s163, %s164
    %p175 = scmp.eq.s32.totalorder %s16, 0
    %p176 = por %p174, %p175
    %p177 = scmp.ne.s32.totalorder %s163, %s164
    %p178 = scmp.eq.s32.totalorder %s17, 1
    %p179 = por %p177, %p178
    %p181 = scmp.ne.s32.totalorder %s164, %s180
    %p182 = scmp.eq.s32.totalorder %s17, 0
    %p183 = por %p181, %p182
    %p184 = scmp.le.s32.totalorder 1, %s11
    %p185 = scmp.lt.s32.totalorder %s11, 3
    %p186 = pnand %p184, %p185
    %p187 = pneg %p186
    // Predicated region
    $region9: #{resnet_stage.17} parent=5 // pred_check
      _
    $region10: #{resnet_stage.17} parent=5 // pred_check_branch
      %189 = sbr.rel (%p186) target = $region12
    $region11: #{resnet_stage.17} parent=5 // pred_region
      %s190 = ssub.s32 %s11, 1
      // Predicated region
      $region13: #{resnet_stage.17} parent=11 // pred_check
        %p191 = pneg %p122
      $region14: #{resnet_stage.17} parent=11 // pred_check_branch
        %193 = sbr.rel (%p191) target = $region16
      $region15: #{resnet_stage.17} parent=11 // pred_region
        _
      $region16: #{resnet_stage.17} parent=11 // pred_fallthru
        _
      // Predicated region
      $region17: #{resnet_stage.17} parent=11 // pred_check
        %p194 = pneg %p148
      $region18: #{resnet_stage.17} parent=11 // pred_check_branch
        %196 = sbr.rel (%p194) target = $region20
      $region19: #{resnet_stage.17} parent=11 // pred_region
        %p197 = scmp.lt.s32.totalorder %s21, 0
        %s198 = scalar_select %p197, %s21, 0
        %s199 = smul.addr %s198, 4
        %s200 = scalar_lea.vmem %s4, %s199
      $region20: #{resnet_stage.17} parent=11 // pred_fallthru
        _
    $region12: #{resnet_stage.17} parent=5 // pred_fallthru
      _
    %p201 = scmp.lt.s32.totalorder %s11, 2
    // Predicated region
    $region21: #{resnet_stage.17} parent=5 // pred_check
      %p202 = pneg %p201
    $region22: #{resnet_stage.17} parent=5 // pred_check_branch
      %204 = sbr.rel (%p202) target = $region24
    $region23: #{resnet_stage.17} parent=5 // pred_region
      // Predicated region
      $region25: #{resnet_stage.17} parent=23 // pred_check
        %p205 = pneg %p43
      $region26: #{resnet_stage.17} parent=23 // pred_check_branch
        %207 = sbr.rel (%p205) target = $region28
      $region27: #{resnet_stage.17} parent=23 // pred_region
        %p208 = scmp.lt.s32.totalorder %s18, 1
        %s209 = scalar_select %p208, %s18, 1
        %s210 = smul.addr %s209, 13
        %s211 = smul.addr %s210, 4
        %s212 = scalar_lea.vmem %s0, %s211
      $region28: #{resnet_stage.17} parent=23 // pred_fallthru
        _
      // Predicated region
      $region29: #{resnet_stage.17} parent=23 // pred_check
        %p213 = pneg %p69
      $region30: #{resnet_stage.17} parent=23 // pred_check_branch
        %215 = sbr.rel (%p213) target = $region32
      $region31: #{resnet_stage.17} parent=23 // pred_region
        %p216 = scmp.lt.s32.totalorder %s18, 1
        %s217 = scalar_select %p216, %s18, 1
        %s218 = scalar_lea.vmem %s1, %s217
      $region32: #{resnet_stage.17} parent=23 // pred_fallthru
        _
      // Predicated region
      $region33: #{resnet_stage.17} parent=23 // pred_check
        %p219 = pneg %p95
      $region34: #{resnet_stage.17} parent=23 // pred_check_branch
        %221 = sbr.rel (%p219) target = $region36
      $region35: #{resnet_stage.17} parent=23 // pred_region
        %p222 = scmp.lt.s32.totalorder %s18, 1
        %s223 = scalar_select %p222, %s18, 1
        %s224 = scalar_lea.vmem %s2, %s223
      $region36: #{resnet_stage.17} parent=23 // pred_fallthru
        _
    $region24: #{resnet_stage.17} parent=5 // pred_fallthru
      _
    %p225 = scmp.le.s32.totalorder 1, %s11
    %p226 = scmp.lt.s32.totalorder %s11, 3
    %p227 = pnand %p225, %p226
    %p228 = pneg %p227
    // Predicated region
    $region37: #{resnet_stage.17} parent=5 // pred_check
      _
    $region38: #{resnet_stage.17} parent=5 // pred_check_branch
      %230 = sbr.rel (%p227) target = $region40
    $region39: #{resnet_stage.17} parent=5 // pred_region
      %s231 = ssub.s32 %s11, 1
      %p232 = scmp.lt.s32.totalorder %s20, 1
      %s233 = scalar_select %p232, %s20, 1
      %s234 = smul.addr %s233, 13
      %s235 = smul.addr %s234, 4
      %s236 = scalar_lea.vmem %s0, %s235
      %p237 = pneg %p49
      %p238 = pneg %p46
      %p239 = scmp.lt.s32.totalorder %s20, 1
      %s240 = scalar_select %p239, %s20, 1
      %s241 = scalar_lea.vmem %s1, %s240
      %p242 = pneg %p75
      %p243 = pneg %p72
      %p244 = scmp.lt.s32.totalorder %s20, 1
      %s245 = scalar_select %p244, %s20, 1
      %s246 = scalar_lea.vmem %s2, %s245
      %p247 = pneg %p101
      %p248 = pneg %p98
      %p249 = pneg %p122
      %p250 = pneg %p119
      %p251 = scmp.lt.s32.totalorder %s21, 0
      %s252 = scalar_select %p251, %s21, 0
      %s253 = smul.addr %s252, 4
      %s254 = scalar_lea.vmem %s4, %s253
      %p255 = pneg %p148
      %p256 = pneg %p145
      %p257 = pneg %p176
      %p258 = pneg %p173
      %p259 = scmp.lt.s32.totalorder %s20, 1
      %s260 = scalar_select %p259, %s20, 1
      %p261 = scmp.lt.s32.totalorder %s21, 0
      %s262 = scalar_select %p261, %s21, 0
      %s263 = smul.addr %s260, 3
      %s264 = sadd.s32 %s262, %s263
      %s265 = smul.addr %s264, 4
      %s266 = scalar_lea.vmem %s5, %s265
      %p267 = scmp.lt.s32.totalorder %s20, 1
      %s268 = scalar_select %p267, %s20, 1
      %s269 = smul.addr %s268, 13
      %s270 = smul.addr %s269, 4
      %s271 = scalar_lea.vmem %s0, %s270
      %p272 = scmp.lt.s32.totalorder %s20, 1
      %s273 = scalar_select %p272, %s20, 1
      %s274 = scalar_lea.vmem %s1, %s273
      %p275 = scmp.lt.s32.totalorder %s20, 1
      %s276 = scalar_select %p275, %s20, 1
      %s277 = scalar_lea.vmem %s2, %s276
      %p278 = scmp.lt.s32.totalorder %s21, 0
      %s279 = scalar_select %p278, %s21, 0
      %s280 = smul.addr %s279, 4
      %s281 = scalar_lea.vmem %s4, %s280
      %p282 = scmp.lt.s32.totalorder %s20, 1
      %s283 = scalar_select %p282, %s20, 1
      %p284 = scmp.lt.s32.totalorder %s21, 0
      %s285 = scalar_select %p284, %s21, 0
      %s286 = smul.addr %s283, 3
      %s287 = sadd.s32 %s285, %s286
      %s288 = smul.addr %s287, 4
      %s289 = scalar_lea.vmem %s5, %s288
      %p291 = scmp.eq.s32.totalorder %s21, 0
      // Predicated region
      $region41: #{resnet_stage.17} parent=39 // pred_check
        %p292 = pneg %p291
      $region42: #{resnet_stage.17} parent=39 // pred_check_branch
        %294 = sbr.rel (%p292) target = $region44
      $region43: #{resnet_stage.17} parent=39 // pred_region
        %v295 = vld [vmem:[%s271] sm:$0xf]
        %v296 = vld [vmem:[%s271 + $0x4] sm:$0xf]
        %v297 = vld [vmem:[%s271 + $0x8] sm:$0xf]
        %v298 = vld [vmem:[%s271 + $0xc] sm:$0xf]
        %v299 = vld [vmem:[%s271 + $0x10] sm:$0xf]
        %v300 = vld [vmem:[%s271 + $0x14] sm:$0xf]
        %v301 = vld [vmem:[%s271 + $0x18] sm:$0xf]
        %v302 = vld [vmem:[%s271 + $0x1c] sm:$0xf]
        %v303 = vld [vmem:[%s271 + $0x20] sm:$0xf]
        %v304 = vld [vmem:[%s271 + $0x24] sm:$0xf]
        %v305 = vld [vmem:[%s271 + $0x28] sm:$0xf]
        %v306 = vld [vmem:[%s271 + $0x2c] sm:$0xf]
        %v307 = vld [vmem:[%s271 + $0x30] sm:$0x3]
        %v308 = vunpack.c.l.bf16 %v295
        %v309 = vunpack.c.l.bf16 %v296
        %v310 = vunpack.c.l.bf16 %v297
        %v311 = vunpack.c.l.bf16 %v298
        %v312 = vunpack.c.l.bf16 %v299
        %v313 = vunpack.c.l.bf16 %v300
        %v314 = vunpack.c.l.bf16 %v301
        %v315 = vunpack.c.l.bf16 %v302
        %v316 = vunpack.c.l.bf16 %v303
        %v317 = vunpack.c.l.bf16 %v304
        %v318 = vunpack.c.l.bf16 %v305
        %v319 = vunpack.c.l.bf16 %v306
        %v320 = vunpack.c.l.bf16 %v307
        %v321 = vld [vmem:[%s274] sm:$0x1]
        %v323 = vlaneseq
        %v324 = vshrl.u32 %v323, 7
        %v325 = vsub.s32 0, %v324
        %v326 = vrot.slane %v321, %v325
        %v328 = vmul.f32 %v308, %v326
        %v329 = vmul.f32 %v309, %v326
        %v330 = vmul.f32 %v310, %v326
        %v331 = vmul.f32 %v311, %v326
        %v332 = vmul.f32 %v312, %v326
        %v333 = vmul.f32 %v313, %v326
        %v334 = vmul.f32 %v314, %v326
        %v335 = vmul.f32 %v315, %v326
        %v336 = vmul.f32 %v316, %v326
        %v337 = vmul.f32 %v317, %v326
        %v338 = vmul.f32 %v318, %v326
        %v339 = vmul.f32 %v319, %v326
        %v340 = vmul.f32 %v320, %v326
        %v341 = vld [vmem:[%s277] sm:$0x1]
        %v343 = vlaneseq
        %v344 = vshrl.u32 %v343, 7
        %v345 = vsub.s32 0, %v344
        %v346 = vrot.slane %v341, %v345
        %v348 = vadd.f32 %v328, %v346
        %v349 = vadd.f32 %v329, %v346
        %v350 = vadd.f32 %v330, %v346
        %v351 = vadd.f32 %v331, %v346
        %v352 = vadd.f32 %v332, %v346
        %v353 = vadd.f32 %v333, %v346
        %v354 = vadd.f32 %v334, %v346
        %v355 = vadd.f32 %v335, %v346
        %v356 = vadd.f32 %v336, %v346
        %v357 = vadd.f32 %v337, %v346
        %v358 = vadd.f32 %v338, %v346
        %v359 = vadd.f32 %v339, %v346
        %v360 = vadd.f32 %v340, %v346
        %v361 = vmax.f32 %v348, 0.0
        %v362 = vmax.f32 %v349, 0.0
        %v363 = vmax.f32 %v350, 0.0
        %v364 = vmax.f32 %v351, 0.0
        %v365 = vmax.f32 %v352, 0.0
        %v366 = vmax.f32 %v353, 0.0
        %v367 = vmax.f32 %v354, 0.0
        %v368 = vmax.f32 %v355, 0.0
        %v369 = vmax.f32 %v356, 0.0
        %v370 = vmax.f32 %v357, 0.0
        %v371 = vmax.f32 %v358, 0.0
        %v372 = vmax.f32 %v359, 0.0
        %v373 = vmax.f32 %v360, 0.0
        %v374 = vld [vmem:[%s3] sm:$0xff]
        %v375 = vld [vmem:[%s3 + $0x8] sm:$0xff]
        %v376 = vld [vmem:[%s3 + $0x10] sm:$0xff]
        %v377 = vld [vmem:[%s3 + $0x18] sm:$0xff]
        %v378 = vld [vmem:[%s3 + $0x20] sm:$0xff]
        %v379 = vld [vmem:[%s3 + $0x28] sm:$0xff]
        %v380 = vld [vmem:[%s3 + $0x30] sm:$0xff]
        %v381 = vld [vmem:[%s3 + $0x38] sm:$0xff]
        %v382 = vld [vmem:[%s3 + $0x40] sm:$0xff]
        %v383 = vld [vmem:[%s3 + $0x48] sm:$0xff]
        %v384 = vld [vmem:[%s3 + $0x50] sm:$0xff]
        %v385 = vld [vmem:[%s3 + $0x58] sm:$0xff]
        %v386 = vld [vmem:[%s3 + $0x60] sm:$0xf]
        %388 = vset.pattern.permute.xlu0 0
        %389 = vperm.xlu0 %388, %v374
        %v390 = vpop.permute.xlu0 %389
        %393 = vset.pattern.permute.xlu0 0
        %394 = vperm.xlu0 %393, %v375
        %v395 = vpop.permute.xlu0 %394
        %398 = vset.pattern.permute.xlu0 0
        %399 = vperm.xlu0 %398, %v376
        %v400 = vpop.permute.xlu0 %399
        %403 = vset.pattern.permute.xlu0 0
        %404 = vperm.xlu0 %403, %v377
        %v405 = vpop.permute.xlu0 %404
        %408 = vset.pattern.permute.xlu0 0
        %409 = vperm.xlu0 %408, %v378
        %v410 = vpop.permute.xlu0 %409
        %413 = vset.pattern.permute.xlu0 0
        %414 = vperm.xlu0 %413, %v379
        %v415 = vpop.permute.xlu0 %414
        %418 = vset.pattern.permute.xlu0 0
        %419 = vperm.xlu0 %418, %v380
        %v420 = vpop.permute.xlu0 %419
        %423 = vset.pattern.permute.xlu0 0
        %424 = vperm.xlu0 %423, %v381
        %v425 = vpop.permute.xlu0 %424
        %428 = vset.pattern.permute.xlu0 0
        %429 = vperm.xlu0 %428, %v382
        %v430 = vpop.permute.xlu0 %429
        %433 = vset.pattern.permute.xlu0 0
        %434 = vperm.xlu0 %433, %v383
        %v435 = vpop.permute.xlu0 %434
        %438 = vset.pattern.permute.xlu0 0
        %439 = vperm.xlu0 %438, %v384
        %v440 = vpop.permute.xlu0 %439
        %443 = vset.pattern.permute.xlu0 0
        %444 = vperm.xlu0 %443, %v385
        %v445 = vpop.permute.xlu0 %444
        %448 = vset.pattern.permute.xlu0 0
        %449 = vperm.xlu0 %448, %v386
        %v450 = vpop.permute.xlu0 %449
        %v452 = vmul.f32 %v361, %v390
        %v453 = vmul.f32 %v362, %v395
        %v454 = vmul.f32 %v363, %v400
        %v455 = vmul.f32 %v364, %v405
        %v456 = vmul.f32 %v365, %v410
        %v457 = vmul.f32 %v366, %v415
        %v458 = vmul.f32 %v367, %v420
        %v459 = vmul.f32 %v368, %v425
        %v460 = vmul.f32 %v369, %v430
        %v461 = vmul.f32 %v370, %v435
        %v462 = vmul.f32 %v371, %v440
        %v463 = vmul.f32 %v372, %v445
        %v464 = vmul.f32 %v373, %v450
        %v465 = vpack.c.bf16 %v453, %v452
        %v466 = vpack.c.bf16 %v455, %v454
        %v467 = vpack.c.bf16 %v457, %v456
        %v468 = vpack.c.bf16 %v459, %v458
        %v469 = vpack.c.bf16 %v461, %v460
        %v470 = vpack.c.bf16 %v463, %v462
        %v471 = vpack.c.bf16 %v464, %v464
        %v479 = vunpack.c.l.b16 %v465
        %v480 = vunpack.c.h.b16 %v465
        %v481 = vunpack.c.l.b16 %v466
        %v482 = vunpack.c.h.b16 %v466
        %v483 = vunpack.c.l.b16 %v467
        %v484 = vunpack.c.h.b16 %v467
        %v485 = vunpack.c.l.b16 %v468
        %v486 = vunpack.c.h.b16 %v468
        %v487 = vunpack.c.l.b16 %v469
        %v488 = vunpack.c.h.b16 %v469
        %v489 = vunpack.c.l.b16 %v470
        %v490 = vunpack.c.h.b16 %v470
        %v491 = vunpack.c.l.b16 %v471
        %v492 = vpack.c.b16 %v479, %v479
        %v493 = vpack.c.b16 %v480, %v480
        %v494 = vpack.c.b16 %v481, %v481
        %v495 = vpack.c.b16 %v482, %v482
        %v496 = vpack.c.b16 %v483, %v483
        %v497 = vpack.c.b16 %v484, %v484
        %v498 = vpack.c.b16 %v485, %v485
        %v499 = vpack.c.b16 %v486, %v486
        %v500 = vpack.c.b16 %v487, %v487
        %v501 = vpack.c.b16 %v488, %v488
        %v502 = vpack.c.b16 %v489, %v489
        %v503 = vpack.c.b16 %v490, %v490
        %v504 = vpack.c.b16 %v491, %v491
        %vm518 = vcmask 257024
        %519 = vst.msk [vmem:[#allocation2] sm:$0xf] %vm518, %v492
        %520 = vst.msk [vmem:[#allocation2 + $0x4] sm:$0xf] %vm518, %v493
        %521 = vst.msk [vmem:[#allocation2 + $0x8] sm:$0xf] %vm518, %v494
        %522 = vst.msk [vmem:[#allocation2 + $0xc] sm:$0xf] %vm518, %v495
        %523 = vst.msk [vmem:[#allocation2 + $0x10] sm:$0xf] %vm518, %v496
        %524 = vst.msk [vmem:[#allocation2 + $0x14] sm:$0xf] %vm518, %v497
        %525 = vst.msk [vmem:[#allocation2 + $0x18] sm:$0xf] %vm518, %v498
        %526 = vst.msk [vmem:[#allocation2 + $0x1c] sm:$0xf] %vm518, %v499
        %527 = vst.msk [vmem:[#allocation2 + $0x20] sm:$0xf] %vm518, %v500
        %528 = vst.msk [vmem:[#allocation2 + $0x24] sm:$0xf] %vm518, %v501
        %529 = vst.msk [vmem:[#allocation2 + $0x28] sm:$0xf] %vm518, %v502
        %530 = vst.msk [vmem:[#allocation2 + $0x2c] sm:$0xf] %vm518, %v503
        %vm531 = vcmask 254976
        %532 = vst.msk [vmem:[#allocation2 + $0x30] sm:$0x3] %vm531, %v504
      $region44: #{resnet_stage.17} parent=39 // pred_fallthru
        _
      %v533 = vld [vmem:[#allocation2] sm:$0xf]
      %v534 = vld [vmem:[#allocation2 + $0x4] sm:$0xf]
      %v535 = vld [vmem:[#allocation2 + $0x8] sm:$0x3]
      %v536 = vld [vmem:[%s281] sm:$0xf]
      %v537 = vld [vmem:[%s281 + $0x4] sm:$0xf]
      %v538 = vld [vmem:[%s281 + $0x8] sm:$0xf]
      %v539 = vld [vmem:[%s281 + $0xc] sm:$0xf]
      %v540 = vld [vmem:[#allocation2 + $0xc] sm:$0xf]
      %v541 = vld [vmem:[#allocation2 + $0x10] sm:$0xf]
      %v542 = vld [vmem:[#allocation2 + $0x14] sm:$0x3]
      %s543 = scalar_lea.vmem %s281, 16
      %v544 = vld [vmem:[%s543] sm:$0xf]
      %v545 = vld [vmem:[%s543 + $0x4] sm:$0xf]
      %v546 = vld [vmem:[%s543 + $0x8] sm:$0xf]
      %v547 = vld [vmem:[%s543 + $0xc] sm:$0xf]
      %v551 = vunpack.c.l.b16 %v540
      %v552 = vunpack.c.l.b16 %v541
      %v553 = vunpack.c.l.b16 %v542
      %v554 = vpack.c.b16 %v552, %v551
      %v555 = vpack.c.b16 %v553, %v553
      %vm556 = vsmask.f32 7424
      %v558 = vshrl.u32 %v554, 16
      %v560 = vshll.u32 %v554, 16
      %v562 = vrot.slane %v560, 1
      %v563 = vor.u32 %v558, %v562
      %v565 = vshll.u32 %v555, 16
      %v567 = vrot.slane %v565, 1
      %v568 = vsel %vm556, %v563, %v567
      %v569 = vshrl.u32 %v555, 16
      %v571 = vor.u32 %v569, %v567
      %v576 = vunpack.c.l.b16 %v544
      %v577 = vunpack.c.l.b16 %v545
      %v578 = vunpack.c.l.b16 %v546
      %v579 = vunpack.c.l.b16 %v547
      %v580 = vpack.c.b16 %v577, %v576
      %v581 = vpack.c.b16 %v579, %v578
      %vm584 = vcmask 261120
      %v586 = vsel %vm584, %v568, 0
      %v589 = vsel %vm584, %v571, 0
      %591 = vmatprep.subr.bf16.mxu0 0
      %592 = vmatpush1.bf16.msra.mxu0 0
      %593 = vmatprep.subr.bf16.mxu0 0
      %594 = vmatpush1.bf16.msra.mxu0 0
      %595 = vmatprep.subr.bf16.mxu0 0
      %596 = vmatpush1.bf16.msra.mxu0 0
      %597 = vmatprep.subr.bf16.mxu0 0
      %598 = vmatpush1.bf16.msra.mxu0 0
      %599 = vmatprep.subr.bf16.mxu0 0
      %600 = vmatpush1.bf16.msra.mxu0 0
      %601 = vmatprep.subr.bf16.mxu0 0
      %602 = vmatpush1.bf16.msra.mxu0 0
      %603 = vmatprep.subr.bf16.mxu0 0
      %604 = vmatpush1.bf16.msra.mxu0 %v581
      %605 = vmatprep.subr.bf16.mxu0 0
      %606 = vmatpush1.bf16.msra.mxu0 %v580
      %607 = vmatprep.subr.bf16.mxu0 0
      %608 = vmatpush2.bf16.msra.mxu0 0
      %609 = vmatprep.subr.bf16.mxu0 0
      %610 = vmatpush2.bf16.msra.mxu0 0
      %611 = vmatprep.subr.bf16.mxu0 0
      %612 = vmatpush2.bf16.msra.mxu0 0
      %613 = vmatprep.subr.bf16.mxu0 0
      %614 = vmatpush2.bf16.msra.mxu0 0
      %615 = vmatprep.subr.bf16.mxu0 0
      %616 = vmatpush2.bf16.msra.mxu0 0
      %617 = vmatprep.subr.bf16.mxu0 0
      %618 = vmatpush2.bf16.msra.mxu0 0
      %619 = vmatprep.subr.bf16.mxu0 0
      %620 = vmatpush2.bf16.msra.mxu0 0
      %621 = vmatprep.subr.bf16.mxu0 0
      %622 = vmatpush2.bf16.msra.mxu0 0
      %623 = vmatprep.mubr.bf16.mxu0 0
      %624 = vmatmul.mubr.bf16.gmra.mxu0 %v586
      %v625 = vpop.f32.mrf.mxu0
      %v626 = vadd.f32 0.0, %v625
      %v627 = vpop.f32.mrf.mxu0
      %v628 = vpop.f32.mrf.mxu0
      %v629 = vadd.f32 0.0, %v628
      %v630 = vpop.f32.mrf.mxu0
      %631 = vmatprep.mubr.bf16.mxu0 0
      %632 = vmatmul.mubr.bf16.gmra.mxu0 %v589
      %v633 = vpop.f32.mrf.mxu0
      %v634 = vadd.f32 0.0, %v633
      %v635 = vpop.f32.mrf.mxu0
      %v636 = vpop.f32.mrf.mxu0
      %v637 = vpop.f32.mrf.mxu0
      %638 = vdwg.mxu0
      %v642 = vunpack.c.l.b16 %v533
      %v643 = vunpack.c.l.b16 %v534
      %v644 = vunpack.c.l.b16 %v535
      %v645 = vpack.c.b16 %v643, %v642
      %v646 = vpack.c.b16 %v644, %v644
      %v651 = vunpack.c.l.b16 %v536
      %v652 = vunpack.c.l.b16 %v537
      %v653 = vunpack.c.l.b16 %v538
      %v654 = vunpack.c.l.b16 %v539
      %v655 = vpack.c.b16 %v652, %v651
      %v656 = vpack.c.b16 %v654, %v653
      %v660 = vsel %vm584, %v645, 0
      %v663 = vsel %vm584, %v646, 0
      %665 = vmatprep.subr.bf16.mxu0 0
      %666 = vmatpush1.bf16.msra.mxu0 0
      %667 = vmatprep.subr.bf16.mxu0 0
      %668 = vmatpush1.bf16.msra.mxu0 0
      %669 = vmatprep.subr.bf16.mxu0 0
      %670 = vmatpush1.bf16.msra.mxu0 0
      %671 = vmatprep.subr.bf16.mxu0 0
      %672 = vmatpush1.bf16.msra.mxu0 0
      %673 = vmatprep.subr.bf16.mxu0 0
      %674 = vmatpush1.bf16.msra.mxu0 0
      %675 = vmatprep.subr.bf16.mxu0 0
      %676 = vmatpush1.bf16.msra.mxu0 0
      %677 = vmatprep.subr.bf16.mxu0 0
      %678 = vmatpush1.bf16.msra.mxu0 %v656
      %679 = vmatprep.subr.bf16.mxu0 0
      %680 = vmatpush1.bf16.msra.mxu0 %v655
      %681 = vmatprep.subr.bf16.mxu0 0
      %682 = vmatpush2.bf16.msra.mxu0 0
      %683 = vmatprep.subr.bf16.mxu0 0
      %684 = vmatpush2.bf16.msra.mxu0 0
      %685 = vmatprep.subr.bf16.mxu0 0
      %686 = vmatpush2.bf16.msra.mxu0 0
      %687 = vmatprep.subr.bf16.mxu0 0
      %688 = vmatpush2.bf16.msra.mxu0 0
      %689 = vmatprep.subr.bf16.mxu0 0
      %690 = vmatpush2.bf16.msra.mxu0 0
      %691 = vmatprep.subr.bf16.mxu0 0
      %692 = vmatpush2.bf16.msra.mxu0 0
      %693 = vmatprep.subr.bf16.mxu0 0
      %694 = vmatpush2.bf16.msra.mxu0 0
      %695 = vmatprep.subr.bf16.mxu0 0
      %696 = vmatpush2.bf16.msra.mxu0 0
      %697 = vmatprep.mubr.bf16.mxu0 0
      %698 = vmatmul.mubr.bf16.gmra.mxu0 %v660
      %v699 = vpop.f32.mrf.mxu0
      %v700 = vadd.f32 %v626, %v699
      %v701 = vpop.f32.mrf.mxu0
      %v702 = vpop.f32.mrf.mxu0
      %v703 = vadd.f32 %v629, %v702
      %v704 = vpop.f32.mrf.mxu0
      %705 = vmatprep.mubr.bf16.mxu0 0
      %706 = vmatmul.mubr.bf16.gmra.mxu0 %v663
      %v707 = vpop.f32.mrf.mxu0
      %v708 = vadd.f32 %v634, %v707
      %v709 = vpop.f32.mrf.mxu0
      %v710 = vpop.f32.mrf.mxu0
      %v711 = vpop.f32.mrf.mxu0
      %712 = vdwg.mxu0
      %s713 = scalar_lea.vmem %s281, 32
      %v714 = vld [vmem:[%s713] sm:$0xf]
      %v715 = vld [vmem:[%s713 + $0x4] sm:$0xf]
      %v716 = vld [vmem:[%s713 + $0x8] sm:$0xf]
      %v717 = vld [vmem:[%s713 + $0xc] sm:$0xf]
      %v718 = vshrl.u32 %v645, 16
      %v720 = vshll.u32 %v645, 16
      %v722 = vrot.slane %v720, 1
      %v723 = vor.u32 %v718, %v722
      %v724 = vshll.u32 %v646, 16
      %v726 = vrot.slane %v724, 1
      %v727 = vsel %vm556, %v723, %v726
      %v728 = vshrl.u32 %v646, 16
      %v730 = vor.u32 %v728, %v726
      %v735 = vunpack.c.l.b16 %v714
      %v736 = vunpack.c.l.b16 %v715
      %v737 = vunpack.c.l.b16 %v716
      %v738 = vunpack.c.l.b16 %v717
      %v739 = vpack.c.b16 %v736, %v735
      %v740 = vpack.c.b16 %v738, %v737
      %v744 = vsel %vm584, %v727, 0
      %v747 = vsel %vm584, %v730, 0
      %749 = vmatprep.subr.bf16.mxu0 0
      %750 = vmatpush1.bf16.msra.mxu0 0
      %751 = vmatprep.subr.bf16.mxu0 0
      %752 = vmatpush1.bf16.msra.mxu0 0
      %753 = vmatprep.subr.bf16.mxu0 0
      %754 = vmatpush1.bf16.msra.mxu0 0
      %755 = vmatprep.subr.bf16.mxu0 0
      %756 = vmatpush1.bf16.msra.mxu0 0
      %757 = vmatprep.subr.bf16.mxu0 0
      %758 = vmatpush1.bf16.msra.mxu0 0
      %759 = vmatprep.subr.bf16.mxu0 0
      %760 = vmatpush1.bf16.msra.mxu0 0
      %761 = vmatprep.subr.bf16.mxu0 0
      %762 = vmatpush1.bf16.msra.mxu0 %v740
      %763 = vmatprep.subr.bf16.mxu0 0
      %764 = vmatpush1.bf16.msra.mxu0 %v739
      %765 = vmatprep.subr.bf16.mxu0 0
      %766 = vmatpush2.bf16.msra.mxu0 0
      %767 = vmatprep.subr.bf16.mxu0 0
      %768 = vmatpush2.bf16.msra.mxu0 0
      %769 = vmatprep.subr.bf16.mxu0 0
      %770 = vmatpush2.bf16.msra.mxu0 0
      %771 = vmatprep.subr.bf16.mxu0 0
      %772 = vmatpush2.bf16.msra.mxu0 0
      %773 = vmatprep.subr.bf16.mxu0 0
      %774 = vmatpush2.bf16.msra.mxu0 0
      %775 = vmatprep.subr.bf16.mxu0 0
      %776 = vmatpush2.bf16.msra.mxu0 0
      %777 = vmatprep.subr.bf16.mxu0 0
      %778 = vmatpush2.bf16.msra.mxu0 0
      %779 = vmatprep.subr.bf16.mxu0 0
      %780 = vmatpush2.bf16.msra.mxu0 0
      %781 = vmatprep.mubr.bf16.mxu0 0
      %782 = vmatmul.mubr.bf16.gmra.mxu0 %v744
      %v783 = vpop.f32.mrf.mxu0
      %v784 = vadd.f32 0.0, %v783
      %v785 = vpop.f32.mrf.mxu0
      %v786 = vpop.f32.mrf.mxu0
      %v787 = vadd.f32 0.0, %v786
      %v788 = vpop.f32.mrf.mxu0
      %789 = vmatprep.mubr.bf16.mxu0 0
      %790 = vmatmul.mubr.bf16.gmra.mxu0 %v747
      %v791 = vpop.f32.mrf.mxu0
      %v792 = vadd.f32 0.0, %v791
      %v793 = vpop.f32.mrf.mxu0
      %v794 = vpop.f32.mrf.mxu0
      %v795 = vpop.f32.mrf.mxu0
      %796 = vdwg.mxu0
      %v797 = vadd.f32 %v700, %v784
      %v798 = vadd.f32 %v703, %v787
      %v799 = vadd.f32 %v708, %v792
      %v800 = vld [vmem:[#allocation2 + $0x18] sm:$0xe]
      %v801 = vld [vmem:[#allocation2 + $0x1c] sm:$0xf]
      %v802 = vld [vmem:[#allocation2 + $0x20] sm:$0x7]
      %s803 = scalar_lea.vmem %s281, 48
      %v804 = vld [vmem:[%s803] sm:$0xf]
      %v805 = vld [vmem:[%s803 + $0x4] sm:$0xf]
      %v806 = vld [vmem:[%s803 + $0x8] sm:$0xf]
      %v807 = vld [vmem:[%s803 + $0xc] sm:$0xf]
      %v811 = vunpack.c.l.b16 %v800
      %v812 = vunpack.c.l.b16 %v801
      %v813 = vunpack.c.l.b16 %v802
      %v814 = vpack.c.b16 %v812, %v811
      %v815 = vpack.c.b16 %v813, %v813
      %vm816 = vcmask 1046528
      %v817 = vrot.slane %v814, 1
      %v818 = vrot.slane %v815, 1
      %v819 = vsel %vm816, %v817, %v818
      %v824 = vunpack.c.l.b16 %v804
      %v825 = vunpack.c.l.b16 %v805
      %v826 = vunpack.c.l.b16 %v806
      %v827 = vunpack.c.l.b16 %v807
      %v828 = vpack.c.b16 %v825, %v824
      %v829 = vpack.c.b16 %v827, %v826
      %v833 = vsel %vm584, %v819, 0
      %v836 = vsel %vm584, %v818, 0
      %838 = vmatprep.subr.bf16.mxu0 0
      %839 = vmatpush1.bf16.msra.mxu0 0
      %840 = vmatprep.subr.bf16.mxu0 0
      %841 = vmatpush1.bf16.msra.mxu0 0
      %842 = vmatprep.subr.bf16.mxu0 0
      %843 = vmatpush1.bf16.msra.mxu0 0
      %844 = vmatprep.subr.bf16.mxu0 0
      %845 = vmatpush1.bf16.msra.mxu0 0
      %846 = vmatprep.subr.bf16.mxu0 0
      %847 = vmatpush1.bf16.msra.mxu0 0
      %848 = vmatprep.subr.bf16.mxu0 0
      %849 = vmatpush1.bf16.msra.mxu0 0
      %850 = vmatprep.subr.bf16.mxu0 0
      %851 = vmatpush1.bf16.msra.mxu0 %v829
      %852 = vmatprep.subr.bf16.mxu0 0
      %853 = vmatpush1.bf16.msra.mxu0 %v828
      %854 = vmatprep.subr.bf16.mxu0 0
      %855 = vmatpush2.bf16.msra.mxu0 0
      %856 = vmatprep.subr.bf16.mxu0 0
      %857 = vmatpush2.bf16.msra.mxu0 0
      %858 = vmatprep.subr.bf16.mxu0 0
      %859 = vmatpush2.bf16.msra.mxu0 0
      %860 = vmatprep.subr.bf16.mxu0 0
      %861 = vmatpush2.bf16.msra.mxu0 0
      %862 = vmatprep.subr.bf16.mxu0 0
      %863 = vmatpush2.bf16.msra.mxu0 0
      %864 = vmatprep.subr.bf16.mxu0 0
      %865 = vmatpush2.bf16.msra.mxu0 0
      %866 = vmatprep.subr.bf16.mxu0 0
      %867 = vmatpush2.bf16.msra.mxu0 0
      %868 = vmatprep.subr.bf16.mxu0 0
      %869 = vmatpush2.bf16.msra.mxu0 0
      %870 = vmatprep.mubr.bf16.mxu0 0
      %871 = vmatmul.mubr.bf16.gmra.mxu0 %v833
      %v872 = vpop.f32.mrf.mxu0
      %v873 = vadd.f32 0.0, %v872
      %v874 = vpop.f32.mrf.mxu0
      %v875 = vpop.f32.mrf.mxu0
      %v876 = vadd.f32 0.0, %v875
      %v877 = vpop.f32.mrf.mxu0
      %878 = vmatprep.mubr.bf16.mxu0 0
      %879 = vmatmul.mubr.bf16.gmra.mxu0 %v836
      %v880 = vpop.f32.mrf.mxu0
      %v881 = vadd.f32 0.0, %v880
      %v882 = vpop.f32.mrf.mxu0
      %v883 = vpop.f32.mrf.mxu0
      %v884 = vpop.f32.mrf.mxu0
      %885 = vdwg.mxu0
      %v886 = vadd.f32 %v797, %v873
      %v887 = vadd.f32 %v798, %v876
      %v888 = vadd.f32 %v799, %v881
      %v889 = vld [vmem:[#allocation2 + $0x24] sm:$0xe]
      %v890 = vld [vmem:[#allocation2 + $0x28] sm:$0xf]
      %v891 = vld [vmem:[#allocation2 + $0x2c] sm:$0x7]
      %s892 = scalar_lea.vmem %s281, 64
      %v893 = vld [vmem:[%s892] sm:$0xf]
      %v894 = vld [vmem:[%s892 + $0x4] sm:$0xf]
      %v895 = vld [vmem:[%s892 + $0x8] sm:$0xf]
      %v896 = vld [vmem:[%s892 + $0xc] sm:$0xf]
      %v900 = vunpack.c.l.b16 %v889
      %v901 = vunpack.c.l.b16 %v890
      %v902 = vunpack.c.l.b16 %v891
      %v903 = vpack.c.b16 %v901, %v900
      %v904 = vpack.c.b16 %v902, %v902
      %vm905 = vsmask.f32 6400
      %v907 = vshrl.u32 %v903, 16
      %v909 = vrot.slane %v907, 1
      %v910 = vshll.u32 %v903, 16
      %v912 = vrot.slane %v910, 2
      %v913 = vor.u32 %v909, %v912
      %v915 = vshrl.u32 %v904, 16
      %v917 = vrot.slane %v915, 1
      %v918 = vshll.u32 %v904, 16
      %v920 = vrot.slane %v918, 2
      %v921 = vor.u32 %v917, %v920
      %v922 = vsel %vm905, %v913, %v921
      %v927 = vunpack.c.l.b16 %v893
      %v928 = vunpack.c.l.b16 %v894
      %v929 = vunpack.c.l.b16 %v895
      %v930 = vunpack.c.l.b16 %v896
      %v931 = vpack.c.b16 %v928, %v927
      %v932 = vpack.c.b16 %v930, %v929
      %v936 = vsel %vm584, %v922, 0
      %v939 = vsel %vm584, %v921, 0
      %941 = vmatprep.subr.bf16.mxu0 0
      %942 = vmatpush1.bf16.msra.mxu0 0
      %943 = vmatprep.subr.bf16.mxu0 0
      %944 = vmatpush1.bf16.msra.mxu0 0
      %945 = vmatprep.subr.bf16.mxu0 0
      %946 = vmatpush1.bf16.msra.mxu0 0
      %947 = vmatprep.subr.bf16.mxu0 0
      %948 = vmatpush1.bf16.msra.mxu0 0
      %949 = vmatprep.subr.bf16.mxu0 0
      %950 = vmatpush1.bf16.msra.mxu0 0
      %951 = vmatprep.subr.bf16.mxu0 0
      %952 = vmatpush1.bf16.msra.mxu0 0
      %953 = vmatprep.subr.bf16.mxu0 0
      %954 = vmatpush1.bf16.msra.mxu0 %v932
      %955 = vmatprep.subr.bf16.mxu0 0
      %956 = vmatpush1.bf16.msra.mxu0 %v931
      %957 = vmatprep.subr.bf16.mxu0 0
      %958 = vmatpush2.bf16.msra.mxu0 0
      %959 = vmatprep.subr.bf16.mxu0 0
      %960 = vmatpush2.bf16.msra.mxu0 0
      %961 = vmatprep.subr.bf16.mxu0 0
      %962 = vmatpush2.bf16.msra.mxu0 0
      %963 = vmatprep.subr.bf16.mxu0 0
      %964 = vmatpush2.bf16.msra.mxu0 0
      %965 = vmatprep.subr.bf16.mxu0 0
      %966 = vmatpush2.bf16.msra.mxu0 0
      %967 = vmatprep.subr.bf16.mxu0 0
      %968 = vmatpush2.bf16.msra.mxu0 0
      %969 = vmatprep.subr.bf16.mxu0 0
      %970 = vmatpush2.bf16.msra.mxu0 0
      %971 = vmatprep.subr.bf16.mxu0 0
      %972 = vmatpush2.bf16.msra.mxu0 0
      %973 = vmatprep.mubr.bf16.mxu0 0
      %974 = vmatmul.mubr.bf16.gmra.mxu0 %v936
      %v975 = vpop.f32.mrf.mxu0
      %v976 = vadd.f32 0.0, %v975
      %v977 = vpop.f32.mrf.mxu0
      %v978 = vpop.f32.mrf.mxu0
      %v979 = vadd.f32 0.0, %v978
      %v980 = vpop.f32.mrf.mxu0
      %981 = vmatprep.mubr.bf16.mxu0 0
      %982 = vmatmul.mubr.bf16.gmra.mxu0 %v939
      %v983 = vpop.f32.mrf.mxu0
      %v984 = vadd.f32 0.0, %v983
      %v985 = vpop.f32.mrf.mxu0
      %v986 = vpop.f32.mrf.mxu0
      %v987 = vpop.f32.mrf.mxu0
      %988 = vdwg.mxu0
      %v989 = vadd.f32 %v886, %v976
      %v990 = vadd.f32 %v887, %v979
      %v991 = vadd.f32 %v888, %v984
      %s992 = scalar_lea.vmem %s281, 80
      %v993 = vld [vmem:[%s992] sm:$0xf]
      %v994 = vld [vmem:[%s992 + $0x4] sm:$0xf]
      %v995 = vld [vmem:[%s992 + $0x8] sm:$0xf]
      %v996 = vld [vmem:[%s992 + $0xc] sm:$0xf]
      %v998 = vshrl.u32 %v814, 16
      %v1000 = vrot.slane %v998, 1
      %v1001 = vshll.u32 %v814, 16
      %v1003 = vrot.slane %v1001, 2
      %v1004 = vor.u32 %v1000, %v1003
      %v1006 = vshrl.u32 %v815, 16
      %v1008 = vrot.slane %v1006, 1
      %v1009 = vshll.u32 %v815, 16
      %v1011 = vrot.slane %v1009, 2
      %v1012 = vor.u32 %v1008, %v1011
      %v1013 = vsel %vm905, %v1004, %v1012
      %v1018 = vunpack.c.l.b16 %v993
      %v1019 = vunpack.c.l.b16 %v994
      %v1020 = vunpack.c.l.b16 %v995
      %v1021 = vunpack.c.l.b16 %v996
      %v1022 = vpack.c.b16 %v1019, %v1018
      %v1023 = vpack.c.b16 %v1021, %v1020
      %v1027 = vsel %vm584, %v1013, 0
      %v1030 = vsel %vm584, %v1012, 0
      %1032 = vmatprep.subr.bf16.mxu0 0
      %1033 = vmatpush1.bf16.msra.mxu0 0
      %1034 = vmatprep.subr.bf16.mxu0 0
      %1035 = vmatpush1.bf16.msra.mxu0 0
      %1036 = vmatprep.subr.bf16.mxu0 0
      %1037 = vmatpush1.bf16.msra.mxu0 0
      %1038 = vmatprep.subr.bf16.mxu0 0
      %1039 = vmatpush1.bf16.msra.mxu0 0
      %1040 = vmatprep.subr.bf16.mxu0 0
      %1041 = vmatpush1.bf16.msra.mxu0 0
      %1042 = vmatprep.subr.bf16.mxu0 0
      %1043 = vmatpush1.bf16.msra.mxu0 0
      %1044 = vmatprep.subr.bf16.mxu0 0
      %1045 = vmatpush1.bf16.msra.mxu0 %v1023
      %1046 = vmatprep.subr.bf16.mxu0 0
      %1047 = vmatpush1.bf16.msra.mxu0 %v1022
      %1048 = vmatprep.subr.bf16.mxu0 0
      %1049 = vmatpush2.bf16.msra.mxu0 0
      %1050 = vmatprep.subr.bf16.mxu0 0
      %1051 = vmatpush2.bf16.msra.mxu0 0
      %1052 = vmatprep.subr.bf16.mxu0 0
      %1053 = vmatpush2.bf16.msra.mxu0 0
      %1054 = vmatprep.subr.bf16.mxu0 0
      %1055 = vmatpush2.bf16.msra.mxu0 0
      %1056 = vmatprep.subr.bf16.mxu0 0
      %1057 = vmatpush2.bf16.msra.mxu0 0
      %1058 = vmatprep.subr.bf16.mxu0 0
      %1059 = vmatpush2.bf16.msra.mxu0 0
      %1060 = vmatprep.subr.bf16.mxu0 0
      %1061 = vmatpush2.bf16.msra.mxu0 0
      %1062 = vmatprep.subr.bf16.mxu0 0
      %1063 = vmatpush2.bf16.msra.mxu0 0
      %1064 = vmatprep.mubr.bf16.mxu0 0
      %1065 = vmatmul.mubr.bf16.gmra.mxu0 %v1027
      %v1066 = vpop.f32.mrf.mxu0
      %v1067 = vadd.f32 0.0, %v1066
      %v1068 = vpop.f32.mrf.mxu0
      %v1069 = vpop.f32.mrf.mxu0
      %v1070 = vadd.f32 0.0, %v1069
      %v1071 = vpop.f32.mrf.mxu0
      %1072 = vmatprep.mubr.bf16.mxu0 0
      %1073 = vmatmul.mubr.bf16.gmra.mxu0 %v1030
      %v1074 = vpop.f32.mrf.mxu0
      %v1075 = vadd.f32 0.0, %v1074
      %v1076 = vpop.f32.mrf.mxu0
      %v1077 = vpop.f32.mrf.mxu0
      %v1078 = vpop.f32.mrf.mxu0
      %1079 = vdwg.mxu0
      %v1080 = vadd.f32 %v989, %v1067
      %v1081 = vadd.f32 %v990, %v1070
      %v1082 = vadd.f32 %v991, %v1075
      %v1083 = vld [vmem:[#allocation2] sm:$0xc]
      %v1084 = vld [vmem:[#allocation2 + $0x8] sm:$0xf]
      %s1085 = scalar_lea.vmem %s281, 96
      %v1086 = vld [vmem:[%s1085] sm:$0xf]
      %v1087 = vld [vmem:[%s1085 + $0x4] sm:$0xf]
      %v1088 = vld [vmem:[%s1085 + $0x8] sm:$0xf]
      %v1089 = vld [vmem:[%s1085 + $0xc] sm:$0xf]
      %v1092 = vunpack.c.l.b16 %v1083
      %v1093 = vunpack.c.l.b16 %v1084
      %v1094 = vpack.c.b16 %v643, %v1092
      %v1095 = vpack.c.b16 %v1093, %v1093
      %vm1096 = vsmask.f32 5376
      %v1098 = vshrl.u32 %v1094, 16
      %v1100 = vrot.slane %v1098, 2
      %v1101 = vshll.u32 %v1094, 16
      %v1103 = vrot.slane %v1101, 3
      %v1104 = vor.u32 %v1100, %v1103
      %v1106 = vshrl.u32 %v1095, 16
      %v1108 = vrot.slane %v1106, 2
      %v1109 = vshll.u32 %v1095, 16
      %v1111 = vrot.slane %v1109, 3
      %v1112 = vor.u32 %v1108, %v1111
      %v1113 = vsel %vm1096, %v1104, %v1112
      %v1118 = vunpack.c.l.b16 %v1086
      %v1119 = vunpack.c.l.b16 %v1087
      %v1120 = vunpack.c.l.b16 %v1088
      %v1121 = vunpack.c.l.b16 %v1089
      %v1122 = vpack.c.b16 %v1119, %v1118
      %v1123 = vpack.c.b16 %v1121, %v1120
      %v1127 = vsel %vm584, %v1113, 0
      %v1130 = vsel %vm584, %v1112, 0
      %1132 = vmatprep.subr.bf16.mxu0 0
      %1133 = vmatpush1.bf16.msra.mxu0 0
      %1134 = vmatprep.subr.bf16.mxu0 0
      %1135 = vmatpush1.bf16.msra.mxu0 0
      %1136 = vmatprep.subr.bf16.mxu0 0
      %1137 = vmatpush1.bf16.msra.mxu0 0
      %1138 = vmatprep.subr.bf16.mxu0 0
      %1139 = vmatpush1.bf16.msra.mxu0 0
      %1140 = vmatprep.subr.bf16.mxu0 0
      %1141 = vmatpush1.bf16.msra.mxu0 0
      %1142 = vmatprep.subr.bf16.mxu0 0
      %1143 = vmatpush1.bf16.msra.mxu0 0
      %1144 = vmatprep.subr.bf16.mxu0 0
      %1145 = vmatpush1.bf16.msra.mxu0 %v1123
      %1146 = vmatprep.subr.bf16.mxu0 0
      %1147 = vmatpush1.bf16.msra.mxu0 %v1122
      %1148 = vmatprep.subr.bf16.mxu0 0
      %1149 = vmatpush2.bf16.msra.mxu0 0
      %1150 = vmatprep.subr.bf16.mxu0 0
      %1151 = vmatpush2.bf16.msra.mxu0 0
      %1152 = vmatprep.subr.bf16.mxu0 0
      %1153 = vmatpush2.bf16.msra.mxu0 0
      %1154 = vmatprep.subr.bf16.mxu0 0
      %1155 = vmatpush2.bf16.msra.mxu0 0
      %1156 = vmatprep.subr.bf16.mxu0 0
      %1157 = vmatpush2.bf16.msra.mxu0 0
      %1158 = vmatprep.subr.bf16.mxu0 0
      %1159 = vmatpush2.bf16.msra.mxu0 0
      %1160 = vmatprep.subr.bf16.mxu0 0
      %1161 = vmatpush2.bf16.msra.mxu0 0
      %1162 = vmatprep.subr.bf16.mxu0 0
      %1163 = vmatpush2.bf16.msra.mxu0 0
      %1164 = vmatprep.mubr.bf16.mxu0 0
      %1165 = vmatmul.mubr.bf16.gmra.mxu0 %v1127
      %v1166 = vpop.f32.mrf.mxu0
      %v1167 = vadd.f32 0.0, %v1166
      %v1168 = vpop.f32.mrf.mxu0
      %v1169 = vpop.f32.mrf.mxu0
      %v1170 = vadd.f32 0.0, %v1169
      %v1171 = vpop.f32.mrf.mxu0
      %1172 = vmatprep.mubr.bf16.mxu0 0
      %1173 = vmatmul.mubr.bf16.gmra.mxu0 %v1130
      %v1174 = vpop.f32.mrf.mxu0
      %v1175 = vadd.f32 0.0, %v1174
      %v1176 = vpop.f32.mrf.mxu0
      %v1177 = vpop.f32.mrf.mxu0
      %v1178 = vpop.f32.mrf.mxu0
      %1179 = vdwg.mxu0
      %v1180 = vadd.f32 %v1080, %v1167
      %v1181 = vadd.f32 %v1081, %v1170
      %v1182 = vadd.f32 %v1082, %v1175
      %v1183 = vld [vmem:[#allocation2 + $0xc] sm:$0x8]
      %v1184 = vld [vmem:[#allocation2 + $0x10] sm:$0xf]
      %v1185 = vld [vmem:[#allocation2 + $0x14] sm:$0xf]
      %v1186 = vld [vmem:[#allocation2 + $0x18] sm:$0x1]
      %s1187 = scalar_lea.vmem %s281, 112
      %v1188 = vld [vmem:[%s1187] sm:$0xf]
      %v1189 = vld [vmem:[%s1187 + $0x4] sm:$0xf]
      %v1190 = vld [vmem:[%s1187 + $0x8] sm:$0xf]
      %v1191 = vld [vmem:[%s1187 + $0xc] sm:$0xf]
      %v1196 = vunpack.c.l.b16 %v1183
      %v1197 = vunpack.c.l.b16 %v1184
      %v1198 = vunpack.c.l.b16 %v1185
      %v1199 = vunpack.c.l.b16 %v1186
      %v1200 = vpack.c.b16 %v1197, %v1196
      %v1201 = vpack.c.b16 %v1199, %v1198
      %vm1202 = vcmask 1044480
      %v1203 = vrot.slane %v1200, 3
      %v1204 = vrot.slane %v1201, 3
      %v1205 = vsel %vm1202, %v1203, %v1204
      %v1210 = vunpack.c.l.b16 %v1188
      %v1211 = vunpack.c.l.b16 %v1189
      %v1212 = vunpack.c.l.b16 %v1190
      %v1213 = vunpack.c.l.b16 %v1191
      %v1214 = vpack.c.b16 %v1211, %v1210
      %v1215 = vpack.c.b16 %v1213, %v1212
      %v1219 = vsel %vm584, %v1205, 0
      %v1222 = vsel %vm584, %v1204, 0
      %1224 = vmatprep.subr.bf16.mxu0 0
      %1225 = vmatpush1.bf16.msra.mxu0 0
      %1226 = vmatprep.subr.bf16.mxu0 0
      %1227 = vmatpush1.bf16.msra.mxu0 0
      %1228 = vmatprep.subr.bf16.mxu0 0
      %1229 = vmatpush1.bf16.msra.mxu0 0
      %1230 = vmatprep.subr.bf16.mxu0 0
      %1231 = vmatpush1.bf16.msra.mxu0 0
      %1232 = vmatprep.subr.bf16.mxu0 0
      %1233 = vmatpush1.bf16.msra.mxu0 0
      %1234 = vmatprep.subr.bf16.mxu0 0
      %1235 = vmatpush1.bf16.msra.mxu0 0
      %1236 = vmatprep.subr.bf16.mxu0 0
      %1237 = vmatpush1.bf16.msra.mxu0 %v1215
      %1238 = vmatprep.subr.bf16.mxu0 0
      %1239 = vmatpush1.bf16.msra.mxu0 %v1214
      %1240 = vmatprep.subr.bf16.mxu0 0
      %1241 = vmatpush2.bf16.msra.mxu0 0
      %1242 = vmatprep.subr.bf16.mxu0 0
      %1243 = vmatpush2.bf16.msra.mxu0 0
      %1244 = vmatprep.subr.bf16.mxu0 0
      %1245 = vmatpush2.bf16.msra.mxu0 0
      %1246 = vmatprep.subr.bf16.mxu0 0
      %1247 = vmatpush2.bf16.msra.mxu0 0
      %1248 = vmatprep.subr.bf16.mxu0 0
      %1249 = vmatpush2.bf16.msra.mxu0 0
      %1250 = vmatprep.subr.bf16.mxu0 0
      %1251 = vmatpush2.bf16.msra.mxu0 0
      %1252 = vmatprep.subr.bf16.mxu0 0
      %1253 = vmatpush2.bf16.msra.mxu0 0
      %1254 = vmatprep.subr.bf16.mxu0 0
      %1255 = vmatpush2.bf16.msra.mxu0 0
      %1256 = vmatprep.mubr.bf16.mxu0 0
      %1257 = vmatmul.mubr.bf16.gmra.mxu0 %v1219
      %v1258 = vpop.f32.mrf.mxu0
      %v1259 = vadd.f32 0.0, %v1258
      %v1260 = vpop.f32.mrf.mxu0
      %v1261 = vpop.f32.mrf.mxu0
      %v1262 = vadd.f32 0.0, %v1261
      %v1263 = vpop.f32.mrf.mxu0
      %1264 = vmatprep.mubr.bf16.mxu0 0
      %1265 = vmatmul.mubr.bf16.gmra.mxu0 %v1222
      %v1266 = vpop.f32.mrf.mxu0
      %v1267 = vadd.f32 0.0, %v1266
      %v1268 = vpop.f32.mrf.mxu0
      %v1269 = vpop.f32.mrf.mxu0
      %v1270 = vpop.f32.mrf.mxu0
      %1271 = vdwg.mxu0
      %v1272 = vadd.f32 %v1180, %v1259
      %v1273 = vadd.f32 %v1181, %v1262
      %v1274 = vadd.f32 %v1182, %v1267
      %v1275 = vld [vmem:[#allocation2] sm:$0x8]
      %v1276 = vld [vmem:[#allocation2 + $0x4] sm:$0xf]
      %v1277 = vld [vmem:[#allocation2 + $0x8] sm:$0xf]
      %v1278 = vld [vmem:[#allocation2 + $0xc] sm:$0x1]
      %s1279 = scalar_lea.vmem %s281, 128
      %v1280 = vld [vmem:[%s1279] sm:$0xf]
      %v1281 = vld [vmem:[%s1279 + $0x4] sm:$0xf]
      %v1282 = vld [vmem:[%s1279 + $0x8] sm:$0xf]
      %v1283 = vld [vmem:[%s1279 + $0xc] sm:$0xf]
      %v1288 = vunpack.c.l.b16 %v1275
      %v1289 = vunpack.c.l.b16 %v1276
      %v1290 = vunpack.c.l.b16 %v1277
      %v1291 = vunpack.c.l.b16 %v1278
      %v1292 = vpack.c.b16 %v1289, %v1288
      %v1293 = vpack.c.b16 %v1291, %v1290
      %v1294 = vrot.slane %v1292, 3
      %v1295 = vrot.slane %v1293, 3
      %v1296 = vsel %vm1202, %v1294, %v1295
      %v1301 = vunpack.c.l.b16 %v1280
      %v1302 = vunpack.c.l.b16 %v1281
      %v1303 = vunpack.c.l.b16 %v1282
      %v1304 = vunpack.c.l.b16 %v1283
      %v1305 = vpack.c.b16 %v1302, %v1301
      %v1306 = vpack.c.b16 %v1304, %v1303
      %v1310 = vsel %vm584, %v1296, 0
      %v1313 = vsel %vm584, %v1295, 0
      %1315 = vmatprep.subr.bf16.mxu0 0
      %1316 = vmatpush1.bf16.msra.mxu0 0
      %1317 = vmatprep.subr.bf16.mxu0 0
      %1318 = vmatpush1.bf16.msra.mxu0 0
      %1319 = vmatprep.subr.bf16.mxu0 0
      %1320 = vmatpush1.bf16.msra.mxu0 0
      %1321 = vmatprep.subr.bf16.mxu0 0
      %1322 = vmatpush1.bf16.msra.mxu0 0
      %1323 = vmatprep.subr.bf16.mxu0 0
      %1324 = vmatpush1.bf16.msra.mxu0 0
      %1325 = vmatprep.subr.bf16.mxu0 0
      %1326 = vmatpush1.bf16.msra.mxu0 0
      %1327 = vmatprep.subr.bf16.mxu0 0
      %1328 = vmatpush1.bf16.msra.mxu0 %v1306
      %1329 = vmatprep.subr.bf16.mxu0 0
      %1330 = vmatpush1.bf16.msra.mxu0 %v1305
      %1331 = vmatprep.subr.bf16.mxu0 0
      %1332 = vmatpush2.bf16.msra.mxu0 0
      %1333 = vmatprep.subr.bf16.mxu0 0
      %1334 = vmatpush2.bf16.msra.mxu0 0
      %1335 = vmatprep.subr.bf16.mxu0 0
      %1336 = vmatpush2.bf16.msra.mxu0 0
      %1337 = vmatprep.subr.bf16.mxu0 0
      %1338 = vmatpush2.bf16.msra.mxu0 0
      %1339 = vmatprep.subr.bf16.mxu0 0
      %1340 = vmatpush2.bf16.msra.mxu0 0
      %1341 = vmatprep.subr.bf16.mxu0 0
      %1342 = vmatpush2.bf16.msra.mxu0 0
      %1343 = vmatprep.subr.bf16.mxu0 0
      %1344 = vmatpush2.bf16.msra.mxu0 0
      %1345 = vmatprep.subr.bf16.mxu0 0
      %1346 = vmatpush2.bf16.msra.mxu0 0
      %1347 = vmatprep.mubr.bf16.mxu0 0
      %1348 = vmatmul.mubr.bf16.gmra.mxu0 %v1310
      %v1349 = vpop.f32.mrf.mxu0
      %v1350 = vadd.f32 0.0, %v1349
      %v1351 = vpop.f32.mrf.mxu0
      %v1352 = vpop.f32.mrf.mxu0
      %v1353 = vadd.f32 0.0, %v1352
      %v1354 = vpop.f32.mrf.mxu0
      %1355 = vmatprep.mubr.bf16.mxu0 0
      %1356 = vmatmul.mubr.bf16.gmra.mxu0 %v1313
      %v1357 = vpop.f32.mrf.mxu0
      %v1358 = vadd.f32 0.0, %v1357
      %v1359 = vpop.f32.mrf.mxu0
      %v1360 = vpop.f32.mrf.mxu0
      %v1361 = vpop.f32.mrf.mxu0
      %1362 = vdwg.mxu0
      %v1363 = vadd.f32 %v1272, %v1350
      %v1364 = vadd.f32 %v1273, %v1353
      %v1365 = vadd.f32 %v1274, %v1358
      %v1366 = vpack.c.bf16 %v1364, %v1363
      %v1367 = vpack.c.bf16 %v1365, %v1365
      %v1370 = vunpack.c.l.b16 %v1366
      %v1371 = vunpack.c.h.b16 %v1366
      %v1372 = vunpack.c.l.b16 %v1367
      %v1373 = vpack.c.b16 %v1370, %v1370
      %v1374 = vpack.c.b16 %v1371, %v1371
      %v1375 = vpack.c.b16 %v1372, %v1372
      %vm1379 = vcmask 257024
      %1380 = vst.msk [vmem:[%s289] sm:$0xf] %vm1379, %v1373
      %1381 = vst.msk [vmem:[%s289 + $0x4] sm:$0xf] %vm1379, %v1374
      %vm1382 = vcmask 254976
      %vm1383 = vsmask.f32 1280
      %vm1384 = vmand %vm1382, %vm1383
      %v1385 = vld [vmem:[%s289 + $0x8] sm:$0x3]
      %v1386 = vsel %vm1384, %v1375, %v1385
      %1387 = vst [vmem:[%s289 + $0x8] sm:$0x3] %v1386
      %p1388 = scmp.lt.s32.totalorder %s20, 1
      %s1389 = scalar_select %p1388, %s20, 1
      %p1390 = scmp.lt.s32.totalorder %s21, 0
      %s1391 = scalar_select %p1390, %s21, 0
      %s1392 = smul.addr %s1389, 3
      %s1393 = sadd.s32 %s1391, %s1392
      %s1394 = smul.addr %s1393, 4
      %s1395 = scalar_lea.vmem %s5, %s1394
      // Predicated region
      $region45: #{resnet_stage.17} parent=39 // pred_check
        %p1396 = pneg %p173
      $region46: #{resnet_stage.17} parent=39 // pred_check_branch
        %1398 = sbr.rel (%p1396) target = $region48
      $region47: #{resnet_stage.17} parent=39 // pred_region
        _
      $region48: #{resnet_stage.17} parent=39 // pred_fallthru
        _
    $region40: #{resnet_stage.17} parent=5 // pred_fallthru
      _
    %p1399 = scmp.le.s32.totalorder 2, %s11
    // Predicated region
    $region49: #{resnet_stage.17} parent=5 // pred_check
      %p1400 = pneg %p1399
    $region50: #{resnet_stage.17} parent=5 // pred_check_branch
      %1402 = sbr.rel (%p1400) target = $region52
    $region51: #{resnet_stage.17} parent=5 // pred_region
      %s1403 = ssub.s32 %s11, 2
      // Predicated region
      $region53: #{resnet_stage.17} parent=51 // pred_check
        %p1404 = pneg %p179
      $region54: #{resnet_stage.17} parent=51 // pred_check_branch
        %1406 = sbr.rel (%p1404) target = $region56
      $region55: #{resnet_stage.17} parent=51 // pred_region
        %p1407 = scmp.lt.s32.totalorder %s22, 1
        %s1408 = scalar_select %p1407, %s22, 1
        %p1409 = scmp.lt.s32.totalorder %s23, 0
        %s1410 = scalar_select %p1409, %s23, 0
        %s1411 = smul.addr %s1408, 3
        %s1412 = sadd.s32 %s1410, %s1411
        %s1413 = smul.addr %s1412, 4
        %s1414 = scalar_lea.vmem %s5, %s1413
      $region56: #{resnet_stage.17} parent=51 // pred_fallthru
        _
    $region52: #{resnet_stage.17} parent=5 // pred_fallthru
      _
  $region6: #{resnet_stage.17} parent=0 // loop_footer
    %s15 = sadd.s32 1, %s11
  $region7: #{resnet_stage.17} parent=0 // loop_footer_branch
    %10 = sbr.rel target = $region3
  $region8: #{resnet_stage.17} parent=0 // loop_exit
    _

// kernel: resnet_stage.19
$region0: #{resnet_stage.19}
  #allocation0 [shape = 'u32[]', space=smem, size = 0x4, offset = 0x4, fixed_abs, tag = 'smem constant byte address 0x4 - core index']
  #allocation1 [shape = 'u32[144,128]{1,0:T(1,128)}', space=vmem, size = 0x12000, scoped, tag = 'internal scratch']
  #allocation2 [shape = 'f32[16,128]{1,0:T(8,128)}', space=vmem, size = 0x2000, scoped, tag = 'scratch operand']
  %s0 = inlined_call_operand.vmem [shape: bf16[2,16,32], index: 0, kind: input, shape index: {}]
  %s1 = inlined_call_operand.vmem [shape: f32[2,1,32], index: 1, kind: input, shape index: {}]
  %s2 = inlined_call_operand.vmem [shape: f32[2,1,32], index: 2, kind: input, shape index: {}]
  %s3 = inlined_call_operand.vmem [shape: bf16[32,128], index: 3, kind: input, shape index: {}]
  %s4 = inlined_call_operand.vmem [shape: bf16[2,16,128], index: 4, kind: input, shape index: {}]
  %s5 = inlined_call_operand.vmem [shape: bf16[2,16,128], index: 5, kind: output, shape index: {}]
  %s6 = sld [smem:[#allocation0]]
  $region61: #{resnet_stage.19} parent=0
    _
  %s8 = ssub.s32 1, %s6
  %s9 = scalar_select 0, %s8, %s6
  loop: start=0, step=1, limit=4
  $region2: #{resnet_stage.19} parent=0 // loop_pre_header
    _
  $region3: #{resnet_stage.19} parent=0 // loop_header
    %s11 = sphi 0, %s15
    %p12 = scmp.ge.s32.totalorder %s11, 4
    %s18 = sphi 0, %s44
    %s19 = sphi 0, %s40
    %s20 = sphi 0, %s36
    %s21 = sphi 0, %s32
    %s22 = sphi 0, %s18
    %s23 = sphi 0, %s19
    %s24 = sphi 0, %s20
    %s25 = sphi 0, %s21
    %s26 = sphi 0, %s22
    %s27 = sphi 0, %s23
    %s28 = sphi 0, %s24
    %s29 = sphi 0, %s25
    %s51 = sphi 0, %s53
    %s54 = sphi 0, %s51
    %s55 = sphi 0, %s54
    %s71 = sphi 0, %s55
    %s79 = sphi 0, %s81
    %s82 = sphi 0, %s79
    %s83 = sphi 0, %s82
    %s99 = sphi 0, %s83
    %s107 = sphi 0, %s109
    %s110 = sphi 0, %s107
    %s111 = sphi 0, %s110
    %s127 = sphi 0, %s111
    %s135 = sphi 0, %s137
    %s138 = sphi 0, %s135
    %s139 = sphi 0, %s138
    %s155 = sphi 0, %s139
    %s165 = sphi 0, %s167
    %s168 = sphi 0, %s165
    %s169 = sphi 0, %s168
    %s185 = sphi 0, %s169
    %s195 = sphi 0, %s197
    %s198 = sphi 0, %s195
    %s199 = sphi 0, %s198
    %s215 = sphi 0, %s199
  $region4: #{resnet_stage.19} parent=0 // loop_header_branch
    %14 = sbr.rel (%p12) target = $region8
  $region5: #{resnet_stage.19} parent=0 // loop_body
    %s16 = ssub.s32 %s11, 1
    %s17 = ssub.s32 %s11, 2
    %s30 = sadd.s32 1, %s21
    %p31 = scmp.ge.s32.totalorder %s30, 1
    %s32 = scalar_select %p31, 0, %s30
    %s33 = sadd.s32 1, %s20
    %s34 = scalar_select %p31, %s33, %s20
    %p35 = scmp.ge.s32.totalorder %s34, 1
    %s36 = scalar_select %p35, 0, %s34
    %s37 = sadd.s32 1, %s19
    %s38 = scalar_select %p35, %s37, %s19
    %p39 = scmp.ge.s32.totalorder %s38, 1
    %s40 = scalar_select %p39, 0, %s38
    %s41 = sadd.s32 1, %s18
    %s42 = scalar_select %p39, %s41, %s18
    %p43 = scmp.ge.s32.totalorder %s42, 2
    %s44 = scalar_select %p43, 0, %s42
    %s45 = ssub.s32 %s18, %s44
    %s46 = ssub.s32 %s19, %s40
    %s47 = sor.u32 %s45, %s46
    %s48 = ssub.s32 %s21, %s32
    %s49 = sor.u32 %s47, %s48
    %p50 = scmp.eq.s32.totalorder %s49, 0
    %s52 = sadd.s32 %s51, 1
    %s53 = scalar_select %p50, %s51, %s52
    %p56 = pneg %p50
    %p57 = scmp.eq.s32.totalorder %s11, 1
    %p58 = por %p56, %p57
    %p59 = scmp.ne.s32.totalorder %s51, %s54
    %p60 = scmp.eq.s32.totalorder %s11, 0
    %p61 = por %p59, %p60
    %p62 = scmp.ne.s32.totalorder %s51, %s54
    %p63 = scmp.eq.s32.totalorder %s16, 1
    %p64 = por %p62, %p63
    %p65 = scmp.ne.s32.totalorder %s54, %s55
    %p66 = scmp.eq.s32.totalorder %s16, 0
    %p67 = por %p65, %p66
    %p68 = scmp.ne.s32.totalorder %s54, %s55
    %p69 = scmp.eq.s32.totalorder %s17, 1
    %p70 = por %p68, %p69
    %p72 = scmp.ne.s32.totalorder %s55, %s71
    %p73 = scmp.eq.s32.totalorder %s17, 0
    %p74 = por %p72, %p73
    %s75 = ssub.s32 %s18, %s44
    %s76 = ssub.s32 %s21, %s32
    %s77 = sor.u32 %s75, %s76
    %p78 = scmp.eq.s32.totalorder %s77, 0
    %s80 = sadd.s32 %s79, 1
    %s81 = scalar_select %p78, %s79, %s80
    %p84 = pneg %p78
    %p85 = scmp.eq.s32.totalorder %s11, 1
    %p86 = por %p84, %p85
    %p87 = scmp.ne.s32.totalorder %s79, %s82
    %p88 = scmp.eq.s32.totalorder %s11, 0
    %p89 = por %p87, %p88
    %p90 = scmp.ne.s32.totalorder %s79, %s82
    %p91 = scmp.eq.s32.totalorder %s16, 1
    %p92 = por %p90, %p91
    %p93 = scmp.ne.s32.totalorder %s82, %s83
    %p94 = scmp.eq.s32.totalorder %s16, 0
    %p95 = por %p93, %p94
    %p96 = scmp.ne.s32.totalorder %s82, %s83
    %p97 = scmp.eq.s32.totalorder %s17, 1
    %p98 = por %p96, %p97
    %p100 = scmp.ne.s32.totalorder %s83, %s99
    %p101 = scmp.eq.s32.totalorder %s17, 0
    %p102 = por %p100, %p101
    %s103 = ssub.s32 %s18, %s44
    %s104 = ssub.s32 %s21, %s32
    %s105 = sor.u32 %s103, %s104
    %p106 = scmp.eq.s32.totalorder %s105, 0
    %s108 = sadd.s32 %s107, 1
    %s109 = scalar_select %p106, %s107, %s108
    %p112 = pneg %p106
    %p113 = scmp.eq.s32.totalorder %s11, 1
    %p114 = por %p112, %p113
    %p115 = scmp.ne.s32.totalorder %s107, %s110
    %p116 = scmp.eq.s32.totalorder %s11, 0
    %p117 = por %p115, %p116
    %p118 = scmp.ne.s32.totalorder %s107, %s110
    %p119 = scmp.eq.s32.totalorder %s16, 1
    %p120 = por %p118, %p119
    %p121 = scmp.ne.s32.totalorder %s110, %s111
    %p122 = scmp.eq.s32.totalorder %s16, 0
    %p123 = por %p121, %p122
    %p124 = scmp.ne.s32.totalorder %s110, %s111
    %p125 = scmp.eq.s32.totalorder %s17, 1
    %p126 = por %p124, %p125
    %p128 = scmp.ne.s32.totalorder %s111, %s127
    %p129 = scmp.eq.s32.totalorder %s17, 0
    %p130 = por %p128, %p129
    %s131 = ssub.s32 %s21, %s32
    %s132 = ssub.s32 %s20, %s36
    %s133 = sor.u32 %s131, %s132
    %p134 = scmp.eq.s32.totalorder %s133, 0
    %s136 = sadd.s32 %s135, 1
    %s137 = scalar_select %p134, %s135, %s136
    %p140 = pneg %p134
    %p141 = scmp.eq.s32.totalorder %s11, 1
    %p142 = por %p140, %p141
    %p143 = scmp.ne.s32.totalorder %s135, %s138
    %p144 = scmp.eq.s32.totalorder %s11, 0
    %p145 = por %p143, %p144
    %p146 = scmp.ne.s32.totalorder %s135, %s138
    %p147 = scmp.eq.s32.totalorder %s16, 1
    %p148 = por %p146, %p147
    %p149 = scmp.ne.s32.totalorder %s138, %s139
    %p150 = scmp.eq.s32.totalorder %s16, 0
    %p151 = por %p149, %p150
    %p152 = scmp.ne.s32.totalorder %s138, %s139
    %p153 = scmp.eq.s32.totalorder %s17, 1
    %p154 = por %p152, %p153
    %p156 = scmp.ne.s32.totalorder %s139, %s155
    %p157 = scmp.eq.s32.totalorder %s17, 0
    %p158 = por %p156, %p157
    %s159 = ssub.s32 %s18, %s44
    %s160 = ssub.s32 %s19, %s40
    %s161 = sor.u32 %s159, %s160
    %s162 = ssub.s32 %s20, %s36
    %s163 = sor.u32 %s161, %s162
    %p164 = scmp.eq.s32.totalorder %s163, 0
    %s166 = sadd.s32 %s165, 1
    %s167 = scalar_select %p164, %s165, %s166
    %p170 = pneg %p164
    %p171 = scmp.eq.s32.totalorder %s11, 1
    %p172 = por %p170, %p171
    %p173 = scmp.ne.s32.totalorder %s165, %s168
    %p174 = scmp.eq.s32.totalorder %s11, 0
    %p175 = por %p173, %p174
    %p176 = scmp.ne.s32.totalorder %s165, %s168
    %p177 = scmp.eq.s32.totalorder %s16, 1
    %p178 = por %p176, %p177
    %p179 = scmp.ne.s32.totalorder %s168, %s169
    %p180 = scmp.eq.s32.totalorder %s16, 0
    %p181 = por %p179, %p180
    %p182 = scmp.ne.s32.totalorder %s168, %s169
    %p183 = scmp.eq.s32.totalorder %s17, 1
    %p184 = por %p182, %p183
    %p186 = scmp.ne.s32.totalorder %s169, %s185
    %p187 = scmp.eq.s32.totalorder %s17, 0
    %p188 = por %p186, %p187
    %s189 = ssub.s32 %s18, %s44
    %s190 = ssub.s32 %s19, %s40
    %s191 = sor.u32 %s189, %s190
    %s192 = ssub.s32 %s20, %s36
    %s193 = sor.u32 %s191, %s192
    %p194 = scmp.eq.s32.totalorder %s193, 0
    %s196 = sadd.s32 %s195, 1
    %s197 = scalar_select %p194, %s195, %s196
    %p200 = pneg %p194
    %p201 = scmp.eq.s32.totalorder %s11, 1
    %p202 = por %p200, %p201
    %p203 = scmp.ne.s32.totalorder %s195, %s198
    %p204 = scmp.eq.s32.totalorder %s11, 0
    %p205 = por %p203, %p204
    %p206 = scmp.ne.s32.totalorder %s195, %s198
    %p207 = scmp.eq.s32.totalorder %s16, 1
    %p208 = por %p206, %p207
    %p209 = scmp.ne.s32.totalorder %s198, %s199
    %p210 = scmp.eq.s32.totalorder %s16, 0
    %p211 = por %p209, %p210
    %p212 = scmp.ne.s32.totalorder %s198, %s199
    %p213 = scmp.eq.s32.totalorder %s17, 1
    %p214 = por %p212, %p213
    %p216 = scmp.ne.s32.totalorder %s199, %s215
    %p217 = scmp.eq.s32.totalorder %s17, 0
    %p218 = por %p216, %p217
    %p219 = scmp.le.s32.totalorder 1, %s11
    %p220 = scmp.lt.s32.totalorder %s11, 3
    %p221 = pnand %p219, %p220
    %p222 = pneg %p221
    // Predicated region
    $region9: #{resnet_stage.19} parent=5 // pred_check
      _
    $region10: #{resnet_stage.19} parent=5 // pred_check_branch
      %224 = sbr.rel (%p221) target = $region12
    $region11: #{resnet_stage.19} parent=5 // pred_region
      %s225 = ssub.s32 %s11, 1
      // Predicated region
      $region13: #{resnet_stage.19} parent=11 // pred_check
        %p226 = pneg %p151
      $region14: #{resnet_stage.19} parent=11 // pred_check_branch
        %228 = sbr.rel (%p226) target = $region16
      $region15: #{resnet_stage.19} parent=11 // pred_region
        %s229 = smul.u32 4, %s25
        %p230 = scmp.lt.s32.totalorder %s229, 3
        %s231 = scalar_select %p230, %s229, 3
        %p232 = scmp.lt.s32.totalorder %s24, 0
        %s233 = scalar_select %p232, %s24, 0
        %s234 = sadd.s32 %s233, %s231
        %s235 = smul.addr %s234, 4
        %s236 = scalar_lea.vmem %s3, %s235
        %s237 = smul.u32 4, %s25
      $region16: #{resnet_stage.19} parent=11 // pred_fallthru
        _
    $region12: #{resnet_stage.19} parent=5 // pred_fallthru
      _
    %p238 = scmp.lt.s32.totalorder %s11, 2
    // Predicated region
    $region17: #{resnet_stage.19} parent=5 // pred_check
      %p239 = pneg %p238
    $region18: #{resnet_stage.19} parent=5 // pred_check_branch
      %241 = sbr.rel (%p239) target = $region20
    $region19: #{resnet_stage.19} parent=5 // pred_region
      // Predicated region
      $region21: #{resnet_stage.19} parent=19 // pred_check
        %p242 = pneg %p61
      $region22: #{resnet_stage.19} parent=19 // pred_check_branch
        %244 = sbr.rel (%p242) target = $region24
      $region23: #{resnet_stage.19} parent=19 // pred_region
        %s245 = smul.u32 2, %s19
        %p246 = scmp.lt.s32.totalorder %s18, 1
        %s247 = scalar_select %p246, %s18, 1
        %p248 = scmp.lt.s32.totalorder %s245, 1
        %s249 = scalar_select %p248, %s245, 1
        %p250 = scmp.lt.s32.totalorder %s21, 0
        %s251 = scalar_select %p250, %s21, 0
        %s252 = sadd.s32 %s251, %s249
        %s253 = smul.addr %s247, 2
        %s254 = sadd.s32 %s252, %s253
        %s255 = smul.addr %s254, 4
        %s256 = scalar_lea.vmem %s0, %s255
        %s257 = smul.u32 2, %s19
      $region24: #{resnet_stage.19} parent=19 // pred_fallthru
        _
      // Predicated region
      $region25: #{resnet_stage.19} parent=19 // pred_check
        %p258 = pneg %p89
      $region26: #{resnet_stage.19} parent=19 // pred_check_branch
        %260 = sbr.rel (%p258) target = $region28
      $region27: #{resnet_stage.19} parent=19 // pred_region
        %p261 = scmp.lt.s32.totalorder %s18, 1
        %s262 = scalar_select %p261, %s18, 1
        %p263 = scmp.lt.s32.totalorder %s21, 0
        %s264 = scalar_select %p263, %s21, 0
        %s265 = sadd.s32 %s264, %s262
        %s266 = scalar_lea.vmem %s1, %s265
      $region28: #{resnet_stage.19} parent=19 // pred_fallthru
        _
      // Predicated region
      $region29: #{resnet_stage.19} parent=19 // pred_check
        %p267 = pneg %p117
      $region30: #{resnet_stage.19} parent=19 // pred_check_branch
        %269 = sbr.rel (%p267) target = $region32
      $region31: #{resnet_stage.19} parent=19 // pred_region
        %p270 = scmp.lt.s32.totalorder %s18, 1
        %s271 = scalar_select %p270, %s18, 1
        %p272 = scmp.lt.s32.totalorder %s21, 0
        %s273 = scalar_select %p272, %s21, 0
        %s274 = sadd.s32 %s273, %s271
        %s275 = scalar_lea.vmem %s2, %s274
      $region32: #{resnet_stage.19} parent=19 // pred_fallthru
        _
      // Predicated region
      $region33: #{resnet_stage.19} parent=19 // pred_check
        %p276 = pneg %p175
      $region34: #{resnet_stage.19} parent=19 // pred_check_branch
        %278 = sbr.rel (%p276) target = $region36
      $region35: #{resnet_stage.19} parent=19 // pred_region
        %s279 = smul.u32 2, %s19
        %p280 = scmp.lt.s32.totalorder %s18, 1
        %s281 = scalar_select %p280, %s18, 1
        %p282 = scmp.lt.s32.totalorder %s279, 1
        %s283 = scalar_select %p282, %s279, 1
        %p284 = scmp.lt.s32.totalorder %s20, 0
        %s285 = scalar_select %p284, %s20, 0
        %s286 = sadd.s32 %s285, %s283
        %s287 = smul.addr %s281, 2
        %s288 = sadd.s32 %s286, %s287
        %s289 = smul.addr %s288, 4
        %s290 = scalar_lea.vmem %s4, %s289
        %s291 = smul.u32 2, %s19
      $region36: #{resnet_stage.19} parent=19 // pred_fallthru
        _
    $region20: #{resnet_stage.19} parent=5 // pred_fallthru
      _
    %p292 = scmp.le.s32.totalorder 1, %s11
    %p293 = scmp.lt.s32.totalorder %s11, 3
    %p294 = pnand %p292, %p293
    %p295 = pneg %p294
    // Predicated region
    $region37: #{resnet_stage.19} parent=5 // pred_check
      _
    $region38: #{resnet_stage.19} parent=5 // pred_check_branch
      %297 = sbr.rel (%p294) target = $region40
    $region39: #{resnet_stage.19} parent=5 // pred_region
      %s298 = ssub.s32 %s11, 1
      %s299 = smul.u32 2, %s23
      %p300 = scmp.lt.s32.totalorder %s22, 1
      %s301 = scalar_select %p300, %s22, 1
      %p302 = scmp.lt.s32.totalorder %s299, 1
      %s303 = scalar_select %p302, %s299, 1
      %p304 = scmp.lt.s32.totalorder %s25, 0
      %s305 = scalar_select %p304, %s25, 0
      %s306 = sadd.s32 %s305, %s303
      %s307 = smul.addr %s301, 2
      %s308 = sadd.s32 %s306, %s307
      %s309 = smul.addr %s308, 4
      %s310 = scalar_lea.vmem %s0, %s309
      %p311 = pneg %p67
      %p312 = pneg %p64
      %p313 = scmp.lt.s32.totalorder %s22, 1
      %s314 = scalar_select %p313, %s22, 1
      %p315 = scmp.lt.s32.totalorder %s25, 0
      %s316 = scalar_select %p315, %s25, 0
      %s317 = sadd.s32 %s316, %s314
      %s318 = scalar_lea.vmem %s1, %s317
      %p319 = pneg %p95
      %p320 = pneg %p92
      %p321 = scmp.lt.s32.totalorder %s22, 1
      %s322 = scalar_select %p321, %s22, 1
      %p323 = scmp.lt.s32.totalorder %s25, 0
      %s324 = scalar_select %p323, %s25, 0
      %s325 = sadd.s32 %s324, %s322
      %s326 = scalar_lea.vmem %s2, %s325
      %p327 = pneg %p123
      %p328 = pneg %p120
      %s329 = smul.u32 4, %s25
      %p330 = scmp.lt.s32.totalorder %s329, 3
      %s331 = scalar_select %p330, %s329, 3
      %p332 = scmp.lt.s32.totalorder %s24, 0
      %s333 = scalar_select %p332, %s24, 0
      %s334 = sadd.s32 %s333, %s331
      %s335 = smul.addr %s334, 4
      %s336 = scalar_lea.vmem %s3, %s335
      %p337 = pneg %p151
      %p338 = pneg %p148
      %s339 = smul.u32 2, %s23
      %p340 = scmp.lt.s32.totalorder %s22, 1
      %s341 = scalar_select %p340, %s22, 1
      %p342 = scmp.lt.s32.totalorder %s339, 1
      %s343 = scalar_select %p342, %s339, 1
      %p344 = scmp.lt.s32.totalorder %s24, 0
      %s345 = scalar_select %p344, %s24, 0
      %s346 = sadd.s32 %s345, %s343
      %s347 = smul.addr %s341, 2
      %s348 = sadd.s32 %s346, %s347
      %s349 = smul.addr %s348, 4
      %s350 = scalar_lea.vmem %s4, %s349
      %p351 = pneg %p181
      %p352 = pneg %p178
      %p353 = pneg %p211
      %p354 = pneg %p208
      %s355 = smul.u32 2, %s23
      %p356 = scmp.lt.s32.totalorder %s22, 1
      %s357 = scalar_select %p356, %s22, 1
      %p358 = scmp.lt.s32.totalorder %s355, 1
      %s359 = scalar_select %p358, %s355, 1
      %p360 = scmp.lt.s32.totalorder %s24, 0
      %s361 = scalar_select %p360, %s24, 0
      %s362 = sadd.s32 %s361, %s359
      %s363 = smul.addr %s357, 2
      %s364 = sadd.s32 %s362, %s363
      %s365 = smul.addr %s364, 4
      %s366 = scalar_lea.vmem %s5, %s365
      %s367 = smul.u32 2, %s23
      %p368 = scmp.lt.s32.totalorder %s22, 1
      %s369 = scalar_select %p368, %s22, 1
      %p370 = scmp.lt.s32.totalorder %s367, 1
      %s371 = scalar_select %p370, %s367, 1
      %p372 = scmp.lt.s32.totalorder %s25, 0
      %s373 = scalar_select %p372, %s25, 0
      %s374 = sadd.s32 %s373, %s371
      %s375 = smul.addr %s369, 2
      %s376 = sadd.s32 %s374, %s375
      %s377 = smul.addr %s376, 4
      %s378 = scalar_lea.vmem %s0, %s377
      %s379 = smul.u32 2, %s23
      %p380 = scmp.lt.s32.totalorder %s22, 1
      %s381 = scalar_select %p380, %s22, 1
      %p382 = scmp.lt.s32.totalorder %s25, 0
      %s383 = scalar_select %p382, %s25, 0
      %s384 = sadd.s32 %s383, %s381
      %s385 = scalar_lea.vmem %s1, %s384
      %p386 = scmp.lt.s32.totalorder %s22, 1
      %s387 = scalar_select %p386, %s22, 1
      %p388 = scmp.lt.s32.totalorder %s25, 0
      %s389 = scalar_select %p388, %s25, 0
      %s390 = sadd.s32 %s389, %s387
      %s391 = scalar_lea.vmem %s2, %s390
      %s392 = smul.u32 4, %s25
      %p393 = scmp.lt.s32.totalorder %s392, 3
      %s394 = scalar_select %p393, %s392, 3
      %p395 = scmp.lt.s32.totalorder %s24, 0
      %s396 = scalar_select %p395, %s24, 0
      %s397 = sadd.s32 %s396, %s394
      %s398 = smul.addr %s397, 4
      %s399 = scalar_lea.vmem %s3, %s398
      %s400 = smul.u32 4, %s25
      %s401 = smul.u32 2, %s23
      %p402 = scmp.lt.s32.totalorder %s22, 1
      %s403 = scalar_select %p402, %s22, 1
      %p404 = scmp.lt.s32.totalorder %s401, 1
      %s405 = scalar_select %p404, %s401, 1
      %p406 = scmp.lt.s32.totalorder %s24, 0
      %s407 = scalar_select %p406, %s24, 0
      %s408 = sadd.s32 %s407, %s405
      %s409 = smul.addr %s403, 2
      %s410 = sadd.s32 %s408, %s409
      %s411 = smul.addr %s410, 4
      %s412 = scalar_lea.vmem %s4, %s411
      %s413 = smul.u32 2, %s23
      %s414 = smul.u32 2, %s23
      %p415 = scmp.lt.s32.totalorder %s22, 1
      %s416 = scalar_select %p415, %s22, 1
      %p417 = scmp.lt.s32.totalorder %s414, 1
      %s418 = scalar_select %p417, %s414, 1
      %p419 = scmp.lt.s32.totalorder %s24, 0
      %s420 = scalar_select %p419, %s24, 0
      %s421 = sadd.s32 %s420, %s418
      %s422 = smul.addr %s416, 2
      %s423 = sadd.s32 %s421, %s422
      %s424 = smul.addr %s423, 4
      %s425 = scalar_lea.vmem %s5, %s424
      %s426 = smul.u32 2, %s23
      %p428 = scmp.eq.s32.totalorder %s25, 0
      // Predicated region
      $region41: #{resnet_stage.19} parent=39 // pred_check
        %p429 = pneg %p428
      $region42: #{resnet_stage.19} parent=39 // pred_check_branch
        %431 = sbr.rel (%p429) target = $region44
      $region43: #{resnet_stage.19} parent=39 // pred_region
        %432 = vst [vmem:[#allocation2] sm:$0xff] 0.0
        %433 = vst [vmem:[#allocation2 + $0x8] sm:$0xff] 0.0
      $region44: #{resnet_stage.19} parent=39 // pred_fallthru
        _
      %v434 = vld [vmem:[%s378] sm:$0xf]
      %v435 = vld [vmem:[%s378 + $0x4] sm:$0xf]
      %v436 = vunpack.c.l.bf16 %v434
      %v437 = vunpack.c.l.bf16 %v435
      %v438 = vld [vmem:[%s385] sm:$0x1]
      %v440 = vlaneseq
      %v441 = vshrl.u32 %v440, 7
      %v442 = vsub.s32 0, %v441
      %v443 = vrot.slane %v438, %v442
      %v445 = vmul.f32 %v436, %v443
      %v446 = vmul.f32 %v437, %v443
      %v447 = vld [vmem:[%s391] sm:$0x1]
      %v449 = vlaneseq
      %v450 = vshrl.u32 %v449, 7
      %v451 = vsub.s32 0, %v450
      %v452 = vrot.slane %v447, %v451
      %v454 = vadd.f32 %v445, %v452
      %v455 = vadd.f32 %v446, %v452
      %v456 = vmax.f32 %v454, 0.0
      %v457 = vmax.f32 %v455, 0.0
      %v458 = vld [vmem:[#allocation2] sm:$0xff]
      %v459 = vld [vmem:[#allocation2 + $0x8] sm:$0xff]
      %v460 = vpack.c.bf16 %v457, %v456
      %v461 = vld [vmem:[%s399] sm:$0xf]
      %v462 = vld [vmem:[%s399 + $0x4] sm:$0xf]
      %v463 = vld [vmem:[%s399 + $0x8] sm:$0xf]
      %v464 = vld [vmem:[%s399 + $0xc] sm:$0xf]
      %v469 = vunpack.c.l.b16 %v461
      %v470 = vunpack.c.l.b16 %v462
      %v471 = vunpack.c.l.b16 %v463
      %v472 = vunpack.c.l.b16 %v464
      %v473 = vpack.c.b16 %v470, %v469
      %v474 = vpack.c.b16 %v472, %v471
      %vm477 = vcmask 261120
      %v479 = vsel %vm477, %v460, 0
      %481 = vmatprep.subr.bf16.mxu0 0
      %482 = vmatpush1.bf16.msra.mxu0 0
      %483 = vmatprep.subr.bf16.mxu0 0
      %484 = vmatpush1.bf16.msra.mxu0 0
      %485 = vmatprep.subr.bf16.mxu0 0
      %486 = vmatpush1.bf16.msra.mxu0 0
      %487 = vmatprep.subr.bf16.mxu0 0
      %488 = vmatpush1.bf16.msra.mxu0 0
      %489 = vmatprep.subr.bf16.mxu0 0
      %490 = vmatpush1.bf16.msra.mxu0 0
      %491 = vmatprep.subr.bf16.mxu0 0
      %492 = vmatpush1.bf16.msra.mxu0 0
      %493 = vmatprep.subr.bf16.mxu0 0
      %494 = vmatpush1.bf16.msra.mxu0 %v474
      %495 = vmatprep.subr.bf16.mxu0 0
      %496 = vmatpush1.bf16.msra.mxu0 %v473
      %497 = vmatprep.subr.bf16.mxu0 0
      %498 = vmatpush2.bf16.msra.mxu0 0
      %499 = vmatprep.subr.bf16.mxu0 0
      %500 = vmatpush2.bf16.msra.mxu0 0
      %501 = vmatprep.subr.bf16.mxu0 0
      %502 = vmatpush2.bf16.msra.mxu0 0
      %503 = vmatprep.subr.bf16.mxu0 0
      %504 = vmatpush2.bf16.msra.mxu0 0
      %505 = vmatprep.subr.bf16.mxu0 0
      %506 = vmatpush2.bf16.msra.mxu0 0
      %507 = vmatprep.subr.bf16.mxu0 0
      %508 = vmatpush2.bf16.msra.mxu0 0
      %509 = vmatprep.subr.bf16.mxu0 0
      %510 = vmatpush2.bf16.msra.mxu0 0
      %511 = vmatprep.subr.bf16.mxu0 0
      %512 = vmatpush2.bf16.msra.mxu0 0
      %513 = vmatprep.mubr.bf16.mxu0 0
      %514 = vmatmul.mubr.bf16.gmra.mxu0 %v479
      %v515 = vpop.f32.mrf.mxu0
      %v516 = vadd.f32 0.0, %v515
      %v517 = vpop.f32.mrf.mxu0
      %v518 = vpop.f32.mrf.mxu0
      %v519 = vadd.f32 0.0, %v518
      %v520 = vpop.f32.mrf.mxu0
      %521 = vdwg.mxu0
      %v522 = vadd.f32 %v458, %v516
      %v523 = vadd.f32 %v459, %v519
      %524 = vst [vmem:[#allocation2] sm:$0xff] %v522
      %525 = vst [vmem:[#allocation2 + $0x8] sm:$0xff] %v523
      // Predicated region
      $region45: #{resnet_stage.19} parent=39 // pred_check
        %p526 = pneg %p428
      $region46: #{resnet_stage.19} parent=39 // pred_check_branch
        %528 = sbr.rel (%p526) target = $region48
      $region47: #{resnet_stage.19} parent=39 // pred_region
        %v529 = vld [vmem:[#allocation2] sm:$0xff]
        %v530 = vld [vmem:[#allocation2 + $0x8] sm:$0xff]
        %v531 = vld [vmem:[%s412] sm:$0xf]
        %v532 = vld [vmem:[%s412 + $0x4] sm:$0xf]
        %v533 = vunpack.c.l.bf16 %v531
        %v534 = vunpack.c.l.bf16 %v532
        %v535 = vadd.f32 %v529, %v533
        %v536 = vadd.f32 %v530, %v534
        %v537 = vpack.c.bf16 %v536, %v535
        %v539 = vunpack.c.l.b16 %v537
        %v540 = vunpack.c.h.b16 %v537
        %v541 = vpack.c.b16 %v539, %v539
        %v542 = vpack.c.b16 %v540, %v540
        %545 = vst [vmem:[%s425] sm:$0xf] %v541
        %546 = vst [vmem:[%s425 + $0x4] sm:$0xf] %v542
      $region48: #{resnet_stage.19} parent=39 // pred_fallthru
        _
      %s547 = smul.u32 2, %s23
      %p548 = scmp.lt.s32.totalorder %s22, 1
      %s549 = scalar_select %p548, %s22, 1
      %p550 = scmp.lt.s32.totalorder %s547, 1
      %s551 = scalar_select %p550, %s547, 1
      %p552 = scmp.lt.s32.totalorder %s24, 0
      %s553 = scalar_select %p552, %s24, 0
      %s554 = sadd.s32 %s553, %s551
      %s555 = smul.addr %s549, 2
      %s556 = sadd.s32 %s554, %s555
      %s557 = smul.addr %s556, 4
      %s558 = scalar_lea.vmem %s5, %s557
      // Predicated region
      $region49: #{resnet_stage.19} parent=39 // pred_check
        %p559 = pneg %p208
      $region50: #{resnet_stage.19} parent=39 // pred_check_branch
        %561 = sbr.rel (%p559) target = $region52
      $region51: #{resnet_stage.19} parent=39 // pred_region
        %s562 = smul.u32 2, %s23
      $region52: #{resnet_stage.19} parent=39 // pred_fallthru
        _
    $region40: #{resnet_stage.19} parent=5 // pred_fallthru
      _
    %p563 = scmp.le.s32.totalorder 2, %s11
    // Predicated region
    $region53: #{resnet_stage.19} parent=5 // pred_check
      %p564 = pneg %p563
    $region54: #{resnet_stage.19} parent=5 // pred_check_branch
      %566 = sbr.rel (%p564) target = $region56
    $region55: #{resnet_stage.19} parent=5 // pred_region
      %s567 = ssub.s32 %s11, 2
      // Predicated region
      $region57: #{resnet_stage.19} parent=55 // pred_check
        %p568 = pneg %p214
      $region58: #{resnet_stage.19} parent=55 // pred_check_branch
        %570 = sbr.rel (%p568) target = $region60
      $region59: #{resnet_stage.19} parent=55 // pred_region
        %s571 = smul.u32 2, %s27
        %p572 = scmp.lt.s32.totalorder %s26, 1
        %s573 = scalar_select %p572, %s26, 1
        %p574 = scmp.lt.s32.totalorder %s571, 1
        %s575 = scalar_select %p574, %s571, 1
        %p576 = scmp.lt.s32.totalorder %s28, 0
        %s577 = scalar_select %p576, %s28, 0
        %s578 = sadd.s32 %s577, %s575
        %s579 = smul.addr %s573, 2
        %s580 = sadd.s32 %s578, %s579
        %s581 = smul.addr %s580, 4
        %s582 = scalar_lea.vmem %s5, %s581
      $region60: #{resnet_stage.19} parent=55 // pred_fallthru
        _
    $region56: #{resnet_stage.19} parent=5 // pred_fallthru
      _
  $region6: #{resnet_stage.19} parent=0 // loop_footer
    %s15 = sadd.s32 1, %s11
  $region7: #{resnet_stage.19} parent=0 // loop_footer_branch
    %10 = sbr.rel target = $region3
  $region8: #{resnet_stage.19} parent=0 // loop_exit
    _

// kernel: resnet_stage.20
$region0: #{resnet_stage.20}
  #allocation0 [shape = 'u32[]', space=smem, size = 0x4, offset = 0x4, fixed_abs, tag = 'smem constant byte address 0x4 - core index']
  #allocation1 [shape = 'u32[144,128]{1,0:T(1,128)}', space=vmem, size = 0x12000, scoped, tag = 'internal scratch']
  #allocation2 [shape = 'f32[1,128]{1,0:T(1,128)}', space=vmem, size = 0x200, scoped, tag = 'scratch operand']
  #allocation3 [shape = 'f32[1,128]{1,0:T(1,128)}', space=vmem, size = 0x200, scoped, tag = 'scratch operand']
  %s0 = inlined_call_operand.vmem [shape: bf16[2,16,128], index: 0, kind: input, shape index: {}]
  %s1 = inlined_call_operand.vmem [shape: f32[128,32], index: 1, kind: input, shape index: {}]
  %s2 = inlined_call_operand.vmem [shape: f32[32,128], index: 2, kind: input, shape index: {}]
  %s3 = inlined_call_operand.vmem [shape: f32[1,128], index: 3, kind: input, shape index: {}]
  %s4 = inlined_call_operand.vmem [shape: f32[1,128], index: 4, kind: input, shape index: {}]
  %s5 = inlined_call_operand.vmem [shape: f32[2,1,128], index: 5, kind: output, shape index: {0}]
  %s6 = inlined_call_operand.vmem [shape: f32[2,1,128], index: 6, kind: output, shape index: {1}]
  %7 = xla_tuple %s5, %s6
  %s8 = sld [smem:[#allocation0]]
  $region69: #{resnet_stage.20} parent=0
    _
  %s10 = ssub.s32 1, %s8
  %s11 = scalar_select 0, %s10, %s8
  loop: start=0, step=1, limit=4
  $region2: #{resnet_stage.20} parent=0 // loop_pre_header
    _
  $region3: #{resnet_stage.20} parent=0 // loop_header
    %s13 = sphi 0, %s17
    %p14 = scmp.ge.s32.totalorder %s13, 4
    %s20 = sphi 0, %s32
    %s21 = sphi 0, %s28
    %s22 = sphi 0, %s20
    %s23 = sphi 0, %s21
    %s24 = sphi 0, %s22
    %s25 = sphi 0, %s23
    %s37 = sphi 0, %s39
    %s40 = sphi 0, %s37
    %s41 = sphi 0, %s40
    %s57 = sphi 0, %s41
    %s61 = sphi 0, %s61
    %s63 = sphi 0, %s61
    %s64 = sphi 0, %s63
    %s78 = sphi 0, %s64
    %s82 = sphi 0, %s82
    %s84 = sphi 0, %s82
    %s85 = sphi 0, %s84
    %s99 = sphi 0, %s85
    %s103 = sphi 0, %s103
    %s105 = sphi 0, %s103
    %s106 = sphi 0, %s105
    %s120 = sphi 0, %s106
    %s124 = sphi 0, %s124
    %s126 = sphi 0, %s124
    %s127 = sphi 0, %s126
    %s141 = sphi 0, %s127
    %s147 = sphi 0, %s149
    %s150 = sphi 0, %s147
    %s151 = sphi 0, %s150
    %s167 = sphi 0, %s151
    %s173 = sphi 0, %s175
    %s176 = sphi 0, %s173
    %s177 = sphi 0, %s176
    %s193 = sphi 0, %s177
  $region4: #{resnet_stage.20} parent=0 // loop_header_branch
    %16 = sbr.rel (%p14) target = $region8
  $region5: #{resnet_stage.20} parent=0 // loop_body
    %s18 = ssub.s32 %s13, 1
    %s19 = ssub.s32 %s13, 2
    %s26 = sadd.s32 1, %s21
    %p27 = scmp.ge.s32.totalorder %s26, 1
    %s28 = scalar_select %p27, 0, %s26
    %s29 = sadd.s32 1, %s20
    %s30 = scalar_select %p27, %s29, %s20
    %p31 = scmp.ge.s32.totalorder %s30, 2
    %s32 = scalar_select %p31, 0, %s30
    %s33 = ssub.s32 %s20, %s32
    %s34 = ssub.s32 %s21, %s28
    %s35 = sor.u32 %s33, %s34
    %p36 = scmp.eq.s32.totalorder %s35, 0
    %s38 = sadd.s32 %s37, 1
    %s39 = scalar_select %p36, %s37, %s38
    %p42 = pneg %p36
    %p43 = scmp.eq.s32.totalorder %s13, 1
    %p44 = por %p42, %p43
    %p45 = scmp.ne.s32.totalorder %s37, %s40
    %p46 = scmp.eq.s32.totalorder %s13, 0
    %p47 = por %p45, %p46
    %p48 = scmp.ne.s32.totalorder %s37, %s40
    %p49 = scmp.eq.s32.totalorder %s18, 1
    %p50 = por %p48, %p49
    %p51 = scmp.ne.s32.totalorder %s40, %s41
    %p52 = scmp.eq.s32.totalorder %s18, 0
    %p53 = por %p51, %p52
    %p54 = scmp.ne.s32.totalorder %s40, %s41
    %p55 = scmp.eq.s32.totalorder %s19, 1
    %p56 = por %p54, %p55
    %p58 = scmp.ne.s32.totalorder %s41, %s57
    %p59 = scmp.eq.s32.totalorder %s19, 0
    %p60 = por %p58, %p59
    %s62 = sadd.s32 %s61, 1
    %p65 = scmp.eq.s32.totalorder %s13, 1
    %p66 = scmp.ne.s32.totalorder %s61, %s63
    %p67 = scmp.eq.s32.totalorder %s13, 0
    %p68 = por %p66, %p67
    %p69 = scmp.ne.s32.totalorder %s61, %s63
    %p70 = scmp.eq.s32.totalorder %s18, 1
    %p71 = por %p69, %p70
    %p72 = scmp.ne.s32.totalorder %s63, %s64
    %p73 = scmp.eq.s32.totalorder %s18, 0
    %p74 = por %p72, %p73
    %p75 = scmp.ne.s32.totalorder %s63, %s64
    %p76 = scmp.eq.s32.totalorder %s19, 1
    %p77 = por %p75, %p76
    %p79 = scmp.ne.s32.totalorder %s64, %s78
    %p80 = scmp.eq.s32.totalorder %s19, 0
    %p81 = por %p79, %p80
    %s83 = sadd.s32 %s82, 1
    %p86 = scmp.eq.s32.totalorder %s13, 1
    %p87 = scmp.ne.s32.totalorder %s82, %s84
    %p88 = scmp.eq.s32.totalorder %s13, 0
    %p89 = por %p87, %p88
    %p90 = scmp.ne.s32.totalorder %s82, %s84
    %p91 = scmp.eq.s32.totalorder %s18, 1
    %p92 = por %p90, %p91
    %p93 = scmp.ne.s32.totalorder %s84, %s85
    %p94 = scmp.eq.s32.totalorder %s18, 0
    %p95 = por %p93, %p94
    %p96 = scmp.ne.s32.totalorder %s84, %s85
    %p97 = scmp.eq.s32.totalorder %s19, 1
    %p98 = por %p96, %p97
    %p100 = scmp.ne.s32.totalorder %s85, %s99
    %p101 = scmp.eq.s32.totalorder %s19, 0
    %p102 = por %p100, %p101
    %s104 = sadd.s32 %s103, 1
    %p107 = scmp.eq.s32.totalorder %s13, 1
    %p108 = scmp.ne.s32.totalorder %s103, %s105
    %p109 = scmp.eq.s32.totalorder %s13, 0
    %p110 = por %p108, %p109
    %p111 = scmp.ne.s32.totalorder %s103, %s105
    %p112 = scmp.eq.s32.totalorder %s18, 1
    %p113 = por %p111, %p112
    %p114 = scmp.ne.s32.totalorder %s105, %s106
    %p115 = scmp.eq.s32.totalorder %s18, 0
    %p116 = por %p114, %p115
    %p117 = scmp.ne.s32.totalorder %s105, %s106
    %p118 = scmp.eq.s32.totalorder %s19, 1
    %p119 = por %p117, %p118
    %p121 = scmp.ne.s32.totalorder %s106, %s120
    %p122 = scmp.eq.s32.totalorder %s19, 0
    %p123 = por %p121, %p122
    %s125 = sadd.s32 %s124, 1
    %p128 = scmp.eq.s32.totalorder %s13, 1
    %p129 = scmp.ne.s32.totalorder %s124, %s126
    %p130 = scmp.eq.s32.totalorder %s13, 0
    %p131 = por %p129, %p130
    %p132 = scmp.ne.s32.totalorder %s124, %s126
    %p133 = scmp.eq.s32.totalorder %s18, 1
    %p134 = por %p132, %p133
    %p135 = scmp.ne.s32.totalorder %s126, %s127
    %p136 = scmp.eq.s32.totalorder %s18, 0
    %p137 = por %p135, %p136
    %p138 = scmp.ne.s32.totalorder %s126, %s127
    %p139 = scmp.eq.s32.totalorder %s19, 1
    %p140 = por %p138, %p139
    %p142 = scmp.ne.s32.totalorder %s127, %s141
    %p143 = scmp.eq.s32.totalorder %s19, 0
    %p144 = por %p142, %p143
    %s145 = ssub.s32 %s20, %s32
    %p146 = scmp.eq.s32.totalorder %s145, 0
    %s148 = sadd.s32 %s147, 1
    %s149 = scalar_select %p146, %s147, %s148
    %p152 = pneg %p146
    %p153 = scmp.eq.s32.totalorder %s13, 1
    %p154 = por %p152, %p153
    %p155 = scmp.ne.s32.totalorder %s147, %s150
    %p156 = scmp.eq.s32.totalorder %s13, 0
    %p157 = por %p155, %p156
    %p158 = scmp.ne.s32.totalorder %s147, %s150
    %p159 = scmp.eq.s32.totalorder %s18, 1
    %p160 = por %p158, %p159
    %p161 = scmp.ne.s32.totalorder %s150, %s151
    %p162 = scmp.eq.s32.totalorder %s18, 0
    %p163 = por %p161, %p162
    %p164 = scmp.ne.s32.totalorder %s150, %s151
    %p165 = scmp.eq.s32.totalorder %s19, 1
    %p166 = por %p164, %p165
    %p168 = scmp.ne.s32.totalorder %s151, %s167
    %p169 = scmp.eq.s32.totalorder %s19, 0
    %p170 = por %p168, %p169
    %s171 = ssub.s32 %s20, %s32
    %p172 = scmp.eq.s32.totalorder %s171, 0
    %s174 = sadd.s32 %s173, 1
    %s175 = scalar_select %p172, %s173, %s174
    %p178 = pneg %p172
    %p179 = scmp.eq.s32.totalorder %s13, 1
    %p180 = por %p178, %p179
    %p181 = scmp.ne.s32.totalorder %s173, %s176
    %p182 = scmp.eq.s32.totalorder %s13, 0
    %p183 = por %p181, %p182
    %p184 = scmp.ne.s32.totalorder %s173, %s176
    %p185 = scmp.eq.s32.totalorder %s18, 1
    %p186 = por %p184, %p185
    %p187 = scmp.ne.s32.totalorder %s176, %s177
    %p188 = scmp.eq.s32.totalorder %s18, 0
    %p189 = por %p187, %p188
    %p190 = scmp.ne.s32.totalorder %s176, %s177
    %p191 = scmp.eq.s32.totalorder %s19, 1
    %p192 = por %p190, %p191
    %p194 = scmp.ne.s32.totalorder %s177, %s193
    %p195 = scmp.eq.s32.totalorder %s19, 0
    %p196 = por %p194, %p195
    %p197 = scmp.le.s32.totalorder 1, %s13
    %p198 = scmp.lt.s32.totalorder %s13, 3
    %p199 = pnand %p197, %p198
    %p200 = pneg %p199
    // Predicated region
    $region9: #{resnet_stage.20} parent=5 // pred_check
      _
    $region10: #{resnet_stage.20} parent=5 // pred_check_branch
      %202 = sbr.rel (%p199) target = $region12
    $region11: #{resnet_stage.20} parent=5 // pred_region
      %s203 = ssub.s32 %s13, 1
      // Predicated region
      $region13: #{resnet_stage.20} parent=11 // pred_check
        %p204 = pneg %p74
      $region14: #{resnet_stage.20} parent=11 // pred_check_branch
        %206 = sbr.rel (%p204) target = $region16
      $region15: #{resnet_stage.20} parent=11 // pred_region
        _
      $region16: #{resnet_stage.20} parent=11 // pred_fallthru
        _
      // Predicated region
      $region17: #{resnet_stage.20} parent=11 // pred_check
        %p207 = pneg %p95
      $region18: #{resnet_stage.20} parent=11 // pred_check_branch
        %209 = sbr.rel (%p207) target = $region20
      $region19: #{resnet_stage.20} parent=11 // pred_region
        _
      $region20: #{resnet_stage.20} parent=11 // pred_fallthru
        _
      // Predicated region
      $region21: #{resnet_stage.20} parent=11 // pred_check
        %p210 = pneg %p116
      $region22: #{resnet_stage.20} parent=11 // pred_check_branch
        %212 = sbr.rel (%p210) target = $region24
      $region23: #{resnet_stage.20} parent=11 // pred_region
        _
      $region24: #{resnet_stage.20} parent=11 // pred_fallthru
        _
      // Predicated region
      $region25: #{resnet_stage.20} parent=11 // pred_check
        %p213 = pneg %p137
      $region26: #{resnet_stage.20} parent=11 // pred_check_branch
        %215 = sbr.rel (%p213) target = $region28
      $region27: #{resnet_stage.20} parent=11 // pred_region
        _
      $region28: #{resnet_stage.20} parent=11 // pred_fallthru
        _
    $region12: #{resnet_stage.20} parent=5 // pred_fallthru
      _
    %p216 = scmp.lt.s32.totalorder %s13, 2
    // Predicated region
    $region29: #{resnet_stage.20} parent=5 // pred_check
      %p217 = pneg %p216
    $region30: #{resnet_stage.20} parent=5 // pred_check_branch
      %219 = sbr.rel (%p217) target = $region32
    $region31: #{resnet_stage.20} parent=5 // pred_region
      // Predicated region
      $region33: #{resnet_stage.20} parent=31 // pred_check
        %p220 = pneg %p47
      $region34: #{resnet_stage.20} parent=31 // pred_check_branch
        %222 = sbr.rel (%p220) target = $region36
      $region35: #{resnet_stage.20} parent=31 // pred_region
        %s223 = smul.u32 2, %s21
        %p224 = scmp.lt.s32.totalorder %s20, 1
        %s225 = scalar_select %p224, %s20, 1
        %p226 = scmp.lt.s32.totalorder %s223, 1
        %s227 = scalar_select %p226, %s223, 1
        %s228 = smul.addr %s225, 2
        %s229 = sadd.s32 %s227, %s228
        %s230 = smul.addr %s229, 4
        %s231 = scalar_lea.vmem %s0, %s230
        %s232 = smul.u32 2, %s21
      $region36: #{resnet_stage.20} parent=31 // pred_fallthru
        _
    $region32: #{resnet_stage.20} parent=5 // pred_fallthru
      _
    %p233 = scmp.le.s32.totalorder 1, %s13
    %p234 = scmp.lt.s32.totalorder %s13, 3
    %p235 = pnand %p233, %p234
    %p236 = pneg %p235
    // Predicated region
    $region37: #{resnet_stage.20} parent=5 // pred_check
      _
    $region38: #{resnet_stage.20} parent=5 // pred_check_branch
      %238 = sbr.rel (%p235) target = $region40
    $region39: #{resnet_stage.20} parent=5 // pred_region
      %s239 = ssub.s32 %s13, 1
      %s240 = smul.u32 2, %s23
      %p241 = scmp.lt.s32.totalorder %s22, 1
      %s242 = scalar_select %p241, %s22, 1
      %p243 = scmp.lt.s32.totalorder %s240, 1
      %s244 = scalar_select %p243, %s240, 1
      %s245 = smul.addr %s242, 2
      %s246 = sadd.s32 %s244, %s245
      %s247 = smul.addr %s246, 4
      %s248 = scalar_lea.vmem %s0, %s247
      %p249 = pneg %p53
      %p250 = pneg %p50
      %p251 = pneg %p74
      %p252 = pneg %p71
      %p253 = pneg %p95
      %p254 = pneg %p92
      %p255 = pneg %p116
      %p256 = pneg %p113
      %p257 = pneg %p137
      %p258 = pneg %p134
      %p259 = pneg %p163
      %p260 = pneg %p160
      %p261 = scmp.lt.s32.totalorder %s22, 1
      %s262 = scalar_select %p261, %s22, 1
      %s263 = scalar_lea.vmem %s5, %s262
      %p264 = pneg %p189
      %p265 = pneg %p186
      %p266 = scmp.lt.s32.totalorder %s22, 1
      %s267 = scalar_select %p266, %s22, 1
      %s268 = scalar_lea.vmem %s6, %s267
      %s269 = smul.u32 2, %s23
      %p270 = scmp.lt.s32.totalorder %s22, 1
      %s271 = scalar_select %p270, %s22, 1
      %p272 = scmp.lt.s32.totalorder %s269, 1
      %s273 = scalar_select %p272, %s269, 1
      %s274 = smul.addr %s271, 2
      %s275 = sadd.s32 %s273, %s274
      %s276 = smul.addr %s275, 4
      %s277 = scalar_lea.vmem %s0, %s276
      %s278 = smul.u32 2, %s23
      %p279 = scmp.lt.s32.totalorder %s22, 1
      %s280 = scalar_select %p279, %s22, 1
      %s281 = scalar_lea.vmem %s5, %s280
      %p282 = scmp.lt.s32.totalorder %s22, 1
      %s283 = scalar_select %p282, %s22, 1
      %s284 = scalar_lea.vmem %s6, %s283
      %p285 = scmp.eq.s32.totalorder %s23, 0
      // Predicated region
      $region41: #{resnet_stage.20} parent=39 // pred_check
        %p286 = pneg %p285
      $region42: #{resnet_stage.20} parent=39 // pred_check_branch
        %288 = sbr.rel (%p286) target = $region44
      $region43: #{resnet_stage.20} parent=39 // pred_region
        %289 = vst [vmem:[#allocation2] sm:$0x1] 0.0
        %290 = vst [vmem:[#allocation3] sm:$0x1] 0.0
      $region44: #{resnet_stage.20} parent=39 // pred_fallthru
        _
      %v291 = vld [vmem:[%s277] sm:$0xf]
      %v292 = vld [vmem:[%s277 + $0x4] sm:$0xf]
      %v293 = vunpack.c.l.bf16 %v291
      %v294 = vunpack.c.l.bf16 %v292
      %v295 = vld [vmem:[#allocation2] sm:$0x1]
      %v296 = vadd.f32 %v293, %v294
      %v297 = vrot.slane %v296, 4
      %v298 = vadd.f32 %v296, %v297
      %v299 = vrot.slane %v298, 2
      %v300 = vadd.f32 %v298, %v299
      %v301 = vrot.slane %v300, 1
      %v302 = vadd.f32 %v300, %v301
      %v303 = vadd.f32 %v295, %v302
      %304 = vst [vmem:[#allocation2] sm:$0x1] %v303
      %v305 = vld [vmem:[#allocation3] sm:$0x1]
      %v306 = vmul.f32 %v293, %v293
      %v307 = vmul.f32 %v294, %v294
      %v308 = vadd.f32 %v306, %v307
      %v309 = vrot.slane %v308, 4
      %v310 = vadd.f32 %v308, %v309
      %v311 = vrot.slane %v310, 2
      %v312 = vadd.f32 %v310, %v311
      %v313 = vrot.slane %v312, 1
      %v314 = vadd.f32 %v312, %v313
      %v315 = vadd.f32 %v305, %v314
      %316 = vst [vmem:[#allocation3] sm:$0x1] %v315
      // Predicated region
      $region45: #{resnet_stage.20} parent=39 // pred_check
        %p317 = pneg %p285
      $region46: #{resnet_stage.20} parent=39 // pred_check_branch
        %319 = sbr.rel (%p317) target = $region48
      $region47: #{resnet_stage.20} parent=39 // pred_region
        %v320 = vld [vmem:[#allocation2] sm:$0x1]
        %v321 = vld [vmem:[%s1] sm:$0xff]
        %v322 = vld [vmem:[%s1 + $0x8] sm:$0xff]
        %v323 = vld [vmem:[%s1 + $0x10] sm:$0xff]
        %v324 = vld [vmem:[%s1 + $0x18] sm:$0xff]
        %v325 = vld [vmem:[%s1 + $0x20] sm:$0xff]
        %v326 = vld [vmem:[%s1 + $0x28] sm:$0xff]
        %v327 = vld [vmem:[%s1 + $0x30] sm:$0xff]
        %v328 = vld [vmem:[%s1 + $0x38] sm:$0xff]
        %v329 = vld [vmem:[%s1 + $0x40] sm:$0xff]
        %v330 = vld [vmem:[%s1 + $0x48] sm:$0xff]
        %v331 = vld [vmem:[%s1 + $0x50] sm:$0xff]
        %v332 = vld [vmem:[%s1 + $0x58] sm:$0xff]
        %v333 = vld [vmem:[%s1 + $0x60] sm:$0xff]
        %v334 = vld [vmem:[%s1 + $0x68] sm:$0xff]
        %v335 = vld [vmem:[%s1 + $0x70] sm:$0xff]
        %v336 = vld [vmem:[%s1 + $0x78] sm:$0xff]
        %337 = vmatprep.subr.mxu0 0.0
        %338 = vmatpush1.msra.mxu0 %v336
        %339 = vmatprep.subr.mxu0 0.0
        %340 = vmatpush1.msra.mxu0 %v335
        %341 = vmatprep.subr.mxu0 0.0
        %342 = vmatpush1.msra.mxu0 %v334
        %343 = vmatprep.subr.mxu0 0.0
        %344 = vmatpush1.msra.mxu0 %v333
        %345 = vmatprep.subr.mxu0 0.0
        %346 = vmatpush1.msra.mxu0 %v332
        %347 = vmatprep.subr.mxu0 0.0
        %348 = vmatpush1.msra.mxu0 %v331
        %349 = vmatprep.subr.mxu0 0.0
        %350 = vmatpush1.msra.mxu0 %v330
        %351 = vmatprep.subr.mxu0 0.0
        %352 = vmatpush1.msra.mxu0 %v329
        %353 = vmatprep.subr.mxu0 0.0
        %354 = vmatpush1.msra.mxu0 %v328
        %355 = vmatprep.subr.mxu0 0.0
        %356 = vmatpush1.msra.mxu0 %v327
        %357 = vmatprep.subr.mxu0 0.0
        %358 = vmatpush1.msra.mxu0 %v326
        %359 = vmatprep.subr.mxu0 0.0
        %360 = vmatpush1.msra.mxu0 %v325
        %361 = vmatprep.subr.mxu0 0.0
        %362 = vmatpush1.msra.mxu0 %v324
        %363 = vmatprep.subr.mxu0 0.0
        %364 = vmatpush1.msra.mxu0 %v323
        %365 = vmatprep.subr.mxu0 0.0
        %366 = vmatpush1.msra.mxu0 %v322
        %367 = vmatprep.subr.mxu0 0.0
        %368 = vmatpush1.msra.mxu0 %v321
        %369 = vmatprep.subr.mxu0 0.0
        %370 = vmatpush2.msra.mxu0 0.0
        %371 = vmatprep.subr.mxu0 0.0
        %372 = vmatpush2.msra.mxu0 0.0
        %373 = vmatprep.subr.mxu0 0.0
        %374 = vmatpush2.msra.mxu0 0.0
        %375 = vmatprep.subr.mxu0 0.0
        %376 = vmatpush2.msra.mxu0 0.0
        %377 = vmatprep.subr.mxu0 0.0
        %378 = vmatpush2.msra.mxu0 0.0
        %379 = vmatprep.subr.mxu0 0.0
        %380 = vmatpush2.msra.mxu0 0.0
        %381 = vmatprep.subr.mxu0 0.0
        %382 = vmatpush2.msra.mxu0 0.0
        %383 = vmatprep.subr.mxu0 0.0
        %384 = vmatpush2.msra.mxu0 0.0
        %385 = vmatprep.subr.mxu0 0.0
        %386 = vmatpush2.msra.mxu0 0.0
        %387 = vmatprep.subr.mxu0 0.0
        %388 = vmatpush2.msra.mxu0 0.0
        %389 = vmatprep.subr.mxu0 0.0
        %390 = vmatpush2.msra.mxu0 0.0
        %391 = vmatprep.subr.mxu0 0.0
        %392 = vmatpush2.msra.mxu0 0.0
        %393 = vmatprep.subr.mxu0 0.0
        %394 = vmatpush2.msra.mxu0 0.0
        %395 = vmatprep.subr.mxu0 0.0
        %396 = vmatpush2.msra.mxu0 0.0
        %397 = vmatprep.subr.mxu0 0.0
        %398 = vmatpush2.msra.mxu0 0.0
        %399 = vmatprep.subr.mxu0 0.0
        %400 = vmatpush2.msra.mxu0 0.0
        %401 = vmatprep.mubr.f32.mxu0 0.0
        %402 = vmatmul.mubr.f32.gmra.mxu0 %v320
        %v403 = vpop.f32.mrf.mxu0
        %v404 = vadd.f32 0.0, %v403
        %v405 = vpop.f32.mrf.mxu0
        %406 = vdwg.mxu0
        %v407 = vld [vmem:[#allocation3] sm:$0x1]
        %408 = vmatprep.subr.mxu0 0.0
        %409 = vmatpush1.msra.mxu0 %v336
        %410 = vmatprep.subr.mxu0 0.0
        %411 = vmatpush1.msra.mxu0 %v335
        %412 = vmatprep.subr.mxu0 0.0
        %413 = vmatpush1.msra.mxu0 %v334
        %414 = vmatprep.subr.mxu0 0.0
        %415 = vmatpush1.msra.mxu0 %v333
        %416 = vmatprep.subr.mxu0 0.0
        %417 = vmatpush1.msra.mxu0 %v332
        %418 = vmatprep.subr.mxu0 0.0
        %419 = vmatpush1.msra.mxu0 %v331
        %420 = vmatprep.subr.mxu0 0.0
        %421 = vmatpush1.msra.mxu0 %v330
        %422 = vmatprep.subr.mxu0 0.0
        %423 = vmatpush1.msra.mxu0 %v329
        %424 = vmatprep.subr.mxu0 0.0
        %425 = vmatpush1.msra.mxu0 %v328
        %426 = vmatprep.subr.mxu0 0.0
        %427 = vmatpush1.msra.mxu0 %v327
        %428 = vmatprep.subr.mxu0 0.0
        %429 = vmatpush1.msra.mxu0 %v326
        %430 = vmatprep.subr.mxu0 0.0
        %431 = vmatpush1.msra.mxu0 %v325
        %432 = vmatprep.subr.mxu0 0.0
        %433 = vmatpush1.msra.mxu0 %v324
        %434 = vmatprep.subr.mxu0 0.0
        %435 = vmatpush1.msra.mxu0 %v323
        %436 = vmatprep.subr.mxu0 0.0
        %437 = vmatpush1.msra.mxu0 %v322
        %438 = vmatprep.subr.mxu0 0.0
        %439 = vmatpush1.msra.mxu0 %v321
        %440 = vmatprep.subr.mxu0 0.0
        %441 = vmatpush2.msra.mxu0 0.0
        %442 = vmatprep.subr.mxu0 0.0
        %443 = vmatpush2.msra.mxu0 0.0
        %444 = vmatprep.subr.mxu0 0.0
        %445 = vmatpush2.msra.mxu0 0.0
        %446 = vmatprep.subr.mxu0 0.0
        %447 = vmatpush2.msra.mxu0 0.0
        %448 = vmatprep.subr.mxu0 0.0
        %449 = vmatpush2.msra.mxu0 0.0
        %450 = vmatprep.subr.mxu0 0.0
        %451 = vmatpush2.msra.mxu0 0.0
        %452 = vmatprep.subr.mxu0 0.0
        %453 = vmatpush2.msra.mxu0 0.0
        %454 = vmatprep.subr.mxu0 0.0
        %455 = vmatpush2.msra.mxu0 0.0
        %456 = vmatprep.subr.mxu0 0.0
        %457 = vmatpush2.msra.mxu0 0.0
        %458 = vmatprep.subr.mxu0 0.0
        %459 = vmatpush2.msra.mxu0 0.0
        %460 = vmatprep.subr.mxu0 0.0
        %461 = vmatpush2.msra.mxu0 0.0
        %462 = vmatprep.subr.mxu0 0.0
        %463 = vmatpush2.msra.mxu0 0.0
        %464 = vmatprep.subr.mxu0 0.0
        %465 = vmatpush2.msra.mxu0 0.0
        %466 = vmatprep.subr.mxu0 0.0
        %467 = vmatpush2.msra.mxu0 0.0
        %468 = vmatprep.subr.mxu0 0.0
        %469 = vmatpush2.msra.mxu0 0.0
        %470 = vmatprep.subr.mxu0 0.0
        %471 = vmatpush2.msra.mxu0 0.0
        %472 = vmatprep.mubr.f32.mxu0 0.0
        %473 = vmatmul.mubr.f32.gmra.mxu0 %v407
        %v474 = vpop.f32.mrf.mxu0
        %v475 = vadd.f32 0.0, %v474
        %v476 = vpop.f32.mrf.mxu0
        %477 = vdwg.mxu0
        %v478 = vrcp.pop 64.0
        %v479 = vmul.f32 %v404, %v478
        %v480 = vmul.f32 %v475, %v478
        %v481 = vmul.f32 %v479, %v479
        %v482 = vsub.f32 %v480, %v481
        %v483 = vmax.f32 %v482, 0.0
        %v484 = vadd.f32 %v483, 1e-05
        %v485 = vrsqrt.pop %v484
        %v486 = vld [vmem:[%s2] sm:$0xff]
        %v487 = vld [vmem:[%s2 + $0x8] sm:$0xff]
        %v488 = vld [vmem:[%s2 + $0x10] sm:$0xff]
        %v489 = vld [vmem:[%s2 + $0x18] sm:$0xff]
        %vm490 = vcmask 261120
        %v492 = vsel %vm490, %v479, 0
        %494 = vmatprep.subr.mxu0 0.0
        %495 = vmatpush1.msra.mxu0 0.0
        %496 = vmatprep.subr.mxu0 0.0
        %497 = vmatpush1.msra.mxu0 0.0
        %498 = vmatprep.subr.mxu0 0.0
        %499 = vmatpush1.msra.mxu0 0.0
        %500 = vmatprep.subr.mxu0 0.0
        %501 = vmatpush1.msra.mxu0 0.0
        %502 = vmatprep.subr.mxu0 0.0
        %503 = vmatpush1.msra.mxu0 0.0
        %504 = vmatprep.subr.mxu0 0.0
        %505 = vmatpush1.msra.mxu0 0.0
        %506 = vmatprep.subr.mxu0 0.0
        %507 = vmatpush1.msra.mxu0 0.0
        %508 = vmatprep.subr.mxu0 0.0
        %509 = vmatpush1.msra.mxu0 0.0
        %510 = vmatprep.subr.mxu0 0.0
        %511 = vmatpush1.msra.mxu0 0.0
        %512 = vmatprep.subr.mxu0 0.0
        %513 = vmatpush1.msra.mxu0 0.0
        %514 = vmatprep.subr.mxu0 0.0
        %515 = vmatpush1.msra.mxu0 0.0
        %516 = vmatprep.subr.mxu0 0.0
        %517 = vmatpush1.msra.mxu0 0.0
        %518 = vmatprep.subr.mxu0 0.0
        %519 = vmatpush1.msra.mxu0 %v489
        %520 = vmatprep.subr.mxu0 0.0
        %521 = vmatpush1.msra.mxu0 %v488
        %522 = vmatprep.subr.mxu0 0.0
        %523 = vmatpush1.msra.mxu0 %v487
        %524 = vmatprep.subr.mxu0 0.0
        %525 = vmatpush1.msra.mxu0 %v486
        %526 = vmatprep.subr.mxu0 0.0
        %527 = vmatpush2.msra.mxu0 0.0
        %528 = vmatprep.subr.mxu0 0.0
        %529 = vmatpush2.msra.mxu0 0.0
        %530 = vmatprep.subr.mxu0 0.0
        %531 = vmatpush2.msra.mxu0 0.0
        %532 = vmatprep.subr.mxu0 0.0
        %533 = vmatpush2.msra.mxu0 0.0
        %534 = vmatprep.subr.mxu0 0.0
        %535 = vmatpush2.msra.mxu0 0.0
        %536 = vmatprep.subr.mxu0 0.0
        %537 = vmatpush2.msra.mxu0 0.0
        %538 = vmatprep.subr.mxu0 0.0
        %539 = vmatpush2.msra.mxu0 0.0
        %540 = vmatprep.subr.mxu0 0.0
        %541 = vmatpush2.msra.mxu0 0.0
        %542 = vmatprep.subr.mxu0 0.0
        %543 = vmatpush2.msra.mxu0 0.0
        %544 = vmatprep.subr.mxu0 0.0
        %545 = vmatpush2.msra.mxu0 0.0
        %546 = vmatprep.subr.mxu0 0.0
        %547 = vmatpush2.msra.mxu0 0.0
        %548 = vmatprep.subr.mxu0 0.0
        %549 = vmatpush2.msra.mxu0 0.0
        %550 = vmatprep.subr.mxu0 0.0
        %551 = vmatpush2.msra.mxu0 0.0
        %552 = vmatprep.subr.mxu0 0.0
        %553 = vmatpush2.msra.mxu0 0.0
        %554 = vmatprep.subr.mxu0 0.0
        %555 = vmatpush2.msra.mxu0 0.0
        %556 = vmatprep.subr.mxu0 0.0
        %557 = vmatpush2.msra.mxu0 0.0
        %558 = vmatprep.mubr.f32.mxu0 0.0
        %559 = vmatmul.mubr.f32.gmra.mxu0 %v492
        %v560 = vpop.f32.mrf.mxu0
        %v561 = vadd.f32 0.0, %v560
        %v562 = vpop.f32.mrf.mxu0
        %563 = vdwg.mxu0
        %v565 = vsel %vm490, %v485, 0
        %567 = vmatprep.subr.mxu0 0.0
        %568 = vmatpush1.msra.mxu0 0.0
        %569 = vmatprep.subr.mxu0 0.0
        %570 = vmatpush1.msra.mxu0 0.0
        %571 = vmatprep.subr.mxu0 0.0
        %572 = vmatpush1.msra.mxu0 0.0
        %573 = vmatprep.subr.mxu0 0.0
        %574 = vmatpush1.msra.mxu0 0.0
        %575 = vmatprep.subr.mxu0 0.0
        %576 = vmatpush1.msra.mxu0 0.0
        %577 = vmatprep.subr.mxu0 0.0
        %578 = vmatpush1.msra.mxu0 0.0
        %579 = vmatprep.subr.mxu0 0.0
        %580 = vmatpush1.msra.mxu0 0.0
        %581 = vmatprep.subr.mxu0 0.0
        %582 = vmatpush1.msra.mxu0 0.0
        %583 = vmatprep.subr.mxu0 0.0
        %584 = vmatpush1.msra.mxu0 0.0
        %585 = vmatprep.subr.mxu0 0.0
        %586 = vmatpush1.msra.mxu0 0.0
        %587 = vmatprep.subr.mxu0 0.0
        %588 = vmatpush1.msra.mxu0 0.0
        %589 = vmatprep.subr.mxu0 0.0
        %590 = vmatpush1.msra.mxu0 0.0
        %591 = vmatprep.subr.mxu0 0.0
        %592 = vmatpush1.msra.mxu0 %v489
        %593 = vmatprep.subr.mxu0 0.0
        %594 = vmatpush1.msra.mxu0 %v488
        %595 = vmatprep.subr.mxu0 0.0
        %596 = vmatpush1.msra.mxu0 %v487
        %597 = vmatprep.subr.mxu0 0.0
        %598 = vmatpush1.msra.mxu0 %v486
        %599 = vmatprep.subr.mxu0 0.0
        %600 = vmatpush2.msra.mxu0 0.0
        %601 = vmatprep.subr.mxu0 0.0
        %602 = vmatpush2.msra.mxu0 0.0
        %603 = vmatprep.subr.mxu0 0.0
        %604 = vmatpush2.msra.mxu0 0.0
        %605 = vmatprep.subr.mxu0 0.0
        %606 = vmatpush2.msra.mxu0 0.0
        %607 = vmatprep.subr.mxu0 0.0
        %608 = vmatpush2.msra.mxu0 0.0
        %609 = vmatprep.subr.mxu0 0.0
        %610 = vmatpush2.msra.mxu0 0.0
        %611 = vmatprep.subr.mxu0 0.0
        %612 = vmatpush2.msra.mxu0 0.0
        %613 = vmatprep.subr.mxu0 0.0
        %614 = vmatpush2.msra.mxu0 0.0
        %615 = vmatprep.subr.mxu0 0.0
        %616 = vmatpush2.msra.mxu0 0.0
        %617 = vmatprep.subr.mxu0 0.0
        %618 = vmatpush2.msra.mxu0 0.0
        %619 = vmatprep.subr.mxu0 0.0
        %620 = vmatpush2.msra.mxu0 0.0
        %621 = vmatprep.subr.mxu0 0.0
        %622 = vmatpush2.msra.mxu0 0.0
        %623 = vmatprep.subr.mxu0 0.0
        %624 = vmatpush2.msra.mxu0 0.0
        %625 = vmatprep.subr.mxu0 0.0
        %626 = vmatpush2.msra.mxu0 0.0
        %627 = vmatprep.subr.mxu0 0.0
        %628 = vmatpush2.msra.mxu0 0.0
        %629 = vmatprep.subr.mxu0 0.0
        %630 = vmatpush2.msra.mxu0 0.0
        %631 = vmatprep.mubr.f32.mxu0 0.0
        %632 = vmatmul.mubr.f32.gmra.mxu0 %v565
        %v633 = vpop.f32.mrf.mxu0
        %v634 = vadd.f32 0.0, %v633
        %v635 = vpop.f32.mrf.mxu0
        %636 = vdwg.mxu0
        %v637 = vld [vmem:[%s3] sm:$0x1]
        %v638 = vmul.f32 %v637, %v634
        %v639 = vld [vmem:[%s4] sm:$0x1]
        %v640 = vmul.f32 %v561, %v638
        %v641 = vsub.f32 %v639, %v640
        %642 = vst [vmem:[%s281] sm:$0x1] %v638
        %643 = vst [vmem:[%s284] sm:$0x1] %v641
      $region48: #{resnet_stage.20} parent=39 // pred_fallthru
        _
      %p644 = scmp.lt.s32.totalorder %s22, 1
      %s645 = scalar_select %p644, %s22, 1
      %s646 = scalar_lea.vmem %s5, %s645
      %p647 = scmp.lt.s32.totalorder %s22, 1
      %s648 = scalar_select %p647, %s22, 1
      %s649 = scalar_lea.vmem %s6, %s648
      // Predicated region
      $region49: #{resnet_stage.20} parent=39 // pred_check
        %p650 = pneg %p160
      $region50: #{resnet_stage.20} parent=39 // pred_check_branch
        %652 = sbr.rel (%p650) target = $region52
      $region51: #{resnet_stage.20} parent=39 // pred_region
        _
      $region52: #{resnet_stage.20} parent=39 // pred_fallthru
        _
      // Predicated region
      $region53: #{resnet_stage.20} parent=39 // pred_check
        %p653 = pneg %p186
      $region54: #{resnet_stage.20} parent=39 // pred_check_branch
        %655 = sbr.rel (%p653) target = $region56
      $region55: #{resnet_stage.20} parent=39 // pred_region
        _
      $region56: #{resnet_stage.20} parent=39 // pred_fallthru
        _
    $region40: #{resnet_stage.20} parent=5 // pred_fallthru
      _
    %p656 = scmp.le.s32.totalorder 2, %s13
    // Predicated region
    $region57: #{resnet_stage.20} parent=5 // pred_check
      %p657 = pneg %p656
    $region58: #{resnet_stage.20} parent=5 // pred_check_branch
      %659 = sbr.rel (%p657) target = $region60
    $region59: #{resnet_stage.20} parent=5 // pred_region
      %s660 = ssub.s32 %s13, 2
      // Predicated region
      $region61: #{resnet_stage.20} parent=59 // pred_check
        %p661 = pneg %p166
      $region62: #{resnet_stage.20} parent=59 // pred_check_branch
        %663 = sbr.rel (%p661) target = $region64
      $region63: #{resnet_stage.20} parent=59 // pred_region
        %p664 = scmp.lt.s32.totalorder %s24, 1
        %s665 = scalar_select %p664, %s24, 1
        %s666 = scalar_lea.vmem %s5, %s665
      $region64: #{resnet_stage.20} parent=59 // pred_fallthru
        _
      // Predicated region
      $region65: #{resnet_stage.20} parent=59 // pred_check
        %p667 = pneg %p192
      $region66: #{resnet_stage.20} parent=59 // pred_check_branch
        %669 = sbr.rel (%p667) target = $region68
      $region67: #{resnet_stage.20} parent=59 // pred_region
        %p670 = scmp.lt.s32.totalorder %s24, 1
        %s671 = scalar_select %p670, %s24, 1
        %s672 = scalar_lea.vmem %s6, %s671
      $region68: #{resnet_stage.20} parent=59 // pred_fallthru
        _
    $region60: #{resnet_stage.20} parent=5 // pred_fallthru
      _
  $region6: #{resnet_stage.20} parent=0 // loop_footer
    %s17 = sadd.s32 1, %s13
  $region7: #{resnet_stage.20} parent=0 // loop_footer_branch
    %12 = sbr.rel target = $region3
  $region8: #{resnet_stage.20} parent=0 // loop_exit
    _

// kernel: resnet_stage.21
$region0: #{resnet_stage.21}
  #allocation0 [shape = 'u32[]', space=smem, size = 0x4, offset = 0x4, fixed_abs, tag = 'smem constant byte address 0x4 - core index']
  #allocation1 [shape = 'u32[144,128]{1,0:T(1,128)}', space=vmem, size = 0x12000, scoped, tag = 'internal scratch']
  #allocation2 [shape = 'f32[16,32]{1,0:T(8,128)}', space=vmem, size = 0x2000, scoped, tag = 'scratch operand']
  %s0 = inlined_call_operand.vmem [shape: bf16[2,16,128], index: 0, kind: input, shape index: {}]
  %s1 = inlined_call_operand.vmem [shape: f32[2,1,128], index: 1, kind: input, shape index: {}]
  %s2 = inlined_call_operand.vmem [shape: f32[2,1,128], index: 2, kind: input, shape index: {}]
  %s3 = inlined_call_operand.vmem [shape: bf16[128,32], index: 3, kind: input, shape index: {}]
  %s4 = inlined_call_operand.vmem [shape: bf16[2,16,32], index: 4, kind: output, shape index: {}]
  %s5 = sld [smem:[#allocation0]]
  $region57: #{resnet_stage.21} parent=0
    _
  %s7 = ssub.s32 1, %s5
  %s8 = scalar_select 0, %s7, %s5
  loop: start=0, step=1, limit=4
  $region2: #{resnet_stage.21} parent=0 // loop_pre_header
    _
  $region3: #{resnet_stage.21} parent=0 // loop_header
    %s10 = sphi 0, %s14
    %p11 = scmp.ge.s32.totalorder %s10, 4
    %s17 = sphi 0, %s43
    %s18 = sphi 0, %s39
    %s19 = sphi 0, %s35
    %s20 = sphi 0, %s31
    %s21 = sphi 0, %s17
    %s22 = sphi 0, %s18
    %s23 = sphi 0, %s19
    %s24 = sphi 0, %s20
    %s25 = sphi 0, %s21
    %s26 = sphi 0, %s22
    %s27 = sphi 0, %s23
    %s28 = sphi 0, %s24
    %s50 = sphi 0, %s52
    %s53 = sphi 0, %s50
    %s54 = sphi 0, %s53
    %s70 = sphi 0, %s54
    %s78 = sphi 0, %s80
    %s81 = sphi 0, %s78
    %s82 = sphi 0, %s81
    %s98 = sphi 0, %s82
    %s106 = sphi 0, %s108
    %s109 = sphi 0, %s106
    %s110 = sphi 0, %s109
    %s126 = sphi 0, %s110
    %s134 = sphi 0, %s136
    %s137 = sphi 0, %s134
    %s138 = sphi 0, %s137
    %s154 = sphi 0, %s138
    %s164 = sphi 0, %s166
    %s167 = sphi 0, %s164
    %s168 = sphi 0, %s167
    %s184 = sphi 0, %s168
  $region4: #{resnet_stage.21} parent=0 // loop_header_branch
    %13 = sbr.rel (%p11) target = $region8
  $region5: #{resnet_stage.21} parent=0 // loop_body
    %s15 = ssub.s32 %s10, 1
    %s16 = ssub.s32 %s10, 2
    %s29 = sadd.s32 1, %s20
    %p30 = scmp.ge.s32.totalorder %s29, 1
    %s31 = scalar_select %p30, 0, %s29
    %s32 = sadd.s32 1, %s19
    %s33 = scalar_select %p30, %s32, %s19
    %p34 = scmp.ge.s32.totalorder %s33, 1
    %s35 = scalar_select %p34, 0, %s33
    %s36 = sadd.s32 1, %s18
    %s37 = scalar_select %p34, %s36, %s18
    %p38 = scmp.ge.s32.totalorder %s37, 1
    %s39 = scalar_select %p38, 0, %s37
    %s40 = sadd.s32 1, %s17
    %s41 = scalar_select %p38, %s40, %s17
    %p42 = scmp.ge.s32.totalorder %s41, 2
    %s43 = scalar_select %p42, 0, %s41
    %s44 = ssub.s32 %s17, %s43
    %s45 = ssub.s32 %s18, %s39
    %s46 = sor.u32 %s44, %s45
    %s47 = ssub.s32 %s20, %s31
    %s48 = sor.u32 %s46, %s47
    %p49 = scmp.eq.s32.totalorder %s48, 0
    %s51 = sadd.s32 %s50, 1
    %s52 = scalar_select %p49, %s50, %s51
    %p55 = pneg %p49
    %p56 = scmp.eq.s32.totalorder %s10, 1
    %p57 = por %p55, %p56
    %p58 = scmp.ne.s32.totalorder %s50, %s53
    %p59 = scmp.eq.s32.totalorder %s10, 0
    %p60 = por %p58, %p59
    %p61 = scmp.ne.s32.totalorder %s50, %s53
    %p62 = scmp.eq.s32.totalorder %s15, 1
    %p63 = por %p61, %p62
    %p64 = scmp.ne.s32.totalorder %s53, %s54
    %p65 = scmp.eq.s32.totalorder %s15, 0
    %p66 = por %p64, %p65
    %p67 = scmp.ne.s32.totalorder %s53, %s54
    %p68 = scmp.eq.s32.totalorder %s16, 1
    %p69 = por %p67, %p68
    %p71 = scmp.ne.s32.totalorder %s54, %s70
    %p72 = scmp.eq.s32.totalorder %s16, 0
    %p73 = por %p71, %p72
    %s74 = ssub.s32 %s17, %s43
    %s75 = ssub.s32 %s20, %s31
    %s76 = sor.u32 %s74, %s75
    %p77 = scmp.eq.s32.totalorder %s76, 0
    %s79 = sadd.s32 %s78, 1
    %s80 = scalar_select %p77, %s78, %s79
    %p83 = pneg %p77
    %p84 = scmp.eq.s32.totalorder %s10, 1
    %p85 = por %p83, %p84
    %p86 = scmp.ne.s32.totalorder %s78, %s81
    %p87 = scmp.eq.s32.totalorder %s10, 0
    %p88 = por %p86, %p87
    %p89 = scmp.ne.s32.totalorder %s78, %s81
    %p90 = scmp.eq.s32.totalorder %s15, 1
    %p91 = por %p89, %p90
    %p92 = scmp.ne.s32.totalorder %s81, %s82
    %p93 = scmp.eq.s32.totalorder %s15, 0
    %p94 = por %p92, %p93
    %p95 = scmp.ne.s32.totalorder %s81, %s82
    %p96 = scmp.eq.s32.totalorder %s16, 1
    %p97 = por %p95, %p96
    %p99 = scmp.ne.s32.totalorder %s82, %s98
    %p100 = scmp.eq.s32.totalorder %s16, 0
    %p101 = por %p99, %p100
    %s102 = ssub.s32 %s17, %s43
    %s103 = ssub.s32 %s20, %s31
    %s104 = sor.u32 %s102, %s103
    %p105 = scmp.eq.s32.totalorder %s104, 0
    %s107 = sadd.s32 %s106, 1
    %s108 = scalar_select %p105, %s106, %s107
    %p111 = pneg %p105
    %p112 = scmp.eq.s32.totalorder %s10, 1
    %p113 = por %p111, %p112
    %p114 = scmp.ne.s32.totalorder %s106, %s109
    %p115 = scmp.eq.s32.totalorder %s10, 0
    %p116 = por %p114, %p115
    %p117 = scmp.ne.s32.totalorder %s106, %s109
    %p118 = scmp.eq.s32.totalorder %s15, 1
    %p119 = por %p117, %p118
    %p120 = scmp.ne.s32.totalorder %s109, %s110
    %p121 = scmp.eq.s32.totalorder %s15, 0
    %p122 = por %p120, %p121
    %p123 = scmp.ne.s32.totalorder %s109, %s110
    %p124 = scmp.eq.s32.totalorder %s16, 1
    %p125 = por %p123, %p124
    %p127 = scmp.ne.s32.totalorder %s110, %s126
    %p128 = scmp.eq.s32.totalorder %s16, 0
    %p129 = por %p127, %p128
    %s130 = ssub.s32 %s20, %s31
    %s131 = ssub.s32 %s19, %s35
    %s132 = sor.u32 %s130, %s131
    %p133 = scmp.eq.s32.totalorder %s132, 0
    %s135 = sadd.s32 %s134, 1
    %s136 = scalar_select %p133, %s134, %s135
    %p139 = pneg %p133
    %p140 = scmp.eq.s32.totalorder %s10, 1
    %p141 = por %p139, %p140
    %p142 = scmp.ne.s32.totalorder %s134, %s137
    %p143 = scmp.eq.s32.totalorder %s10, 0
    %p144 = por %p142, %p143
    %p145 = scmp.ne.s32.totalorder %s134, %s137
    %p146 = scmp.eq.s32.totalorder %s15, 1
    %p147 = por %p145, %p146
    %p148 = scmp.ne.s32.totalorder %s137, %s138
    %p149 = scmp.eq.s32.totalorder %s15, 0
    %p150 = por %p148, %p149
    %p151 = scmp.ne.s32.totalorder %s137, %s138
    %p152 = scmp.eq.s32.totalorder %s16, 1
    %p153 = por %p151, %p152
    %p155 = scmp.ne.s32.totalorder %s138, %s154
    %p156 = scmp.eq.s32.totalorder %s16, 0
    %p157 = por %p155, %p156
    %s158 = ssub.s32 %s17, %s43
    %s159 = ssub.s32 %s18, %s39
    %s160 = sor.u32 %s158, %s159
    %s161 = ssub.s32 %s19, %s35
    %s162 = sor.u32 %s160, %s161
    %p163 = scmp.eq.s32.totalorder %s162, 0
    %s165 = sadd.s32 %s164, 1
    %s166 = scalar_select %p163, %s164, %s165
    %p169 = pneg %p163
    %p170 = scmp.eq.s32.totalorder %s10, 1
    %p171 = por %p169, %p170
    %p172 = scmp.ne.s32.totalorder %s164, %s167
    %p173 = scmp.eq.s32.totalorder %s10, 0
    %p174 = por %p172, %p173
    %p175 = scmp.ne.s32.totalorder %s164, %s167
    %p176 = scmp.eq.s32.totalorder %s15, 1
    %p177 = por %p175, %p176
    %p178 = scmp.ne.s32.totalorder %s167, %s168
    %p179 = scmp.eq.s32.totalorder %s15, 0
    %p180 = por %p178, %p179
    %p181 = scmp.ne.s32.totalorder %s167, %s168
    %p182 = scmp.eq.s32.totalorder %s16, 1
    %p183 = por %p181, %p182
    %p185 = scmp.ne.s32.totalorder %s168, %s184
    %p186 = scmp.eq.s32.totalorder %s16, 0
    %p187 = por %p185, %p186
    %p188 = scmp.le.s32.totalorder 1, %s10
    %p189 = scmp.lt.s32.totalorder %s10, 3
    %p190 = pnand %p188, %p189
    %p191 = pneg %p190
    // Predicated region
    $region9: #{resnet_stage.21} parent=5 // pred_check
      _
    $region10: #{resnet_stage.21} parent=5 // pred_check_branch
      %193 = sbr.rel (%p190) target = $region12
    $region11: #{resnet_stage.21} parent=5 // pred_region
      %s194 = ssub.s32 %s10, 1
      // Predicated region
      $region13: #{resnet_stage.21} parent=11 // pred_check
        %p195 = pneg %p150
      $region14: #{resnet_stage.21} parent=11 // pred_check_branch
        %197 = sbr.rel (%p195) target = $region16
      $region15: #{resnet_stage.21} parent=11 // pred_region
        %s198 = smul.u32 16, %s24
        %p199 = scmp.lt.s32.totalorder %s198, 15
        %s200 = scalar_select %p199, %s198, 15
        %p201 = scmp.lt.s32.totalorder %s23, 0
        %s202 = scalar_select %p201, %s23, 0
        %s203 = sadd.s32 %s202, %s200
        %s204 = smul.addr %s203, 4
        %s205 = scalar_lea.vmem %s3, %s204
        %s206 = smul.u32 16, %s24
      $region16: #{resnet_stage.21} parent=11 // pred_fallthru
        _
    $region12: #{resnet_stage.21} parent=5 // pred_fallthru
      _
    %p207 = scmp.lt.s32.totalorder %s10, 2
    // Predicated region
    $region17: #{resnet_stage.21} parent=5 // pred_check
      %p208 = pneg %p207
    $region18: #{resnet_stage.21} parent=5 // pred_check_branch
      %210 = sbr.rel (%p208) target = $region20
    $region19: #{resnet_stage.21} parent=5 // pred_region
      // Predicated region
      $region21: #{resnet_stage.21} parent=19 // pred_check
        %p211 = pneg %p60
      $region22: #{resnet_stage.21} parent=19 // pred_check_branch
        %213 = sbr.rel (%p211) target = $region24
      $region23: #{resnet_stage.21} parent=19 // pred_region
        %s214 = smul.u32 2, %s18
        %p215 = scmp.lt.s32.totalorder %s17, 1
        %s216 = scalar_select %p215, %s17, 1
        %p217 = scmp.lt.s32.totalorder %s214, 1
        %s218 = scalar_select %p217, %s214, 1
        %p219 = scmp.lt.s32.totalorder %s20, 0
        %s220 = scalar_select %p219, %s20, 0
        %s221 = sadd.s32 %s220, %s218
        %s222 = smul.addr %s216, 2
        %s223 = sadd.s32 %s221, %s222
        %s224 = smul.addr %s223, 4
        %s225 = scalar_lea.vmem %s0, %s224
        %s226 = smul.u32 2, %s18
      $region24: #{resnet_stage.21} parent=19 // pred_fallthru
        _
      // Predicated region
      $region25: #{resnet_stage.21} parent=19 // pred_check
        %p227 = pneg %p88
      $region26: #{resnet_stage.21} parent=19 // pred_check_branch
        %229 = sbr.rel (%p227) target = $region28
      $region27: #{resnet_stage.21} parent=19 // pred_region
        %p230 = scmp.lt.s32.totalorder %s17, 1
        %s231 = scalar_select %p230, %s17, 1
        %p232 = scmp.lt.s32.totalorder %s20, 0
        %s233 = scalar_select %p232, %s20, 0
        %s234 = sadd.s32 %s233, %s231
        %s235 = scalar_lea.vmem %s1, %s234
      $region28: #{resnet_stage.21} parent=19 // pred_fallthru
        _
      // Predicated region
      $region29: #{resnet_stage.21} parent=19 // pred_check
        %p236 = pneg %p116
      $region30: #{resnet_stage.21} parent=19 // pred_check_branch
        %238 = sbr.rel (%p236) target = $region32
      $region31: #{resnet_stage.21} parent=19 // pred_region
        %p239 = scmp.lt.s32.totalorder %s17, 1
        %s240 = scalar_select %p239, %s17, 1
        %p241 = scmp.lt.s32.totalorder %s20, 0
        %s242 = scalar_select %p241, %s20, 0
        %s243 = sadd.s32 %s242, %s240
        %s244 = scalar_lea.vmem %s2, %s243
      $region32: #{resnet_stage.21} parent=19 // pred_fallthru
        _
    $region20: #{resnet_stage.21} parent=5 // pred_fallthru
      _
    %p245 = scmp.le.s32.totalorder 1, %s10
    %p246 = scmp.lt.s32.totalorder %s10, 3
    %p247 = pnand %p245, %p246
    %p248 = pneg %p247
    // Predicated region
    $region33: #{resnet_stage.21} parent=5 // pred_check
      _
    $region34: #{resnet_stage.21} parent=5 // pred_check_branch
      %250 = sbr.rel (%p247) target = $region36
    $region35: #{resnet_stage.21} parent=5 // pred_region
      %s251 = ssub.s32 %s10, 1
      %s252 = smul.u32 2, %s22
      %p253 = scmp.lt.s32.totalorder %s21, 1
      %s254 = scalar_select %p253, %s21, 1
      %p255 = scmp.lt.s32.totalorder %s252, 1
      %s256 = scalar_select %p255, %s252, 1
      %p257 = scmp.lt.s32.totalorder %s24, 0
      %s258 = scalar_select %p257, %s24, 0
      %s259 = sadd.s32 %s258, %s256
      %s260 = smul.addr %s254, 2
      %s261 = sadd.s32 %s259, %s260
      %s262 = smul.addr %s261, 4
      %s263 = scalar_lea.vmem %s0, %s262
      %p264 = pneg %p66
      %p265 = pneg %p63
      %p266 = scmp.lt.s32.totalorder %s21, 1
      %s267 = scalar_select %p266, %s21, 1
      %p268 = scmp.lt.s32.totalorder %s24, 0
      %s269 = scalar_select %p268, %s24, 0
      %s270 = sadd.s32 %s269, %s267
      %s271 = scalar_lea.vmem %s1, %s270
      %p272 = pneg %p94
      %p273 = pneg %p91
      %p274 = scmp.lt.s32.totalorder %s21, 1
      %s275 = scalar_select %p274, %s21, 1
      %p276 = scmp.lt.s32.totalorder %s24, 0
      %s277 = scalar_select %p276, %s24, 0
      %s278 = sadd.s32 %s277, %s275
      %s279 = scalar_lea.vmem %s2, %s278
      %p280 = pneg %p122
      %p281 = pneg %p119
      %s282 = smul.u32 16, %s24
      %p283 = scmp.lt.s32.totalorder %s282, 15
      %s284 = scalar_select %p283, %s282, 15
      %p285 = scmp.lt.s32.totalorder %s23, 0
      %s286 = scalar_select %p285, %s23, 0
      %s287 = sadd.s32 %s286, %s284
      %s288 = smul.addr %s287, 4
      %s289 = scalar_lea.vmem %s3, %s288
      %p290 = pneg %p150
      %p291 = pneg %p147
      %p292 = pneg %p180
      %p293 = pneg %p177
      %s294 = smul.u32 2, %s22
      %p295 = scmp.lt.s32.totalorder %s21, 1
      %s296 = scalar_select %p295, %s21, 1
      %p297 = scmp.lt.s32.totalorder %s294, 1
      %s298 = scalar_select %p297, %s294, 1
      %p299 = scmp.lt.s32.totalorder %s23, 0
      %s300 = scalar_select %p299, %s23, 0
      %s301 = sadd.s32 %s300, %s298
      %s302 = smul.addr %s296, 2
      %s303 = sadd.s32 %s301, %s302
      %s304 = smul.addr %s303, 4
      %s305 = scalar_lea.vmem %s4, %s304
      %s306 = smul.u32 2, %s22
      %p307 = scmp.lt.s32.totalorder %s21, 1
      %s308 = scalar_select %p307, %s21, 1
      %p309 = scmp.lt.s32.totalorder %s306, 1
      %s310 = scalar_select %p309, %s306, 1
      %p311 = scmp.lt.s32.totalorder %s24, 0
      %s312 = scalar_select %p311, %s24, 0
      %s313 = sadd.s32 %s312, %s310
      %s314 = smul.addr %s308, 2
      %s315 = sadd.s32 %s313, %s314
      %s316 = smul.addr %s315, 4
      %s317 = scalar_lea.vmem %s0, %s316
      %s318 = smul.u32 2, %s22
      %p319 = scmp.lt.s32.totalorder %s21, 1
      %s320 = scalar_select %p319, %s21, 1
      %p321 = scmp.lt.s32.totalorder %s24, 0
      %s322 = scalar_select %p321, %s24, 0
      %s323 = sadd.s32 %s322, %s320
      %s324 = scalar_lea.vmem %s1, %s323
      %p325 = scmp.lt.s32.totalorder %s21, 1
      %s326 = scalar_select %p325, %s21, 1
      %p327 = scmp.lt.s32.totalorder %s24, 0
      %s328 = scalar_select %p327, %s24, 0
      %s329 = sadd.s32 %s328, %s326
      %s330 = scalar_lea.vmem %s2, %s329
      %s331 = smul.u32 16, %s24
      %p332 = scmp.lt.s32.totalorder %s331, 15
      %s333 = scalar_select %p332, %s331, 15
      %p334 = scmp.lt.s32.totalorder %s23, 0
      %s335 = scalar_select %p334, %s23, 0
      %s336 = sadd.s32 %s335, %s333
      %s337 = smul.addr %s336, 4
      %s338 = scalar_lea.vmem %s3, %s337
      %s339 = smul.u32 16, %s24
      %s340 = smul.u32 2, %s22
      %p341 = scmp.lt.s32.totalorder %s21, 1
      %s342 = scalar_select %p341, %s21, 1
      %p343 = scmp.lt.s32.totalorder %s340, 1
      %s344 = scalar_select %p343, %s340, 1
      %p345 = scmp.lt.s32.totalorder %s23, 0
      %s346 = scalar_select %p345, %s23, 0
      %s347 = sadd.s32 %s346, %s344
      %s348 = smul.addr %s342, 2
      %s349 = sadd.s32 %s347, %s348
      %s350 = smul.addr %s349, 4
      %s351 = scalar_lea.vmem %s4, %s350
      %s352 = smul.u32 2, %s22
      %p354 = scmp.eq.s32.totalorder %s24, 0
      // Predicated region
      $region37: #{resnet_stage.21} parent=35 // pred_check
        %p355 = pneg %p354
      $region38: #{resnet_stage.21} parent=35 // pred_check_branch
        %357 = sbr.rel (%p355) target = $region40
      $region39: #{resnet_stage.21} parent=35 // pred_region
        %vm358 = vcmask 261120
        %359 = vst.msk [vmem:[#allocation2] sm:$0xff] %vm358, 0.0
        %360 = vst.msk [vmem:[#allocation2 + $0x8] sm:$0xff] %vm358, 0.0
      $region40: #{resnet_stage.21} parent=35 // pred_fallthru
        _
      %v361 = vld [vmem:[%s317] sm:$0xf]
      %v362 = vld [vmem:[%s317 + $0x4] sm:$0xf]
      %v363 = vunpack.c.l.bf16 %v361
      %v364 = vunpack.c.l.bf16 %v362
      %v365 = vld [vmem:[%s324] sm:$0x1]
      %v367 = vlaneseq
      %v368 = vshrl.u32 %v367, 7
      %v369 = vsub.s32 0, %v368
      %v370 = vrot.slane %v365, %v369
      %v372 = vmul.f32 %v363, %v370
      %v373 = vmul.f32 %v364, %v370
      %v374 = vld [vmem:[%s330] sm:$0x1]
      %v376 = vlaneseq
      %v377 = vshrl.u32 %v376, 7
      %v378 = vsub.s32 0, %v377
      %v379 = vrot.slane %v374, %v378
      %v381 = vadd.f32 %v372, %v379
      %v382 = vadd.f32 %v373, %v379
      %v383 = vmax.f32 %v381, 0.0
      %v384 = vmax.f32 %v382, 0.0
      %v385 = vld [vmem:[#allocation2] sm:$0xff]
      %v386 = vld [vmem:[#allocation2 + $0x8] sm:$0xff]
      %v387 = vpack.c.bf16 %v384, %v383
      %v388 = vld [vmem:[%s338] sm:$0xf]
      %v389 = vld [vmem:[%s338 + $0x4] sm:$0xf]
      %v390 = vld [vmem:[%s338 + $0x8] sm:$0xf]
      %v391 = vld [vmem:[%s338 + $0xc] sm:$0xf]
      %v392 = vld [vmem:[%s338 + $0x10] sm:$0xf]
      %v393 = vld [vmem:[%s338 + $0x14] sm:$0xf]
      %v394 = vld [vmem:[%s338 + $0x18] sm:$0xf]
      %v395 = vld [vmem:[%s338 + $0x1c] sm:$0xf]
      %v396 = vld [vmem:[%s338 + $0x20] sm:$0xf]
      %v397 = vld [vmem:[%s338 + $0x24] sm:$0xf]
      %v398 = vld [vmem:[%s338 + $0x28] sm:$0xf]
      %v399 = vld [vmem:[%s338 + $0x2c] sm:$0xf]
      %v400 = vld [vmem:[%s338 + $0x30] sm:$0xf]
      %v401 = vld [vmem:[%s338 + $0x34] sm:$0xf]
      %v402 = vld [vmem:[%s338 + $0x38] sm:$0xf]
      %v403 = vld [vmem:[%s338 + $0x3c] sm:$0xf]
      %v420 = vunpack.c.l.b16 %v388
      %v421 = vunpack.c.l.b16 %v389
      %v422 = vunpack.c.l.b16 %v390
      %v423 = vunpack.c.l.b16 %v391
      %v424 = vunpack.c.l.b16 %v392
      %v425 = vunpack.c.l.b16 %v393
      %v426 = vunpack.c.l.b16 %v394
      %v427 = vunpack.c.l.b16 %v395
      %v428 = vunpack.c.l.b16 %v396
      %v429 = vunpack.c.l.b16 %v397
      %v430 = vunpack.c.l.b16 %v398
      %v431 = vunpack.c.l.b16 %v399
      %v432 = vunpack.c.l.b16 %v400
      %v433 = vunpack.c.l.b16 %v401
      %v434 = vunpack.c.l.b16 %v402
      %v435 = vunpack.c.l.b16 %v403
      %v436 = vpack.c.b16 %v421, %v420
      %v437 = vpack.c.b16 %v423, %v422
      %v438 = vpack.c.b16 %v425, %v424
      %v439 = vpack.c.b16 %v427, %v426
      %v440 = vpack.c.b16 %v429, %v428
      %v441 = vpack.c.b16 %v431, %v430
      %v442 = vpack.c.b16 %v433, %v432
      %v443 = vpack.c.b16 %v435, %v434
      %452 = vmatprep.subr.bf16.mxu0 0
      %453 = vmatpush1.bf16.msra.mxu0 %v443
      %454 = vmatprep.subr.bf16.mxu0 0
      %455 = vmatpush1.bf16.msra.mxu0 %v442
      %456 = vmatprep.subr.bf16.mxu0 0
      %457 = vmatpush1.bf16.msra.mxu0 %v441
      %458 = vmatprep.subr.bf16.mxu0 0
      %459 = vmatpush1.bf16.msra.mxu0 %v440
      %460 = vmatprep.subr.bf16.mxu0 0
      %461 = vmatpush1.bf16.msra.mxu0 %v439
      %462 = vmatprep.subr.bf16.mxu0 0
      %463 = vmatpush1.bf16.msra.mxu0 %v438
      %464 = vmatprep.subr.bf16.mxu0 0
      %465 = vmatpush1.bf16.msra.mxu0 %v437
      %466 = vmatprep.subr.bf16.mxu0 0
      %467 = vmatpush1.bf16.msra.mxu0 %v436
      %468 = vmatprep.subr.bf16.mxu0 0
      %469 = vmatpush2.bf16.msra.mxu0 0
      %470 = vmatprep.subr.bf16.mxu0 0
      %471 = vmatpush2.bf16.msra.mxu0 0
      %472 = vmatprep.subr.bf16.mxu0 0
      %473 = vmatpush2.bf16.msra.mxu0 0
      %474 = vmatprep.subr.bf16.mxu0 0
      %475 = vmatpush2.bf16.msra.mxu0 0
      %476 = vmatprep.subr.bf16.mxu0 0
      %477 = vmatpush2.bf16.msra.mxu0 0
      %478 = vmatprep.subr.bf16.mxu0 0
      %479 = vmatpush2.bf16.msra.mxu0 0
      %480 = vmatprep.subr.bf16.mxu0 0
      %481 = vmatpush2.bf16.msra.mxu0 0
      %482 = vmatprep.subr.bf16.mxu0 0
      %483 = vmatpush2.bf16.msra.mxu0 0
      %484 = vmatprep.mubr.bf16.mxu0 0
      %485 = vmatmul.mubr.bf16.gmra.mxu0 %v387
      %v486 = vpop.f32.mrf.mxu0
      %v487 = vadd.f32 0.0, %v486
      %v488 = vpop.f32.mrf.mxu0
      %v489 = vpop.f32.mrf.mxu0
      %v490 = vadd.f32 0.0, %v489
      %v491 = vpop.f32.mrf.mxu0
      %492 = vdwg.mxu0
      %v493 = vadd.f32 %v385, %v487
      %v494 = vadd.f32 %v386, %v490
      %vm495 = vcmask 261120
      %496 = vst.msk [vmem:[#allocation2] sm:$0xff] %vm495, %v493
      %497 = vst.msk [vmem:[#allocation2 + $0x8] sm:$0xff] %vm495, %v494
      // Predicated region
      $region41: #{resnet_stage.21} parent=35 // pred_check
        %p498 = pneg %p354
      $region42: #{resnet_stage.21} parent=35 // pred_check_branch
        %500 = sbr.rel (%p498) target = $region44
      $region43: #{resnet_stage.21} parent=35 // pred_region
        %v501 = vld [vmem:[#allocation2] sm:$0xff]
        %v502 = vld [vmem:[#allocation2 + $0x8] sm:$0xff]
        %v503 = vpack.c.bf16 %v502, %v501
        %v505 = vunpack.c.l.b16 %v503
        %v506 = vunpack.c.h.b16 %v503
        %v507 = vpack.c.b16 %v505, %v505
        %v508 = vpack.c.b16 %v506, %v506
        %vm511 = vcmask 257024
        %512 = vst.msk [vmem:[%s351] sm:$0xf] %vm511, %v507
        %513 = vst.msk [vmem:[%s351 + $0x4] sm:$0xf] %vm511, %v508
      $region44: #{resnet_stage.21} parent=35 // pred_fallthru
        _
      %s514 = smul.u32 2, %s22
      %p515 = scmp.lt.s32.totalorder %s21, 1
      %s516 = scalar_select %p515, %s21, 1
      %p517 = scmp.lt.s32.totalorder %s514, 1
      %s518 = scalar_select %p517, %s514, 1
      %p519 = scmp.lt.s32.totalorder %s23, 0
      %s520 = scalar_select %p519, %s23, 0
      %s521 = sadd.s32 %s520, %s518
      %s522 = smul.addr %s516, 2
      %s523 = sadd.s32 %s521, %s522
      %s524 = smul.addr %s523, 4
      %s525 = scalar_lea.vmem %s4, %s524
      // Predicated region
      $region45: #{resnet_stage.21} parent=35 // pred_check
        %p526 = pneg %p177
      $region46: #{resnet_stage.21} parent=35 // pred_check_branch
        %528 = sbr.rel (%p526) target = $region48
      $region47: #{resnet_stage.21} parent=35 // pred_region
        %s529 = smul.u32 2, %s22
      $region48: #{resnet_stage.21} parent=35 // pred_fallthru
        _
    $region36: #{resnet_stage.21} parent=5 // pred_fallthru
      _
    %p530 = scmp.le.s32.totalorder 2, %s10
    // Predicated region
    $region49: #{resnet_stage.21} parent=5 // pred_check
      %p531 = pneg %p530
    $region50: #{resnet_stage.21} parent=5 // pred_check_branch
      %533 = sbr.rel (%p531) target = $region52
    $region51: #{resnet_stage.21} parent=5 // pred_region
      %s534 = ssub.s32 %s10, 2
      // Predicated region
      $region53: #{resnet_stage.21} parent=51 // pred_check
        %p535 = pneg %p183
      $region54: #{resnet_stage.21} parent=51 // pred_check_branch
        %537 = sbr.rel (%p535) target = $region56
      $region55: #{resnet_stage.21} parent=51 // pred_region
        %s538 = smul.u32 2, %s26
        %p539 = scmp.lt.s32.totalorder %s25, 1
        %s540 = scalar_select %p539, %s25, 1
        %p541 = scmp.lt.s32.totalorder %s538, 1
        %s542 = scalar_select %p541, %s538, 1
        %p543 = scmp.lt.s32.totalorder %s27, 0
        %s544 = scalar_select %p543, %s27, 0
        %s545 = sadd.s32 %s544, %s542
        %s546 = smul.addr %s540, 2
        %s547 = sadd.s32 %s545, %s546
        %s548 = smul.addr %s547, 4
        %s549 = scalar_lea.vmem %s4, %s548
      $region56: #{resnet_stage.21} parent=51 // pred_fallthru
        _
    $region52: #{resnet_stage.21} parent=5 // pred_fallthru
      _
  $region6: #{resnet_stage.21} parent=0 // loop_footer
    %s14 = sadd.s32 1, %s10
  $region7: #{resnet_stage.21} parent=0 // loop_footer_branch
    %9 = sbr.rel target = $region3
  $region8: #{resnet_stage.21} parent=0 // loop_exit
    _

// kernel: resnet_stage.23
$region0: #{resnet_stage.23}
  #allocation0 [shape = 'u32[]', space=smem, size = 0x4, offset = 0x4, fixed_abs, tag = 'smem constant byte address 0x4 - core index']
  #allocation1 [shape = 'u32[144,128]{1,0:T(1,128)}', space=vmem, size = 0x12000, scoped, tag = 'internal scratch']
  #allocation2 [shape = 'bf16[36,32]{1,0:T(8,128)(2,1)}', space=vmem, size = 0x2800, scoped, tag = 'scratch operand']
  %s0 = inlined_call_operand.vmem [shape: bf16[2,36,32], index: 0, kind: input, shape index: {}]
  %s1 = inlined_call_operand.vmem [shape: f32[2,1,32], index: 1, kind: input, shape index: {}]
  %s2 = inlined_call_operand.vmem [shape: f32[2,1,32], index: 2, kind: input, shape index: {}]
  %s3 = inlined_call_operand.vmem [shape: f32[36,1], index: 3, kind: input, shape index: {}]
  %s4 = inlined_call_operand.vmem [shape: bf16[9,32,32], index: 4, kind: input, shape index: {}]
  %s5 = inlined_call_operand.vmem [shape: bf16[2,22,32], index: 5, kind: output, shape index: {}]
  %s6 = sld [smem:[#allocation0]]
  $region57: #{resnet_stage.23} parent=0
    _
  %s8 = ssub.s32 1, %s6
  %s9 = scalar_select 0, %s8, %s6
  loop: start=0, step=1, limit=4
  $region2: #{resnet_stage.23} parent=0 // loop_pre_header
    _
  $region3: #{resnet_stage.23} parent=0 // loop_header
    %s11 = sphi 0, %s15
    %p12 = scmp.ge.s32.totalorder %s11, 4
    %s18 = sphi 0, %s30
    %s19 = sphi 0, %s26
    %s20 = sphi 0, %s18
    %s21 = sphi 0, %s19
    %s22 = sphi 0, %s20
    %s23 = sphi 0, %s21
    %s33 = sphi 0, %s35
    %s36 = sphi 0, %s33
    %s37 = sphi 0, %s36
    %s53 = sphi 0, %s37
    %s59 = sphi 0, %s61
    %s62 = sphi 0, %s59
    %s63 = sphi 0, %s62
    %s79 = sphi 0, %s63
    %s85 = sphi 0, %s87
    %s88 = sphi 0, %s85
    %s89 = sphi 0, %s88
    %s105 = sphi 0, %s89
    %s109 = sphi 0, %s109
    %s111 = sphi 0, %s109
    %s112 = sphi 0, %s111
    %s126 = sphi 0, %s112
    %s132 = sphi 0, %s134
    %s135 = sphi 0, %s132
    %s136 = sphi 0, %s135
    %s152 = sphi 0, %s136
    %s160 = sphi 0, %s162
    %s163 = sphi 0, %s160
    %s164 = sphi 0, %s163
    %s180 = sphi 0, %s164
  $region4: #{resnet_stage.23} parent=0 // loop_header_branch
    %14 = sbr.rel (%p12) target = $region8
  $region5: #{resnet_stage.23} parent=0 // loop_body
    %s16 = ssub.s32 %s11, 1
    %s17 = ssub.s32 %s11, 2
    %s24 = sadd.s32 1, %s19
    %p25 = scmp.ge.s32.totalorder %s24, 1
    %s26 = scalar_select %p25, 0, %s24
    %s27 = sadd.s32 1, %s18
    %s28 = scalar_select %p25, %s27, %s18
    %p29 = scmp.ge.s32.totalorder %s28, 2
    %s30 = scalar_select %p29, 0, %s28
    %s31 = ssub.s32 %s18, %s30
    %p32 = scmp.eq.s32.totalorder %s31, 0
    %s34 = sadd.s32 %s33, 1
    %s35 = scalar_select %p32, %s33, %s34
    %p38 = pneg %p32
    %p39 = scmp.eq.s32.totalorder %s11, 1
    %p40 = por %p38, %p39
    %p41 = scmp.ne.s32.totalorder %s33, %s36
    %p42 = scmp.eq.s32.totalorder %s11, 0
    %p43 = por %p41, %p42
    %p44 = scmp.ne.s32.totalorder %s33, %s36
    %p45 = scmp.eq.s32.totalorder %s16, 1
    %p46 = por %p44, %p45
    %p47 = scmp.ne.s32.totalorder %s36, %s37
    %p48 = scmp.eq.s32.totalorder %s16, 0
    %p49 = por %p47, %p48
    %p50 = scmp.ne.s32.totalorder %s36, %s37
    %p51 = scmp.eq.s32.totalorder %s17, 1
    %p52 = por %p50, %p51
    %p54 = scmp.ne.s32.totalorder %s37, %s53
    %p55 = scmp.eq.s32.totalorder %s17, 0
    %p56 = por %p54, %p55
    %s57 = ssub.s32 %s18, %s30
    %p58 = scmp.eq.s32.totalorder %s57, 0
    %s60 = sadd.s32 %s59, 1
    %s61 = scalar_select %p58, %s59, %s60
    %p64 = pneg %p58
    %p65 = scmp.eq.s32.totalorder %s11, 1
    %p66 = por %p64, %p65
    %p67 = scmp.ne.s32.totalorder %s59, %s62
    %p68 = scmp.eq.s32.totalorder %s11, 0
    %p69 = por %p67, %p68
    %p70 = scmp.ne.s32.totalorder %s59, %s62
    %p71 = scmp.eq.s32.totalorder %s16, 1
    %p72 = por %p70, %p71
    %p73 = scmp.ne.s32.totalorder %s62, %s63
    %p74 = scmp.eq.s32.totalorder %s16, 0
    %p75 = por %p73, %p74
    %p76 = scmp.ne.s32.totalorder %s62, %s63
    %p77 = scmp.eq.s32.totalorder %s17, 1
    %p78 = por %p76, %p77
    %p80 = scmp.ne.s32.totalorder %s63, %s79
    %p81 = scmp.eq.s32.totalorder %s17, 0
    %p82 = por %p80, %p81
    %s83 = ssub.s32 %s18, %s30
    %p84 = scmp.eq.s32.totalorder %s83, 0
    %s86 = sadd.s32 %s85, 1
    %s87 = scalar_select %p84, %s85, %s86
    %p90 = pneg %p84
    %p91 = scmp.eq.s32.totalorder %s11, 1
    %p92 = por %p90, %p91
    %p93 = scmp.ne.s32.totalorder %s85, %s88
    %p94 = scmp.eq.s32.totalorder %s11, 0
    %p95 = por %p93, %p94
    %p96 = scmp.ne.s32.totalorder %s85, %s88
    %p97 = scmp.eq.s32.totalorder %s16, 1
    %p98 = por %p96, %p97
    %p99 = scmp.ne.s32.totalorder %s88, %s89
    %p100 = scmp.eq.s32.totalorder %s16, 0
    %p101 = por %p99, %p100
    %p102 = scmp.ne.s32.totalorder %s88, %s89
    %p103 = scmp.eq.s32.totalorder %s17, 1
    %p104 = por %p102, %p103
    %p106 = scmp.ne.s32.totalorder %s89, %s105
    %p107 = scmp.eq.s32.totalorder %s17, 0
    %p108 = por %p106, %p107
    %s110 = sadd.s32 %s109, 1
    %p113 = scmp.eq.s32.totalorder %s11, 1
    %p114 = scmp.ne.s32.totalorder %s109, %s111
    %p115 = scmp.eq.s32.totalorder %s11, 0
    %p116 = por %p114, %p115
    %p117 = scmp.ne.s32.totalorder %s109, %s111
    %p118 = scmp.eq.s32.totalorder %s16, 1
    %p119 = por %p117, %p118
    %p120 = scmp.ne.s32.totalorder %s111, %s112
    %p121 = scmp.eq.s32.totalorder %s16, 0
    %p122 = por %p120, %p121
    %p123 = scmp.ne.s32.totalorder %s111, %s112
    %p124 = scmp.eq.s32.totalorder %s17, 1
    %p125 = por %p123, %p124
    %p127 = scmp.ne.s32.totalorder %s112, %s126
    %p128 = scmp.eq.s32.totalorder %s17, 0
    %p129 = por %p127, %p128
    %s130 = ssub.s32 %s19, %s26
    %p131 = scmp.eq.s32.totalorder %s130, 0
    %s133 = sadd.s32 %s132, 1
    %s134 = scalar_select %p131, %s132, %s133
    %p137 = pneg %p131
    %p138 = scmp.eq.s32.totalorder %s11, 1
    %p139 = por %p137, %p138
    %p140 = scmp.ne.s32.totalorder %s132, %s135
    %p141 = scmp.eq.s32.totalorder %s11, 0
    %p142 = por %p140, %p141
    %p143 = scmp.ne.s32.totalorder %s132, %s135
    %p144 = scmp.eq.s32.totalorder %s16, 1
    %p145 = por %p143, %p144
    %p146 = scmp.ne.s32.totalorder %s135, %s136
    %p147 = scmp.eq.s32.totalorder %s16, 0
    %p148 = por %p146, %p147
    %p149 = scmp.ne.s32.totalorder %s135, %s136
    %p150 = scmp.eq.s32.totalorder %s17, 1
    %p151 = por %p149, %p150
    %p153 = scmp.ne.s32.totalorder %s136, %s152
    %p154 = scmp.eq.s32.totalorder %s17, 0
    %p155 = por %p153, %p154
    %s156 = ssub.s32 %s18, %s30
    %s157 = ssub.s32 %s19, %s26
    %s158 = sor.u32 %s156, %s157
    %p159 = scmp.eq.s32.totalorder %s158, 0
    %s161 = sadd.s32 %s160, 1
    %s162 = scalar_select %p159, %s160, %s161
    %p165 = pneg %p159
    %p166 = scmp.eq.s32.totalorder %s11, 1
    %p167 = por %p165, %p166
    %p168 = scmp.ne.s32.totalorder %s160, %s163
    %p169 = scmp.eq.s32.totalorder %s11, 0
    %p170 = por %p168, %p169
    %p171 = scmp.ne.s32.totalorder %s160, %s163
    %p172 = scmp.eq.s32.totalorder %s16, 1
    %p173 = por %p171, %p172
    %p174 = scmp.ne.s32.totalorder %s163, %s164
    %p175 = scmp.eq.s32.totalorder %s16, 0
    %p176 = por %p174, %p175
    %p177 = scmp.ne.s32.totalorder %s163, %s164
    %p178 = scmp.eq.s32.totalorder %s17, 1
    %p179 = por %p177, %p178
    %p181 = scmp.ne.s32.totalorder %s164, %s180
    %p182 = scmp.eq.s32.totalorder %s17, 0
    %p183 = por %p181, %p182
    %p184 = scmp.le.s32.totalorder 1, %s11
    %p185 = scmp.lt.s32.totalorder %s11, 3
    %p186 = pnand %p184, %p185
    %p187 = pneg %p186
    // Predicated region
    $region9: #{resnet_stage.23} parent=5 // pred_check
      _
    $region10: #{resnet_stage.23} parent=5 // pred_check_branch
      %189 = sbr.rel (%p186) target = $region12
    $region11: #{resnet_stage.23} parent=5 // pred_region
      %s190 = ssub.s32 %s11, 1
      // Predicated region
      $region13: #{resnet_stage.23} parent=11 // pred_check
        %p191 = pneg %p122
      $region14: #{resnet_stage.23} parent=11 // pred_check_branch
        %193 = sbr.rel (%p191) target = $region16
      $region15: #{resnet_stage.23} parent=11 // pred_region
        _
      $region16: #{resnet_stage.23} parent=11 // pred_fallthru
        _
      // Predicated region
      $region17: #{resnet_stage.23} parent=11 // pred_check
        %p194 = pneg %p148
      $region18: #{resnet_stage.23} parent=11 // pred_check_branch
        %196 = sbr.rel (%p194) target = $region20
      $region19: #{resnet_stage.23} parent=11 // pred_region
        %p197 = scmp.lt.s32.totalorder %s21, 0
        %s198 = scalar_select %p197, %s21, 0
        %s199 = smul.addr %s198, 4
        %s200 = scalar_lea.vmem %s4, %s199
      $region20: #{resnet_stage.23} parent=11 // pred_fallthru
        _
    $region12: #{resnet_stage.23} parent=5 // pred_fallthru
      _
    %p201 = scmp.lt.s32.totalorder %s11, 2
    // Predicated region
    $region21: #{resnet_stage.23} parent=5 // pred_check
      %p202 = pneg %p201
    $region22: #{resnet_stage.23} parent=5 // pred_check_branch
      %204 = sbr.rel (%p202) target = $region24
    $region23: #{resnet_stage.23} parent=5 // pred_region
      // Predicated region
      $region25: #{resnet_stage.23} parent=23 // pred_check
        %p205 = pneg %p43
      $region26: #{resnet_stage.23} parent=23 // pred_check_branch
        %207 = sbr.rel (%p205) target = $region28
      $region27: #{resnet_stage.23} parent=23 // pred_region
        %p208 = scmp.lt.s32.totalorder %s18, 1
        %s209 = scalar_select %p208, %s18, 1
        %s210 = smul.addr %s209, 5
        %s211 = smul.addr %s210, 4
        %s212 = scalar_lea.vmem %s0, %s211
      $region28: #{resnet_stage.23} parent=23 // pred_fallthru
        _
      // Predicated region
      $region29: #{resnet_stage.23} parent=23 // pred_check
        %p213 = pneg %p69
      $region30: #{resnet_stage.23} parent=23 // pred_check_branch
        %215 = sbr.rel (%p213) target = $region32
      $region31: #{resnet_stage.23} parent=23 // pred_region
        %p216 = scmp.lt.s32.totalorder %s18, 1
        %s217 = scalar_select %p216, %s18, 1
        %s218 = scalar_lea.vmem %s1, %s217
      $region32: #{resnet_stage.23} parent=23 // pred_fallthru
        _
      // Predicated region
      $region33: #{resnet_stage.23} parent=23 // pred_check
        %p219 = pneg %p95
      $region34: #{resnet_stage.23} parent=23 // pred_check_branch
        %221 = sbr.rel (%p219) target = $region36
      $region35: #{resnet_stage.23} parent=23 // pred_region
        %p222 = scmp.lt.s32.totalorder %s18, 1
        %s223 = scalar_select %p222, %s18, 1
        %s224 = scalar_lea.vmem %s2, %s223
      $region36: #{resnet_stage.23} parent=23 // pred_fallthru
        _
    $region24: #{resnet_stage.23} parent=5 // pred_fallthru
      _
    %p225 = scmp.le.s32.totalorder 1, %s11
    %p226 = scmp.lt.s32.totalorder %s11, 3
    %p227 = pnand %p225, %p226
    %p228 = pneg %p227
    // Predicated region
    $region37: #{resnet_stage.23} parent=5 // pred_check
      _
    $region38: #{resnet_stage.23} parent=5 // pred_check_branch
      %230 = sbr.rel (%p227) target = $region40
    $region39: #{resnet_stage.23} parent=5 // pred_region
      %s231 = ssub.s32 %s11, 1
      %p232 = scmp.lt.s32.totalorder %s20, 1
      %s233 = scalar_select %p232, %s20, 1
      %s234 = smul.addr %s233, 5
      %s235 = smul.addr %s234, 4
      %s236 = scalar_lea.vmem %s0, %s235
      %p237 = pneg %p49
      %p238 = pneg %p46
      %p239 = scmp.lt.s32.totalorder %s20, 1
      %s240 = scalar_select %p239, %s20, 1
      %s241 = scalar_lea.vmem %s1, %s240
      %p242 = pneg %p75
      %p243 = pneg %p72
      %p244 = scmp.lt.s32.totalorder %s20, 1
      %s245 = scalar_select %p244, %s20, 1
      %s246 = scalar_lea.vmem %s2, %s245
      %p247 = pneg %p101
      %p248 = pneg %p98
      %p249 = pneg %p122
      %p250 = pneg %p119
      %p251 = scmp.lt.s32.totalorder %s21, 0
      %s252 = scalar_select %p251, %s21, 0
      %s253 = smul.addr %s252, 4
      %s254 = scalar_lea.vmem %s4, %s253
      %p255 = pneg %p148
      %p256 = pneg %p145
      %p257 = pneg %p176
      %p258 = pneg %p173
      %p259 = scmp.lt.s32.totalorder %s20, 1
      %s260 = scalar_select %p259, %s20, 1
      %p261 = scmp.lt.s32.totalorder %s21, 0
      %s262 = scalar_select %p261, %s21, 0
      %s263 = smul.addr %s260, 3
      %s264 = sadd.s32 %s262, %s263
      %s265 = smul.addr %s264, 4
      %s266 = scalar_lea.vmem %s5, %s265
      %p267 = scmp.lt.s32.totalorder %s20, 1
      %s268 = scalar_select %p267, %s20, 1
      %s269 = smul.addr %s268, 5
      %s270 = smul.addr %s269, 4
      %s271 = scalar_lea.vmem %s0, %s270
      %p272 = scmp.lt.s32.totalorder %s20, 1
      %s273 = scalar_select %p272, %s20, 1
      %s274 = scalar_lea.vmem %s1, %s273
      %p275 = scmp.lt.s32.totalorder %s20, 1
      %s276 = scalar_select %p275, %s20, 1
      %s277 = scalar_lea.vmem %s2, %s276
      %p278 = scmp.lt.s32.totalorder %s21, 0
      %s279 = scalar_select %p278, %s21, 0
      %s280 = smul.addr %s279, 4
      %s281 = scalar_lea.vmem %s4, %s280
      %p282 = scmp.lt.s32.totalorder %s20, 1
      %s283 = scalar_select %p282, %s20, 1
      %p284 = scmp.lt.s32.totalorder %s21, 0
      %s285 = scalar_select %p284, %s21, 0
      %s286 = smul.addr %s283, 3
      %s287 = sadd.s32 %s285, %s286
      %s288 = smul.addr %s287, 4
      %s289 = scalar_lea.vmem %s5, %s288
      %p291 = scmp.eq.s32.totalorder %s21, 0
      // Predicated region
      $region41: #{resnet_stage.23} parent=39 // pred_check
        %p292 = pneg %p291
      $region42: #{resnet_stage.23} parent=39 // pred_check_branch
        %294 = sbr.rel (%p292) target = $region44
      $region43: #{resnet_stage.23} parent=39 // pred_region
        %v295 = vld [vmem:[%s271] sm:$0xf]
        %v296 = vld [vmem:[%s271 + $0x4] sm:$0xf]
        %v297 = vld [vmem:[%s271 + $0x8] sm:$0xf]
        %v298 = vld [vmem:[%s271 + $0xc] sm:$0xf]
        %v299 = vld [vmem:[%s271 + $0x10] sm:$0x3]
        %v300 = vunpack.c.l.bf16 %v295
        %v301 = vunpack.c.l.bf16 %v296
        %v302 = vunpack.c.l.bf16 %v297
        %v303 = vunpack.c.l.bf16 %v298
        %v304 = vunpack.c.l.bf16 %v299
        %v305 = vld [vmem:[%s274] sm:$0x1]
        %v307 = vlaneseq
        %v308 = vshrl.u32 %v307, 7
        %v309 = vsub.s32 0, %v308
        %v310 = vrot.slane %v305, %v309
        %v312 = vmul.f32 %v300, %v310
        %v313 = vmul.f32 %v301, %v310
        %v314 = vmul.f32 %v302, %v310
        %v315 = vmul.f32 %v303, %v310
        %v316 = vmul.f32 %v304, %v310
        %v317 = vld [vmem:[%s277] sm:$0x1]
        %v319 = vlaneseq
        %v320 = vshrl.u32 %v319, 7
        %v321 = vsub.s32 0, %v320
        %v322 = vrot.slane %v317, %v321
        %v324 = vadd.f32 %v312, %v322
        %v325 = vadd.f32 %v313, %v322
        %v326 = vadd.f32 %v314, %v322
        %v327 = vadd.f32 %v315, %v322
        %v328 = vadd.f32 %v316, %v322
        %v329 = vmax.f32 %v324, 0.0
        %v330 = vmax.f32 %v325, 0.0
        %v331 = vmax.f32 %v326, 0.0
        %v332 = vmax.f32 %v327, 0.0
        %v333 = vmax.f32 %v328, 0.0
        %v334 = vld [vmem:[%s3] sm:$0xff]
        %v335 = vld [vmem:[%s3 + $0x8] sm:$0xff]
        %v336 = vld [vmem:[%s3 + $0x10] sm:$0xff]
        %v337 = vld [vmem:[%s3 + $0x18] sm:$0xff]
        %v338 = vld [vmem:[%s3 + $0x20] sm:$0xf]
        %340 = vset.pattern.permute.xlu0 0
        %341 = vperm.xlu0 %340, %v334
        %v342 = vpop.permute.xlu0 %341
        %345 = vset.pattern.permute.xlu0 0
        %346 = vperm.xlu0 %345, %v335
        %v347 = vpop.permute.xlu0 %346
        %350 = vset.pattern.permute.xlu0 0
        %351 = vperm.xlu0 %350, %v336
        %v352 = vpop.permute.xlu0 %351
        %355 = vset.pattern.permute.xlu0 0
        %356 = vperm.xlu0 %355, %v337
        %v357 = vpop.permute.xlu0 %356
        %360 = vset.pattern.permute.xlu0 0
        %361 = vperm.xlu0 %360, %v338
        %v362 = vpop.permute.xlu0 %361
        %v364 = vmul.f32 %v329, %v342
        %v365 = vmul.f32 %v330, %v347
        %v366 = vmul.f32 %v331, %v352
        %v367 = vmul.f32 %v332, %v357
        %v368 = vmul.f32 %v333, %v362
        %v369 = vpack.c.bf16 %v365, %v364
        %v370 = vpack.c.bf16 %v367, %v366
        %v371 = vpack.c.bf16 %v368, %v368
        %v375 = vunpack.c.l.b16 %v369
        %v376 = vunpack.c.h.b16 %v369
        %v377 = vunpack.c.l.b16 %v370
        %v378 = vunpack.c.h.b16 %v370
        %v379 = vunpack.c.l.b16 %v371
        %v380 = vpack.c.b16 %v375, %v375
        %v381 = vpack.c.b16 %v376, %v376
        %v382 = vpack.c.b16 %v377, %v377
        %v383 = vpack.c.b16 %v378, %v378
        %v384 = vpack.c.b16 %v379, %v379
        %vm390 = vcmask 257024
        %391 = vst.msk [vmem:[#allocation2] sm:$0xf] %vm390, %v380
        %392 = vst.msk [vmem:[#allocation2 + $0x4] sm:$0xf] %vm390, %v381
        %393 = vst.msk [vmem:[#allocation2 + $0x8] sm:$0xf] %vm390, %v382
        %394 = vst.msk [vmem:[#allocation2 + $0xc] sm:$0xf] %vm390, %v383
        %vm395 = vcmask 254976
        %396 = vst.msk [vmem:[#allocation2 + $0x10] sm:$0x3] %vm395, %v384
      $region44: #{resnet_stage.23} parent=39 // pred_fallthru
        _
      %v397 = vld [vmem:[#allocation2] sm:$0xf]
      %v398 = vld [vmem:[#allocation2 + $0x4] sm:$0xf]
      %v399 = vld [vmem:[#allocation2 + $0x8] sm:$0x7]
      %v400 = vld [vmem:[%s281] sm:$0xf]
      %v401 = vld [vmem:[%s281 + $0x4] sm:$0xf]
      %v402 = vld [vmem:[%s281 + $0x8] sm:$0xf]
      %v403 = vld [vmem:[%s281 + $0xc] sm:$0xf]
      %v404 = vld [vmem:[#allocation2 + $0x8] sm:$0xf]
      %s405 = scalar_lea.vmem %s281, 16
      %v406 = vld [vmem:[%s405] sm:$0xf]
      %v407 = vld [vmem:[%s405 + $0x4] sm:$0xf]
      %v408 = vld [vmem:[%s405 + $0x8] sm:$0xf]
      %v409 = vld [vmem:[%s405 + $0xc] sm:$0xf]
      %v413 = vunpack.c.l.b16 %v397
      %v414 = vunpack.c.l.b16 %v398
      %v415 = vunpack.c.l.b16 %v404
      %v416 = vpack.c.b16 %v414, %v413
      %v417 = vpack.c.b16 %v415, %v415
      %vm418 = vsmask.f32 7424
      %v420 = vshrl.u32 %v416, 16
      %v422 = vshll.u32 %v416, 16
      %v424 = vrot.slane %v422, 1
      %v425 = vor.u32 %v420, %v424
      %v427 = vshll.u32 %v417, 16
      %v429 = vrot.slane %v427, 1
      %v430 = vsel %vm418, %v425, %v429
      %v431 = vshrl.u32 %v417, 16
      %v433 = vor.u32 %v431, %v429
      %v438 = vunpack.c.l.b16 %v406
      %v439 = vunpack.c.l.b16 %v407
      %v440 = vunpack.c.l.b16 %v408
      %v441 = vunpack.c.l.b16 %v409
      %v442 = vpack.c.b16 %v439, %v438
      %v443 = vpack.c.b16 %v441, %v440
      %vm446 = vcmask 261120
      %v448 = vsel %vm446, %v430, 0
      %v451 = vsel %vm446, %v433, 0
      %453 = vmatprep.subr.bf16.mxu0 0
      %454 = vmatpush1.bf16.msra.mxu0 0
      %455 = vmatprep.subr.bf16.mxu0 0
      %456 = vmatpush1.bf16.msra.mxu0 0
      %457 = vmatprep.subr.bf16.mxu0 0
      %458 = vmatpush1.bf16.msra.mxu0 0
      %459 = vmatprep.subr.bf16.mxu0 0
      %460 = vmatpush1.bf16.msra.mxu0 0
      %461 = vmatprep.subr.bf16.mxu0 0
      %462 = vmatpush1.bf16.msra.mxu0 0
      %463 = vmatprep.subr.bf16.mxu0 0
      %464 = vmatpush1.bf16.msra.mxu0 0
      %465 = vmatprep.subr.bf16.mxu0 0
      %466 = vmatpush1.bf16.msra.mxu0 %v443
      %467 = vmatprep.subr.bf16.mxu0 0
      %468 = vmatpush1.bf16.msra.mxu0 %v442
      %469 = vmatprep.subr.bf16.mxu0 0
      %470 = vmatpush2.bf16.msra.mxu0 0
      %471 = vmatprep.subr.bf16.mxu0 0
      %472 = vmatpush2.bf16.msra.mxu0 0
      %473 = vmatprep.subr.bf16.mxu0 0
      %474 = vmatpush2.bf16.msra.mxu0 0
      %475 = vmatprep.subr.bf16.mxu0 0
      %476 = vmatpush2.bf16.msra.mxu0 0
      %477 = vmatprep.subr.bf16.mxu0 0
      %478 = vmatpush2.bf16.msra.mxu0 0
      %479 = vmatprep.subr.bf16.mxu0 0
      %480 = vmatpush2.bf16.msra.mxu0 0
      %481 = vmatprep.subr.bf16.mxu0 0
      %482 = vmatpush2.bf16.msra.mxu0 0
      %483 = vmatprep.subr.bf16.mxu0 0
      %484 = vmatpush2.bf16.msra.mxu0 0
      %485 = vmatprep.mubr.bf16.mxu0 0
      %486 = vmatmul.mubr.bf16.gmra.mxu0 %v448
      %v487 = vpop.f32.mrf.mxu0
      %v488 = vadd.f32 0.0, %v487
      %v489 = vpop.f32.mrf.mxu0
      %v490 = vpop.f32.mrf.mxu0
      %v491 = vadd.f32 0.0, %v490
      %v492 = vpop.f32.mrf.mxu0
      %493 = vmatprep.mubr.bf16.mxu0 0
      %494 = vmatmul.mubr.bf16.gmra.mxu0 %v451
      %v495 = vpop.f32.mrf.mxu0
      %v496 = vadd.f32 0.0, %v495
      %v497 = vpop.f32.mrf.mxu0
      %v498 = vpop.f32.mrf.mxu0
      %v499 = vpop.f32.mrf.mxu0
      %500 = vdwg.mxu0
      %v502 = vunpack.c.l.b16 %v399
      %v503 = vpack.c.b16 %v502, %v502
      %v508 = vunpack.c.l.b16 %v400
      %v509 = vunpack.c.l.b16 %v401
      %v510 = vunpack.c.l.b16 %v402
      %v511 = vunpack.c.l.b16 %v403
      %v512 = vpack.c.b16 %v509, %v508
      %v513 = vpack.c.b16 %v511, %v510
      %v516 = vsel %vm446, %v416, 0
      %v519 = vsel %vm446, %v503, 0
      %521 = vmatprep.subr.bf16.mxu0 0
      %522 = vmatpush1.bf16.msra.mxu0 0
      %523 = vmatprep.subr.bf16.mxu0 0
      %524 = vmatpush1.bf16.msra.mxu0 0
      %525 = vmatprep.subr.bf16.mxu0 0
      %526 = vmatpush1.bf16.msra.mxu0 0
      %527 = vmatprep.subr.bf16.mxu0 0
      %528 = vmatpush1.bf16.msra.mxu0 0
      %529 = vmatprep.subr.bf16.mxu0 0
      %530 = vmatpush1.bf16.msra.mxu0 0
      %531 = vmatprep.subr.bf16.mxu0 0
      %532 = vmatpush1.bf16.msra.mxu0 0
      %533 = vmatprep.subr.bf16.mxu0 0
      %534 = vmatpush1.bf16.msra.mxu0 %v513
      %535 = vmatprep.subr.bf16.mxu0 0
      %536 = vmatpush1.bf16.msra.mxu0 %v512
      %537 = vmatprep.subr.bf16.mxu0 0
      %538 = vmatpush2.bf16.msra.mxu0 0
      %539 = vmatprep.subr.bf16.mxu0 0
      %540 = vmatpush2.bf16.msra.mxu0 0
      %541 = vmatprep.subr.bf16.mxu0 0
      %542 = vmatpush2.bf16.msra.mxu0 0
      %543 = vmatprep.subr.bf16.mxu0 0
      %544 = vmatpush2.bf16.msra.mxu0 0
      %545 = vmatprep.subr.bf16.mxu0 0
      %546 = vmatpush2.bf16.msra.mxu0 0
      %547 = vmatprep.subr.bf16.mxu0 0
      %548 = vmatpush2.bf16.msra.mxu0 0
      %549 = vmatprep.subr.bf16.mxu0 0
      %550 = vmatpush2.bf16.msra.mxu0 0
      %551 = vmatprep.subr.bf16.mxu0 0
      %552 = vmatpush2.bf16.msra.mxu0 0
      %553 = vmatprep.mubr.bf16.mxu0 0
      %554 = vmatmul.mubr.bf16.gmra.mxu0 %v516
      %v555 = vpop.f32.mrf.mxu0
      %v556 = vadd.f32 %v488, %v555
      %v557 = vpop.f32.mrf.mxu0
      %v558 = vpop.f32.mrf.mxu0
      %v559 = vadd.f32 %v491, %v558
      %v560 = vpop.f32.mrf.mxu0
      %561 = vmatprep.mubr.bf16.mxu0 0
      %562 = vmatmul.mubr.bf16.gmra.mxu0 %v519
      %v563 = vpop.f32.mrf.mxu0
      %v564 = vadd.f32 %v496, %v563
      %v565 = vpop.f32.mrf.mxu0
      %v566 = vpop.f32.mrf.mxu0
      %v567 = vpop.f32.mrf.mxu0
      %568 = vdwg.mxu0
      %v569 = vld [vmem:[#allocation2] sm:$0xe]
      %s570 = scalar_lea.vmem %s281, 32
      %v571 = vld [vmem:[%s570] sm:$0xf]
      %v572 = vld [vmem:[%s570 + $0x4] sm:$0xf]
      %v573 = vld [vmem:[%s570 + $0x8] sm:$0xf]
      %v574 = vld [vmem:[%s570 + $0xc] sm:$0xf]
      %v576 = vunpack.c.l.b16 %v569
      %v577 = vpack.c.b16 %v414, %v576
      %vm578 = vcmask 1046528
      %v579 = vrot.slane %v577, 1
      %v580 = vrot.slane %v417, 1
      %v581 = vsel %vm578, %v579, %v580
      %v586 = vunpack.c.l.b16 %v571
      %v587 = vunpack.c.l.b16 %v572
      %v588 = vunpack.c.l.b16 %v573
      %v589 = vunpack.c.l.b16 %v574
      %v590 = vpack.c.b16 %v587, %v586
      %v591 = vpack.c.b16 %v589, %v588
      %v595 = vsel %vm446, %v581, 0
      %v598 = vsel %vm446, %v580, 0
      %600 = vmatprep.subr.bf16.mxu0 0
      %601 = vmatpush1.bf16.msra.mxu0 0
      %602 = vmatprep.subr.bf16.mxu0 0
      %603 = vmatpush1.bf16.msra.mxu0 0
      %604 = vmatprep.subr.bf16.mxu0 0
      %605 = vmatpush1.bf16.msra.mxu0 0
      %606 = vmatprep.subr.bf16.mxu0 0
      %607 = vmatpush1.bf16.msra.mxu0 0
      %608 = vmatprep.subr.bf16.mxu0 0
      %609 = vmatpush1.bf16.msra.mxu0 0
      %610 = vmatprep.subr.bf16.mxu0 0
      %611 = vmatpush1.bf16.msra.mxu0 0
      %612 = vmatprep.subr.bf16.mxu0 0
      %613 = vmatpush1.bf16.msra.mxu0 %v591
      %614 = vmatprep.subr.bf16.mxu0 0
      %615 = vmatpush1.bf16.msra.mxu0 %v590
      %616 = vmatprep.subr.bf16.mxu0 0
      %617 = vmatpush2.bf16.msra.mxu0 0
      %618 = vmatprep.subr.bf16.mxu0 0
      %619 = vmatpush2.bf16.msra.mxu0 0
      %620 = vmatprep.subr.bf16.mxu0 0
      %621 = vmatpush2.bf16.msra.mxu0 0
      %622 = vmatprep.subr.bf16.mxu0 0
      %623 = vmatpush2.bf16.msra.mxu0 0
      %624 = vmatprep.subr.bf16.mxu0 0
      %625 = vmatpush2.bf16.msra.mxu0 0
      %626 = vmatprep.subr.bf16.mxu0 0
      %627 = vmatpush2.bf16.msra.mxu0 0
      %628 = vmatprep.subr.bf16.mxu0 0
      %629 = vmatpush2.bf16.msra.mxu0 0
      %630 = vmatprep.subr.bf16.mxu0 0
      %631 = vmatpush2.bf16.msra.mxu0 0
      %632 = vmatprep.mubr.bf16.mxu0 0
      %633 = vmatmul.mubr.bf16.gmra.mxu0 %v595
      %v634 = vpop.f32.mrf.mxu0
      %v635 = vadd.f32 0.0, %v634
      %v636 = vpop.f32.mrf.mxu0
      %v637 = vpop.f32.mrf.mxu0
      %v638 = vadd.f32 0.0, %v637
      %v639 = vpop.f32.mrf.mxu0
      %640 = vmatprep.mubr.bf16.mxu0 0
      %641 = vmatmul.mubr.bf16.gmra.mxu0 %v598
      %v642 = vpop.f32.mrf.mxu0
      %v643 = vadd.f32 0.0, %v642
      %v644 = vpop.f32.mrf.mxu0
      %v645 = vpop.f32.mrf.mxu0
      %v646 = vpop.f32.mrf.mxu0
      %647 = vdwg.mxu0
      %v648 = vadd.f32 %v556, %v635
      %v649 = vadd.f32 %v559, %v638
      %v650 = vadd.f32 %v564, %v643
      %v651 = vld [vmem:[#allocation2] sm:$0x8]
      %v652 = vld [vmem:[#allocation2 + $0x4] sm:$0xf]
      %v653 = vld [vmem:[#allocation2 + $0x8] sm:$0xf]
      %v654 = vld [vmem:[#allocation2 + $0xc] sm:$0x3]
      %s655 = scalar_lea.vmem %s281, 48
      %v656 = vld [vmem:[%s655] sm:$0xf]
      %v657 = vld [vmem:[%s655 + $0x4] sm:$0xf]
      %v658 = vld [vmem:[%s655 + $0x8] sm:$0xf]
      %v659 = vld [vmem:[%s655 + $0xc] sm:$0xf]
      %v664 = vunpack.c.l.b16 %v651
      %v665 = vunpack.c.l.b16 %v652
      %v666 = vunpack.c.l.b16 %v653
      %v667 = vunpack.c.l.b16 %v654
      %v668 = vpack.c.b16 %v665, %v664
      %v669 = vpack.c.b16 %v667, %v666
      %vm670 = vcmask 1044480
      %v671 = vrot.slane %v668, 3
      %v672 = vrot.slane %v669, 3
      %v673 = vsel %vm670, %v671, %v672
      %v678 = vunpack.c.l.b16 %v656
      %v679 = vunpack.c.l.b16 %v657
      %v680 = vunpack.c.l.b16 %v658
      %v681 = vunpack.c.l.b16 %v659
      %v682 = vpack.c.b16 %v679, %v678
      %v683 = vpack.c.b16 %v681, %v680
      %v687 = vsel %vm446, %v673, 0
      %v690 = vsel %vm446, %v672, 0
      %692 = vmatprep.subr.bf16.mxu0 0
      %693 = vmatpush1.bf16.msra.mxu0 0
      %694 = vmatprep.subr.bf16.mxu0 0
      %695 = vmatpush1.bf16.msra.mxu0 0
      %696 = vmatprep.subr.bf16.mxu0 0
      %697 = vmatpush1.bf16.msra.mxu0 0
      %698 = vmatprep.subr.bf16.mxu0 0
      %699 = vmatpush1.bf16.msra.mxu0 0
      %700 = vmatprep.subr.bf16.mxu0 0
      %701 = vmatpush1.bf16.msra.mxu0 0
      %702 = vmatprep.subr.bf16.mxu0 0
      %703 = vmatpush1.bf16.msra.mxu0 0
      %704 = vmatprep.subr.bf16.mxu0 0
      %705 = vmatpush1.bf16.msra.mxu0 %v683
      %706 = vmatprep.subr.bf16.mxu0 0
      %707 = vmatpush1.bf16.msra.mxu0 %v682
      %708 = vmatprep.subr.bf16.mxu0 0
      %709 = vmatpush2.bf16.msra.mxu0 0
      %710 = vmatprep.subr.bf16.mxu0 0
      %711 = vmatpush2.bf16.msra.mxu0 0
      %712 = vmatprep.subr.bf16.mxu0 0
      %713 = vmatpush2.bf16.msra.mxu0 0
      %714 = vmatprep.subr.bf16.mxu0 0
      %715 = vmatpush2.bf16.msra.mxu0 0
      %716 = vmatprep.subr.bf16.mxu0 0
      %717 = vmatpush2.bf16.msra.mxu0 0
      %718 = vmatprep.subr.bf16.mxu0 0
      %719 = vmatpush2.bf16.msra.mxu0 0
      %720 = vmatprep.subr.bf16.mxu0 0
      %721 = vmatpush2.bf16.msra.mxu0 0
      %722 = vmatprep.subr.bf16.mxu0 0
      %723 = vmatpush2.bf16.msra.mxu0 0
      %724 = vmatprep.mubr.bf16.mxu0 0
      %725 = vmatmul.mubr.bf16.gmra.mxu0 %v687
      %v726 = vpop.f32.mrf.mxu0
      %v727 = vadd.f32 0.0, %v726
      %v728 = vpop.f32.mrf.mxu0
      %v729 = vpop.f32.mrf.mxu0
      %v730 = vadd.f32 0.0, %v729
      %v731 = vpop.f32.mrf.mxu0
      %732 = vmatprep.mubr.bf16.mxu0 0
      %733 = vmatmul.mubr.bf16.gmra.mxu0 %v690
      %v734 = vpop.f32.mrf.mxu0
      %v735 = vadd.f32 0.0, %v734
      %v736 = vpop.f32.mrf.mxu0
      %v737 = vpop.f32.mrf.mxu0
      %v738 = vpop.f32.mrf.mxu0
      %739 = vdwg.mxu0
      %v740 = vadd.f32 %v648, %v727
      %v741 = vadd.f32 %v649, %v730
      %v742 = vadd.f32 %v650, %v735
      %v743 = vld [vmem:[#allocation2 + $0xc] sm:$0x7]
      %s744 = scalar_lea.vmem %s281, 64
      %v745 = vld [vmem:[%s744] sm:$0xf]
      %v746 = vld [vmem:[%s744 + $0x4] sm:$0xf]
      %v747 = vld [vmem:[%s744 + $0x8] sm:$0xf]
      %v748 = vld [vmem:[%s744 + $0xc] sm:$0xf]
      %v750 = vunpack.c.l.b16 %v743
      %v751 = vpack.c.b16 %v750, %v666
      %vm752 = vsmask.f32 4352
      %v754 = vshrl.u32 %v668, 16
      %v756 = vrot.slane %v754, 3
      %v757 = vshll.u32 %v668, 16
      %v759 = vrot.slane %v757, 4
      %v760 = vor.u32 %v756, %v759
      %v762 = vshrl.u32 %v751, 16
      %v764 = vrot.slane %v762, 3
      %v765 = vshll.u32 %v751, 16
      %v767 = vrot.slane %v765, 4
      %v768 = vor.u32 %v764, %v767
      %v769 = vsel %vm752, %v760, %v768
      %v774 = vunpack.c.l.b16 %v745
      %v775 = vunpack.c.l.b16 %v746
      %v776 = vunpack.c.l.b16 %v747
      %v777 = vunpack.c.l.b16 %v748
      %v778 = vpack.c.b16 %v775, %v774
      %v779 = vpack.c.b16 %v777, %v776
      %v783 = vsel %vm446, %v769, 0
      %v786 = vsel %vm446, %v768, 0
      %788 = vmatprep.subr.bf16.mxu0 0
      %789 = vmatpush1.bf16.msra.mxu0 0
      %790 = vmatprep.subr.bf16.mxu0 0
      %791 = vmatpush1.bf16.msra.mxu0 0
      %792 = vmatprep.subr.bf16.mxu0 0
      %793 = vmatpush1.bf16.msra.mxu0 0
      %794 = vmatprep.subr.bf16.mxu0 0
      %795 = vmatpush1.bf16.msra.mxu0 0
      %796 = vmatprep.subr.bf16.mxu0 0
      %797 = vmatpush1.bf16.msra.mxu0 0
      %798 = vmatprep.subr.bf16.mxu0 0
      %799 = vmatpush1.bf16.msra.mxu0 0
      %800 = vmatprep.subr.bf16.mxu0 0
      %801 = vmatpush1.bf16.msra.mxu0 %v779
      %802 = vmatprep.subr.bf16.mxu0 0
      %803 = vmatpush1.bf16.msra.mxu0 %v778
      %804 = vmatprep.subr.bf16.mxu0 0
      %805 = vmatpush2.bf16.msra.mxu0 0
      %806 = vmatprep.subr.bf16.mxu0 0
      %807 = vmatpush2.bf16.msra.mxu0 0
      %808 = vmatprep.subr.bf16.mxu0 0
      %809 = vmatpush2.bf16.msra.mxu0 0
      %810 = vmatprep.subr.bf16.mxu0 0
      %811 = vmatpush2.bf16.msra.mxu0 0
      %812 = vmatprep.subr.bf16.mxu0 0
      %813 = vmatpush2.bf16.msra.mxu0 0
      %814 = vmatprep.subr.bf16.mxu0 0
      %815 = vmatpush2.bf16.msra.mxu0 0
      %816 = vmatprep.subr.bf16.mxu0 0
      %817 = vmatpush2.bf16.msra.mxu0 0
      %818 = vmatprep.subr.bf16.mxu0 0
      %819 = vmatpush2.bf16.msra.mxu0 0
      %820 = vmatprep.mubr.bf16.mxu0 0
      %821 = vmatmul.mubr.bf16.gmra.mxu0 %v783
      %v822 = vpop.f32.mrf.mxu0
      %v823 = vadd.f32 0.0, %v822
      %v824 = vpop.f32.mrf.mxu0
      %v825 = vpop.f32.mrf.mxu0
      %v826 = vadd.f32 0.0, %v825
      %v827 = vpop.f32.mrf.mxu0
      %828 = vmatprep.mubr.bf16.mxu0 0
      %829 = vmatmul.mubr.bf16.gmra.mxu0 %v786
      %v830 = vpop.f32.mrf.mxu0
      %v831 = vadd.f32 0.0, %v830
      %v832 = vpop.f32.mrf.mxu0
      %v833 = vpop.f32.mrf.mxu0
      %v834 = vpop.f32.mrf.mxu0
      %835 = vdwg.mxu0
      %v836 = vadd.f32 %v740, %v823
      %v837 = vadd.f32 %v741, %v826
      %v838 = vadd.f32 %v742, %v831
      %s839 = scalar_lea.vmem %s281, 80
      %v840 = vld [vmem:[%s839] sm:$0xf]
      %v841 = vld [vmem:[%s839 + $0x4] sm:$0xf]
      %v842 = vld [vmem:[%s839 + $0x8] sm:$0xf]
      %v843 = vld [vmem:[%s839 + $0xc] sm:$0xf]
      %v844 = vpack.c.b16 %v666, %v665
      %v845 = vpack.c.b16 %v750, %v750
      %v850 = vunpack.c.l.b16 %v840
      %v851 = vunpack.c.l.b16 %v841
      %v852 = vunpack.c.l.b16 %v842
      %v853 = vunpack.c.l.b16 %v843
      %v854 = vpack.c.b16 %v851, %v850
      %v855 = vpack.c.b16 %v853, %v852
      %v859 = vsel %vm446, %v844, 0
      %v862 = vsel %vm446, %v845, 0
      %864 = vmatprep.subr.bf16.mxu0 0
      %865 = vmatpush1.bf16.msra.mxu0 0
      %866 = vmatprep.subr.bf16.mxu0 0
      %867 = vmatpush1.bf16.msra.mxu0 0
      %868 = vmatprep.subr.bf16.mxu0 0
      %869 = vmatpush1.bf16.msra.mxu0 0
      %870 = vmatprep.subr.bf16.mxu0 0
      %871 = vmatpush1.bf16.msra.mxu0 0
      %872 = vmatprep.subr.bf16.mxu0 0
      %873 = vmatpush1.bf16.msra.mxu0 0
      %874 = vmatprep.subr.bf16.mxu0 0
      %875 = vmatpush1.bf16.msra.mxu0 0
      %876 = vmatprep.subr.bf16.mxu0 0
      %877 = vmatpush1.bf16.msra.mxu0 %v855
      %878 = vmatprep.subr.bf16.mxu0 0
      %879 = vmatpush1.bf16.msra.mxu0 %v854
      %880 = vmatprep.subr.bf16.mxu0 0
      %881 = vmatpush2.bf16.msra.mxu0 0
      %882 = vmatprep.subr.bf16.mxu0 0
      %883 = vmatpush2.bf16.msra.mxu0 0
      %884 = vmatprep.subr.bf16.mxu0 0
      %885 = vmatpush2.bf16.msra.mxu0 0
      %886 = vmatprep.subr.bf16.mxu0 0
      %887 = vmatpush2.bf16.msra.mxu0 0
      %888 = vmatprep.subr.bf16.mxu0 0
      %889 = vmatpush2.bf16.msra.mxu0 0
      %890 = vmatprep.subr.bf16.mxu0 0
      %891 = vmatpush2.bf16.msra.mxu0 0
      %892 = vmatprep.subr.bf16.mxu0 0
      %893 = vmatpush2.bf16.msra.mxu0 0
      %894 = vmatprep.subr.bf16.mxu0 0
      %895 = vmatpush2.bf16.msra.mxu0 0
      %896 = vmatprep.mubr.bf16.mxu0 0
      %897 = vmatmul.mubr.bf16.gmra.mxu0 %v859
      %v898 = vpop.f32.mrf.mxu0
      %v899 = vadd.f32 0.0, %v898
      %v900 = vpop.f32.mrf.mxu0
      %v901 = vpop.f32.mrf.mxu0
      %v902 = vadd.f32 0.0, %v901
      %v903 = vpop.f32.mrf.mxu0
      %904 = vmatprep.mubr.bf16.mxu0 0
      %905 = vmatmul.mubr.bf16.gmra.mxu0 %v862
      %v906 = vpop.f32.mrf.mxu0
      %v907 = vadd.f32 0.0, %v906
      %v908 = vpop.f32.mrf.mxu0
      %v909 = vpop.f32.mrf.mxu0
      %v910 = vpop.f32.mrf.mxu0
      %911 = vdwg.mxu0
      %v912 = vadd.f32 %v836, %v899
      %v913 = vadd.f32 %v837, %v902
      %v914 = vadd.f32 %v838, %v907
      %v915 = vld [vmem:[#allocation2 + $0x4] sm:$0xc]
      %v916 = vld [vmem:[#allocation2 + $0x8] sm:$0xf]
      %v917 = vld [vmem:[#allocation2 + $0xc] sm:$0xf]
      %v918 = vld [vmem:[#allocation2 + $0x10] sm:$0x1]
      %s919 = scalar_lea.vmem %s281, 96
      %v920 = vld [vmem:[%s919] sm:$0xf]
      %v921 = vld [vmem:[%s919 + $0x4] sm:$0xf]
      %v922 = vld [vmem:[%s919 + $0x8] sm:$0xf]
      %v923 = vld [vmem:[%s919 + $0xc] sm:$0xf]
      %v928 = vunpack.c.l.b16 %v915
      %v929 = vunpack.c.l.b16 %v916
      %v930 = vunpack.c.l.b16 %v917
      %v931 = vunpack.c.l.b16 %v918
      %v932 = vpack.c.b16 %v929, %v928
      %v933 = vpack.c.b16 %v931, %v930
      %vm934 = vcmask 1045504
      %v935 = vrot.slane %v932, 2
      %v936 = vrot.slane %v933, 2
      %v937 = vsel %vm934, %v935, %v936
      %v942 = vunpack.c.l.b16 %v920
      %v943 = vunpack.c.l.b16 %v921
      %v944 = vunpack.c.l.b16 %v922
      %v945 = vunpack.c.l.b16 %v923
      %v946 = vpack.c.b16 %v943, %v942
      %v947 = vpack.c.b16 %v945, %v944
      %v951 = vsel %vm446, %v937, 0
      %v954 = vsel %vm446, %v936, 0
      %956 = vmatprep.subr.bf16.mxu0 0
      %957 = vmatpush1.bf16.msra.mxu0 0
      %958 = vmatprep.subr.bf16.mxu0 0
      %959 = vmatpush1.bf16.msra.mxu0 0
      %960 = vmatprep.subr.bf16.mxu0 0
      %961 = vmatpush1.bf16.msra.mxu0 0
      %962 = vmatprep.subr.bf16.mxu0 0
      %963 = vmatpush1.bf16.msra.mxu0 0
      %964 = vmatprep.subr.bf16.mxu0 0
      %965 = vmatpush1.bf16.msra.mxu0 0
      %966 = vmatprep.subr.bf16.mxu0 0
      %967 = vmatpush1.bf16.msra.mxu0 0
      %968 = vmatprep.subr.bf16.mxu0 0
      %969 = vmatpush1.bf16.msra.mxu0 %v947
      %970 = vmatprep.subr.bf16.mxu0 0
      %971 = vmatpush1.bf16.msra.mxu0 %v946
      %972 = vmatprep.subr.bf16.mxu0 0
      %973 = vmatpush2.bf16.msra.mxu0 0
      %974 = vmatprep.subr.bf16.mxu0 0
      %975 = vmatpush2.bf16.msra.mxu0 0
      %976 = vmatprep.subr.bf16.mxu0 0
      %977 = vmatpush2.bf16.msra.mxu0 0
      %978 = vmatprep.subr.bf16.mxu0 0
      %979 = vmatpush2.bf16.msra.mxu0 0
      %980 = vmatprep.subr.bf16.mxu0 0
      %981 = vmatpush2.bf16.msra.mxu0 0
      %982 = vmatprep.subr.bf16.mxu0 0
      %983 = vmatpush2.bf16.msra.mxu0 0
      %984 = vmatprep.subr.bf16.mxu0 0
      %985 = vmatpush2.bf16.msra.mxu0 0
      %986 = vmatprep.subr.bf16.mxu0 0
      %987 = vmatpush2.bf16.msra.mxu0 0
      %988 = vmatprep.mubr.bf16.mxu0 0
      %989 = vmatmul.mubr.bf16.gmra.mxu0 %v951
      %v990 = vpop.f32.mrf.mxu0
      %v991 = vadd.f32 0.0, %v990
      %v992 = vpop.f32.mrf.mxu0
      %v993 = vpop.f32.mrf.mxu0
      %v994 = vadd.f32 0.0, %v993
      %v995 = vpop.f32.mrf.mxu0
      %996 = vmatprep.mubr.bf16.mxu0 0
      %997 = vmatmul.mubr.bf16.gmra.mxu0 %v954
      %v998 = vpop.f32.mrf.mxu0
      %v999 = vadd.f32 0.0, %v998
      %v1000 = vpop.f32.mrf.mxu0
      %v1001 = vpop.f32.mrf.mxu0
      %v1002 = vpop.f32.mrf.mxu0
      %1003 = vdwg.mxu0
      %v1004 = vadd.f32 %v912, %v991
      %v1005 = vadd.f32 %v913, %v994
      %v1006 = vadd.f32 %v914, %v999
      %v1007 = vld [vmem:[#allocation2 + $0x10] sm:$0x3]
      %s1008 = scalar_lea.vmem %s281, 112
      %v1009 = vld [vmem:[%s1008] sm:$0xf]
      %v1010 = vld [vmem:[%s1008 + $0x4] sm:$0xf]
      %v1011 = vld [vmem:[%s1008 + $0x8] sm:$0xf]
      %v1012 = vld [vmem:[%s1008 + $0xc] sm:$0xf]
      %v1014 = vunpack.c.l.b16 %v1007
      %v1015 = vpack.c.b16 %v1014, %v930
      %vm1016 = vsmask.f32 5376
      %v1018 = vshrl.u32 %v932, 16
      %v1020 = vrot.slane %v1018, 2
      %v1021 = vshll.u32 %v932, 16
      %v1023 = vrot.slane %v1021, 3
      %v1024 = vor.u32 %v1020, %v1023
      %v1026 = vshrl.u32 %v1015, 16
      %v1028 = vrot.slane %v1026, 2
      %v1029 = vshll.u32 %v1015, 16
      %v1031 = vrot.slane %v1029, 3
      %v1032 = vor.u32 %v1028, %v1031
      %v1033 = vsel %vm1016, %v1024, %v1032
      %v1038 = vunpack.c.l.b16 %v1009
      %v1039 = vunpack.c.l.b16 %v1010
      %v1040 = vunpack.c.l.b16 %v1011
      %v1041 = vunpack.c.l.b16 %v1012
      %v1042 = vpack.c.b16 %v1039, %v1038
      %v1043 = vpack.c.b16 %v1041, %v1040
      %v1047 = vsel %vm446, %v1033, 0
      %v1050 = vsel %vm446, %v1032, 0
      %1052 = vmatprep.subr.bf16.mxu0 0
      %1053 = vmatpush1.bf16.msra.mxu0 0
      %1054 = vmatprep.subr.bf16.mxu0 0
      %1055 = vmatpush1.bf16.msra.mxu0 0
      %1056 = vmatprep.subr.bf16.mxu0 0
      %1057 = vmatpush1.bf16.msra.mxu0 0
      %1058 = vmatprep.subr.bf16.mxu0 0
      %1059 = vmatpush1.bf16.msra.mxu0 0
      %1060 = vmatprep.subr.bf16.mxu0 0
      %1061 = vmatpush1.bf16.msra.mxu0 0
      %1062 = vmatprep.subr.bf16.mxu0 0
      %1063 = vmatpush1.bf16.msra.mxu0 0
      %1064 = vmatprep.subr.bf16.mxu0 0
      %1065 = vmatpush1.bf16.msra.mxu0 %v1043
      %1066 = vmatprep.subr.bf16.mxu0 0
      %1067 = vmatpush1.bf16.msra.mxu0 %v1042
      %1068 = vmatprep.subr.bf16.mxu0 0
      %1069 = vmatpush2.bf16.msra.mxu0 0
      %1070 = vmatprep.subr.bf16.mxu0 0
      %1071 = vmatpush2.bf16.msra.mxu0 0
      %1072 = vmatprep.subr.bf16.mxu0 0
      %1073 = vmatpush2.bf16.msra.mxu0 0
      %1074 = vmatprep.subr.bf16.mxu0 0
      %1075 = vmatpush2.bf16.msra.mxu0 0
      %1076 = vmatprep.subr.bf16.mxu0 0
      %1077 = vmatpush2.bf16.msra.mxu0 0
      %1078 = vmatprep.subr.bf16.mxu0 0
      %1079 = vmatpush2.bf16.msra.mxu0 0
      %1080 = vmatprep.subr.bf16.mxu0 0
      %1081 = vmatpush2.bf16.msra.mxu0 0
      %1082 = vmatprep.subr.bf16.mxu0 0
      %1083 = vmatpush2.bf16.msra.mxu0 0
      %1084 = vmatprep.mubr.bf16.mxu0 0
      %1085 = vmatmul.mubr.bf16.gmra.mxu0 %v1047
      %v1086 = vpop.f32.mrf.mxu0
      %v1087 = vadd.f32 0.0, %v1086
      %v1088 = vpop.f32.mrf.mxu0
      %v1089 = vpop.f32.mrf.mxu0
      %v1090 = vadd.f32 0.0, %v1089
      %v1091 = vpop.f32.mrf.mxu0
      %1092 = vmatprep.mubr.bf16.mxu0 0
      %1093 = vmatmul.mubr.bf16.gmra.mxu0 %v1050
      %v1094 = vpop.f32.mrf.mxu0
      %v1095 = vadd.f32 0.0, %v1094
      %v1096 = vpop.f32.mrf.mxu0
      %v1097 = vpop.f32.mrf.mxu0
      %v1098 = vpop.f32.mrf.mxu0
      %1099 = vdwg.mxu0
      %v1100 = vadd.f32 %v1004, %v1087
      %v1101 = vadd.f32 %v1005, %v1090
      %v1102 = vadd.f32 %v1006, %v1095
      %v1103 = vld [vmem:[#allocation2 + $0x4] sm:$0x8]
      %s1104 = scalar_lea.vmem %s281, 128
      %v1105 = vld [vmem:[%s1104] sm:$0xf]
      %v1106 = vld [vmem:[%s1104 + $0x4] sm:$0xf]
      %v1107 = vld [vmem:[%s1104 + $0x8] sm:$0xf]
      %v1108 = vld [vmem:[%s1104 + $0xc] sm:$0xf]
      %v1110 = vunpack.c.l.b16 %v1103
      %v1111 = vpack.c.b16 %v929, %v1110
      %v1112 = vrot.slane %v1111, 3
      %v1113 = vrot.slane %v1015, 3
      %v1114 = vsel %vm670, %v1112, %v1113
      %v1119 = vunpack.c.l.b16 %v1105
      %v1120 = vunpack.c.l.b16 %v1106
      %v1121 = vunpack.c.l.b16 %v1107
      %v1122 = vunpack.c.l.b16 %v1108
      %v1123 = vpack.c.b16 %v1120, %v1119
      %v1124 = vpack.c.b16 %v1122, %v1121
      %v1128 = vsel %vm446, %v1114, 0
      %v1131 = vsel %vm446, %v1113, 0
      %1133 = vmatprep.subr.bf16.mxu0 0
      %1134 = vmatpush1.bf16.msra.mxu0 0
      %1135 = vmatprep.subr.bf16.mxu0 0
      %1136 = vmatpush1.bf16.msra.mxu0 0
      %1137 = vmatprep.subr.bf16.mxu0 0
      %1138 = vmatpush1.bf16.msra.mxu0 0
      %1139 = vmatprep.subr.bf16.mxu0 0
      %1140 = vmatpush1.bf16.msra.mxu0 0
      %1141 = vmatprep.subr.bf16.mxu0 0
      %1142 = vmatpush1.bf16.msra.mxu0 0
      %1143 = vmatprep.subr.bf16.mxu0 0
      %1144 = vmatpush1.bf16.msra.mxu0 0
      %1145 = vmatprep.subr.bf16.mxu0 0
      %1146 = vmatpush1.bf16.msra.mxu0 %v1124
      %1147 = vmatprep.subr.bf16.mxu0 0
      %1148 = vmatpush1.bf16.msra.mxu0 %v1123
      %1149 = vmatprep.subr.bf16.mxu0 0
      %1150 = vmatpush2.bf16.msra.mxu0 0
      %1151 = vmatprep.subr.bf16.mxu0 0
      %1152 = vmatpush2.bf16.msra.mxu0 0
      %1153 = vmatprep.subr.bf16.mxu0 0
      %1154 = vmatpush2.bf16.msra.mxu0 0
      %1155 = vmatprep.subr.bf16.mxu0 0
      %1156 = vmatpush2.bf16.msra.mxu0 0
      %1157 = vmatprep.subr.bf16.mxu0 0
      %1158 = vmatpush2.bf16.msra.mxu0 0
      %1159 = vmatprep.subr.bf16.mxu0 0
      %1160 = vmatpush2.bf16.msra.mxu0 0
      %1161 = vmatprep.subr.bf16.mxu0 0
      %1162 = vmatpush2.bf16.msra.mxu0 0
      %1163 = vmatprep.subr.bf16.mxu0 0
      %1164 = vmatpush2.bf16.msra.mxu0 0
      %1165 = vmatprep.mubr.bf16.mxu0 0
      %1166 = vmatmul.mubr.bf16.gmra.mxu0 %v1128
      %v1167 = vpop.f32.mrf.mxu0
      %v1168 = vadd.f32 0.0, %v1167
      %v1169 = vpop.f32.mrf.mxu0
      %v1170 = vpop.f32.mrf.mxu0
      %v1171 = vadd.f32 0.0, %v1170
      %v1172 = vpop.f32.mrf.mxu0
      %1173 = vmatprep.mubr.bf16.mxu0 0
      %1174 = vmatmul.mubr.bf16.gmra.mxu0 %v1131
      %v1175 = vpop.f32.mrf.mxu0
      %v1176 = vadd.f32 0.0, %v1175
      %v1177 = vpop.f32.mrf.mxu0
      %v1178 = vpop.f32.mrf.mxu0
      %v1179 = vpop.f32.mrf.mxu0
      %1180 = vdwg.mxu0
      %v1181 = vadd.f32 %v1100, %v1168
      %v1182 = vadd.f32 %v1101, %v1171
      %v1183 = vadd.f32 %v1102, %v1176
      %v1184 = vpack.c.bf16 %v1182, %v1181
      %v1185 = vpack.c.bf16 %v1183, %v1183
      %v1188 = vunpack.c.l.b16 %v1184
      %v1189 = vunpack.c.h.b16 %v1184
      %v1190 = vunpack.c.l.b16 %v1185
      %v1191 = vpack.c.b16 %v1188, %v1188
      %v1192 = vpack.c.b16 %v1189, %v1189
      %v1193 = vpack.c.b16 %v1190, %v1190
      %vm1197 = vcmask 257024
      %1198 = vst.msk [vmem:[%s289] sm:$0xf] %vm1197, %v1191
      %1199 = vst.msk [vmem:[%s289 + $0x4] sm:$0xf] %vm1197, %v1192
      %vm1200 = vcmask 256000
      %1201 = vst.msk [vmem:[%s289 + $0x8] sm:$0x7] %vm1200, %v1193
      %p1202 = scmp.lt.s32.totalorder %s20, 1
      %s1203 = scalar_select %p1202, %s20, 1
      %p1204 = scmp.lt.s32.totalorder %s21, 0
      %s1205 = scalar_select %p1204, %s21, 0
      %s1206 = smul.addr %s1203, 3
      %s1207 = sadd.s32 %s1205, %s1206
      %s1208 = smul.addr %s1207, 4
      %s1209 = scalar_lea.vmem %s5, %s1208
      // Predicated region
      $region45: #{resnet_stage.23} parent=39 // pred_check
        %p1210 = pneg %p173
      $region46: #{resnet_stage.23} parent=39 // pred_check_branch
        %1212 = sbr.rel (%p1210) target = $region48
      $region47: #{resnet_stage.23} parent=39 // pred_region
        _
      $region48: #{resnet_stage.23} parent=39 // pred_fallthru
        _
    $region40: #{resnet_stage.23} parent=5 // pred_fallthru
      _
    %p1213 = scmp.le.s32.totalorder 2, %s11
    // Predicated region
    $region49: #{resnet_stage.23} parent=5 // pred_check
      %p1214 = pneg %p1213
    $region50: #{resnet_stage.23} parent=5 // pred_check_branch
      %1216 = sbr.rel (%p1214) target = $region52
    $region51: #{resnet_stage.23} parent=5 // pred_region
      %s1217 = ssub.s32 %s11, 2
      // Predicated region
      $region53: #{resnet_stage.23} parent=51 // pred_check
        %p1218 = pneg %p179
      $region54: #{resnet_stage.23} parent=51 // pred_check_branch
        %1220 = sbr.rel (%p1218) target = $region56
      $region55: #{resnet_stage.23} parent=51 // pred_region
        %p1221 = scmp.lt.s32.totalorder %s22, 1
        %s1222 = scalar_select %p1221, %s22, 1
        %p1223 = scmp.lt.s32.totalorder %s23, 0
        %s1224 = scalar_select %p1223, %s23, 0
        %s1225 = smul.addr %s1222, 3
        %s1226 = sadd.s32 %s1224, %s1225
        %s1227 = smul.addr %s1226, 4
        %s1228 = scalar_lea.vmem %s5, %s1227
      $region56: #{resnet_stage.23} parent=51 // pred_fallthru
        _
    $region52: #{resnet_stage.23} parent=5 // pred_fallthru
      _
  $region6: #{resnet_stage.23} parent=0 // loop_footer
    %s15 = sadd.s32 1, %s11
  $region7: #{resnet_stage.23} parent=0 // loop_footer_branch
    %10 = sbr.rel target = $region3
  $region8: #{resnet_stage.23} parent=0 // loop_exit
    _

</llo_original>
